<compile_context>
chip_gen: v7x
topology: tpu7x:2x2x1
jax: 0.10.0
libtpu: 0.0.40
codegen_flags: <defaults>
</compile_context>

<pallas_src>
import functools

import jax
import jax.numpy as jnp
from jax.experimental import pallas as pl
from jax.experimental.pallas import tpu as pltpu


# ----------------------------------------------------------------------------
# Pallas kernel 1: fused (im2col-matmul + bias + ReLU), used by both convs.
# ----------------------------------------------------------------------------
def _matmul_bias_relu_kernel(a_ref, w_ref, b_ref, o_ref):
    acc = jnp.dot(a_ref[...], w_ref[...], preferred_element_type=jnp.float32)
    o_ref[...] = jnp.maximum(acc + b_ref[...], 0.0)      # fused bias + ReLU


def pallas_matmul_bias_relu(a, w, b, tm):
    M, K = a.shape
    N = w.shape[1]
    assert M % tm == 0 and tm % 8 == 0
    ce = pl.CostEstimate(
        flops=2 * M * K * N,
        transcendentals=0,
        bytes_accessed=4 * (M * K + K * N + M * N + N),
    )
    return pl.pallas_call(
        _matmul_bias_relu_kernel,
        out_shape=jax.ShapeDtypeStruct((M, N), jnp.float32),
        grid=(M // tm,),
        in_specs=[
            pl.BlockSpec((tm, K), lambda i: (i, 0)),
            pl.BlockSpec((K, N), lambda i: (0, 0)),
            pl.BlockSpec((1, N), lambda i: (0, 0)),
        ],
        out_specs=pl.BlockSpec((tm, N), lambda i: (i, 0)),
        compiler_params=pltpu.CompilerParams(dimension_semantics=("parallel",)),
        cost_estimate=ce,
    )(a, w, b.reshape(1, N))


# ----------------------------------------------------------------------------
# Pallas kernel 2: capsule head (per-capsule 8->16 transform, 3 routing
# iterations, squash, norm, softmax).  1152 capsules live in the lane dim.
# ----------------------------------------------------------------------------
def _caps_kernel(u8_ref, w_ref, wb_ref, o_ref, *, in_dim, out_dim, n_cls, n_iter):
    u8 = u8_ref[0]                       # [in_dim, n_caps]   (capsules in lanes)
    w = w_ref[...]                       # [in_dim*out_dim, n_caps]
    # per-capsule transform: u[f, n] = sum_e u8[e, n] * dig_W[n, e, f] + dig_Wb[n, f]
    u = wb_ref[...]                      # [out_dim, n_caps]
    for e in range(in_dim):
        u = u + u8[e:e + 1, :] * w[e * out_dim:(e + 1) * out_dim, :]
    u_col = u.T                          # [n_caps, out_dim]; hoisted out of the loop

    # --- dynamic routing: literal transcription of the torch code -------------
    b = jnp.zeros((n_cls, u.shape[1]), jnp.float32)      # [n_cls, n_caps]
    vT = None
    for _ in range(n_iter):
        bmax = jnp.max(b, axis=0, keepdims=True)                      # softmax over
        eb = jnp.exp(b - bmax)                                        # the class axis
        c = eb * pl.reciprocal(jnp.sum(eb, axis=0, keepdims=True), approx=True)
        s = jnp.dot(c, u_col, preferred_element_type=jnp.float32)     # [n_cls, out_dim]
        # squash(s) with torch dim=1 == class axis (sum-of-squares, no sqrt^2)
        s_l2sq = jnp.sum(s * s, axis=0, keepdims=True)                # [1, out_dim]
        s_l1 = jnp.sum(jnp.abs(s), axis=0, keepdims=True)             # [1, out_dim]
        coef = s_l2sq * pl.reciprocal(1.0 + s_l2sq * s_l1, approx=True)
        vT = coef * s                                                 # [n_cls, out_dim] == v.T
        b = b + jnp.dot(vT, u, preferred_element_type=jnp.float32)    # [n_cls, n_caps]

    # --- final squash of dig_out (= v [out_dim, n_cls]), norm over out_dim ----
    t_l2sq = jnp.sum(vT * vT, axis=1, keepdims=True)     # [n_cls, 1]
    t_l1 = jnp.sum(jnp.abs(vT), axis=1, keepdims=True)   # [n_cls, 1]
    coef2 = t_l2sq * pl.reciprocal(1.0 + t_l2sq * t_l1, approx=True)
    sq = coef2 * vT                                      # [n_cls, out_dim]
    # torch.norm(out, dim=2) then softmax(dim=1)
    nrm = jnp.sqrt(jnp.sum(sq * sq, axis=1, keepdims=True))           # [n_cls, 1]
    m = jnp.max(nrm, axis=0, keepdims=True)
    en = jnp.exp(nrm - m)
    probs = en * pl.reciprocal(jnp.sum(en, axis=0, keepdims=True), approx=True)
    o_ref[0] = probs                                     # [n_cls, 1]


def pallas_caps_head(u8T, dig_W, dig_Wb):
    B, in_dim, n_caps = u8T.shape
    out_dim = dig_W.shape[-1]
    n_cls = 10
    Wt = dig_W.reshape(n_caps, in_dim * out_dim).T       # [128, 1152], rows = e*16+f
    Wbt = dig_Wb.T                                       # [16, 1152]
    kernel = functools.partial(_caps_kernel, in_dim=in_dim, out_dim=out_dim,
                               n_cls=n_cls, n_iter=3)
    ce = pl.CostEstimate(
        flops=B * (2 * n_caps * in_dim * out_dim
                   + 3 * (4 * n_cls * n_caps * out_dim + 6 * n_cls * n_caps)),
        transcendentals=B * 4 * n_cls * n_caps,
        bytes_accessed=4 * (u8T.size + Wt.size + Wbt.size + B * n_cls),
    )
    out = pl.pallas_call(
        kernel,
        out_shape=jax.ShapeDtypeStruct((B, n_cls, 1), jnp.float32),
        grid=(B,),
        in_specs=[
            pl.BlockSpec((1, in_dim, n_caps), lambda b: (b, 0, 0)),
            pl.BlockSpec((in_dim * out_dim, n_caps), lambda b: (0, 0)),
            pl.BlockSpec((out_dim, n_caps), lambda b: (0, 0)),
        ],
        out_specs=pl.BlockSpec((1, n_cls, 1), lambda b: (b, 0, 0)),
        compiler_params=pltpu.CompilerParams(dimension_semantics=("parallel",)),
        cost_estimate=ce,
    )(u8T, Wt, Wbt)
    return out.reshape(B, n_cls)


# ----------------------------------------------------------------------------
# Forward pass glue (layout plumbing is kept small and single-pass).
# ----------------------------------------------------------------------------
def capsnet_forward(x, params):
    B = x.shape[0]

    # ---- conv1: Conv2d(1, 256, 9) + ReLU  (im2col + Pallas matmul) -----------
    pat = jnp.stack([x[:, 0, kh:kh + 20, kw:kw + 20]
                     for kh in range(9) for kw in range(9)], axis=-1)   # [B,20,20,81]
    p1 = jnp.pad(pat.reshape(B * 400, 81), ((0, 0), (0, 47)))           # [B*400,128]
    # Weight columns permuted to (d, ic) order (conv channel c = ic*8 + d) so the
    # conv1 output reshapes for free into the prim conv's layout.
    w1 = params["conv1_w"].reshape(32, 8, 81).transpose(1, 0, 2).reshape(256, 81).T
    w1 = jnp.pad(w1, ((0, 47), (0, 0)))                                 # [128,256]
    b1 = params["conv1_b"].reshape(32, 8).T.reshape(256)
    o1 = pallas_matmul_bias_relu(p1, w1, b1, tm=400)                    # [B*400,256]
    a1 = o1.reshape(B, 20, 20, 8, 32)            # [b, h, w, d, ic]  (free reshape)

    # ---- prim_layer: Conv3d(32, 32, [1,9,9], stride=[1,2,2]) + ReLU ----------
    # Single fused slice/stack builds the im2col matrix directly in its final
    # layout (rows = (b, oh, ow, d), K = (kh, kw, ic)); no NCHW transposes.
    taps = [a1[:, kh:kh + 12:2, kw:kw + 12:2, :, :]                     # [B,6,6,8,32]
            for kh in range(9) for kw in range(9)]
    p2 = jnp.stack(taps, axis=4).reshape(B * 6 * 6 * 8, 81 * 32)        # [576,2592]
    w2 = params["prim_w"][:, :, 0].transpose(2, 3, 1, 0).reshape(81 * 32, 32)
    w2 = jnp.pad(w2, ((0, 0), (0, 96)))          # pad N 32->128: lane-dense store
    b2 = jnp.pad(params["prim_b"], (0, 96))
    o2 = pallas_matmul_bias_relu(p2, w2, b2, tm=288)                    # [576,128]
    o2 = o2[:, :32].reshape(B, 6, 6, 8, 32)      # [b, oh, ow, d, oc]

    # torch: transpose(2,-1) + reshape([-1,1152,1,8])  ==> capsule n = oc*36+ow*6+oh,
    # expressed with the 1152 capsules in the lane dim (tiny 73 KB shuffle).
    u8T = o2.transpose(0, 3, 4, 2, 1).reshape(B, 8, 1152)               # [B,8,1152]

    probs = pallas_caps_head(u8T, params["dig_W"], params["dig_Wb"])    # [B,10]
    # TODO(synk): reconstruct()/lin1-3, digit_caps, output conv and margin_loss
    # are not exercised by the testing=True forward path.
    return probs, None


def init_params(key):
    k1, k2, k3, k4, k5 = jax.random.split(key, 5)
    b1 = 1.0 / (81.0 ** 0.5)
    conv1_w = jax.random.uniform(k1, (256, 1, 9, 9), jnp.float32, -b1, b1)
    conv1_b = jax.random.uniform(k2, (256,), jnp.float32, -b1, b1)
    b2 = 1.0 / ((32.0 * 81.0) ** 0.5)
    prim_w = jax.random.uniform(k3, (32, 32, 1, 9, 9), jnp.float32, -b2, b2)
    prim_b = jax.random.uniform(k4, (32,), jnp.float32, -b2, b2)
    fan_in, fan_out = 8 * 16, 1152 * 16                  # xavier_uniform on [1152,8,16]
    bx = (6.0 / (fan_in + fan_out)) ** 0.5
    dig_W = jax.random.uniform(k5, (1152, 8, 16), jnp.float32, -bx, bx)
    dig_Wb = jnp.zeros((1152, 16), jnp.float32)
    return dict(conv1_w=conv1_w, conv1_b=conv1_b,
                prim_w=prim_w, prim_b=prim_b,
                dig_W=dig_W, dig_Wb=dig_Wb)


if __name__ == "__main__":
    key = jax.random.PRNGKey(0)
    kx, kp = jax.random.split(key)
    x = jax.random.normal(kx, (2, 1, 28, 28), jnp.float32)   # 28x28 forced by the arch
    params = init_params(kp)

    probs, recon = jax.jit(capsnet_forward)(x, params)
    jax.block_until_ready(probs)

    assert probs.shape == (2, 10)
    assert recon is None
    assert bool(jnp.all(jnp.isfinite(probs)))
    assert bool(jnp.all(jnp.abs(jnp.sum(probs, axis=1) - 1.0) < 5e-2))
    print("KERNEL_OK")
</pallas_src>

<mosaic_0001>
module attributes {stable_mosaic.version = 11 : i64} {
  func.func @_matmul_bias_relu_kernel(%arg0: i32, %arg1: memref<400x128xf32, #tpu.memory_space<vmem>>, %arg2: memref<128x256xf32, #tpu.memory_space<vmem>>, %arg3: memref<1x256xf32, #tpu.memory_space<vmem>>, %arg4: memref<400x256xf32, #tpu.memory_space<vmem>>) attributes {dimension_semantics = [#tpu.dimension_semantics<parallel>], iteration_bounds = array<i64: 2>, scalar_prefetch = 0 : i64, scratch_operands = 0 : i64, tpu.core_type = #tpu.core_type<tc>, window_params = [{transform_indices = @transform_0, window_bounds = array<i64: 400, 128>}, {pipeline_mode = #tpu.pipeline_mode<synchronous>, transform_indices = @transform_1, window_bounds = array<i64: 128, 256>}, {pipeline_mode = #tpu.pipeline_mode<synchronous>, transform_indices = @transform_2, window_bounds = array<i64: 1, 256>}, {transform_indices = @transform_3, window_bounds = array<i64: 400, 256>}]} {
    %c0 = arith.constant 0 : index
    %c0_0 = arith.constant 0 : index
    %0 = vector.load %arg1[%c0, %c0_0] : memref<400x128xf32, #tpu.memory_space<vmem>>, vector<400x128xf32>
    %c0_1 = arith.constant 0 : index
    %c0_2 = arith.constant 0 : index
    %1 = vector.load %arg2[%c0_1, %c0_2] : memref<128x256xf32, #tpu.memory_space<vmem>>, vector<128x256xf32>
    %cst = arith.constant dense<0.000000e+00> : vector<400x256xf32>
    %2 = tpu.matmul %0, %1, %cst {dimension_numbers = #tpu.dot_dimension_numbers<[1], [0], [0], [1], [0, 0, 1, 1], [], []>} : vector<400x128xf32>, vector<128x256xf32>, vector<400x256xf32> -> vector<400x256xf32>
    %c0_3 = arith.constant 0 : index
    %c0_4 = arith.constant 0 : index
    %3 = vector.load %arg3[%c0_3, %c0_4] : memref<1x256xf32, #tpu.memory_space<vmem>>, vector<1x256xf32>
    %4 = vector.broadcast %3 : vector<1x256xf32> to vector<400x256xf32>
    %5 = arith.addf %2, %4 : vector<400x256xf32>
    %cst_5 = arith.constant 0.000000e+00 : f32
    %6 = vector.broadcast %cst_5 : f32 to vector<400x256xf32>
    %7 = arith.maximumf %5, %6 : vector<400x256xf32>
    %c0_6 = arith.constant 0 : index
    %c0_7 = arith.constant 0 : index
    %8 = vector.load %arg4[%c0_6, %c0_7] : memref<400x256xf32, #tpu.memory_space<vmem>>, vector<400x256xf32>
    tpu.vector_store %arg4[%c0_6, %c0_7], %7 {strides = array<i32>} : memref<400x256xf32, #tpu.memory_space<vmem>>, vector<400x256xf32>,
    return
  }
  func.func @transform_0(%arg0: i32) -> (i32, i32) {
    %c0_i32 = arith.constant 0 : i32
    %c0_i32_0 = arith.constant 0 : i32
    return %arg0, %c0_i32 : i32, i32
  }
  func.func @transform_1(%arg0: i32) -> (i32, i32) {
    %c0_i32 = arith.constant 0 : i32
    %c0_i32_0 = arith.constant 0 : i32
    %c0_i32_1 = arith.constant 0 : i32
    return %c0_i32, %c0_i32_0 : i32, i32
  }
  func.func @transform_2(%arg0: i32) -> (i32, i32) {
    %c0_i32 = arith.constant 0 : i32
    %c0_i32_0 = arith.constant 0 : i32
    %c0_i32_1 = arith.constant 0 : i32
    return %c0_i32, %c0_i32_0 : i32, i32
  }
  func.func @transform_3(%arg0: i32) -> (i32, i32) {
    %c0_i32 = arith.constant 0 : i32
    %c0_i32_0 = arith.constant 0 : i32
    return %arg0, %c0_i32 : i32, i32
  }
}

module attributes {stable_mosaic.version = 11 : i64} {
  func.func @_matmul_bias_relu_kernel(%arg0: i32, %arg1: memref<288x2592xf32, #tpu.memory_space<vmem>>, %arg2: memref<2592x128xf32, #tpu.memory_space<vmem>>, %arg3: memref<1x128xf32, #tpu.memory_space<vmem>>, %arg4: memref<288x128xf32, #tpu.memory_space<vmem>>) attributes {dimension_semantics = [#tpu.dimension_semantics<parallel>], iteration_bounds = array<i64: 2>, scalar_prefetch = 0 : i64, scratch_operands = 0 : i64, tpu.core_type = #tpu.core_type<tc>, window_params = [{transform_indices = @transform_0, window_bounds = array<i64: 288, 2592>}, {pipeline_mode = #tpu.pipeline_mode<synchronous>, transform_indices = @transform_1, window_bounds = array<i64: 2592, 128>}, {pipeline_mode = #tpu.pipeline_mode<synchronous>, transform_indices = @transform_2, window_bounds = array<i64: 1, 128>}, {transform_indices = @transform_3, window_bounds = array<i64: 288, 128>}]} {
    %c0 = arith.constant 0 : index
    %c0_0 = arith.constant 0 : index
    %0 = vector.load %arg1[%c0, %c0_0] : memref<288x2592xf32, #tpu.memory_space<vmem>>, vector<288x2592xf32>
    %c0_1 = arith.constant 0 : index
    %c0_2 = arith.constant 0 : index
    %1 = vector.load %arg2[%c0_1, %c0_2] : memref<2592x128xf32, #tpu.memory_space<vmem>>, vector<2592x128xf32>
    %cst = arith.constant dense<0.000000e+00> : vector<288x128xf32>
    %2 = tpu.matmul %0, %1, %cst {dimension_numbers = #tpu.dot_dimension_numbers<[1], [0], [0], [1], [0, 0, 1, 1], [], []>} : vector<288x2592xf32>, vector<2592x128xf32>, vector<288x128xf32> -> vector<288x128xf32>
    %c0_3 = arith.constant 0 : index
    %c0_4 = arith.constant 0 : index
    %3 = vector.load %arg3[%c0_3, %c0_4] : memref<1x128xf32, #tpu.memory_space<vmem>>, vector<1x128xf32>
    %4 = vector.broadcast %3 : vector<1x128xf32> to vector<288x128xf32>
    %5 = arith.addf %2, %4 : vector<288x128xf32>
    %cst_5 = arith.constant 0.000000e+00 : f32
    %6 = vector.broadcast %cst_5 : f32 to vector<288x128xf32>
    %7 = arith.maximumf %5, %6 : vector<288x128xf32>
    %c0_6 = arith.constant 0 : index
    %c0_7 = arith.constant 0 : index
    %8 = vector.load %arg4[%c0_6, %c0_7] : memref<288x128xf32, #tpu.memory_space<vmem>>, vector<288x128xf32>
    tpu.vector_store %arg4[%c0_6, %c0_7], %7 {strides = array<i32>} : memref<288x128xf32, #tpu.memory_space<vmem>>, vector<288x128xf32>,
    return
  }
  func.func @transform_0(%arg0: i32) -> (i32, i32) {
    %c0_i32 = arith.constant 0 : i32
    %c0_i32_0 = arith.constant 0 : i32
    return %arg0, %c0_i32 : i32, i32
  }
  func.func @transform_1(%arg0: i32) -> (i32, i32) {
    %c0_i32 = arith.constant 0 : i32
    %c0_i32_0 = arith.constant 0 : i32
    %c0_i32_1 = arith.constant 0 : i32
    return %c0_i32, %c0_i32_0 : i32, i32
  }
  func.func @transform_2(%arg0: i32) -> (i32, i32) {
    %c0_i32 = arith.constant 0 : i32
    %c0_i32_0 = arith.constant 0 : i32
    %c0_i32_1 = arith.constant 0 : i32
    return %c0_i32, %c0_i32_0 : i32, i32
  }
  func.func @transform_3(%arg0: i32) -> (i32, i32) {
    %c0_i32 = arith.constant 0 : i32
    %c0_i32_0 = arith.constant 0 : i32
    return %arg0, %c0_i32 : i32, i32
  }
}

module attributes {stable_mosaic.version = 11 : i64} {
  func.func @_caps_kernel(%arg0: i32, %arg1: memref<1x8x1152xf32, #tpu.memory_space<vmem>>, %arg2: memref<128x1152xf32, #tpu.memory_space<vmem>>, %arg3: memref<16x1152xf32, #tpu.memory_space<vmem>>, %arg4: memref<1x10x1xf32, #tpu.memory_space<vmem>>) attributes {dimension_semantics = [#tpu.dimension_semantics<parallel>], iteration_bounds = array<i64: 2>, scalar_prefetch = 0 : i64, scratch_operands = 0 : i64, tpu.core_type = #tpu.core_type<tc>, window_params = [{transform_indices = @transform_0, window_bounds = array<i64: 1, 8, 1152>}, {pipeline_mode = #tpu.pipeline_mode<synchronous>, transform_indices = @transform_1, window_bounds = array<i64: 128, 1152>}, {pipeline_mode = #tpu.pipeline_mode<synchronous>, transform_indices = @transform_2, window_bounds = array<i64: 16, 1152>}, {transform_indices = @transform_3, window_bounds = array<i64: 1, 10, 1>}]} {
    %c0 = arith.constant 0 : index
    %c0_0 = arith.constant 0 : index
    %c0_1 = arith.constant 0 : index
    %0 = vector.load %arg1[%c0, %c0_0, %c0_1] : memref<1x8x1152xf32, #tpu.memory_space<vmem>>, vector<1x8x1152xf32>
    %1 = vector.shape_cast %0 : vector<1x8x1152xf32> to vector<8x1152xf32>
    %c0_2 = arith.constant 0 : index
    %c0_3 = arith.constant 0 : index
    %2 = vector.load %arg2[%c0_2, %c0_3] : memref<128x1152xf32, #tpu.memory_space<vmem>>, vector<128x1152xf32>
    %c0_4 = arith.constant 0 : index
    %c0_5 = arith.constant 0 : index
    %3 = vector.load %arg3[%c0_4, %c0_5] : memref<16x1152xf32, #tpu.memory_space<vmem>>, vector<16x1152xf32>
    %4 = vector.extract_strided_slice %1 {offsets = [0, 0], sizes = [1, 1152], strides = [1, 1]} : vector<8x1152xf32> to vector<1x1152xf32>
    %5 = vector.extract_strided_slice %2 {offsets = [0, 0], sizes = [16, 1152], strides = [1, 1]} : vector<128x1152xf32> to vector<16x1152xf32>
    %6 = vector.broadcast %4 : vector<1x1152xf32> to vector<16x1152xf32>
    %7 = arith.mulf %6, %5 : vector<16x1152xf32>
    %8 = arith.addf %3, %7 : vector<16x1152xf32>
    %9 = vector.extract_strided_slice %1 {offsets = [1, 0], sizes = [1, 1152], strides = [1, 1]} : vector<8x1152xf32> to vector<1x1152xf32>
    %10 = vector.extract_strided_slice %2 {offsets = [16, 0], sizes = [16, 1152], strides = [1, 1]} : vector<128x1152xf32> to vector<16x1152xf32>
    %11 = vector.broadcast %9 : vector<1x1152xf32> to vector<16x1152xf32>
    %12 = arith.mulf %11, %10 : vector<16x1152xf32>
    %13 = arith.addf %8, %12 : vector<16x1152xf32>
    %14 = vector.extract_strided_slice %1 {offsets = [2, 0], sizes = [1, 1152], strides = [1, 1]} : vector<8x1152xf32> to vector<1x1152xf32>
    %15 = vector.extract_strided_slice %2 {offsets = [32, 0], sizes = [16, 1152], strides = [1, 1]} : vector<128x1152xf32> to vector<16x1152xf32>
    %16 = vector.broadcast %14 : vector<1x1152xf32> to vector<16x1152xf32>
    %17 = arith.mulf %16, %15 : vector<16x1152xf32>
    %18 = arith.addf %13, %17 : vector<16x1152xf32>
    %19 = vector.extract_strided_slice %1 {offsets = [3, 0], sizes = [1, 1152], strides = [1, 1]} : vector<8x1152xf32> to vector<1x1152xf32>
    %20 = vector.extract_strided_slice %2 {offsets = [48, 0], sizes = [16, 1152], strides = [1, 1]} : vector<128x1152xf32> to vector<16x1152xf32>
    %21 = vector.broadcast %19 : vector<1x1152xf32> to vector<16x1152xf32>
    %22 = arith.mulf %21, %20 : vector<16x1152xf32>
    %23 = arith.addf %18, %22 : vector<16x1152xf32>
    %24 = vector.extract_strided_slice %1 {offsets = [4, 0], sizes = [1, 1152], strides = [1, 1]} : vector<8x1152xf32> to vector<1x1152xf32>
    %25 = vector.extract_strided_slice %2 {offsets = [64, 0], sizes = [16, 1152], strides = [1, 1]} : vector<128x1152xf32> to vector<16x1152xf32>
    %26 = vector.broadcast %24 : vector<1x1152xf32> to vector<16x1152xf32>
    %27 = arith.mulf %26, %25 : vector<16x1152xf32>
    %28 = arith.addf %23, %27 : vector<16x1152xf32>
    %29 = vector.extract_strided_slice %1 {offsets = [5, 0], sizes = [1, 1152], strides = [1, 1]} : vector<8x1152xf32> to vector<1x1152xf32>
    %30 = vector.extract_strided_slice %2 {offsets = [80, 0], sizes = [16, 1152], strides = [1, 1]} : vector<128x1152xf32> to vector<16x1152xf32>
    %31 = vector.broadcast %29 : vector<1x1152xf32> to vector<16x1152xf32>
    %32 = arith.mulf %31, %30 : vector<16x1152xf32>
    %33 = arith.addf %28, %32 : vector<16x1152xf32>
    %34 = vector.extract_strided_slice %1 {offsets = [6, 0], sizes = [1, 1152], strides = [1, 1]} : vector<8x1152xf32> to vector<1x1152xf32>
    %35 = vector.extract_strided_slice %2 {offsets = [96, 0], sizes = [16, 1152], strides = [1, 1]} : vector<128x1152xf32> to vector<16x1152xf32>
    %36 = vector.broadcast %34 : vector<1x1152xf32> to vector<16x1152xf32>
    %37 = arith.mulf %36, %35 : vector<16x1152xf32>
    %38 = arith.addf %33, %37 : vector<16x1152xf32>
    %39 = vector.extract_strided_slice %1 {offsets = [7, 0], sizes = [1, 1152], strides = [1, 1]} : vector<8x1152xf32> to vector<1x1152xf32>
    %40 = vector.extract_strided_slice %2 {offsets = [112, 0], sizes = [16, 1152], strides = [1, 1]} : vector<128x1152xf32> to vector<16x1152xf32>
    %41 = vector.broadcast %39 : vector<1x1152xf32> to vector<16x1152xf32>
    %42 = arith.mulf %41, %40 : vector<16x1152xf32>
    %43 = arith.addf %38, %42 : vector<16x1152xf32>
    %44 = tpu.transpose %43, [1, 0] : vector<16x1152xf32> -> vector<1152x16xf32>
    %cst = arith.constant 0.000000e+00 : f32
    %45 = vector.broadcast %cst : f32 to vector<10x1152xf32>
    %cst_6 = arith.constant dense<0xFF800000> : vector<1152xf32>
    %46 = vector.multi_reduction <maximumf>, %45, %cst_6 [0] : vector<10x1152xf32> to vector<1152xf32>
    %47 = vector.shape_cast %46 : vector<1152xf32> to vector<1x1152xf32>
    %48 = vector.broadcast %47 : vector<1x1152xf32> to vector<10x1152xf32>
    %49 = arith.subf %45, %48 : vector<10x1152xf32>
    %50 = math.exp %49 : vector<10x1152xf32>
    %cst_7 = arith.constant dense<0.000000e+00> : vector<1152xf32>
    %51 = vector.multi_reduction <add>, %50, %cst_7 [0] : vector<10x1152xf32> to vector<1152xf32>
    %52 = vector.shape_cast %51 : vector<1152xf32> to vector<1x1152xf32>
    %53 = tpu.reciprocal %52 {approx = true} : vector<1x1152xf32> -> vector<1x1152xf32>
    %54 = vector.broadcast %53 : vector<1x1152xf32> to vector<10x1152xf32>
    %55 = arith.mulf %50, %54 : vector<10x1152xf32>
    %cst_8 = arith.constant dense<0.000000e+00> : vector<10x16xf32>
    %56 = tpu.matmul %55, %44, %cst_8 {dimension_numbers = #tpu.dot_dimension_numbers<[1], [0], [0], [1], [0, 0, 1, 1], [], []>} : vector<10x1152xf32>, vector<1152x16xf32>, vector<10x16xf32> -> vector<10x16xf32>
    %57 = arith.mulf %56, %56 : vector<10x16xf32>
    %cst_9 = arith.constant dense<0.000000e+00> : vector<16xf32>
    %58 = vector.multi_reduction <add>, %57, %cst_9 [0] : vector<10x16xf32> to vector<16xf32>
    %59 = vector.shape_cast %58 : vector<16xf32> to vector<1x16xf32>
    %60 = math.absf %56 : vector<10x16xf32>
    %cst_10 = arith.constant dense<0.000000e+00> : vector<16xf32>
    %61 = vector.multi_reduction <add>, %60, %cst_10 [0] : vector<10x16xf32> to vector<16xf32>
    %62 = vector.shape_cast %61 : vector<16xf32> to vector<1x16xf32>
    %63 = arith.mulf %59, %62 : vector<1x16xf32>
    %cst_11 = arith.constant 1.000000e+00 : f32
    %64 = vector.broadcast %cst_11 : f32 to vector<1x16xf32>
    %65 = arith.addf %64, %63 : vector<1x16xf32>
    %66 = tpu.reciprocal %65 {approx = true} : vector<1x16xf32> -> vector<1x16xf32>
    %67 = arith.mulf %59, %66 : vector<1x16xf32>
    %68 = vector.broadcast %67 : vector<1x16xf32> to vector<10x16xf32>
    %69 = arith.mulf %68, %56 : vector<10x16xf32>
    %cst_12 = arith.constant dense<0.000000e+00> : vector<10x1152xf32>
    %70 = tpu.matmul %69, %43, %cst_12 {dimension_numbers = #tpu.dot_dimension_numbers<[1], [0], [0], [1], [0, 0, 1, 1], [], []>} : vector<10x16xf32>, vector<16x1152xf32>, vector<10x1152xf32> -> vector<10x1152xf32>
    %71 = arith.addf %45, %70 : vector<10x1152xf32>
    %cst_13 = arith.constant dense<0xFF800000> : vector<1152xf32>
    %72 = vector.multi_reduction <maximumf>, %71, %cst_13 [0] : vector<10x1152xf32> to vector<1152xf32>
    %73 = vector.shape_cast %72 : vector<1152xf32> to vector<1x1152xf32>
    %74 = vector.broadcast %73 : vector<1x1152xf32> to vector<10x1152xf32>
    %75 = arith.subf %71, %74 : vector<10x1152xf32>
    %76 = math.exp %75 : vector<10x1152xf32>
    %cst_14 = arith.constant dense<0.000000e+00> : vector<1152xf32>
    %77 = vector.multi_reduction <add>, %76, %cst_14 [0] : vector<10x1152xf32> to vector<1152xf32>
    %78 = vector.shape_cast %77 : vector<1152xf32> to vector<1x1152xf32>
    %79 = tpu.reciprocal %78 {approx = true} : vector<1x1152xf32> -> vector<1x1152xf32>
    %80 = vector.broadcast %79 : vector<1x1152xf32> to vector<10x1152xf32>
    %81 = arith.mulf %76, %80 : vector<10x1152xf32>
    %cst_15 = arith.constant dense<0.000000e+00> : vector<10x16xf32>
    %82 = tpu.matmul %81, %44, %cst_15 {dimension_numbers = #tpu.dot_dimension_numbers<[1], [0], [0], [1], [0, 0, 1, 1], [], []>} : vector<10x1152xf32>, vector<1152x16xf32>, vector<10x16xf32> -> vector<10x16xf32>
    %83 = arith.mulf %82, %82 : vector<10x16xf32>
    %cst_16 = arith.constant dense<0.000000e+00> : vector<16xf32>
    %84 = vector.multi_reduction <add>, %83, %cst_16 [0] : vector<10x16xf32> to vector<16xf32>
    %85 = vector.shape_cast %84 : vector<16xf32> to vector<1x16xf32>
    %86 = math.absf %82 : vector<10x16xf32>
    %cst_17 = arith.constant dense<0.000000e+00> : vector<16xf32>
    %87 = vector.multi_reduction <add>, %86, %cst_17 [0] : vector<10x16xf32> to vector<16xf32>
    %88 = vector.shape_cast %87 : vector<16xf32> to vector<1x16xf32>
    %89 = arith.mulf %85, %88 : vector<1x16xf32>
    %cst_18 = arith.constant 1.000000e+00 : f32
    %90 = vector.broadcast %cst_18 : f32 to vector<1x16xf32>
    %91 = arith.addf %90, %89 : vector<1x16xf32>
    %92 = tpu.reciprocal %91 {approx = true} : vector<1x16xf32> -> vector<1x16xf32>
    %93 = arith.mulf %85, %92 : vector<1x16xf32>
    %94 = vector.broadcast %93 : vector<1x16xf32> to vector<10x16xf32>
    %95 = arith.mulf %94, %82 : vector<10x16xf32>
    %cst_19 = arith.constant dense<0.000000e+00> : vector<10x1152xf32>
    %96 = tpu.matmul %95, %43, %cst_19 {dimension_numbers = #tpu.dot_dimension_numbers<[1], [0], [0], [1], [0, 0, 1, 1], [], []>} : vector<10x16xf32>, vector<16x1152xf32>, vector<10x1152xf32> -> vector<10x1152xf32>
    %97 = arith.addf %71, %96 : vector<10x1152xf32>
    %cst_20 = arith.constant dense<0xFF800000> : vector<1152xf32>
    %98 = vector.multi_reduction <maximumf>, %97, %cst_20 [0] : vector<10x1152xf32> to vector<1152xf32>
    %99 = vector.shape_cast %98 : vector<1152xf32> to vector<1x1152xf32>
    %100 = vector.broadcast %99 : vector<1x1152xf32> to vector<10x1152xf32>
    %101 = arith.subf %97, %100 : vector<10x1152xf32>
    %102 = math.exp %101 : vector<10x1152xf32>
    %cst_21 = arith.constant dense<0.000000e+00> : vector<1152xf32>
    %103 = vector.multi_reduction <add>, %102, %cst_21 [0] : vector<10x1152xf32> to vector<1152xf32>
    %104 = vector.shape_cast %103 : vector<1152xf32> to vector<1x1152xf32>
    %105 = tpu.reciprocal %104 {approx = true} : vector<1x1152xf32> -> vector<1x1152xf32>
    %106 = vector.broadcast %105 : vector<1x1152xf32> to vector<10x1152xf32>
    %107 = arith.mulf %102, %106 : vector<10x1152xf32>
    %cst_22 = arith.constant dense<0.000000e+00> : vector<10x16xf32>
    %108 = tpu.matmul %107, %44, %cst_22 {dimension_numbers = #tpu.dot_dimension_numbers<[1], [0], [0], [1], [0, 0, 1, 1], [], []>} : vector<10x1152xf32>, vector<1152x16xf32>, vector<10x16xf32> -> vector<10x16xf32>
    %109 = arith.mulf %108, %108 : vector<10x16xf32>
    %cst_23 = arith.constant dense<0.000000e+00> : vector<16xf32>
    %110 = vector.multi_reduction <add>, %109, %cst_23 [0] : vector<10x16xf32> to vector<16xf32>
    %111 = vector.shape_cast %110 : vector<16xf32> to vector<1x16xf32>
    %112 = math.absf %108 : vector<10x16xf32>
    %cst_24 = arith.constant dense<0.000000e+00> : vector<16xf32>
    %113 = vector.multi_reduction <add>, %112, %cst_24 [0] : vector<10x16xf32> to vector<16xf32>
    %114 = vector.shape_cast %113 : vector<16xf32> to vector<1x16xf32>
    %115 = arith.mulf %111, %114 : vector<1x16xf32>
    %cst_25 = arith.constant 1.000000e+00 : f32
    %116 = vector.broadcast %cst_25 : f32 to vector<1x16xf32>
    %117 = arith.addf %116, %115 : vector<1x16xf32>
    %118 = tpu.reciprocal %117 {approx = true} : vector<1x16xf32> -> vector<1x16xf32>
    %119 = arith.mulf %111, %118 : vector<1x16xf32>
    %120 = vector.broadcast %119 : vector<1x16xf32> to vector<10x16xf32>
    %121 = arith.mulf %120, %108 : vector<10x16xf32>
    %122 = arith.mulf %121, %121 : vector<10x16xf32>
    %cst_26 = arith.constant dense<0.000000e+00> : vector<10xf32>
    %123 = vector.multi_reduction <add>, %122, %cst_26 [1] : vector<10x16xf32> to vector<10xf32>
    %124 = vector.shape_cast %123 : vector<10xf32> to vector<10x1xf32>
    %125 = math.absf %121 : vector<10x16xf32>
    %cst_27 = arith.constant dense<0.000000e+00> : vector<10xf32>
    %126 = vector.multi_reduction <add>, %125, %cst_27 [1] : vector<10x16xf32> to vector<10xf32>
    %127 = vector.shape_cast %126 : vector<10xf32> to vector<10x1xf32>
    %128 = arith.mulf %124, %127 : vector<10x1xf32>
    %cst_28 = arith.constant 1.000000e+00 : f32
    %129 = vector.broadcast %cst_28 : f32 to vector<10x1xf32>
    %130 = arith.addf %129, %128 : vector<10x1xf32>
    %131 = tpu.reciprocal %130 {approx = true} : vector<10x1xf32> -> vector<10x1xf32>
    %132 = arith.mulf %124, %131 : vector<10x1xf32>
    %133 = vector.broadcast %132 : vector<10x1xf32> to vector<10x16xf32>
    %134 = arith.mulf %133, %121 : vector<10x16xf32>
    %135 = arith.mulf %134, %134 : vector<10x16xf32>
    %cst_29 = arith.constant dense<0.000000e+00> : vector<10xf32>
    %136 = vector.multi_reduction <add>, %135, %cst_29 [1] : vector<10x16xf32> to vector<10xf32>
    %137 = vector.shape_cast %136 : vector<10xf32> to vector<10x1xf32>
    %138 = math.sqrt %137 : vector<10x1xf32>
    %cst_30 = arith.constant dense<0xFF800000> : vector<1xf32>
    %139 = vector.multi_reduction <maximumf>, %138, %cst_30 [0] : vector<10x1xf32> to vector<1xf32>
    %140 = vector.shape_cast %139 : vector<1xf32> to vector<1x1xf32>
    %141 = vector.broadcast %140 : vector<1x1xf32> to vector<10x1xf32>
    %142 = arith.subf %138, %141 : vector<10x1xf32>
    %143 = math.exp %142 : vector<10x1xf32>
    %cst_31 = arith.constant dense<0.000000e+00> : vector<1xf32>
    %144 = vector.multi_reduction <add>, %143, %cst_31 [0] : vector<10x1xf32> to vector<1xf32>
    %145 = vector.shape_cast %144 : vector<1xf32> to vector<1x1xf32>
    %146 = tpu.reciprocal %145 {approx = true} : vector<1x1xf32> -> vector<1x1xf32>
    %147 = vector.broadcast %146 : vector<1x1xf32> to vector<10x1xf32>
    %148 = arith.mulf %143, %147 : vector<10x1xf32>
    %c0_32 = arith.constant 0 : index
    %c0_33 = arith.constant 0 : index
    %c0_34 = arith.constant 0 : index
    %149 = vector.load %arg4[%c0_32, %c0_33, %c0_34] : memref<1x10x1xf32, #tpu.memory_space<vmem>>, vector<1x10x1xf32>
    %150 = vector.shape_cast %149 : vector<1x10x1xf32> to vector<10x1xf32>
    %151 = vector.shape_cast %148 : vector<10x1xf32> to vector<1x10x1xf32>
    tpu.vector_store %arg4[%c0_32, %c0_33, %c0_34], %151 {strides = array<i32>} : memref<1x10x1xf32, #tpu.memory_space<vmem>>, vector<1x10x1xf32>,
    return
  }
  func.func @transform_0(%arg0: i32) -> (i32, i32, i32) {
    %c0_i32 = arith.constant 0 : i32
    %c0_i32_0 = arith.constant 0 : i32
    %c0_i32_1 = arith.constant 0 : i32
    return %arg0, %c0_i32, %c0_i32_0 : i32, i32, i32
  }
  func.func @transform_1(%arg0: i32) -> (i32, i32) {
    %c0_i32 = arith.constant 0 : i32
    %c0_i32_0 = arith.constant 0 : i32
    %c0_i32_1 = arith.constant 0 : i32
    return %c0_i32, %c0_i32_0 : i32, i32
  }
  func.func @transform_2(%arg0: i32) -> (i32, i32) {
    %c0_i32 = arith.constant 0 : i32
    %c0_i32_0 = arith.constant 0 : i32
    %c0_i32_1 = arith.constant 0 : i32
    return %c0_i32, %c0_i32_0 : i32, i32
  }
  func.func @transform_3(%arg0: i32) -> (i32, i32, i32) {
    %c0_i32 = arith.constant 0 : i32
    %c0_i32_0 = arith.constant 0 : i32
    %c0_i32_1 = arith.constant 0 : i32
    return %arg0, %c0_i32, %c0_i32_0 : i32, i32, i32
  }
}

</mosaic_0001>

<llo_original>
// kernel: capsnet_forward.3
$region0: #{capsnet_forward.3}
  #allocation0 [shape = 'u32[]', space=smem, size = 0x4, offset = 0x4, fixed_abs, tag = 'smem constant byte address 0x4 - core index']
  #allocation1 [shape = 'u32[144,128]{1,0:T(1,128)}', space=vmem, size = 0x12000, scoped, tag = 'internal scratch']
  %s0 = inlined_call_operand.vmem [shape: f32[800,128], index: 0, kind: input, shape index: {}]
  %s1 = inlined_call_operand.vmem [shape: f32[128,256], index: 1, kind: input, shape index: {}]
  %s2 = inlined_call_operand.vmem [shape: f32[1,256], index: 2, kind: input, shape index: {}]
  %s3 = inlined_call_operand.vmem [shape: f32[800,256], index: 3, kind: output, shape index: {}]
  %s4 = sld [smem:[#allocation0]]
  $region45: #{capsnet_forward.3} parent=0
    _
  %s6 = ssub.s32 1, %s4
  %s7 = scalar_select 0, %s6, %s4
  loop: start=0, step=1, limit=4
  $region2: #{capsnet_forward.3} parent=0 // loop_pre_header
    _
  $region3: #{capsnet_forward.3} parent=0 // loop_header
    %s9 = sphi 0, %s13
    %p10 = scmp.ge.s32.totalorder %s9, 4
    %s19 = sphi 0, %s21
    %s22 = sphi 0, %s19
    %s23 = sphi 0, %s22
    %s39 = sphi 0, %s23
    %s43 = sphi 0, %s43
    %s45 = sphi 0, %s43
    %s46 = sphi 0, %s45
    %s60 = sphi 0, %s46
    %s64 = sphi 0, %s64
    %s66 = sphi 0, %s64
    %s67 = sphi 0, %s66
    %s81 = sphi 0, %s67
    %s87 = sphi 0, %s89
    %s90 = sphi 0, %s87
    %s91 = sphi 0, %s90
    %s107 = sphi 0, %s91
  $region4: #{capsnet_forward.3} parent=0 // loop_header_branch
    %12 = sbr.rel (%p10) target = $region8
  $region5: #{capsnet_forward.3} parent=0 // loop_body
    %s14 = ssub.s32 %s9, 1
    %s15 = ssub.s32 %s9, 2
    %s16 = sadd.s32 %s9, 1
    %s17 = ssub.s32 %s9, %s16
    %p18 = scmp.eq.s32.totalorder %s17, 0
    %s20 = sadd.s32 %s19, 1
    %s21 = scalar_select %p18, %s19, %s20
    %p24 = pneg %p18
    %p25 = scmp.eq.s32.totalorder %s9, 1
    %p26 = por %p24, %p25
    %p27 = scmp.ne.s32.totalorder %s19, %s22
    %p28 = scmp.eq.s32.totalorder %s9, 0
    %p29 = por %p27, %p28
    %p30 = scmp.ne.s32.totalorder %s19, %s22
    %p31 = scmp.eq.s32.totalorder %s14, 1
    %p32 = por %p30, %p31
    %p33 = scmp.ne.s32.totalorder %s22, %s23
    %p34 = scmp.eq.s32.totalorder %s14, 0
    %p35 = por %p33, %p34
    %p36 = scmp.ne.s32.totalorder %s22, %s23
    %p37 = scmp.eq.s32.totalorder %s15, 1
    %p38 = por %p36, %p37
    %p40 = scmp.ne.s32.totalorder %s23, %s39
    %p41 = scmp.eq.s32.totalorder %s15, 0
    %p42 = por %p40, %p41
    %s44 = sadd.s32 %s43, 1
    %p47 = scmp.eq.s32.totalorder %s9, 1
    %p48 = scmp.ne.s32.totalorder %s43, %s45
    %p49 = scmp.eq.s32.totalorder %s9, 0
    %p50 = por %p48, %p49
    %p51 = scmp.ne.s32.totalorder %s43, %s45
    %p52 = scmp.eq.s32.totalorder %s14, 1
    %p53 = por %p51, %p52
    %p54 = scmp.ne.s32.totalorder %s45, %s46
    %p55 = scmp.eq.s32.totalorder %s14, 0
    %p56 = por %p54, %p55
    %p57 = scmp.ne.s32.totalorder %s45, %s46
    %p58 = scmp.eq.s32.totalorder %s15, 1
    %p59 = por %p57, %p58
    %p61 = scmp.ne.s32.totalorder %s46, %s60
    %p62 = scmp.eq.s32.totalorder %s15, 0
    %p63 = por %p61, %p62
    %s65 = sadd.s32 %s64, 1
    %p68 = scmp.eq.s32.totalorder %s9, 1
    %p69 = scmp.ne.s32.totalorder %s64, %s66
    %p70 = scmp.eq.s32.totalorder %s9, 0
    %p71 = por %p69, %p70
    %p72 = scmp.ne.s32.totalorder %s64, %s66
    %p73 = scmp.eq.s32.totalorder %s14, 1
    %p74 = por %p72, %p73
    %p75 = scmp.ne.s32.totalorder %s66, %s67
    %p76 = scmp.eq.s32.totalorder %s14, 0
    %p77 = por %p75, %p76
    %p78 = scmp.ne.s32.totalorder %s66, %s67
    %p79 = scmp.eq.s32.totalorder %s15, 1
    %p80 = por %p78, %p79
    %p82 = scmp.ne.s32.totalorder %s67, %s81
    %p83 = scmp.eq.s32.totalorder %s15, 0
    %p84 = por %p82, %p83
    %s85 = ssub.s32 %s9, %s16
    %p86 = scmp.eq.s32.totalorder %s85, 0
    %s88 = sadd.s32 %s87, 1
    %s89 = scalar_select %p86, %s87, %s88
    %p92 = pneg %p86
    %p93 = scmp.eq.s32.totalorder %s9, 1
    %p94 = por %p92, %p93
    %p95 = scmp.ne.s32.totalorder %s87, %s90
    %p96 = scmp.eq.s32.totalorder %s9, 0
    %p97 = por %p95, %p96
    %p98 = scmp.ne.s32.totalorder %s87, %s90
    %p99 = scmp.eq.s32.totalorder %s14, 1
    %p100 = por %p98, %p99
    %p101 = scmp.ne.s32.totalorder %s90, %s91
    %p102 = scmp.eq.s32.totalorder %s14, 0
    %p103 = por %p101, %p102
    %p104 = scmp.ne.s32.totalorder %s90, %s91
    %p105 = scmp.eq.s32.totalorder %s15, 1
    %p106 = por %p104, %p105
    %p108 = scmp.ne.s32.totalorder %s91, %s107
    %p109 = scmp.eq.s32.totalorder %s15, 0
    %p110 = por %p108, %p109
    %p111 = scmp.le.s32.totalorder 1, %s9
    %p112 = scmp.lt.s32.totalorder %s9, 3
    %p113 = pnand %p111, %p112
    %p114 = pneg %p113
    // Predicated region
    $region9: #{capsnet_forward.3} parent=5 // pred_check
      _
    $region10: #{capsnet_forward.3} parent=5 // pred_check_branch
      %116 = sbr.rel (%p113) target = $region12
    $region11: #{capsnet_forward.3} parent=5 // pred_region
      %s117 = ssub.s32 %s9, 1
      // Predicated region
      $region13: #{capsnet_forward.3} parent=11 // pred_check
        %p118 = pneg %p56
      $region14: #{capsnet_forward.3} parent=11 // pred_check_branch
        %120 = sbr.rel (%p118) target = $region16
      $region15: #{capsnet_forward.3} parent=11 // pred_region
        _
      $region16: #{capsnet_forward.3} parent=11 // pred_fallthru
        _
      // Predicated region
      $region17: #{capsnet_forward.3} parent=11 // pred_check
        %p121 = pneg %p77
      $region18: #{capsnet_forward.3} parent=11 // pred_check_branch
        %123 = sbr.rel (%p121) target = $region20
      $region19: #{capsnet_forward.3} parent=11 // pred_region
        _
      $region20: #{capsnet_forward.3} parent=11 // pred_fallthru
        _
    $region12: #{capsnet_forward.3} parent=5 // pred_fallthru
      _
    %p124 = scmp.lt.s32.totalorder %s9, 2
    // Predicated region
    $region21: #{capsnet_forward.3} parent=5 // pred_check
      %p125 = pneg %p124
    $region22: #{capsnet_forward.3} parent=5 // pred_check_branch
      %127 = sbr.rel (%p125) target = $region24
    $region23: #{capsnet_forward.3} parent=5 // pred_region
      // Predicated region
      $region25: #{capsnet_forward.3} parent=23 // pred_check
        %p128 = pneg %p29
      $region26: #{capsnet_forward.3} parent=23 // pred_check_branch
        %130 = sbr.rel (%p128) target = $region28
      $region27: #{capsnet_forward.3} parent=23 // pred_region
        %s131 = smul.u32 50, %s9
        %p132 = scmp.lt.s32.totalorder %s131, 99
        %s133 = scalar_select %p132, %s131, 99
        %s134 = smul.addr %s133, 8
        %s135 = scalar_lea.vmem %s0, %s134
        %s136 = smul.u32 50, %s9
      $region28: #{capsnet_forward.3} parent=23 // pred_fallthru
        _
    $region24: #{capsnet_forward.3} parent=5 // pred_fallthru
      _
    %p137 = scmp.le.s32.totalorder 1, %s9
    %p138 = scmp.lt.s32.totalorder %s9, 3
    %p139 = pnand %p137, %p138
    %p140 = pneg %p139
    // Predicated region
    $region29: #{capsnet_forward.3} parent=5 // pred_check
      _
    $region30: #{capsnet_forward.3} parent=5 // pred_check_branch
      %142 = sbr.rel (%p139) target = $region32
    $region31: #{capsnet_forward.3} parent=5 // pred_region
      %s143 = ssub.s32 %s9, 1
      %s144 = smul.u32 50, %s14
      %p145 = scmp.lt.s32.totalorder %s144, 99
      %s146 = scalar_select %p145, %s144, 99
      %s147 = smul.addr %s146, 8
      %s148 = scalar_lea.vmem %s0, %s147
      %p149 = pneg %p35
      %p150 = pneg %p32
      %p151 = pneg %p56
      %p152 = pneg %p53
      %p153 = pneg %p77
      %p154 = pneg %p74
      %p155 = pneg %p103
      %p156 = pneg %p100
      %s157 = smul.u32 50, %s14
      %p158 = scmp.lt.s32.totalorder %s157, 99
      %s159 = scalar_select %p158, %s157, 99
      %s160 = smul.addr %s159, 2
      %s161 = smul.addr %s160, 8
      %s162 = scalar_lea.vmem %s3, %s161
      %s163 = smul.u32 50, %s14
      %p164 = scmp.lt.s32.totalorder %s163, 99
      %s165 = scalar_select %p164, %s163, 99
      %s166 = smul.addr %s165, 8
      %s167 = scalar_lea.vmem %s0, %s166
      %s168 = smul.u32 50, %s14
      %s169 = smul.u32 50, %s14
      %p170 = scmp.lt.s32.totalorder %s169, 99
      %s171 = scalar_select %p170, %s169, 99
      %s172 = smul.addr %s171, 2
      %s173 = smul.addr %s172, 8
      %s174 = scalar_lea.vmem %s3, %s173
      %s175 = smul.u32 50, %s14
      %v176 = vld [vmem:[%s167] sm:$0xff]
      %v177 = vld [vmem:[%s167 + $0x8] sm:$0xff]
      %v178 = vld [vmem:[%s167 + $0x10] sm:$0xff]
      %v179 = vld [vmem:[%s167 + $0x18] sm:$0xff]
      %v180 = vld [vmem:[%s167 + $0x20] sm:$0xff]
      %v181 = vld [vmem:[%s167 + $0x28] sm:$0xff]
      %v182 = vld [vmem:[%s167 + $0x30] sm:$0xff]
      %v183 = vld [vmem:[%s167 + $0x38] sm:$0xff]
      %v184 = vld [vmem:[%s167 + $0x40] sm:$0xff]
      %v185 = vld [vmem:[%s167 + $0x48] sm:$0xff]
      %v186 = vld [vmem:[%s167 + $0x50] sm:$0xff]
      %v187 = vld [vmem:[%s167 + $0x58] sm:$0xff]
      %v188 = vld [vmem:[%s167 + $0x60] sm:$0xff]
      %v189 = vld [vmem:[%s167 + $0x68] sm:$0xff]
      %v190 = vld [vmem:[%s167 + $0x70] sm:$0xff]
      %v191 = vld [vmem:[%s167 + $0x78] sm:$0xff]
      %v192 = vld [vmem:[%s167 + $0x80] sm:$0xff]
      %v193 = vld [vmem:[%s167 + $0x88] sm:$0xff]
      %v194 = vld [vmem:[%s167 + $0x90] sm:$0xff]
      %v195 = vld [vmem:[%s167 + $0x98] sm:$0xff]
      %v196 = vld [vmem:[%s167 + $0xa0] sm:$0xff]
      %v197 = vld [vmem:[%s167 + $0xa8] sm:$0xff]
      %v198 = vld [vmem:[%s167 + $0xb0] sm:$0xff]
      %v199 = vld [vmem:[%s167 + $0xb8] sm:$0xff]
      %v200 = vld [vmem:[%s167 + $0xc0] sm:$0xff]
      %v201 = vld [vmem:[%s167 + $0xc8] sm:$0xff]
      %v202 = vld [vmem:[%s167 + $0xd0] sm:$0xff]
      %v203 = vld [vmem:[%s167 + $0xd8] sm:$0xff]
      %v204 = vld [vmem:[%s167 + $0xe0] sm:$0xff]
      %v205 = vld [vmem:[%s167 + $0xe8] sm:$0xff]
      %v206 = vld [vmem:[%s167 + $0xf0] sm:$0xff]
      %v207 = vld [vmem:[%s167 + $0xf8] sm:$0xff]
      %v208 = vld [vmem:[%s167 + $0x100] sm:$0xff]
      %v209 = vld [vmem:[%s167 + $0x108] sm:$0xff]
      %v210 = vld [vmem:[%s167 + $0x110] sm:$0xff]
      %v211 = vld [vmem:[%s167 + $0x118] sm:$0xff]
      %v212 = vld [vmem:[%s167 + $0x120] sm:$0xff]
      %v213 = vld [vmem:[%s167 + $0x128] sm:$0xff]
      %v214 = vld [vmem:[%s167 + $0x130] sm:$0xff]
      %v215 = vld [vmem:[%s167 + $0x138] sm:$0xff]
      %v216 = vld [vmem:[%s167 + $0x140] sm:$0xff]
      %v217 = vld [vmem:[%s167 + $0x148] sm:$0xff]
      %v218 = vld [vmem:[%s167 + $0x150] sm:$0xff]
      %v219 = vld [vmem:[%s167 + $0x158] sm:$0xff]
      %v220 = vld [vmem:[%s167 + $0x160] sm:$0xff]
      %v221 = vld [vmem:[%s167 + $0x168] sm:$0xff]
      %v222 = vld [vmem:[%s167 + $0x170] sm:$0xff]
      %v223 = vld [vmem:[%s167 + $0x178] sm:$0xff]
      %v224 = vld [vmem:[%s167 + $0x180] sm:$0xff]
      %v225 = vld [vmem:[%s167 + $0x188] sm:$0xff]
      %v226 = vld [vmem:[%s1] sm:$0xff]
      %v227 = vld [vmem:[%s1 + $0x8] sm:$0xff]
      %v228 = vld [vmem:[%s1 + $0x10] sm:$0xff]
      %v229 = vld [vmem:[%s1 + $0x18] sm:$0xff]
      %v230 = vld [vmem:[%s1 + $0x20] sm:$0xff]
      %v231 = vld [vmem:[%s1 + $0x28] sm:$0xff]
      %v232 = vld [vmem:[%s1 + $0x30] sm:$0xff]
      %v233 = vld [vmem:[%s1 + $0x38] sm:$0xff]
      %v234 = vld [vmem:[%s1 + $0x40] sm:$0xff]
      %v235 = vld [vmem:[%s1 + $0x48] sm:$0xff]
      %v236 = vld [vmem:[%s1 + $0x50] sm:$0xff]
      %v237 = vld [vmem:[%s1 + $0x58] sm:$0xff]
      %v238 = vld [vmem:[%s1 + $0x60] sm:$0xff]
      %v239 = vld [vmem:[%s1 + $0x68] sm:$0xff]
      %v240 = vld [vmem:[%s1 + $0x70] sm:$0xff]
      %v241 = vld [vmem:[%s1 + $0x78] sm:$0xff]
      %v242 = vld [vmem:[%s1 + $0x80] sm:$0xff]
      %v243 = vld [vmem:[%s1 + $0x88] sm:$0xff]
      %v244 = vld [vmem:[%s1 + $0x90] sm:$0xff]
      %v245 = vld [vmem:[%s1 + $0x98] sm:$0xff]
      %v246 = vld [vmem:[%s1 + $0xa0] sm:$0xff]
      %v247 = vld [vmem:[%s1 + $0xa8] sm:$0xff]
      %v248 = vld [vmem:[%s1 + $0xb0] sm:$0xff]
      %v249 = vld [vmem:[%s1 + $0xb8] sm:$0xff]
      %v250 = vld [vmem:[%s1 + $0xc0] sm:$0xff]
      %v251 = vld [vmem:[%s1 + $0xc8] sm:$0xff]
      %v252 = vld [vmem:[%s1 + $0xd0] sm:$0xff]
      %v253 = vld [vmem:[%s1 + $0xd8] sm:$0xff]
      %v254 = vld [vmem:[%s1 + $0xe0] sm:$0xff]
      %v255 = vld [vmem:[%s1 + $0xe8] sm:$0xff]
      %v256 = vld [vmem:[%s1 + $0xf0] sm:$0xff]
      %v257 = vld [vmem:[%s1 + $0xf8] sm:$0xff]
      %v258 = vld [vmem:[%s2] sm:$0x3]
      %v260 = vlaneseq
      %v261 = vshrl.u32 %v260, 7
      %v262 = vsub.s32 0, %v261
      %v263 = vrot.slane %v258, %v262
      %v264 = vlaneseq
      %v265 = vshrl.u32 %v264, 7
      %v266 = vsub.s32 1, %v265
      %v267 = vrot.slane %v258, %v266
      %270 = vmatprep.subr.mxu0 %v227
      %271 = vmatpush1.msra.mxu0 %v226
      %272 = vmatprep.subr.mxu0 %v229
      %273 = vmatpush1.msra.mxu0 %v228
      %274 = vmatprep.subr.mxu0 %v231
      %275 = vmatpush1.msra.mxu0 %v230
      %276 = vmatprep.subr.mxu0 %v233
      %277 = vmatpush1.msra.mxu0 %v232
      %278 = vmatprep.subr.mxu0 %v235
      %279 = vmatpush1.msra.mxu0 %v234
      %280 = vmatprep.subr.mxu0 %v237
      %281 = vmatpush1.msra.mxu0 %v236
      %282 = vmatprep.subr.mxu0 %v239
      %283 = vmatpush1.msra.mxu0 %v238
      %284 = vmatprep.subr.mxu0 %v241
      %285 = vmatpush1.msra.mxu0 %v240
      %286 = vmatprep.subr.mxu0 %v243
      %287 = vmatpush1.msra.mxu0 %v242
      %288 = vmatprep.subr.mxu0 %v245
      %289 = vmatpush1.msra.mxu0 %v244
      %290 = vmatprep.subr.mxu0 %v247
      %291 = vmatpush1.msra.mxu0 %v246
      %292 = vmatprep.subr.mxu0 %v249
      %293 = vmatpush1.msra.mxu0 %v248
      %294 = vmatprep.subr.mxu0 %v251
      %295 = vmatpush1.msra.mxu0 %v250
      %296 = vmatprep.subr.mxu0 %v253
      %297 = vmatpush1.msra.mxu0 %v252
      %298 = vmatprep.subr.mxu0 %v255
      %299 = vmatpush1.msra.mxu0 %v254
      %300 = vmatprep.subr.mxu0 %v257
      %301 = vmatpush1.msra.mxu0 %v256
      %302 = vmatprep.subr.mxu0 0.0
      %303 = vmatpush1.msra.mxu0 0.0
      %304 = vmatprep.subr.mxu0 0.0
      %305 = vmatpush1.msra.mxu0 0.0
      %306 = vmatprep.subr.mxu0 0.0
      %307 = vmatpush1.msra.mxu0 0.0
      %308 = vmatprep.subr.mxu0 0.0
      %309 = vmatpush1.msra.mxu0 0.0
      %310 = vmatprep.subr.mxu0 0.0
      %311 = vmatpush1.msra.mxu0 0.0
      %312 = vmatprep.subr.mxu0 0.0
      %313 = vmatpush1.msra.mxu0 0.0
      %314 = vmatprep.subr.mxu0 0.0
      %315 = vmatpush1.msra.mxu0 0.0
      %316 = vmatprep.subr.mxu0 0.0
      %317 = vmatpush1.msra.mxu0 0.0
      %318 = vmatprep.subr.mxu0 0.0
      %319 = vmatpush1.msra.mxu0 0.0
      %320 = vmatprep.subr.mxu0 0.0
      %321 = vmatpush1.msra.mxu0 0.0
      %322 = vmatprep.subr.mxu0 0.0
      %323 = vmatpush1.msra.mxu0 0.0
      %324 = vmatprep.subr.mxu0 0.0
      %325 = vmatpush1.msra.mxu0 0.0
      %326 = vmatprep.subr.mxu0 0.0
      %327 = vmatpush1.msra.mxu0 0.0
      %328 = vmatprep.subr.mxu0 0.0
      %329 = vmatpush1.msra.mxu0 0.0
      %330 = vmatprep.subr.mxu0 0.0
      %331 = vmatpush1.msra.mxu0 0.0
      %332 = vmatprep.subr.mxu0 0.0
      %333 = vmatpush1.msra.mxu0 0.0
      %334 = vmatprep.mubr.f32.mxu0 0.0
      %335 = vmatmul.mubr.f32.gmra.mrb[0].mxu0 %v176
      %v336 = vpop.f32.mrb[0].mxu0
      %v337 = vadd.f32 %v263, %v336
      %v338 = vpop.f32.mrb[0].mxu0
      %v339 = vadd.f32 %v267, %v338
      %340 = vmatprep.mubr.f32.mxu0 0.0
      %341 = vmatmul.mubr.f32.gmra.mrb[0].mxu0 %v177
      %v342 = vpop.f32.mrb[0].mxu0
      %v343 = vadd.f32 %v263, %v342
      %v344 = vpop.f32.mrb[0].mxu0
      %v345 = vadd.f32 %v267, %v344
      %346 = vmatprep.mubr.f32.mxu0 0.0
      %347 = vmatmul.mubr.f32.gmra.mrb[0].mxu0 %v178
      %v348 = vpop.f32.mrb[0].mxu0
      %v349 = vadd.f32 %v263, %v348
      %v350 = vpop.f32.mrb[0].mxu0
      %v351 = vadd.f32 %v267, %v350
      %352 = vmatprep.mubr.f32.mxu0 0.0
      %353 = vmatmul.mubr.f32.gmra.mrb[0].mxu0 %v179
      %v354 = vpop.f32.mrb[0].mxu0
      %v355 = vadd.f32 %v263, %v354
      %v356 = vpop.f32.mrb[0].mxu0
      %v357 = vadd.f32 %v267, %v356
      %358 = vmatprep.mubr.f32.mxu0 0.0
      %359 = vmatmul.mubr.f32.gmra.mrb[0].mxu0 %v180
      %v360 = vpop.f32.mrb[0].mxu0
      %v361 = vadd.f32 %v263, %v360
      %v362 = vpop.f32.mrb[0].mxu0
      %v363 = vadd.f32 %v267, %v362
      %364 = vmatprep.mubr.f32.mxu0 0.0
      %365 = vmatmul.mubr.f32.gmra.mrb[0].mxu0 %v181
      %v366 = vpop.f32.mrb[0].mxu0
      %v367 = vadd.f32 %v263, %v366
      %v368 = vpop.f32.mrb[0].mxu0
      %v369 = vadd.f32 %v267, %v368
      %370 = vmatprep.mubr.f32.mxu0 0.0
      %371 = vmatmul.mubr.f32.gmra.mrb[0].mxu0 %v182
      %v372 = vpop.f32.mrb[0].mxu0
      %v373 = vadd.f32 %v263, %v372
      %v374 = vpop.f32.mrb[0].mxu0
      %v375 = vadd.f32 %v267, %v374
      %376 = vmatprep.mubr.f32.mxu0 0.0
      %377 = vmatmul.mubr.f32.gmra.mrb[0].mxu0 %v183
      %v378 = vpop.f32.mrb[0].mxu0
      %v379 = vadd.f32 %v263, %v378
      %v380 = vpop.f32.mrb[0].mxu0
      %v381 = vadd.f32 %v267, %v380
      %382 = vmatprep.mubr.f32.mxu0 0.0
      %383 = vmatmul.mubr.f32.gmra.mrb[0].mxu0 %v184
      %v384 = vpop.f32.mrb[0].mxu0
      %v385 = vadd.f32 %v263, %v384
      %v386 = vpop.f32.mrb[0].mxu0
      %v387 = vadd.f32 %v267, %v386
      %388 = vmatprep.mubr.f32.mxu0 0.0
      %389 = vmatmul.mubr.f32.gmra.mrb[0].mxu0 %v185
      %v390 = vpop.f32.mrb[0].mxu0
      %v391 = vadd.f32 %v263, %v390
      %v392 = vpop.f32.mrb[0].mxu0
      %v393 = vadd.f32 %v267, %v392
      %394 = vmatprep.mubr.f32.mxu0 0.0
      %395 = vmatmul.mubr.f32.gmra.mrb[0].mxu0 %v186
      %v396 = vpop.f32.mrb[0].mxu0
      %v397 = vadd.f32 %v263, %v396
      %v398 = vpop.f32.mrb[0].mxu0
      %v399 = vadd.f32 %v267, %v398
      %400 = vmatprep.mubr.f32.mxu0 0.0
      %401 = vmatmul.mubr.f32.gmra.mrb[0].mxu0 %v187
      %v402 = vpop.f32.mrb[0].mxu0
      %v403 = vadd.f32 %v263, %v402
      %v404 = vpop.f32.mrb[0].mxu0
      %v405 = vadd.f32 %v267, %v404
      %406 = vmatprep.mubr.f32.mxu0 0.0
      %407 = vmatmul.mubr.f32.gmra.mrb[0].mxu0 %v188
      %v408 = vpop.f32.mrb[0].mxu0
      %v409 = vadd.f32 %v263, %v408
      %v410 = vpop.f32.mrb[0].mxu0
      %v411 = vadd.f32 %v267, %v410
      %412 = vmatprep.mubr.f32.mxu0 0.0
      %413 = vmatmul.mubr.f32.gmra.mrb[0].mxu0 %v189
      %v414 = vpop.f32.mrb[0].mxu0
      %v415 = vadd.f32 %v263, %v414
      %v416 = vpop.f32.mrb[0].mxu0
      %v417 = vadd.f32 %v267, %v416
      %418 = vmatprep.mubr.f32.mxu0 0.0
      %419 = vmatmul.mubr.f32.gmra.mrb[0].mxu0 %v190
      %v420 = vpop.f32.mrb[0].mxu0
      %v421 = vadd.f32 %v263, %v420
      %v422 = vpop.f32.mrb[0].mxu0
      %v423 = vadd.f32 %v267, %v422
      %424 = vmatprep.mubr.f32.mxu0 0.0
      %425 = vmatmul.mubr.f32.gmra.mrb[0].mxu0 %v191
      %v426 = vpop.f32.mrb[0].mxu0
      %v427 = vadd.f32 %v263, %v426
      %v428 = vpop.f32.mrb[0].mxu0
      %v429 = vadd.f32 %v267, %v428
      %430 = vmatprep.mubr.f32.mxu0 0.0
      %431 = vmatmul.mubr.f32.gmra.mrb[0].mxu0 %v192
      %v432 = vpop.f32.mrb[0].mxu0
      %v433 = vadd.f32 %v263, %v432
      %v434 = vpop.f32.mrb[0].mxu0
      %v435 = vadd.f32 %v267, %v434
      %436 = vmatprep.mubr.f32.mxu0 0.0
      %437 = vmatmul.mubr.f32.gmra.mrb[0].mxu0 %v193
      %v438 = vpop.f32.mrb[0].mxu0
      %v439 = vadd.f32 %v263, %v438
      %v440 = vpop.f32.mrb[0].mxu0
      %v441 = vadd.f32 %v267, %v440
      %442 = vmatprep.mubr.f32.mxu0 0.0
      %443 = vmatmul.mubr.f32.gmra.mrb[0].mxu0 %v194
      %v444 = vpop.f32.mrb[0].mxu0
      %v445 = vadd.f32 %v263, %v444
      %v446 = vpop.f32.mrb[0].mxu0
      %v447 = vadd.f32 %v267, %v446
      %448 = vmatprep.mubr.f32.mxu0 0.0
      %449 = vmatmul.mubr.f32.gmra.mrb[0].mxu0 %v195
      %v450 = vpop.f32.mrb[0].mxu0
      %v451 = vadd.f32 %v263, %v450
      %v452 = vpop.f32.mrb[0].mxu0
      %v453 = vadd.f32 %v267, %v452
      %454 = vmatprep.mubr.f32.mxu0 0.0
      %455 = vmatmul.mubr.f32.gmra.mrb[0].mxu0 %v196
      %v456 = vpop.f32.mrb[0].mxu0
      %v457 = vadd.f32 %v263, %v456
      %v458 = vpop.f32.mrb[0].mxu0
      %v459 = vadd.f32 %v267, %v458
      %460 = vmatprep.mubr.f32.mxu0 0.0
      %461 = vmatmul.mubr.f32.gmra.mrb[0].mxu0 %v197
      %v462 = vpop.f32.mrb[0].mxu0
      %v463 = vadd.f32 %v263, %v462
      %v464 = vpop.f32.mrb[0].mxu0
      %v465 = vadd.f32 %v267, %v464
      %466 = vmatprep.mubr.f32.mxu0 0.0
      %467 = vmatmul.mubr.f32.gmra.mrb[0].mxu0 %v198
      %v468 = vpop.f32.mrb[0].mxu0
      %v469 = vadd.f32 %v263, %v468
      %v470 = vpop.f32.mrb[0].mxu0
      %v471 = vadd.f32 %v267, %v470
      %472 = vmatprep.mubr.f32.mxu0 0.0
      %473 = vmatmul.mubr.f32.gmra.mrb[0].mxu0 %v199
      %v474 = vpop.f32.mrb[0].mxu0
      %v475 = vadd.f32 %v263, %v474
      %v476 = vpop.f32.mrb[0].mxu0
      %v477 = vadd.f32 %v267, %v476
      %478 = vmatprep.mubr.f32.mxu0 0.0
      %479 = vmatmul.mubr.f32.gmra.mrb[0].mxu0 %v200
      %v480 = vpop.f32.mrb[0].mxu0
      %v481 = vadd.f32 %v263, %v480
      %v482 = vpop.f32.mrb[0].mxu0
      %v483 = vadd.f32 %v267, %v482
      %484 = vmatprep.mubr.f32.mxu0 0.0
      %485 = vmatmul.mubr.f32.gmra.mrb[0].mxu0 %v201
      %v486 = vpop.f32.mrb[0].mxu0
      %v487 = vadd.f32 %v263, %v486
      %v488 = vpop.f32.mrb[0].mxu0
      %v489 = vadd.f32 %v267, %v488
      %490 = vmatprep.mubr.f32.mxu0 0.0
      %491 = vmatmul.mubr.f32.gmra.mrb[0].mxu0 %v202
      %v492 = vpop.f32.mrb[0].mxu0
      %v493 = vadd.f32 %v263, %v492
      %v494 = vpop.f32.mrb[0].mxu0
      %v495 = vadd.f32 %v267, %v494
      %496 = vmatprep.mubr.f32.mxu0 0.0
      %497 = vmatmul.mubr.f32.gmra.mrb[0].mxu0 %v203
      %v498 = vpop.f32.mrb[0].mxu0
      %v499 = vadd.f32 %v263, %v498
      %v500 = vpop.f32.mrb[0].mxu0
      %v501 = vadd.f32 %v267, %v500
      %502 = vmatprep.mubr.f32.mxu0 0.0
      %503 = vmatmul.mubr.f32.gmra.mrb[0].mxu0 %v204
      %v504 = vpop.f32.mrb[0].mxu0
      %v505 = vadd.f32 %v263, %v504
      %v506 = vpop.f32.mrb[0].mxu0
      %v507 = vadd.f32 %v267, %v506
      %508 = vmatprep.mubr.f32.mxu0 0.0
      %509 = vmatmul.mubr.f32.gmra.mrb[0].mxu0 %v205
      %v510 = vpop.f32.mrb[0].mxu0
      %v511 = vadd.f32 %v263, %v510
      %v512 = vpop.f32.mrb[0].mxu0
      %v513 = vadd.f32 %v267, %v512
      %514 = vmatprep.mubr.f32.mxu0 0.0
      %515 = vmatmul.mubr.f32.gmra.mrb[0].mxu0 %v206
      %v516 = vpop.f32.mrb[0].mxu0
      %v517 = vadd.f32 %v263, %v516
      %v518 = vpop.f32.mrb[0].mxu0
      %v519 = vadd.f32 %v267, %v518
      %520 = vmatprep.mubr.f32.mxu0 0.0
      %521 = vmatmul.mubr.f32.gmra.mrb[0].mxu0 %v207
      %v522 = vpop.f32.mrb[0].mxu0
      %v523 = vadd.f32 %v263, %v522
      %v524 = vpop.f32.mrb[0].mxu0
      %v525 = vadd.f32 %v267, %v524
      %526 = vmatprep.mubr.f32.mxu0 0.0
      %527 = vmatmul.mubr.f32.gmra.mrb[0].mxu0 %v208
      %v528 = vpop.f32.mrb[0].mxu0
      %v529 = vadd.f32 %v263, %v528
      %v530 = vpop.f32.mrb[0].mxu0
      %v531 = vadd.f32 %v267, %v530
      %532 = vmatprep.mubr.f32.mxu0 0.0
      %533 = vmatmul.mubr.f32.gmra.mrb[0].mxu0 %v209
      %v534 = vpop.f32.mrb[0].mxu0
      %v535 = vadd.f32 %v263, %v534
      %v536 = vpop.f32.mrb[0].mxu0
      %v537 = vadd.f32 %v267, %v536
      %538 = vmatprep.mubr.f32.mxu0 0.0
      %539 = vmatmul.mubr.f32.gmra.mrb[0].mxu0 %v210
      %v540 = vpop.f32.mrb[0].mxu0
      %v541 = vadd.f32 %v263, %v540
      %v542 = vpop.f32.mrb[0].mxu0
      %v543 = vadd.f32 %v267, %v542
      %544 = vmatprep.mubr.f32.mxu0 0.0
      %545 = vmatmul.mubr.f32.gmra.mrb[0].mxu0 %v211
      %v546 = vpop.f32.mrb[0].mxu0
      %v547 = vadd.f32 %v263, %v546
      %v548 = vpop.f32.mrb[0].mxu0
      %v549 = vadd.f32 %v267, %v548
      %550 = vmatprep.mubr.f32.mxu0 0.0
      %551 = vmatmul.mubr.f32.gmra.mrb[0].mxu0 %v212
      %v552 = vpop.f32.mrb[0].mxu0
      %v553 = vadd.f32 %v263, %v552
      %v554 = vpop.f32.mrb[0].mxu0
      %v555 = vadd.f32 %v267, %v554
      %556 = vmatprep.mubr.f32.mxu0 0.0
      %557 = vmatmul.mubr.f32.gmra.mrb[0].mxu0 %v213
      %v558 = vpop.f32.mrb[0].mxu0
      %v559 = vadd.f32 %v263, %v558
      %v560 = vpop.f32.mrb[0].mxu0
      %v561 = vadd.f32 %v267, %v560
      %562 = vmatprep.mubr.f32.mxu0 0.0
      %563 = vmatmul.mubr.f32.gmra.mrb[0].mxu0 %v214
      %v564 = vpop.f32.mrb[0].mxu0
      %v565 = vadd.f32 %v263, %v564
      %v566 = vpop.f32.mrb[0].mxu0
      %v567 = vadd.f32 %v267, %v566
      %568 = vmatprep.mubr.f32.mxu0 0.0
      %569 = vmatmul.mubr.f32.gmra.mrb[0].mxu0 %v215
      %v570 = vpop.f32.mrb[0].mxu0
      %v571 = vadd.f32 %v263, %v570
      %v572 = vpop.f32.mrb[0].mxu0
      %v573 = vadd.f32 %v267, %v572
      %574 = vmatprep.mubr.f32.mxu0 0.0
      %575 = vmatmul.mubr.f32.gmra.mrb[0].mxu0 %v216
      %v576 = vpop.f32.mrb[0].mxu0
      %v577 = vadd.f32 %v263, %v576
      %v578 = vpop.f32.mrb[0].mxu0
      %v579 = vadd.f32 %v267, %v578
      %580 = vmatprep.mubr.f32.mxu0 0.0
      %581 = vmatmul.mubr.f32.gmra.mrb[0].mxu0 %v217
      %v582 = vpop.f32.mrb[0].mxu0
      %v583 = vadd.f32 %v263, %v582
      %v584 = vpop.f32.mrb[0].mxu0
      %v585 = vadd.f32 %v267, %v584
      %586 = vmatprep.mubr.f32.mxu0 0.0
      %587 = vmatmul.mubr.f32.gmra.mrb[0].mxu0 %v218
      %v588 = vpop.f32.mrb[0].mxu0
      %v589 = vadd.f32 %v263, %v588
      %v590 = vpop.f32.mrb[0].mxu0
      %v591 = vadd.f32 %v267, %v590
      %592 = vmatprep.mubr.f32.mxu0 0.0
      %593 = vmatmul.mubr.f32.gmra.mrb[0].mxu0 %v219
      %v594 = vpop.f32.mrb[0].mxu0
      %v595 = vadd.f32 %v263, %v594
      %v596 = vpop.f32.mrb[0].mxu0
      %v597 = vadd.f32 %v267, %v596
      %598 = vmatprep.mubr.f32.mxu0 0.0
      %599 = vmatmul.mubr.f32.gmra.mrb[0].mxu0 %v220
      %v600 = vpop.f32.mrb[0].mxu0
      %v601 = vadd.f32 %v263, %v600
      %v602 = vpop.f32.mrb[0].mxu0
      %v603 = vadd.f32 %v267, %v602
      %604 = vmatprep.mubr.f32.mxu0 0.0
      %605 = vmatmul.mubr.f32.gmra.mrb[0].mxu0 %v221
      %v606 = vpop.f32.mrb[0].mxu0
      %v607 = vadd.f32 %v263, %v606
      %v608 = vpop.f32.mrb[0].mxu0
      %v609 = vadd.f32 %v267, %v608
      %610 = vmatprep.mubr.f32.mxu0 0.0
      %611 = vmatmul.mubr.f32.gmra.mrb[0].mxu0 %v222
      %v612 = vpop.f32.mrb[0].mxu0
      %v613 = vadd.f32 %v263, %v612
      %v614 = vpop.f32.mrb[0].mxu0
      %v615 = vadd.f32 %v267, %v614
      %616 = vmatprep.mubr.f32.mxu0 0.0
      %617 = vmatmul.mubr.f32.gmra.mrb[0].mxu0 %v223
      %v618 = vpop.f32.mrb[0].mxu0
      %v619 = vadd.f32 %v263, %v618
      %v620 = vpop.f32.mrb[0].mxu0
      %v621 = vadd.f32 %v267, %v620
      %622 = vmatprep.mubr.f32.mxu0 0.0
      %623 = vmatmul.mubr.f32.gmra.mrb[0].mxu0 %v224
      %v624 = vpop.f32.mrb[0].mxu0
      %v625 = vadd.f32 %v263, %v624
      %v626 = vpop.f32.mrb[0].mxu0
      %v627 = vadd.f32 %v267, %v626
      %628 = vmatprep.mubr.f32.mxu0 0.0
      %629 = vmatmul.mubr.f32.gmra.mrb[0].mxu0 %v225
      %v630 = vpop.f32.mrb[0].mxu0
      %v631 = vadd.f32 %v263, %v630
      %v632 = vpop.f32.mrb[0].mxu0
      %v633 = vadd.f32 %v267, %v632
      %634 = vdwg.mxu0
      %v635 = vmax.f32 %v337, 0.0
      %v636 = vmax.f32 %v339, 0.0
      %v637 = vmax.f32 %v343, 0.0
      %v638 = vmax.f32 %v345, 0.0
      %v639 = vmax.f32 %v349, 0.0
      %v640 = vmax.f32 %v351, 0.0
      %v641 = vmax.f32 %v355, 0.0
      %v642 = vmax.f32 %v357, 0.0
      %v643 = vmax.f32 %v361, 0.0
      %v644 = vmax.f32 %v363, 0.0
      %v645 = vmax.f32 %v367, 0.0
      %v646 = vmax.f32 %v369, 0.0
      %v647 = vmax.f32 %v373, 0.0
      %v648 = vmax.f32 %v375, 0.0
      %v649 = vmax.f32 %v379, 0.0
      %v650 = vmax.f32 %v381, 0.0
      %v651 = vmax.f32 %v385, 0.0
      %v652 = vmax.f32 %v387, 0.0
      %v653 = vmax.f32 %v391, 0.0
      %v654 = vmax.f32 %v393, 0.0
      %v655 = vmax.f32 %v397, 0.0
      %v656 = vmax.f32 %v399, 0.0
      %v657 = vmax.f32 %v403, 0.0
      %v658 = vmax.f32 %v405, 0.0
      %v659 = vmax.f32 %v409, 0.0
      %v660 = vmax.f32 %v411, 0.0
      %v661 = vmax.f32 %v415, 0.0
      %v662 = vmax.f32 %v417, 0.0
      %v663 = vmax.f32 %v421, 0.0
      %v664 = vmax.f32 %v423, 0.0
      %v665 = vmax.f32 %v427, 0.0
      %v666 = vmax.f32 %v429, 0.0
      %v667 = vmax.f32 %v433, 0.0
      %v668 = vmax.f32 %v435, 0.0
      %v669 = vmax.f32 %v439, 0.0
      %v670 = vmax.f32 %v441, 0.0
      %v671 = vmax.f32 %v445, 0.0
      %v672 = vmax.f32 %v447, 0.0
      %v673 = vmax.f32 %v451, 0.0
      %v674 = vmax.f32 %v453, 0.0
      %v675 = vmax.f32 %v457, 0.0
      %v676 = vmax.f32 %v459, 0.0
      %v677 = vmax.f32 %v463, 0.0
      %v678 = vmax.f32 %v465, 0.0
      %v679 = vmax.f32 %v469, 0.0
      %v680 = vmax.f32 %v471, 0.0
      %v681 = vmax.f32 %v475, 0.0
      %v682 = vmax.f32 %v477, 0.0
      %v683 = vmax.f32 %v481, 0.0
      %v684 = vmax.f32 %v483, 0.0
      %v685 = vmax.f32 %v487, 0.0
      %v686 = vmax.f32 %v489, 0.0
      %v687 = vmax.f32 %v493, 0.0
      %v688 = vmax.f32 %v495, 0.0
      %v689 = vmax.f32 %v499, 0.0
      %v690 = vmax.f32 %v501, 0.0
      %v691 = vmax.f32 %v505, 0.0
      %v692 = vmax.f32 %v507, 0.0
      %v693 = vmax.f32 %v511, 0.0
      %v694 = vmax.f32 %v513, 0.0
      %v695 = vmax.f32 %v517, 0.0
      %v696 = vmax.f32 %v519, 0.0
      %v697 = vmax.f32 %v523, 0.0
      %v698 = vmax.f32 %v525, 0.0
      %v699 = vmax.f32 %v529, 0.0
      %v700 = vmax.f32 %v531, 0.0
      %v701 = vmax.f32 %v535, 0.0
      %v702 = vmax.f32 %v537, 0.0
      %v703 = vmax.f32 %v541, 0.0
      %v704 = vmax.f32 %v543, 0.0
      %v705 = vmax.f32 %v547, 0.0
      %v706 = vmax.f32 %v549, 0.0
      %v707 = vmax.f32 %v553, 0.0
      %v708 = vmax.f32 %v555, 0.0
      %v709 = vmax.f32 %v559, 0.0
      %v710 = vmax.f32 %v561, 0.0
      %v711 = vmax.f32 %v565, 0.0
      %v712 = vmax.f32 %v567, 0.0
      %v713 = vmax.f32 %v571, 0.0
      %v714 = vmax.f32 %v573, 0.0
      %v715 = vmax.f32 %v577, 0.0
      %v716 = vmax.f32 %v579, 0.0
      %v717 = vmax.f32 %v583, 0.0
      %v718 = vmax.f32 %v585, 0.0
      %v719 = vmax.f32 %v589, 0.0
      %v720 = vmax.f32 %v591, 0.0
      %v721 = vmax.f32 %v595, 0.0
      %v722 = vmax.f32 %v597, 0.0
      %v723 = vmax.f32 %v601, 0.0
      %v724 = vmax.f32 %v603, 0.0
      %v725 = vmax.f32 %v607, 0.0
      %v726 = vmax.f32 %v609, 0.0
      %v727 = vmax.f32 %v613, 0.0
      %v728 = vmax.f32 %v615, 0.0
      %v729 = vmax.f32 %v619, 0.0
      %v730 = vmax.f32 %v621, 0.0
      %v731 = vmax.f32 %v625, 0.0
      %v732 = vmax.f32 %v627, 0.0
      %v733 = vmax.f32 %v631, 0.0
      %v734 = vmax.f32 %v633, 0.0
      %735 = vst [vmem:[%s174] sm:$0xff] %v635
      %736 = vst [vmem:[%s174 + $0x8] sm:$0xff] %v636
      %737 = vst [vmem:[%s174 + $0x10] sm:$0xff] %v637
      %738 = vst [vmem:[%s174 + $0x18] sm:$0xff] %v638
      %739 = vst [vmem:[%s174 + $0x20] sm:$0xff] %v639
      %740 = vst [vmem:[%s174 + $0x28] sm:$0xff] %v640
      %741 = vst [vmem:[%s174 + $0x30] sm:$0xff] %v641
      %742 = vst [vmem:[%s174 + $0x38] sm:$0xff] %v642
      %743 = vst [vmem:[%s174 + $0x40] sm:$0xff] %v643
      %744 = vst [vmem:[%s174 + $0x48] sm:$0xff] %v644
      %745 = vst [vmem:[%s174 + $0x50] sm:$0xff] %v645
      %746 = vst [vmem:[%s174 + $0x58] sm:$0xff] %v646
      %747 = vst [vmem:[%s174 + $0x60] sm:$0xff] %v647
      %748 = vst [vmem:[%s174 + $0x68] sm:$0xff] %v648
      %749 = vst [vmem:[%s174 + $0x70] sm:$0xff] %v649
      %750 = vst [vmem:[%s174 + $0x78] sm:$0xff] %v650
      %751 = vst [vmem:[%s174 + $0x80] sm:$0xff] %v651
      %752 = vst [vmem:[%s174 + $0x88] sm:$0xff] %v652
      %753 = vst [vmem:[%s174 + $0x90] sm:$0xff] %v653
      %754 = vst [vmem:[%s174 + $0x98] sm:$0xff] %v654
      %755 = vst [vmem:[%s174 + $0xa0] sm:$0xff] %v655
      %756 = vst [vmem:[%s174 + $0xa8] sm:$0xff] %v656
      %757 = vst [vmem:[%s174 + $0xb0] sm:$0xff] %v657
      %758 = vst [vmem:[%s174 + $0xb8] sm:$0xff] %v658
      %759 = vst [vmem:[%s174 + $0xc0] sm:$0xff] %v659
      %760 = vst [vmem:[%s174 + $0xc8] sm:$0xff] %v660
      %761 = vst [vmem:[%s174 + $0xd0] sm:$0xff] %v661
      %762 = vst [vmem:[%s174 + $0xd8] sm:$0xff] %v662
      %763 = vst [vmem:[%s174 + $0xe0] sm:$0xff] %v663
      %764 = vst [vmem:[%s174 + $0xe8] sm:$0xff] %v664
      %765 = vst [vmem:[%s174 + $0xf0] sm:$0xff] %v665
      %766 = vst [vmem:[%s174 + $0xf8] sm:$0xff] %v666
      %767 = vst [vmem:[%s174 + $0x100] sm:$0xff] %v667
      %768 = vst [vmem:[%s174 + $0x108] sm:$0xff] %v668
      %769 = vst [vmem:[%s174 + $0x110] sm:$0xff] %v669
      %770 = vst [vmem:[%s174 + $0x118] sm:$0xff] %v670
      %771 = vst [vmem:[%s174 + $0x120] sm:$0xff] %v671
      %772 = vst [vmem:[%s174 + $0x128] sm:$0xff] %v672
      %773 = vst [vmem:[%s174 + $0x130] sm:$0xff] %v673
      %774 = vst [vmem:[%s174 + $0x138] sm:$0xff] %v674
      %775 = vst [vmem:[%s174 + $0x140] sm:$0xff] %v675
      %776 = vst [vmem:[%s174 + $0x148] sm:$0xff] %v676
      %777 = vst [vmem:[%s174 + $0x150] sm:$0xff] %v677
      %778 = vst [vmem:[%s174 + $0x158] sm:$0xff] %v678
      %779 = vst [vmem:[%s174 + $0x160] sm:$0xff] %v679
      %780 = vst [vmem:[%s174 + $0x168] sm:$0xff] %v680
      %781 = vst [vmem:[%s174 + $0x170] sm:$0xff] %v681
      %782 = vst [vmem:[%s174 + $0x178] sm:$0xff] %v682
      %783 = vst [vmem:[%s174 + $0x180] sm:$0xff] %v683
      %784 = vst [vmem:[%s174 + $0x188] sm:$0xff] %v684
      %785 = vst [vmem:[%s174 + $0x190] sm:$0xff] %v685
      %786 = vst [vmem:[%s174 + $0x198] sm:$0xff] %v686
      %787 = vst [vmem:[%s174 + $0x1a0] sm:$0xff] %v687
      %788 = vst [vmem:[%s174 + $0x1a8] sm:$0xff] %v688
      %789 = vst [vmem:[%s174 + $0x1b0] sm:$0xff] %v689
      %790 = vst [vmem:[%s174 + $0x1b8] sm:$0xff] %v690
      %791 = vst [vmem:[%s174 + $0x1c0] sm:$0xff] %v691
      %792 = vst [vmem:[%s174 + $0x1c8] sm:$0xff] %v692
      %793 = vst [vmem:[%s174 + $0x1d0] sm:$0xff] %v693
      %794 = vst [vmem:[%s174 + $0x1d8] sm:$0xff] %v694
      %795 = vst [vmem:[%s174 + $0x1e0] sm:$0xff] %v695
      %796 = vst [vmem:[%s174 + $0x1e8] sm:$0xff] %v696
      %797 = vst [vmem:[%s174 + $0x1f0] sm:$0xff] %v697
      %798 = vst [vmem:[%s174 + $0x1f8] sm:$0xff] %v698
      %799 = vst [vmem:[%s174 + $0x200] sm:$0xff] %v699
      %800 = vst [vmem:[%s174 + $0x208] sm:$0xff] %v700
      %801 = vst [vmem:[%s174 + $0x210] sm:$0xff] %v701
      %802 = vst [vmem:[%s174 + $0x218] sm:$0xff] %v702
      %803 = vst [vmem:[%s174 + $0x220] sm:$0xff] %v703
      %804 = vst [vmem:[%s174 + $0x228] sm:$0xff] %v704
      %805 = vst [vmem:[%s174 + $0x230] sm:$0xff] %v705
      %806 = vst [vmem:[%s174 + $0x238] sm:$0xff] %v706
      %807 = vst [vmem:[%s174 + $0x240] sm:$0xff] %v707
      %808 = vst [vmem:[%s174 + $0x248] sm:$0xff] %v708
      %809 = vst [vmem:[%s174 + $0x250] sm:$0xff] %v709
      %810 = vst [vmem:[%s174 + $0x258] sm:$0xff] %v710
      %811 = vst [vmem:[%s174 + $0x260] sm:$0xff] %v711
      %812 = vst [vmem:[%s174 + $0x268] sm:$0xff] %v712
      %813 = vst [vmem:[%s174 + $0x270] sm:$0xff] %v713
      %814 = vst [vmem:[%s174 + $0x278] sm:$0xff] %v714
      %815 = vst [vmem:[%s174 + $0x280] sm:$0xff] %v715
      %816 = vst [vmem:[%s174 + $0x288] sm:$0xff] %v716
      %817 = vst [vmem:[%s174 + $0x290] sm:$0xff] %v717
      %818 = vst [vmem:[%s174 + $0x298] sm:$0xff] %v718
      %819 = vst [vmem:[%s174 + $0x2a0] sm:$0xff] %v719
      %820 = vst [vmem:[%s174 + $0x2a8] sm:$0xff] %v720
      %821 = vst [vmem:[%s174 + $0x2b0] sm:$0xff] %v721
      %822 = vst [vmem:[%s174 + $0x2b8] sm:$0xff] %v722
      %823 = vst [vmem:[%s174 + $0x2c0] sm:$0xff] %v723
      %824 = vst [vmem:[%s174 + $0x2c8] sm:$0xff] %v724
      %825 = vst [vmem:[%s174 + $0x2d0] sm:$0xff] %v725
      %826 = vst [vmem:[%s174 + $0x2d8] sm:$0xff] %v726
      %827 = vst [vmem:[%s174 + $0x2e0] sm:$0xff] %v727
      %828 = vst [vmem:[%s174 + $0x2e8] sm:$0xff] %v728
      %829 = vst [vmem:[%s174 + $0x2f0] sm:$0xff] %v729
      %830 = vst [vmem:[%s174 + $0x2f8] sm:$0xff] %v730
      %831 = vst [vmem:[%s174 + $0x300] sm:$0xff] %v731
      %832 = vst [vmem:[%s174 + $0x308] sm:$0xff] %v732
      %833 = vst [vmem:[%s174 + $0x310] sm:$0xff] %v733
      %834 = vst [vmem:[%s174 + $0x318] sm:$0xff] %v734
      %s835 = smul.u32 50, %s14
      %p836 = scmp.lt.s32.totalorder %s835, 99
      %s837 = scalar_select %p836, %s835, 99
      %s838 = smul.addr %s837, 2
      %s839 = smul.addr %s838, 8
      %s840 = scalar_lea.vmem %s3, %s839
      // Predicated region
      $region33: #{capsnet_forward.3} parent=31 // pred_check
        %p841 = pneg %p100
      $region34: #{capsnet_forward.3} parent=31 // pred_check_branch
        %843 = sbr.rel (%p841) target = $region36
      $region35: #{capsnet_forward.3} parent=31 // pred_region
        %s844 = smul.u32 50, %s14
      $region36: #{capsnet_forward.3} parent=31 // pred_fallthru
        _
    $region32: #{capsnet_forward.3} parent=5 // pred_fallthru
      _
    %p845 = scmp.le.s32.totalorder 2, %s9
    // Predicated region
    $region37: #{capsnet_forward.3} parent=5 // pred_check
      %p846 = pneg %p845
    $region38: #{capsnet_forward.3} parent=5 // pred_check_branch
      %848 = sbr.rel (%p846) target = $region40
    $region39: #{capsnet_forward.3} parent=5 // pred_region
      %s849 = ssub.s32 %s9, 2
      // Predicated region
      $region41: #{capsnet_forward.3} parent=39 // pred_check
        %p850 = pneg %p106
      $region42: #{capsnet_forward.3} parent=39 // pred_check_branch
        %852 = sbr.rel (%p850) target = $region44
      $region43: #{capsnet_forward.3} parent=39 // pred_region
        %s853 = smul.u32 50, %s15
        %p854 = scmp.lt.s32.totalorder %s853, 99
        %s855 = scalar_select %p854, %s853, 99
        %s856 = smul.addr %s855, 2
        %s857 = smul.addr %s856, 8
        %s858 = scalar_lea.vmem %s3, %s857
      $region44: #{capsnet_forward.3} parent=39 // pred_fallthru
        _
    $region40: #{capsnet_forward.3} parent=5 // pred_fallthru
      _
  $region6: #{capsnet_forward.3} parent=0 // loop_footer
    %s13 = sadd.s32 1, %s9
  $region7: #{capsnet_forward.3} parent=0 // loop_footer_branch
    %8 = sbr.rel target = $region3
  $region8: #{capsnet_forward.3} parent=0 // loop_exit
    _

// kernel: capsnet_forward.4
$region0: #{capsnet_forward.4}
  #allocation0 [shape = 'u32[]', space=smem, size = 0x4, offset = 0x4, fixed_abs, tag = 'smem constant byte address 0x4 - core index']
  #allocation1 [shape = 'u32[144,128]{1,0:T(1,128)}', space=vmem, size = 0x12000, scoped, tag = 'internal scratch']
  %s0 = inlined_call_operand.vmem [shape: f32[576,2592], index: 0, kind: input, shape index: {}]
  %s1 = inlined_call_operand.vmem [shape: f32[2592,128], index: 1, kind: input, shape index: {}]
  %s2 = inlined_call_operand.vmem [shape: f32[1,128], index: 2, kind: input, shape index: {}]
  %s3 = inlined_call_operand.vmem [shape: f32[576,128], index: 3, kind: output, shape index: {}]
  %s4 = sld [smem:[#allocation0]]
  $region45: #{capsnet_forward.4} parent=0
    _
  %s6 = ssub.s32 1, %s4
  %s7 = scalar_select 0, %s6, %s4
  loop: start=0, step=1, limit=4
  $region2: #{capsnet_forward.4} parent=0 // loop_pre_header
    _
  $region3: #{capsnet_forward.4} parent=0 // loop_header
    %s9 = sphi 0, %s13
    %p10 = scmp.ge.s32.totalorder %s9, 4
    %s19 = sphi 0, %s21
    %s22 = sphi 0, %s19
    %s23 = sphi 0, %s22
    %s39 = sphi 0, %s23
    %s43 = sphi 0, %s43
    %s45 = sphi 0, %s43
    %s46 = sphi 0, %s45
    %s60 = sphi 0, %s46
    %s64 = sphi 0, %s64
    %s66 = sphi 0, %s64
    %s67 = sphi 0, %s66
    %s81 = sphi 0, %s67
    %s87 = sphi 0, %s89
    %s90 = sphi 0, %s87
    %s91 = sphi 0, %s90
    %s107 = sphi 0, %s91
  $region4: #{capsnet_forward.4} parent=0 // loop_header_branch
    %12 = sbr.rel (%p10) target = $region8
  $region5: #{capsnet_forward.4} parent=0 // loop_body
    %s14 = ssub.s32 %s9, 1
    %s15 = ssub.s32 %s9, 2
    %s16 = sadd.s32 %s9, 1
    %s17 = ssub.s32 %s9, %s16
    %p18 = scmp.eq.s32.totalorder %s17, 0
    %s20 = sadd.s32 %s19, 1
    %s21 = scalar_select %p18, %s19, %s20
    %p24 = pneg %p18
    %p25 = scmp.eq.s32.totalorder %s9, 1
    %p26 = por %p24, %p25
    %p27 = scmp.ne.s32.totalorder %s19, %s22
    %p28 = scmp.eq.s32.totalorder %s9, 0
    %p29 = por %p27, %p28
    %p30 = scmp.ne.s32.totalorder %s19, %s22
    %p31 = scmp.eq.s32.totalorder %s14, 1
    %p32 = por %p30, %p31
    %p33 = scmp.ne.s32.totalorder %s22, %s23
    %p34 = scmp.eq.s32.totalorder %s14, 0
    %p35 = por %p33, %p34
    %p36 = scmp.ne.s32.totalorder %s22, %s23
    %p37 = scmp.eq.s32.totalorder %s15, 1
    %p38 = por %p36, %p37
    %p40 = scmp.ne.s32.totalorder %s23, %s39
    %p41 = scmp.eq.s32.totalorder %s15, 0
    %p42 = por %p40, %p41
    %s44 = sadd.s32 %s43, 1
    %p47 = scmp.eq.s32.totalorder %s9, 1
    %p48 = scmp.ne.s32.totalorder %s43, %s45
    %p49 = scmp.eq.s32.totalorder %s9, 0
    %p50 = por %p48, %p49
    %p51 = scmp.ne.s32.totalorder %s43, %s45
    %p52 = scmp.eq.s32.totalorder %s14, 1
    %p53 = por %p51, %p52
    %p54 = scmp.ne.s32.totalorder %s45, %s46
    %p55 = scmp.eq.s32.totalorder %s14, 0
    %p56 = por %p54, %p55
    %p57 = scmp.ne.s32.totalorder %s45, %s46
    %p58 = scmp.eq.s32.totalorder %s15, 1
    %p59 = por %p57, %p58
    %p61 = scmp.ne.s32.totalorder %s46, %s60
    %p62 = scmp.eq.s32.totalorder %s15, 0
    %p63 = por %p61, %p62
    %s65 = sadd.s32 %s64, 1
    %p68 = scmp.eq.s32.totalorder %s9, 1
    %p69 = scmp.ne.s32.totalorder %s64, %s66
    %p70 = scmp.eq.s32.totalorder %s9, 0
    %p71 = por %p69, %p70
    %p72 = scmp.ne.s32.totalorder %s64, %s66
    %p73 = scmp.eq.s32.totalorder %s14, 1
    %p74 = por %p72, %p73
    %p75 = scmp.ne.s32.totalorder %s66, %s67
    %p76 = scmp.eq.s32.totalorder %s14, 0
    %p77 = por %p75, %p76
    %p78 = scmp.ne.s32.totalorder %s66, %s67
    %p79 = scmp.eq.s32.totalorder %s15, 1
    %p80 = por %p78, %p79
    %p82 = scmp.ne.s32.totalorder %s67, %s81
    %p83 = scmp.eq.s32.totalorder %s15, 0
    %p84 = por %p82, %p83
    %s85 = ssub.s32 %s9, %s16
    %p86 = scmp.eq.s32.totalorder %s85, 0
    %s88 = sadd.s32 %s87, 1
    %s89 = scalar_select %p86, %s87, %s88
    %p92 = pneg %p86
    %p93 = scmp.eq.s32.totalorder %s9, 1
    %p94 = por %p92, %p93
    %p95 = scmp.ne.s32.totalorder %s87, %s90
    %p96 = scmp.eq.s32.totalorder %s9, 0
    %p97 = por %p95, %p96
    %p98 = scmp.ne.s32.totalorder %s87, %s90
    %p99 = scmp.eq.s32.totalorder %s14, 1
    %p100 = por %p98, %p99
    %p101 = scmp.ne.s32.totalorder %s90, %s91
    %p102 = scmp.eq.s32.totalorder %s14, 0
    %p103 = por %p101, %p102
    %p104 = scmp.ne.s32.totalorder %s90, %s91
    %p105 = scmp.eq.s32.totalorder %s15, 1
    %p106 = por %p104, %p105
    %p108 = scmp.ne.s32.totalorder %s91, %s107
    %p109 = scmp.eq.s32.totalorder %s15, 0
    %p110 = por %p108, %p109
    %p111 = scmp.le.s32.totalorder 1, %s9
    %p112 = scmp.lt.s32.totalorder %s9, 3
    %p113 = pnand %p111, %p112
    %p114 = pneg %p113
    // Predicated region
    $region9: #{capsnet_forward.4} parent=5 // pred_check
      _
    $region10: #{capsnet_forward.4} parent=5 // pred_check_branch
      %116 = sbr.rel (%p113) target = $region12
    $region11: #{capsnet_forward.4} parent=5 // pred_region
      %s117 = ssub.s32 %s9, 1
      // Predicated region
      $region13: #{capsnet_forward.4} parent=11 // pred_check
        %p118 = pneg %p56
      $region14: #{capsnet_forward.4} parent=11 // pred_check_branch
        %120 = sbr.rel (%p118) target = $region16
      $region15: #{capsnet_forward.4} parent=11 // pred_region
        _
      $region16: #{capsnet_forward.4} parent=11 // pred_fallthru
        _
      // Predicated region
      $region17: #{capsnet_forward.4} parent=11 // pred_check
        %p121 = pneg %p77
      $region18: #{capsnet_forward.4} parent=11 // pred_check_branch
        %123 = sbr.rel (%p121) target = $region20
      $region19: #{capsnet_forward.4} parent=11 // pred_region
        _
      $region20: #{capsnet_forward.4} parent=11 // pred_fallthru
        _
    $region12: #{capsnet_forward.4} parent=5 // pred_fallthru
      _
    %p124 = scmp.lt.s32.totalorder %s9, 2
    // Predicated region
    $region21: #{capsnet_forward.4} parent=5 // pred_check
      %p125 = pneg %p124
    $region22: #{capsnet_forward.4} parent=5 // pred_check_branch
      %127 = sbr.rel (%p125) target = $region24
    $region23: #{capsnet_forward.4} parent=5 // pred_region
      // Predicated region
      $region25: #{capsnet_forward.4} parent=23 // pred_check
        %p128 = pneg %p29
      $region26: #{capsnet_forward.4} parent=23 // pred_check_branch
        %130 = sbr.rel (%p128) target = $region28
      $region27: #{capsnet_forward.4} parent=23 // pred_region
        %s131 = smul.u32 36, %s9
        %p132 = scmp.lt.s32.totalorder %s131, 71
        %s133 = scalar_select %p132, %s131, 71
        %s134 = smul.addr %s133, 21
        %s135 = smul.addr %s134, 8
        %s136 = scalar_lea.vmem %s0, %s135
        %s137 = smul.u32 36, %s9
      $region28: #{capsnet_forward.4} parent=23 // pred_fallthru
        _
    $region24: #{capsnet_forward.4} parent=5 // pred_fallthru
      _
    %p138 = scmp.le.s32.totalorder 1, %s9
    %p139 = scmp.lt.s32.totalorder %s9, 3
    %p140 = pnand %p138, %p139
    %p141 = pneg %p140
    // Predicated region
    $region29: #{capsnet_forward.4} parent=5 // pred_check
      _
    $region30: #{capsnet_forward.4} parent=5 // pred_check_branch
      %143 = sbr.rel (%p140) target = $region32
    $region31: #{capsnet_forward.4} parent=5 // pred_region
      %s144 = ssub.s32 %s9, 1
      %s145 = smul.u32 36, %s14
      %p146 = scmp.lt.s32.totalorder %s145, 71
      %s147 = scalar_select %p146, %s145, 71
      %s148 = smul.addr %s147, 21
      %s149 = smul.addr %s148, 8
      %s150 = scalar_lea.vmem %s0, %s149
      %p151 = pneg %p35
      %p152 = pneg %p32
      %p153 = pneg %p56
      %p154 = pneg %p53
      %p155 = pneg %p77
      %p156 = pneg %p74
      %p157 = pneg %p103
      %p158 = pneg %p100
      %s159 = smul.u32 36, %s14
      %p160 = scmp.lt.s32.totalorder %s159, 71
      %s161 = scalar_select %p160, %s159, 71
      %s162 = smul.addr %s161, 8
      %s163 = scalar_lea.vmem %s3, %s162
      %s164 = smul.u32 36, %s14
      %p165 = scmp.lt.s32.totalorder %s164, 71
      %s166 = scalar_select %p165, %s164, 71
      %s167 = smul.addr %s166, 21
      %s168 = smul.addr %s167, 8
      %s169 = scalar_lea.vmem %s0, %s168
      %s170 = smul.u32 36, %s14
      %s171 = smul.u32 36, %s14
      %p172 = scmp.lt.s32.totalorder %s171, 71
      %s173 = scalar_select %p172, %s171, 71
      %s174 = smul.addr %s173, 8
      %s175 = scalar_lea.vmem %s3, %s174
      %s176 = smul.u32 36, %s14
      %v177 = vld [vmem:[%s169] sm:$0xff]
      %v178 = vld [vmem:[%s169 + $0x8] sm:$0xff]
      %v179 = vld [vmem:[%s169 + $0x10] sm:$0xff]
      %v180 = vld [vmem:[%s169 + $0x18] sm:$0xff]
      %v181 = vld [vmem:[%s169 + $0x20] sm:$0xff]
      %v182 = vld [vmem:[%s169 + $0x28] sm:$0xff]
      %v183 = vld [vmem:[%s169 + $0x30] sm:$0xff]
      %v184 = vld [vmem:[%s169 + $0x38] sm:$0xff]
      %v185 = vld [vmem:[%s169 + $0x40] sm:$0xff]
      %v186 = vld [vmem:[%s169 + $0x48] sm:$0xff]
      %v187 = vld [vmem:[%s169 + $0x50] sm:$0xff]
      %v188 = vld [vmem:[%s169 + $0x58] sm:$0xff]
      %v189 = vld [vmem:[%s169 + $0x60] sm:$0xff]
      %v190 = vld [vmem:[%s169 + $0x68] sm:$0xff]
      %v191 = vld [vmem:[%s169 + $0x70] sm:$0xff]
      %v192 = vld [vmem:[%s169 + $0x78] sm:$0xff]
      %v193 = vld [vmem:[%s169 + $0x80] sm:$0xff]
      %v194 = vld [vmem:[%s169 + $0x88] sm:$0xff]
      %v195 = vld [vmem:[%s169 + $0x90] sm:$0xff]
      %v196 = vld [vmem:[%s169 + $0x98] sm:$0xff]
      %v197 = vld [vmem:[%s169 + $0xa0] sm:$0xff]
      %v198 = vld [vmem:[%s169 + $0xa8] sm:$0xff]
      %v199 = vld [vmem:[%s169 + $0xb0] sm:$0xff]
      %v200 = vld [vmem:[%s169 + $0xb8] sm:$0xff]
      %v201 = vld [vmem:[%s169 + $0xc0] sm:$0xff]
      %v202 = vld [vmem:[%s169 + $0xc8] sm:$0xff]
      %v203 = vld [vmem:[%s169 + $0xd0] sm:$0xff]
      %v204 = vld [vmem:[%s169 + $0xd8] sm:$0xff]
      %v205 = vld [vmem:[%s169 + $0xe0] sm:$0xff]
      %v206 = vld [vmem:[%s169 + $0xe8] sm:$0xff]
      %v207 = vld [vmem:[%s169 + $0xf0] sm:$0xff]
      %v208 = vld [vmem:[%s169 + $0xf8] sm:$0xff]
      %v209 = vld [vmem:[%s169 + $0x100] sm:$0xff]
      %v210 = vld [vmem:[%s169 + $0x108] sm:$0xff]
      %v211 = vld [vmem:[%s169 + $0x110] sm:$0xff]
      %v212 = vld [vmem:[%s169 + $0x118] sm:$0xff]
      %v213 = vld [vmem:[%s169 + $0x120] sm:$0xff]
      %v214 = vld [vmem:[%s169 + $0x128] sm:$0xff]
      %v215 = vld [vmem:[%s169 + $0x130] sm:$0xff]
      %v216 = vld [vmem:[%s169 + $0x138] sm:$0xff]
      %v217 = vld [vmem:[%s169 + $0x140] sm:$0xff]
      %v218 = vld [vmem:[%s169 + $0x148] sm:$0xff]
      %v219 = vld [vmem:[%s169 + $0x150] sm:$0xff]
      %v220 = vld [vmem:[%s169 + $0x158] sm:$0xff]
      %v221 = vld [vmem:[%s169 + $0x160] sm:$0xff]
      %v222 = vld [vmem:[%s169 + $0x168] sm:$0xff]
      %v223 = vld [vmem:[%s169 + $0x170] sm:$0xff]
      %v224 = vld [vmem:[%s169 + $0x178] sm:$0xff]
      %v225 = vld [vmem:[%s169 + $0x180] sm:$0xff]
      %v226 = vld [vmem:[%s169 + $0x188] sm:$0xff]
      %v227 = vld [vmem:[%s169 + $0x190] sm:$0xff]
      %v228 = vld [vmem:[%s169 + $0x198] sm:$0xff]
      %v229 = vld [vmem:[%s169 + $0x1a0] sm:$0xff]
      %v230 = vld [vmem:[%s169 + $0x1a8] sm:$0xff]
      %v231 = vld [vmem:[%s169 + $0x1b0] sm:$0xff]
      %v232 = vld [vmem:[%s169 + $0x1b8] sm:$0xff]
      %v233 = vld [vmem:[%s169 + $0x1c0] sm:$0xff]
      %v234 = vld [vmem:[%s169 + $0x1c8] sm:$0xff]
      %v235 = vld [vmem:[%s169 + $0x1d0] sm:$0xff]
      %v236 = vld [vmem:[%s169 + $0x1d8] sm:$0xff]
      %v237 = vld [vmem:[%s169 + $0x1e0] sm:$0xff]
      %v238 = vld [vmem:[%s169 + $0x1e8] sm:$0xff]
      %v239 = vld [vmem:[%s169 + $0x1f0] sm:$0xff]
      %v240 = vld [vmem:[%s169 + $0x1f8] sm:$0xff]
      %v241 = vld [vmem:[%s169 + $0x200] sm:$0xff]
      %v242 = vld [vmem:[%s169 + $0x208] sm:$0xff]
      %v243 = vld [vmem:[%s169 + $0x210] sm:$0xff]
      %v244 = vld [vmem:[%s169 + $0x218] sm:$0xff]
      %v245 = vld [vmem:[%s169 + $0x220] sm:$0xff]
      %v246 = vld [vmem:[%s169 + $0x228] sm:$0xff]
      %v247 = vld [vmem:[%s169 + $0x230] sm:$0xff]
      %v248 = vld [vmem:[%s169 + $0x238] sm:$0xff]
      %v249 = vld [vmem:[%s169 + $0x240] sm:$0xff]
      %v250 = vld [vmem:[%s169 + $0x248] sm:$0xff]
      %v251 = vld [vmem:[%s169 + $0x250] sm:$0xff]
      %v252 = vld [vmem:[%s169 + $0x258] sm:$0xff]
      %v253 = vld [vmem:[%s169 + $0x260] sm:$0xff]
      %v254 = vld [vmem:[%s169 + $0x268] sm:$0xff]
      %v255 = vld [vmem:[%s169 + $0x270] sm:$0xff]
      %v256 = vld [vmem:[%s169 + $0x278] sm:$0xff]
      %v257 = vld [vmem:[%s169 + $0x280] sm:$0xff]
      %v258 = vld [vmem:[%s169 + $0x288] sm:$0xff]
      %v259 = vld [vmem:[%s169 + $0x290] sm:$0xff]
      %v260 = vld [vmem:[%s169 + $0x298] sm:$0xff]
      %v261 = vld [vmem:[%s169 + $0x2a0] sm:$0xff]
      %v262 = vld [vmem:[%s169 + $0x2a8] sm:$0xff]
      %v263 = vld [vmem:[%s169 + $0x2b0] sm:$0xff]
      %v264 = vld [vmem:[%s169 + $0x2b8] sm:$0xff]
      %v265 = vld [vmem:[%s169 + $0x2c0] sm:$0xff]
      %v266 = vld [vmem:[%s169 + $0x2c8] sm:$0xff]
      %v267 = vld [vmem:[%s169 + $0x2d0] sm:$0xff]
      %v268 = vld [vmem:[%s169 + $0x2d8] sm:$0xff]
      %v269 = vld [vmem:[%s169 + $0x2e0] sm:$0xff]
      %v270 = vld [vmem:[%s169 + $0x2e8] sm:$0xff]
      %v271 = vld [vmem:[%s169 + $0x2f0] sm:$0xff]
      %v272 = vld [vmem:[%s169 + $0x2f8] sm:$0xff]
      %v273 = vld [vmem:[%s169 + $0x300] sm:$0xff]
      %v274 = vld [vmem:[%s169 + $0x308] sm:$0xff]
      %v275 = vld [vmem:[%s169 + $0x310] sm:$0xff]
      %v276 = vld [vmem:[%s169 + $0x318] sm:$0xff]
      %v277 = vld [vmem:[%s169 + $0x320] sm:$0xff]
      %v278 = vld [vmem:[%s169 + $0x328] sm:$0xff]
      %v279 = vld [vmem:[%s169 + $0x330] sm:$0xff]
      %v280 = vld [vmem:[%s169 + $0x338] sm:$0xff]
      %v281 = vld [vmem:[%s169 + $0x340] sm:$0xff]
      %v282 = vld [vmem:[%s169 + $0x348] sm:$0xff]
      %v283 = vld [vmem:[%s169 + $0x350] sm:$0xff]
      %v284 = vld [vmem:[%s169 + $0x358] sm:$0xff]
      %v285 = vld [vmem:[%s169 + $0x360] sm:$0xff]
      %v286 = vld [vmem:[%s169 + $0x368] sm:$0xff]
      %v287 = vld [vmem:[%s169 + $0x370] sm:$0xff]
      %v288 = vld [vmem:[%s169 + $0x378] sm:$0xff]
      %v289 = vld [vmem:[%s169 + $0x380] sm:$0xff]
      %v290 = vld [vmem:[%s169 + $0x388] sm:$0xff]
      %v291 = vld [vmem:[%s169 + $0x390] sm:$0xff]
      %v292 = vld [vmem:[%s169 + $0x398] sm:$0xff]
      %v293 = vld [vmem:[%s169 + $0x3a0] sm:$0xff]
      %v294 = vld [vmem:[%s169 + $0x3a8] sm:$0xff]
      %v295 = vld [vmem:[%s169 + $0x3b0] sm:$0xff]
      %v296 = vld [vmem:[%s169 + $0x3b8] sm:$0xff]
      %v297 = vld [vmem:[%s169 + $0x3c0] sm:$0xff]
      %v298 = vld [vmem:[%s169 + $0x3c8] sm:$0xff]
      %v299 = vld [vmem:[%s169 + $0x3d0] sm:$0xff]
      %v300 = vld [vmem:[%s169 + $0x3d8] sm:$0xff]
      %v301 = vld [vmem:[%s169 + $0x3e0] sm:$0xff]
      %v302 = vld [vmem:[%s169 + $0x3e8] sm:$0xff]
      %v303 = vld [vmem:[%s169 + $0x3f0] sm:$0xff]
      %v304 = vld [vmem:[%s169 + $0x3f8] sm:$0xff]
      %v305 = vld [vmem:[%s169 + $0x400] sm:$0xff]
      %v306 = vld [vmem:[%s169 + $0x408] sm:$0xff]
      %v307 = vld [vmem:[%s169 + $0x410] sm:$0xff]
      %v308 = vld [vmem:[%s169 + $0x418] sm:$0xff]
      %v309 = vld [vmem:[%s169 + $0x420] sm:$0xff]
      %v310 = vld [vmem:[%s169 + $0x428] sm:$0xff]
      %v311 = vld [vmem:[%s169 + $0x430] sm:$0xff]
      %v312 = vld [vmem:[%s169 + $0x438] sm:$0xff]
      %v313 = vld [vmem:[%s169 + $0x440] sm:$0xff]
      %v314 = vld [vmem:[%s169 + $0x448] sm:$0xff]
      %v315 = vld [vmem:[%s169 + $0x450] sm:$0xff]
      %v316 = vld [vmem:[%s169 + $0x458] sm:$0xff]
      %v317 = vld [vmem:[%s169 + $0x460] sm:$0xff]
      %v318 = vld [vmem:[%s169 + $0x468] sm:$0xff]
      %v319 = vld [vmem:[%s169 + $0x470] sm:$0xff]
      %v320 = vld [vmem:[%s169 + $0x478] sm:$0xff]
      %v321 = vld [vmem:[%s169 + $0x480] sm:$0xff]
      %v322 = vld [vmem:[%s169 + $0x488] sm:$0xff]
      %v323 = vld [vmem:[%s169 + $0x490] sm:$0xff]
      %v324 = vld [vmem:[%s169 + $0x498] sm:$0xff]
      %v325 = vld [vmem:[%s169 + $0x4a0] sm:$0xff]
      %v326 = vld [vmem:[%s169 + $0x4a8] sm:$0xff]
      %v327 = vld [vmem:[%s169 + $0x4b0] sm:$0xff]
      %v328 = vld [vmem:[%s169 + $0x4b8] sm:$0xff]
      %v329 = vld [vmem:[%s169 + $0x4c0] sm:$0xff]
      %v330 = vld [vmem:[%s169 + $0x4c8] sm:$0xff]
      %v331 = vld [vmem:[%s169 + $0x4d0] sm:$0xff]
      %v332 = vld [vmem:[%s169 + $0x4d8] sm:$0xff]
      %v333 = vld [vmem:[%s169 + $0x4e0] sm:$0xff]
      %v334 = vld [vmem:[%s169 + $0x4e8] sm:$0xff]
      %v335 = vld [vmem:[%s169 + $0x4f0] sm:$0xff]
      %v336 = vld [vmem:[%s169 + $0x4f8] sm:$0xff]
      %v337 = vld [vmem:[%s169 + $0x500] sm:$0xff]
      %v338 = vld [vmem:[%s169 + $0x508] sm:$0xff]
      %v339 = vld [vmem:[%s169 + $0x510] sm:$0xff]
      %v340 = vld [vmem:[%s169 + $0x518] sm:$0xff]
      %v341 = vld [vmem:[%s169 + $0x520] sm:$0xff]
      %v342 = vld [vmem:[%s169 + $0x528] sm:$0xff]
      %v343 = vld [vmem:[%s169 + $0x530] sm:$0xff]
      %v344 = vld [vmem:[%s169 + $0x538] sm:$0xff]
      %v345 = vld [vmem:[%s169 + $0x540] sm:$0xff]
      %v346 = vld [vmem:[%s169 + $0x548] sm:$0xff]
      %v347 = vld [vmem:[%s169 + $0x550] sm:$0xff]
      %v348 = vld [vmem:[%s169 + $0x558] sm:$0xff]
      %v349 = vld [vmem:[%s169 + $0x560] sm:$0xff]
      %v350 = vld [vmem:[%s169 + $0x568] sm:$0xff]
      %v351 = vld [vmem:[%s169 + $0x570] sm:$0xff]
      %v352 = vld [vmem:[%s169 + $0x578] sm:$0xff]
      %v353 = vld [vmem:[%s169 + $0x580] sm:$0xff]
      %v354 = vld [vmem:[%s169 + $0x588] sm:$0xff]
      %v355 = vld [vmem:[%s169 + $0x590] sm:$0xff]
      %v356 = vld [vmem:[%s169 + $0x598] sm:$0xff]
      %v357 = vld [vmem:[%s169 + $0x5a0] sm:$0xff]
      %v358 = vld [vmem:[%s169 + $0x5a8] sm:$0xff]
      %v359 = vld [vmem:[%s169 + $0x5b0] sm:$0xff]
      %v360 = vld [vmem:[%s169 + $0x5b8] sm:$0xff]
      %v361 = vld [vmem:[%s169 + $0x5c0] sm:$0xff]
      %v362 = vld [vmem:[%s169 + $0x5c8] sm:$0xff]
      %v363 = vld [vmem:[%s169 + $0x5d0] sm:$0xff]
      %v364 = vld [vmem:[%s169 + $0x5d8] sm:$0xff]
      %v365 = vld [vmem:[%s169 + $0x5e0] sm:$0xff]
      %v366 = vld [vmem:[%s169 + $0x5e8] sm:$0xff]
      %v367 = vld [vmem:[%s169 + $0x5f0] sm:$0xff]
      %v368 = vld [vmem:[%s169 + $0x5f8] sm:$0xff]
      %v369 = vld [vmem:[%s169 + $0x600] sm:$0xff]
      %v370 = vld [vmem:[%s169 + $0x608] sm:$0xff]
      %v371 = vld [vmem:[%s169 + $0x610] sm:$0xff]
      %v372 = vld [vmem:[%s169 + $0x618] sm:$0xff]
      %v373 = vld [vmem:[%s169 + $0x620] sm:$0xff]
      %v374 = vld [vmem:[%s169 + $0x628] sm:$0xff]
      %v375 = vld [vmem:[%s169 + $0x630] sm:$0xff]
      %v376 = vld [vmem:[%s169 + $0x638] sm:$0xff]
      %v377 = vld [vmem:[%s169 + $0x640] sm:$0xff]
      %v378 = vld [vmem:[%s169 + $0x648] sm:$0xff]
      %v379 = vld [vmem:[%s169 + $0x650] sm:$0xff]
      %v380 = vld [vmem:[%s169 + $0x658] sm:$0xff]
      %v381 = vld [vmem:[%s169 + $0x660] sm:$0xff]
      %v382 = vld [vmem:[%s169 + $0x668] sm:$0xff]
      %v383 = vld [vmem:[%s169 + $0x670] sm:$0xff]
      %v384 = vld [vmem:[%s169 + $0x678] sm:$0xff]
      %v385 = vld [vmem:[%s169 + $0x680] sm:$0xff]
      %v386 = vld [vmem:[%s169 + $0x688] sm:$0xff]
      %v387 = vld [vmem:[%s169 + $0x690] sm:$0xff]
      %v388 = vld [vmem:[%s169 + $0x698] sm:$0xff]
      %v389 = vld [vmem:[%s169 + $0x6a0] sm:$0xff]
      %v390 = vld [vmem:[%s169 + $0x6a8] sm:$0xff]
      %v391 = vld [vmem:[%s169 + $0x6b0] sm:$0xff]
      %v392 = vld [vmem:[%s169 + $0x6b8] sm:$0xff]
      %v393 = vld [vmem:[%s169 + $0x6c0] sm:$0xff]
      %v394 = vld [vmem:[%s169 + $0x6c8] sm:$0xff]
      %v395 = vld [vmem:[%s169 + $0x6d0] sm:$0xff]
      %v396 = vld [vmem:[%s169 + $0x6d8] sm:$0xff]
      %v397 = vld [vmem:[%s169 + $0x6e0] sm:$0xff]
      %v398 = vld [vmem:[%s169 + $0x6e8] sm:$0xff]
      %v399 = vld [vmem:[%s169 + $0x6f0] sm:$0xff]
      %v400 = vld [vmem:[%s169 + $0x6f8] sm:$0xff]
      %v401 = vld [vmem:[%s169 + $0x700] sm:$0xff]
      %v402 = vld [vmem:[%s169 + $0x708] sm:$0xff]
      %v403 = vld [vmem:[%s169 + $0x710] sm:$0xff]
      %v404 = vld [vmem:[%s169 + $0x718] sm:$0xff]
      %v405 = vld [vmem:[%s169 + $0x720] sm:$0xff]
      %v406 = vld [vmem:[%s169 + $0x728] sm:$0xff]
      %v407 = vld [vmem:[%s169 + $0x730] sm:$0xff]
      %v408 = vld [vmem:[%s169 + $0x738] sm:$0xff]
      %v409 = vld [vmem:[%s169 + $0x740] sm:$0xff]
      %v410 = vld [vmem:[%s169 + $0x748] sm:$0xff]
      %v411 = vld [vmem:[%s169 + $0x750] sm:$0xff]
      %v412 = vld [vmem:[%s169 + $0x758] sm:$0xff]
      %v413 = vld [vmem:[%s169 + $0x760] sm:$0xff]
      %v414 = vld [vmem:[%s169 + $0x768] sm:$0xff]
      %v415 = vld [vmem:[%s169 + $0x770] sm:$0xff]
      %v416 = vld [vmem:[%s169 + $0x778] sm:$0xff]
      %v417 = vld [vmem:[%s169 + $0x780] sm:$0xff]
      %v418 = vld [vmem:[%s169 + $0x788] sm:$0xff]
      %v419 = vld [vmem:[%s169 + $0x790] sm:$0xff]
      %v420 = vld [vmem:[%s169 + $0x798] sm:$0xff]
      %v421 = vld [vmem:[%s169 + $0x7a0] sm:$0xff]
      %v422 = vld [vmem:[%s169 + $0x7a8] sm:$0xff]
      %v423 = vld [vmem:[%s169 + $0x7b0] sm:$0xff]
      %v424 = vld [vmem:[%s169 + $0x7b8] sm:$0xff]
      %v425 = vld [vmem:[%s169 + $0x7c0] sm:$0xff]
      %v426 = vld [vmem:[%s169 + $0x7c8] sm:$0xff]
      %v427 = vld [vmem:[%s169 + $0x7d0] sm:$0xff]
      %v428 = vld [vmem:[%s169 + $0x7d8] sm:$0xff]
      %v429 = vld [vmem:[%s169 + $0x7e0] sm:$0xff]
      %v430 = vld [vmem:[%s169 + $0x7e8] sm:$0xff]
      %v431 = vld [vmem:[%s169 + $0x7f0] sm:$0xff]
      %v432 = vld [vmem:[%s169 + $0x7f8] sm:$0xff]
      %v433 = vld [vmem:[%s169 + $0x800] sm:$0xff]
      %v434 = vld [vmem:[%s169 + $0x808] sm:$0xff]
      %v435 = vld [vmem:[%s169 + $0x810] sm:$0xff]
      %v436 = vld [vmem:[%s169 + $0x818] sm:$0xff]
      %v437 = vld [vmem:[%s169 + $0x820] sm:$0xff]
      %v438 = vld [vmem:[%s169 + $0x828] sm:$0xff]
      %v439 = vld [vmem:[%s169 + $0x830] sm:$0xff]
      %v440 = vld [vmem:[%s169 + $0x838] sm:$0xff]
      %v441 = vld [vmem:[%s169 + $0x840] sm:$0xff]
      %v442 = vld [vmem:[%s169 + $0x848] sm:$0xff]
      %v443 = vld [vmem:[%s169 + $0x850] sm:$0xff]
      %v444 = vld [vmem:[%s169 + $0x858] sm:$0xff]
      %v445 = vld [vmem:[%s169 + $0x860] sm:$0xff]
      %v446 = vld [vmem:[%s169 + $0x868] sm:$0xff]
      %v447 = vld [vmem:[%s169 + $0x870] sm:$0xff]
      %v448 = vld [vmem:[%s169 + $0x878] sm:$0xff]
      %v449 = vld [vmem:[%s169 + $0x880] sm:$0xff]
      %v450 = vld [vmem:[%s169 + $0x888] sm:$0xff]
      %v451 = vld [vmem:[%s169 + $0x890] sm:$0xff]
      %v452 = vld [vmem:[%s169 + $0x898] sm:$0xff]
      %v453 = vld [vmem:[%s169 + $0x8a0] sm:$0xff]
      %v454 = vld [vmem:[%s169 + $0x8a8] sm:$0xff]
      %v455 = vld [vmem:[%s169 + $0x8b0] sm:$0xff]
      %v456 = vld [vmem:[%s169 + $0x8b8] sm:$0xff]
      %v457 = vld [vmem:[%s169 + $0x8c0] sm:$0xff]
      %v458 = vld [vmem:[%s169 + $0x8c8] sm:$0xff]
      %v459 = vld [vmem:[%s169 + $0x8d0] sm:$0xff]
      %v460 = vld [vmem:[%s169 + $0x8d8] sm:$0xff]
      %v461 = vld [vmem:[%s169 + $0x8e0] sm:$0xff]
      %v462 = vld [vmem:[%s169 + $0x8e8] sm:$0xff]
      %v463 = vld [vmem:[%s169 + $0x8f0] sm:$0xff]
      %v464 = vld [vmem:[%s169 + $0x8f8] sm:$0xff]
      %v465 = vld [vmem:[%s169 + $0x900] sm:$0xff]
      %v466 = vld [vmem:[%s169 + $0x908] sm:$0xff]
      %v467 = vld [vmem:[%s169 + $0x910] sm:$0xff]
      %v468 = vld [vmem:[%s169 + $0x918] sm:$0xff]
      %v469 = vld [vmem:[%s169 + $0x920] sm:$0xff]
      %v470 = vld [vmem:[%s169 + $0x928] sm:$0xff]
      %v471 = vld [vmem:[%s169 + $0x930] sm:$0xff]
      %v472 = vld [vmem:[%s169 + $0x938] sm:$0xff]
      %v473 = vld [vmem:[%s169 + $0x940] sm:$0xff]
      %v474 = vld [vmem:[%s169 + $0x948] sm:$0xff]
      %v475 = vld [vmem:[%s169 + $0x950] sm:$0xff]
      %v476 = vld [vmem:[%s169 + $0x958] sm:$0xff]
      %v477 = vld [vmem:[%s169 + $0x960] sm:$0xff]
      %v478 = vld [vmem:[%s169 + $0x968] sm:$0xff]
      %v479 = vld [vmem:[%s169 + $0x970] sm:$0xff]
      %v480 = vld [vmem:[%s169 + $0x978] sm:$0xff]
      %v481 = vld [vmem:[%s169 + $0x980] sm:$0xff]
      %v482 = vld [vmem:[%s169 + $0x988] sm:$0xff]
      %v483 = vld [vmem:[%s169 + $0x990] sm:$0xff]
      %v484 = vld [vmem:[%s169 + $0x998] sm:$0xff]
      %v485 = vld [vmem:[%s169 + $0x9a0] sm:$0xff]
      %v486 = vld [vmem:[%s169 + $0x9a8] sm:$0xff]
      %v487 = vld [vmem:[%s169 + $0x9b0] sm:$0xff]
      %v488 = vld [vmem:[%s169 + $0x9b8] sm:$0xff]
      %v489 = vld [vmem:[%s169 + $0x9c0] sm:$0xff]
      %v490 = vld [vmem:[%s169 + $0x9c8] sm:$0xff]
      %v491 = vld [vmem:[%s169 + $0x9d0] sm:$0xff]
      %v492 = vld [vmem:[%s169 + $0x9d8] sm:$0xff]
      %v493 = vld [vmem:[%s169 + $0x9e0] sm:$0xff]
      %v494 = vld [vmem:[%s169 + $0x9e8] sm:$0xff]
      %v495 = vld [vmem:[%s169 + $0x9f0] sm:$0xff]
      %v496 = vld [vmem:[%s169 + $0x9f8] sm:$0xff]
      %v497 = vld [vmem:[%s169 + $0xa00] sm:$0xff]
      %v498 = vld [vmem:[%s169 + $0xa08] sm:$0xff]
      %v499 = vld [vmem:[%s169 + $0xa10] sm:$0xff]
      %v500 = vld [vmem:[%s169 + $0xa18] sm:$0xff]
      %v501 = vld [vmem:[%s169 + $0xa20] sm:$0xff]
      %v502 = vld [vmem:[%s169 + $0xa28] sm:$0xff]
      %v503 = vld [vmem:[%s169 + $0xa30] sm:$0xff]
      %v504 = vld [vmem:[%s169 + $0xa38] sm:$0xff]
      %v505 = vld [vmem:[%s169 + $0xa40] sm:$0xff]
      %v506 = vld [vmem:[%s169 + $0xa48] sm:$0xff]
      %v507 = vld [vmem:[%s169 + $0xa50] sm:$0xff]
      %v508 = vld [vmem:[%s169 + $0xa58] sm:$0xff]
      %v509 = vld [vmem:[%s169 + $0xa60] sm:$0xff]
      %v510 = vld [vmem:[%s169 + $0xa68] sm:$0xff]
      %v511 = vld [vmem:[%s169 + $0xa70] sm:$0xff]
      %v512 = vld [vmem:[%s169 + $0xa78] sm:$0xff]
      %v513 = vld [vmem:[%s169 + $0xa80] sm:$0xff]
      %v514 = vld [vmem:[%s169 + $0xa88] sm:$0xff]
      %v515 = vld [vmem:[%s169 + $0xa90] sm:$0xff]
      %v516 = vld [vmem:[%s169 + $0xa98] sm:$0xff]
      %v517 = vld [vmem:[%s169 + $0xaa0] sm:$0xff]
      %v518 = vld [vmem:[%s169 + $0xaa8] sm:$0xff]
      %v519 = vld [vmem:[%s169 + $0xab0] sm:$0xff]
      %v520 = vld [vmem:[%s169 + $0xab8] sm:$0xff]
      %v521 = vld [vmem:[%s169 + $0xac0] sm:$0xff]
      %v522 = vld [vmem:[%s169 + $0xac8] sm:$0xff]
      %v523 = vld [vmem:[%s169 + $0xad0] sm:$0xff]
      %v524 = vld [vmem:[%s169 + $0xad8] sm:$0xff]
      %v525 = vld [vmem:[%s169 + $0xae0] sm:$0xff]
      %v526 = vld [vmem:[%s169 + $0xae8] sm:$0xff]
      %v527 = vld [vmem:[%s169 + $0xaf0] sm:$0xff]
      %v528 = vld [vmem:[%s169 + $0xaf8] sm:$0xff]
      %v529 = vld [vmem:[%s169 + $0xb00] sm:$0xff]
      %v530 = vld [vmem:[%s169 + $0xb08] sm:$0xff]
      %v531 = vld [vmem:[%s169 + $0xb10] sm:$0xff]
      %v532 = vld [vmem:[%s169 + $0xb18] sm:$0xff]
      %v533 = vld [vmem:[%s169 + $0xb20] sm:$0xff]
      %v534 = vld [vmem:[%s169 + $0xb28] sm:$0xff]
      %v535 = vld [vmem:[%s169 + $0xb30] sm:$0xff]
      %v536 = vld [vmem:[%s169 + $0xb38] sm:$0xff]
      %v537 = vld [vmem:[%s169 + $0xb40] sm:$0xff]
      %v538 = vld [vmem:[%s169 + $0xb48] sm:$0xff]
      %v539 = vld [vmem:[%s169 + $0xb50] sm:$0xff]
      %v540 = vld [vmem:[%s169 + $0xb58] sm:$0xff]
      %v541 = vld [vmem:[%s169 + $0xb60] sm:$0xff]
      %v542 = vld [vmem:[%s169 + $0xb68] sm:$0xff]
      %v543 = vld [vmem:[%s169 + $0xb70] sm:$0xff]
      %v544 = vld [vmem:[%s169 + $0xb78] sm:$0xff]
      %v545 = vld [vmem:[%s169 + $0xb80] sm:$0xff]
      %v546 = vld [vmem:[%s169 + $0xb88] sm:$0xff]
      %v547 = vld [vmem:[%s169 + $0xb90] sm:$0xff]
      %v548 = vld [vmem:[%s169 + $0xb98] sm:$0xff]
      %v549 = vld [vmem:[%s169 + $0xba0] sm:$0xff]
      %v550 = vld [vmem:[%s169 + $0xba8] sm:$0xff]
      %v551 = vld [vmem:[%s169 + $0xbb0] sm:$0xff]
      %v552 = vld [vmem:[%s169 + $0xbb8] sm:$0xff]
      %v553 = vld [vmem:[%s169 + $0xbc0] sm:$0xff]
      %v554 = vld [vmem:[%s169 + $0xbc8] sm:$0xff]
      %v555 = vld [vmem:[%s169 + $0xbd0] sm:$0xff]
      %v556 = vld [vmem:[%s169 + $0xbd8] sm:$0xff]
      %v557 = vld [vmem:[%s169 + $0xbe0] sm:$0xff]
      %v558 = vld [vmem:[%s169 + $0xbe8] sm:$0xff]
      %v559 = vld [vmem:[%s169 + $0xbf0] sm:$0xff]
      %v560 = vld [vmem:[%s169 + $0xbf8] sm:$0xff]
      %v561 = vld [vmem:[%s169 + $0xc00] sm:$0xff]
      %v562 = vld [vmem:[%s169 + $0xc08] sm:$0xff]
      %v563 = vld [vmem:[%s169 + $0xc10] sm:$0xff]
      %v564 = vld [vmem:[%s169 + $0xc18] sm:$0xff]
      %v565 = vld [vmem:[%s169 + $0xc20] sm:$0xff]
      %v566 = vld [vmem:[%s169 + $0xc28] sm:$0xff]
      %v567 = vld [vmem:[%s169 + $0xc30] sm:$0xff]
      %v568 = vld [vmem:[%s169 + $0xc38] sm:$0xff]
      %v569 = vld [vmem:[%s169 + $0xc40] sm:$0xff]
      %v570 = vld [vmem:[%s169 + $0xc48] sm:$0xff]
      %v571 = vld [vmem:[%s169 + $0xc50] sm:$0xff]
      %v572 = vld [vmem:[%s169 + $0xc58] sm:$0xff]
      %v573 = vld [vmem:[%s169 + $0xc60] sm:$0xff]
      %v574 = vld [vmem:[%s169 + $0xc68] sm:$0xff]
      %v575 = vld [vmem:[%s169 + $0xc70] sm:$0xff]
      %v576 = vld [vmem:[%s169 + $0xc78] sm:$0xff]
      %v577 = vld [vmem:[%s169 + $0xc80] sm:$0xff]
      %v578 = vld [vmem:[%s169 + $0xc88] sm:$0xff]
      %v579 = vld [vmem:[%s169 + $0xc90] sm:$0xff]
      %v580 = vld [vmem:[%s169 + $0xc98] sm:$0xff]
      %v581 = vld [vmem:[%s169 + $0xca0] sm:$0xff]
      %v582 = vld [vmem:[%s169 + $0xca8] sm:$0xff]
      %v583 = vld [vmem:[%s169 + $0xcb0] sm:$0xff]
      %v584 = vld [vmem:[%s169 + $0xcb8] sm:$0xff]
      %v585 = vld [vmem:[%s169 + $0xcc0] sm:$0xff]
      %v586 = vld [vmem:[%s169 + $0xcc8] sm:$0xff]
      %v587 = vld [vmem:[%s169 + $0xcd0] sm:$0xff]
      %v588 = vld [vmem:[%s169 + $0xcd8] sm:$0xff]
      %v589 = vld [vmem:[%s169 + $0xce0] sm:$0xff]
      %v590 = vld [vmem:[%s169 + $0xce8] sm:$0xff]
      %v591 = vld [vmem:[%s169 + $0xcf0] sm:$0xff]
      %v592 = vld [vmem:[%s169 + $0xcf8] sm:$0xff]
      %v593 = vld [vmem:[%s169 + $0xd00] sm:$0xff]
      %v594 = vld [vmem:[%s169 + $0xd08] sm:$0xff]
      %v595 = vld [vmem:[%s169 + $0xd10] sm:$0xff]
      %v596 = vld [vmem:[%s169 + $0xd18] sm:$0xff]
      %v597 = vld [vmem:[%s169 + $0xd20] sm:$0xff]
      %v598 = vld [vmem:[%s169 + $0xd28] sm:$0xff]
      %v599 = vld [vmem:[%s169 + $0xd30] sm:$0xff]
      %v600 = vld [vmem:[%s169 + $0xd38] sm:$0xff]
      %v601 = vld [vmem:[%s169 + $0xd40] sm:$0xff]
      %v602 = vld [vmem:[%s169 + $0xd48] sm:$0xff]
      %v603 = vld [vmem:[%s169 + $0xd50] sm:$0xff]
      %v604 = vld [vmem:[%s169 + $0xd58] sm:$0xff]
      %v605 = vld [vmem:[%s169 + $0xd60] sm:$0xff]
      %v606 = vld [vmem:[%s169 + $0xd68] sm:$0xff]
      %v607 = vld [vmem:[%s169 + $0xd70] sm:$0xff]
      %v608 = vld [vmem:[%s169 + $0xd78] sm:$0xff]
      %v609 = vld [vmem:[%s169 + $0xd80] sm:$0xff]
      %v610 = vld [vmem:[%s169 + $0xd88] sm:$0xff]
      %v611 = vld [vmem:[%s169 + $0xd90] sm:$0xff]
      %v612 = vld [vmem:[%s169 + $0xd98] sm:$0xff]
      %v613 = vld [vmem:[%s169 + $0xda0] sm:$0xff]
      %v614 = vld [vmem:[%s169 + $0xda8] sm:$0xff]
      %v615 = vld [vmem:[%s169 + $0xdb0] sm:$0xff]
      %v616 = vld [vmem:[%s169 + $0xdb8] sm:$0xff]
      %v617 = vld [vmem:[%s169 + $0xdc0] sm:$0xff]
      %v618 = vld [vmem:[%s169 + $0xdc8] sm:$0xff]
      %v619 = vld [vmem:[%s169 + $0xdd0] sm:$0xff]
      %v620 = vld [vmem:[%s169 + $0xdd8] sm:$0xff]
      %v621 = vld [vmem:[%s169 + $0xde0] sm:$0xff]
      %v622 = vld [vmem:[%s169 + $0xde8] sm:$0xff]
      %v623 = vld [vmem:[%s169 + $0xdf0] sm:$0xff]
      %v624 = vld [vmem:[%s169 + $0xdf8] sm:$0xff]
      %v625 = vld [vmem:[%s169 + $0xe00] sm:$0xff]
      %v626 = vld [vmem:[%s169 + $0xe08] sm:$0xff]
      %v627 = vld [vmem:[%s169 + $0xe10] sm:$0xff]
      %v628 = vld [vmem:[%s169 + $0xe18] sm:$0xff]
      %v629 = vld [vmem:[%s169 + $0xe20] sm:$0xff]
      %v630 = vld [vmem:[%s169 + $0xe28] sm:$0xff]
      %v631 = vld [vmem:[%s169 + $0xe30] sm:$0xff]
      %v632 = vld [vmem:[%s169 + $0xe38] sm:$0xff]
      %v633 = vld [vmem:[%s169 + $0xe40] sm:$0xff]
      %v634 = vld [vmem:[%s169 + $0xe48] sm:$0xff]
      %v635 = vld [vmem:[%s169 + $0xe50] sm:$0xff]
      %v636 = vld [vmem:[%s169 + $0xe58] sm:$0xff]
      %v637 = vld [vmem:[%s169 + $0xe60] sm:$0xff]
      %v638 = vld [vmem:[%s169 + $0xe68] sm:$0xff]
      %v639 = vld [vmem:[%s169 + $0xe70] sm:$0xff]
      %v640 = vld [vmem:[%s169 + $0xe78] sm:$0xff]
      %v641 = vld [vmem:[%s169 + $0xe80] sm:$0xff]
      %v642 = vld [vmem:[%s169 + $0xe88] sm:$0xff]
      %v643 = vld [vmem:[%s169 + $0xe90] sm:$0xff]
      %v644 = vld [vmem:[%s169 + $0xe98] sm:$0xff]
      %v645 = vld [vmem:[%s169 + $0xea0] sm:$0xff]
      %v646 = vld [vmem:[%s169 + $0xea8] sm:$0xff]
      %v647 = vld [vmem:[%s169 + $0xeb0] sm:$0xff]
      %v648 = vld [vmem:[%s169 + $0xeb8] sm:$0xff]
      %v649 = vld [vmem:[%s169 + $0xec0] sm:$0xff]
      %v650 = vld [vmem:[%s169 + $0xec8] sm:$0xff]
      %v651 = vld [vmem:[%s169 + $0xed0] sm:$0xff]
      %v652 = vld [vmem:[%s169 + $0xed8] sm:$0xff]
      %v653 = vld [vmem:[%s169 + $0xee0] sm:$0xff]
      %v654 = vld [vmem:[%s169 + $0xee8] sm:$0xff]
      %v655 = vld [vmem:[%s169 + $0xef0] sm:$0xff]
      %v656 = vld [vmem:[%s169 + $0xef8] sm:$0xff]
      %v657 = vld [vmem:[%s169 + $0xf00] sm:$0xff]
      %v658 = vld [vmem:[%s169 + $0xf08] sm:$0xff]
      %v659 = vld [vmem:[%s169 + $0xf10] sm:$0xff]
      %v660 = vld [vmem:[%s169 + $0xf18] sm:$0xff]
      %v661 = vld [vmem:[%s169 + $0xf20] sm:$0xff]
      %v662 = vld [vmem:[%s169 + $0xf28] sm:$0xff]
      %v663 = vld [vmem:[%s169 + $0xf30] sm:$0xff]
      %v664 = vld [vmem:[%s169 + $0xf38] sm:$0xff]
      %v665 = vld [vmem:[%s169 + $0xf40] sm:$0xff]
      %v666 = vld [vmem:[%s169 + $0xf48] sm:$0xff]
      %v667 = vld [vmem:[%s169 + $0xf50] sm:$0xff]
      %v668 = vld [vmem:[%s169 + $0xf58] sm:$0xff]
      %v669 = vld [vmem:[%s169 + $0xf60] sm:$0xff]
      %v670 = vld [vmem:[%s169 + $0xf68] sm:$0xff]
      %v671 = vld [vmem:[%s169 + $0xf70] sm:$0xff]
      %v672 = vld [vmem:[%s169 + $0xf78] sm:$0xff]
      %v673 = vld [vmem:[%s169 + $0xf80] sm:$0xff]
      %v674 = vld [vmem:[%s169 + $0xf88] sm:$0xff]
      %v675 = vld [vmem:[%s169 + $0xf90] sm:$0xff]
      %v676 = vld [vmem:[%s169 + $0xf98] sm:$0xff]
      %v677 = vld [vmem:[%s169 + $0xfa0] sm:$0xff]
      %v678 = vld [vmem:[%s169 + $0xfa8] sm:$0xff]
      %v679 = vld [vmem:[%s169 + $0xfb0] sm:$0xff]
      %v680 = vld [vmem:[%s169 + $0xfb8] sm:$0xff]
      %v681 = vld [vmem:[%s169 + $0xfc0] sm:$0xff]
      %v682 = vld [vmem:[%s169 + $0xfc8] sm:$0xff]
      %v683 = vld [vmem:[%s169 + $0xfd0] sm:$0xff]
      %v684 = vld [vmem:[%s169 + $0xfd8] sm:$0xff]
      %v685 = vld [vmem:[%s169 + $0xfe0] sm:$0xff]
      %v686 = vld [vmem:[%s169 + $0xfe8] sm:$0xff]
      %v687 = vld [vmem:[%s169 + $0xff0] sm:$0xff]
      %v688 = vld [vmem:[%s169 + $0xff8] sm:$0xff]
      %v689 = vld [vmem:[%s169 + $0x1000] sm:$0xff]
      %v690 = vld [vmem:[%s169 + $0x1008] sm:$0xff]
      %v691 = vld [vmem:[%s169 + $0x1010] sm:$0xff]
      %v692 = vld [vmem:[%s169 + $0x1018] sm:$0xff]
      %v693 = vld [vmem:[%s169 + $0x1020] sm:$0xff]
      %v694 = vld [vmem:[%s169 + $0x1028] sm:$0xff]
      %v695 = vld [vmem:[%s169 + $0x1030] sm:$0xff]
      %v696 = vld [vmem:[%s169 + $0x1038] sm:$0xff]
      %v697 = vld [vmem:[%s169 + $0x1040] sm:$0xff]
      %v698 = vld [vmem:[%s169 + $0x1048] sm:$0xff]
      %v699 = vld [vmem:[%s169 + $0x1050] sm:$0xff]
      %v700 = vld [vmem:[%s169 + $0x1058] sm:$0xff]
      %v701 = vld [vmem:[%s169 + $0x1060] sm:$0xff]
      %v702 = vld [vmem:[%s169 + $0x1068] sm:$0xff]
      %v703 = vld [vmem:[%s169 + $0x1070] sm:$0xff]
      %v704 = vld [vmem:[%s169 + $0x1078] sm:$0xff]
      %v705 = vld [vmem:[%s169 + $0x1080] sm:$0xff]
      %v706 = vld [vmem:[%s169 + $0x1088] sm:$0xff]
      %v707 = vld [vmem:[%s169 + $0x1090] sm:$0xff]
      %v708 = vld [vmem:[%s169 + $0x1098] sm:$0xff]
      %v709 = vld [vmem:[%s169 + $0x10a0] sm:$0xff]
      %v710 = vld [vmem:[%s169 + $0x10a8] sm:$0xff]
      %v711 = vld [vmem:[%s169 + $0x10b0] sm:$0xff]
      %v712 = vld [vmem:[%s169 + $0x10b8] sm:$0xff]
      %v713 = vld [vmem:[%s169 + $0x10c0] sm:$0xff]
      %v714 = vld [vmem:[%s169 + $0x10c8] sm:$0xff]
      %v715 = vld [vmem:[%s169 + $0x10d0] sm:$0xff]
      %v716 = vld [vmem:[%s169 + $0x10d8] sm:$0xff]
      %v717 = vld [vmem:[%s169 + $0x10e0] sm:$0xff]
      %v718 = vld [vmem:[%s169 + $0x10e8] sm:$0xff]
      %v719 = vld [vmem:[%s169 + $0x10f0] sm:$0xff]
      %v720 = vld [vmem:[%s169 + $0x10f8] sm:$0xff]
      %v721 = vld [vmem:[%s169 + $0x1100] sm:$0xff]
      %v722 = vld [vmem:[%s169 + $0x1108] sm:$0xff]
      %v723 = vld [vmem:[%s169 + $0x1110] sm:$0xff]
      %v724 = vld [vmem:[%s169 + $0x1118] sm:$0xff]
      %v725 = vld [vmem:[%s169 + $0x1120] sm:$0xff]
      %v726 = vld [vmem:[%s169 + $0x1128] sm:$0xff]
      %v727 = vld [vmem:[%s169 + $0x1130] sm:$0xff]
      %v728 = vld [vmem:[%s169 + $0x1138] sm:$0xff]
      %v729 = vld [vmem:[%s169 + $0x1140] sm:$0xff]
      %v730 = vld [vmem:[%s169 + $0x1148] sm:$0xff]
      %v731 = vld [vmem:[%s169 + $0x1150] sm:$0xff]
      %v732 = vld [vmem:[%s169 + $0x1158] sm:$0xff]
      %v733 = vld [vmem:[%s169 + $0x1160] sm:$0xff]
      %v734 = vld [vmem:[%s169 + $0x1168] sm:$0xff]
      %v735 = vld [vmem:[%s169 + $0x1170] sm:$0xff]
      %v736 = vld [vmem:[%s169 + $0x1178] sm:$0xff]
      %v737 = vld [vmem:[%s169 + $0x1180] sm:$0xff]
      %v738 = vld [vmem:[%s169 + $0x1188] sm:$0xff]
      %v739 = vld [vmem:[%s169 + $0x1190] sm:$0xff]
      %v740 = vld [vmem:[%s169 + $0x1198] sm:$0xff]
      %v741 = vld [vmem:[%s169 + $0x11a0] sm:$0xff]
      %v742 = vld [vmem:[%s169 + $0x11a8] sm:$0xff]
      %v743 = vld [vmem:[%s169 + $0x11b0] sm:$0xff]
      %v744 = vld [vmem:[%s169 + $0x11b8] sm:$0xff]
      %v745 = vld [vmem:[%s169 + $0x11c0] sm:$0xff]
      %v746 = vld [vmem:[%s169 + $0x11c8] sm:$0xff]
      %v747 = vld [vmem:[%s169 + $0x11d0] sm:$0xff]
      %v748 = vld [vmem:[%s169 + $0x11d8] sm:$0xff]
      %v749 = vld [vmem:[%s169 + $0x11e0] sm:$0xff]
      %v750 = vld [vmem:[%s169 + $0x11e8] sm:$0xff]
      %v751 = vld [vmem:[%s169 + $0x11f0] sm:$0xff]
      %v752 = vld [vmem:[%s169 + $0x11f8] sm:$0xff]
      %v753 = vld [vmem:[%s169 + $0x1200] sm:$0xff]
      %v754 = vld [vmem:[%s169 + $0x1208] sm:$0xff]
      %v755 = vld [vmem:[%s169 + $0x1210] sm:$0xff]
      %v756 = vld [vmem:[%s169 + $0x1218] sm:$0xff]
      %v757 = vld [vmem:[%s169 + $0x1220] sm:$0xff]
      %v758 = vld [vmem:[%s169 + $0x1228] sm:$0xff]
      %v759 = vld [vmem:[%s169 + $0x1230] sm:$0xff]
      %v760 = vld [vmem:[%s169 + $0x1238] sm:$0xff]
      %v761 = vld [vmem:[%s169 + $0x1240] sm:$0xff]
      %v762 = vld [vmem:[%s169 + $0x1248] sm:$0xff]
      %v763 = vld [vmem:[%s169 + $0x1250] sm:$0xff]
      %v764 = vld [vmem:[%s169 + $0x1258] sm:$0xff]
      %v765 = vld [vmem:[%s169 + $0x1260] sm:$0xff]
      %v766 = vld [vmem:[%s169 + $0x1268] sm:$0xff]
      %v767 = vld [vmem:[%s169 + $0x1270] sm:$0xff]
      %v768 = vld [vmem:[%s169 + $0x1278] sm:$0xff]
      %v769 = vld [vmem:[%s169 + $0x1280] sm:$0xff]
      %v770 = vld [vmem:[%s169 + $0x1288] sm:$0xff]
      %v771 = vld [vmem:[%s169 + $0x1290] sm:$0xff]
      %v772 = vld [vmem:[%s169 + $0x1298] sm:$0xff]
      %v773 = vld [vmem:[%s169 + $0x12a0] sm:$0xff]
      %v774 = vld [vmem:[%s169 + $0x12a8] sm:$0xff]
      %v775 = vld [vmem:[%s169 + $0x12b0] sm:$0xff]
      %v776 = vld [vmem:[%s169 + $0x12b8] sm:$0xff]
      %v777 = vld [vmem:[%s169 + $0x12c0] sm:$0xff]
      %v778 = vld [vmem:[%s169 + $0x12c8] sm:$0xff]
      %v779 = vld [vmem:[%s169 + $0x12d0] sm:$0xff]
      %v780 = vld [vmem:[%s169 + $0x12d8] sm:$0xff]
      %v781 = vld [vmem:[%s169 + $0x12e0] sm:$0xff]
      %v782 = vld [vmem:[%s169 + $0x12e8] sm:$0xff]
      %v783 = vld [vmem:[%s169 + $0x12f0] sm:$0xff]
      %v784 = vld [vmem:[%s169 + $0x12f8] sm:$0xff]
      %v785 = vld [vmem:[%s169 + $0x1300] sm:$0xff]
      %v786 = vld [vmem:[%s169 + $0x1308] sm:$0xff]
      %v787 = vld [vmem:[%s169 + $0x1310] sm:$0xff]
      %v788 = vld [vmem:[%s169 + $0x1318] sm:$0xff]
      %v789 = vld [vmem:[%s169 + $0x1320] sm:$0xff]
      %v790 = vld [vmem:[%s169 + $0x1328] sm:$0xff]
      %v791 = vld [vmem:[%s169 + $0x1330] sm:$0xff]
      %v792 = vld [vmem:[%s169 + $0x1338] sm:$0xff]
      %v793 = vld [vmem:[%s169 + $0x1340] sm:$0xff]
      %v794 = vld [vmem:[%s169 + $0x1348] sm:$0xff]
      %v795 = vld [vmem:[%s169 + $0x1350] sm:$0xff]
      %v796 = vld [vmem:[%s169 + $0x1358] sm:$0xff]
      %v797 = vld [vmem:[%s169 + $0x1360] sm:$0xff]
      %v798 = vld [vmem:[%s169 + $0x1368] sm:$0xff]
      %v799 = vld [vmem:[%s169 + $0x1370] sm:$0xff]
      %v800 = vld [vmem:[%s169 + $0x1378] sm:$0xff]
      %v801 = vld [vmem:[%s169 + $0x1380] sm:$0xff]
      %v802 = vld [vmem:[%s169 + $0x1388] sm:$0xff]
      %v803 = vld [vmem:[%s169 + $0x1390] sm:$0xff]
      %v804 = vld [vmem:[%s169 + $0x1398] sm:$0xff]
      %v805 = vld [vmem:[%s169 + $0x13a0] sm:$0xff]
      %v806 = vld [vmem:[%s169 + $0x13a8] sm:$0xff]
      %v807 = vld [vmem:[%s169 + $0x13b0] sm:$0xff]
      %v808 = vld [vmem:[%s169 + $0x13b8] sm:$0xff]
      %v809 = vld [vmem:[%s169 + $0x13c0] sm:$0xff]
      %v810 = vld [vmem:[%s169 + $0x13c8] sm:$0xff]
      %v811 = vld [vmem:[%s169 + $0x13d0] sm:$0xff]
      %v812 = vld [vmem:[%s169 + $0x13d8] sm:$0xff]
      %v813 = vld [vmem:[%s169 + $0x13e0] sm:$0xff]
      %v814 = vld [vmem:[%s169 + $0x13e8] sm:$0xff]
      %v815 = vld [vmem:[%s169 + $0x13f0] sm:$0xff]
      %v816 = vld [vmem:[%s169 + $0x13f8] sm:$0xff]
      %v817 = vld [vmem:[%s169 + $0x1400] sm:$0xff]
      %v818 = vld [vmem:[%s169 + $0x1408] sm:$0xff]
      %v819 = vld [vmem:[%s169 + $0x1410] sm:$0xff]
      %v820 = vld [vmem:[%s169 + $0x1418] sm:$0xff]
      %v821 = vld [vmem:[%s169 + $0x1420] sm:$0xff]
      %v822 = vld [vmem:[%s169 + $0x1428] sm:$0xff]
      %v823 = vld [vmem:[%s169 + $0x1430] sm:$0xff]
      %v824 = vld [vmem:[%s169 + $0x1438] sm:$0xff]
      %v825 = vld [vmem:[%s169 + $0x1440] sm:$0xff]
      %v826 = vld [vmem:[%s169 + $0x1448] sm:$0xff]
      %v827 = vld [vmem:[%s169 + $0x1450] sm:$0xff]
      %v828 = vld [vmem:[%s169 + $0x1458] sm:$0xff]
      %v829 = vld [vmem:[%s169 + $0x1460] sm:$0xff]
      %v830 = vld [vmem:[%s169 + $0x1468] sm:$0xff]
      %v831 = vld [vmem:[%s169 + $0x1470] sm:$0xff]
      %v832 = vld [vmem:[%s169 + $0x1478] sm:$0xff]
      %v833 = vld [vmem:[%s169 + $0x1480] sm:$0xff]
      %v834 = vld [vmem:[%s169 + $0x1488] sm:$0xff]
      %v835 = vld [vmem:[%s169 + $0x1490] sm:$0xff]
      %v836 = vld [vmem:[%s169 + $0x1498] sm:$0xff]
      %v837 = vld [vmem:[%s169 + $0x14a0] sm:$0xff]
      %v838 = vld [vmem:[%s169 + $0x14a8] sm:$0xff]
      %v839 = vld [vmem:[%s169 + $0x14b0] sm:$0xff]
      %v840 = vld [vmem:[%s169 + $0x14b8] sm:$0xff]
      %v841 = vld [vmem:[%s169 + $0x14c0] sm:$0xff]
      %v842 = vld [vmem:[%s169 + $0x14c8] sm:$0xff]
      %v843 = vld [vmem:[%s169 + $0x14d0] sm:$0xff]
      %v844 = vld [vmem:[%s169 + $0x14d8] sm:$0xff]
      %v845 = vld [vmem:[%s169 + $0x14e0] sm:$0xff]
      %v846 = vld [vmem:[%s169 + $0x14e8] sm:$0xff]
      %v847 = vld [vmem:[%s169 + $0x14f0] sm:$0xff]
      %v848 = vld [vmem:[%s169 + $0x14f8] sm:$0xff]
      %v849 = vld [vmem:[%s169 + $0x1500] sm:$0xff]
      %v850 = vld [vmem:[%s169 + $0x1508] sm:$0xff]
      %v851 = vld [vmem:[%s169 + $0x1510] sm:$0xff]
      %v852 = vld [vmem:[%s169 + $0x1518] sm:$0xff]
      %v853 = vld [vmem:[%s169 + $0x1520] sm:$0xff]
      %v854 = vld [vmem:[%s169 + $0x1528] sm:$0xff]
      %v855 = vld [vmem:[%s169 + $0x1530] sm:$0xff]
      %v856 = vld [vmem:[%s169 + $0x1538] sm:$0xff]
      %v857 = vld [vmem:[%s169 + $0x1540] sm:$0xff]
      %v858 = vld [vmem:[%s169 + $0x1548] sm:$0xff]
      %v859 = vld [vmem:[%s169 + $0x1550] sm:$0xff]
      %v860 = vld [vmem:[%s169 + $0x1558] sm:$0xff]
      %v861 = vld [vmem:[%s169 + $0x1560] sm:$0xff]
      %v862 = vld [vmem:[%s169 + $0x1568] sm:$0xff]
      %v863 = vld [vmem:[%s169 + $0x1570] sm:$0xff]
      %v864 = vld [vmem:[%s169 + $0x1578] sm:$0xff]
      %v865 = vld [vmem:[%s169 + $0x1580] sm:$0xff]
      %v866 = vld [vmem:[%s169 + $0x1588] sm:$0xff]
      %v867 = vld [vmem:[%s169 + $0x1590] sm:$0xff]
      %v868 = vld [vmem:[%s169 + $0x1598] sm:$0xff]
      %v869 = vld [vmem:[%s169 + $0x15a0] sm:$0xff]
      %v870 = vld [vmem:[%s169 + $0x15a8] sm:$0xff]
      %v871 = vld [vmem:[%s169 + $0x15b0] sm:$0xff]
      %v872 = vld [vmem:[%s169 + $0x15b8] sm:$0xff]
      %v873 = vld [vmem:[%s169 + $0x15c0] sm:$0xff]
      %v874 = vld [vmem:[%s169 + $0x15c8] sm:$0xff]
      %v875 = vld [vmem:[%s169 + $0x15d0] sm:$0xff]
      %v876 = vld [vmem:[%s169 + $0x15d8] sm:$0xff]
      %v877 = vld [vmem:[%s169 + $0x15e0] sm:$0xff]
      %v878 = vld [vmem:[%s169 + $0x15e8] sm:$0xff]
      %v879 = vld [vmem:[%s169 + $0x15f0] sm:$0xff]
      %v880 = vld [vmem:[%s169 + $0x15f8] sm:$0xff]
      %v881 = vld [vmem:[%s169 + $0x1600] sm:$0xff]
      %v882 = vld [vmem:[%s169 + $0x1608] sm:$0xff]
      %v883 = vld [vmem:[%s169 + $0x1610] sm:$0xff]
      %v884 = vld [vmem:[%s169 + $0x1618] sm:$0xff]
      %v885 = vld [vmem:[%s169 + $0x1620] sm:$0xff]
      %v886 = vld [vmem:[%s169 + $0x1628] sm:$0xff]
      %v887 = vld [vmem:[%s169 + $0x1630] sm:$0xff]
      %v888 = vld [vmem:[%s169 + $0x1638] sm:$0xff]
      %v889 = vld [vmem:[%s169 + $0x1640] sm:$0xff]
      %v890 = vld [vmem:[%s169 + $0x1648] sm:$0xff]
      %v891 = vld [vmem:[%s169 + $0x1650] sm:$0xff]
      %v892 = vld [vmem:[%s169 + $0x1658] sm:$0xff]
      %v893 = vld [vmem:[%s169 + $0x1660] sm:$0xff]
      %v894 = vld [vmem:[%s169 + $0x1668] sm:$0xff]
      %v895 = vld [vmem:[%s169 + $0x1670] sm:$0xff]
      %v896 = vld [vmem:[%s169 + $0x1678] sm:$0xff]
      %v897 = vld [vmem:[%s169 + $0x1680] sm:$0xff]
      %v898 = vld [vmem:[%s169 + $0x1688] sm:$0xff]
      %v899 = vld [vmem:[%s169 + $0x1690] sm:$0xff]
      %v900 = vld [vmem:[%s169 + $0x1698] sm:$0xff]
      %v901 = vld [vmem:[%s169 + $0x16a0] sm:$0xff]
      %v902 = vld [vmem:[%s169 + $0x16a8] sm:$0xff]
      %v903 = vld [vmem:[%s169 + $0x16b0] sm:$0xff]
      %v904 = vld [vmem:[%s169 + $0x16b8] sm:$0xff]
      %v905 = vld [vmem:[%s169 + $0x16c0] sm:$0xff]
      %v906 = vld [vmem:[%s169 + $0x16c8] sm:$0xff]
      %v907 = vld [vmem:[%s169 + $0x16d0] sm:$0xff]
      %v908 = vld [vmem:[%s169 + $0x16d8] sm:$0xff]
      %v909 = vld [vmem:[%s169 + $0x16e0] sm:$0xff]
      %v910 = vld [vmem:[%s169 + $0x16e8] sm:$0xff]
      %v911 = vld [vmem:[%s169 + $0x16f0] sm:$0xff]
      %v912 = vld [vmem:[%s169 + $0x16f8] sm:$0xff]
      %v913 = vld [vmem:[%s169 + $0x1700] sm:$0xff]
      %v914 = vld [vmem:[%s169 + $0x1708] sm:$0xff]
      %v915 = vld [vmem:[%s169 + $0x1710] sm:$0xff]
      %v916 = vld [vmem:[%s169 + $0x1718] sm:$0xff]
      %v917 = vld [vmem:[%s169 + $0x1720] sm:$0xff]
      %v918 = vld [vmem:[%s169 + $0x1728] sm:$0xff]
      %v919 = vld [vmem:[%s169 + $0x1730] sm:$0xff]
      %v920 = vld [vmem:[%s169 + $0x1738] sm:$0xff]
      %v921 = vld [vmem:[%s169 + $0x1740] sm:$0xff]
      %v922 = vld [vmem:[%s169 + $0x1748] sm:$0xff]
      %v923 = vld [vmem:[%s169 + $0x1750] sm:$0xff]
      %v924 = vld [vmem:[%s169 + $0x1758] sm:$0xff]
      %v925 = vld [vmem:[%s169 + $0x1760] sm:$0xff]
      %v926 = vld [vmem:[%s169 + $0x1768] sm:$0xff]
      %v927 = vld [vmem:[%s169 + $0x1770] sm:$0xff]
      %v928 = vld [vmem:[%s169 + $0x1778] sm:$0xff]
      %v929 = vld [vmem:[%s169 + $0x1780] sm:$0xff]
      %v930 = vld [vmem:[%s169 + $0x1788] sm:$0xff]
      %v931 = vld [vmem:[%s169 + $0x1790] sm:$0xff]
      %v932 = vld [vmem:[%s169 + $0x1798] sm:$0xff]
      %v933 = vld [vmem:[%s1] sm:$0xff]
      %v934 = vld [vmem:[%s1 + $0x8] sm:$0xff]
      %v935 = vld [vmem:[%s1 + $0x10] sm:$0xff]
      %v936 = vld [vmem:[%s1 + $0x18] sm:$0xff]
      %v937 = vld [vmem:[%s1 + $0x20] sm:$0xff]
      %v938 = vld [vmem:[%s1 + $0x28] sm:$0xff]
      %v939 = vld [vmem:[%s1 + $0x30] sm:$0xff]
      %v940 = vld [vmem:[%s1 + $0x38] sm:$0xff]
      %v941 = vld [vmem:[%s1 + $0x40] sm:$0xff]
      %v942 = vld [vmem:[%s1 + $0x48] sm:$0xff]
      %v943 = vld [vmem:[%s1 + $0x50] sm:$0xff]
      %v944 = vld [vmem:[%s1 + $0x58] sm:$0xff]
      %v945 = vld [vmem:[%s1 + $0x60] sm:$0xff]
      %v946 = vld [vmem:[%s1 + $0x68] sm:$0xff]
      %v947 = vld [vmem:[%s1 + $0x70] sm:$0xff]
      %v948 = vld [vmem:[%s1 + $0x78] sm:$0xff]
      %v949 = vld [vmem:[%s1 + $0x80] sm:$0xff]
      %v950 = vld [vmem:[%s1 + $0x88] sm:$0xff]
      %v951 = vld [vmem:[%s1 + $0x90] sm:$0xff]
      %v952 = vld [vmem:[%s1 + $0x98] sm:$0xff]
      %v953 = vld [vmem:[%s1 + $0xa0] sm:$0xff]
      %v954 = vld [vmem:[%s1 + $0xa8] sm:$0xff]
      %v955 = vld [vmem:[%s1 + $0xb0] sm:$0xff]
      %v956 = vld [vmem:[%s1 + $0xb8] sm:$0xff]
      %v957 = vld [vmem:[%s1 + $0xc0] sm:$0xff]
      %v958 = vld [vmem:[%s1 + $0xc8] sm:$0xff]
      %v959 = vld [vmem:[%s1 + $0xd0] sm:$0xff]
      %v960 = vld [vmem:[%s1 + $0xd8] sm:$0xff]
      %v961 = vld [vmem:[%s1 + $0xe0] sm:$0xff]
      %v962 = vld [vmem:[%s1 + $0xe8] sm:$0xff]
      %v963 = vld [vmem:[%s1 + $0xf0] sm:$0xff]
      %v964 = vld [vmem:[%s1 + $0xf8] sm:$0xff]
      %v965 = vld [vmem:[%s1 + $0x100] sm:$0xff]
      %v966 = vld [vmem:[%s1 + $0x108] sm:$0xff]
      %v967 = vld [vmem:[%s1 + $0x110] sm:$0xff]
      %v968 = vld [vmem:[%s1 + $0x118] sm:$0xff]
      %v969 = vld [vmem:[%s1 + $0x120] sm:$0xff]
      %v970 = vld [vmem:[%s1 + $0x128] sm:$0xff]
      %v971 = vld [vmem:[%s1 + $0x130] sm:$0xff]
      %v972 = vld [vmem:[%s1 + $0x138] sm:$0xff]
      %v973 = vld [vmem:[%s1 + $0x140] sm:$0xff]
      %v974 = vld [vmem:[%s1 + $0x148] sm:$0xff]
      %v975 = vld [vmem:[%s1 + $0x150] sm:$0xff]
      %v976 = vld [vmem:[%s1 + $0x158] sm:$0xff]
      %v977 = vld [vmem:[%s1 + $0x160] sm:$0xff]
      %v978 = vld [vmem:[%s1 + $0x168] sm:$0xff]
      %v979 = vld [vmem:[%s1 + $0x170] sm:$0xff]
      %v980 = vld [vmem:[%s1 + $0x178] sm:$0xff]
      %v981 = vld [vmem:[%s1 + $0x180] sm:$0xff]
      %v982 = vld [vmem:[%s1 + $0x188] sm:$0xff]
      %v983 = vld [vmem:[%s1 + $0x190] sm:$0xff]
      %v984 = vld [vmem:[%s1 + $0x198] sm:$0xff]
      %v985 = vld [vmem:[%s1 + $0x1a0] sm:$0xff]
      %v986 = vld [vmem:[%s1 + $0x1a8] sm:$0xff]
      %v987 = vld [vmem:[%s1 + $0x1b0] sm:$0xff]
      %v988 = vld [vmem:[%s1 + $0x1b8] sm:$0xff]
      %v989 = vld [vmem:[%s1 + $0x1c0] sm:$0xff]
      %v990 = vld [vmem:[%s1 + $0x1c8] sm:$0xff]
      %v991 = vld [vmem:[%s1 + $0x1d0] sm:$0xff]
      %v992 = vld [vmem:[%s1 + $0x1d8] sm:$0xff]
      %v993 = vld [vmem:[%s1 + $0x1e0] sm:$0xff]
      %v994 = vld [vmem:[%s1 + $0x1e8] sm:$0xff]
      %v995 = vld [vmem:[%s1 + $0x1f0] sm:$0xff]
      %v996 = vld [vmem:[%s1 + $0x1f8] sm:$0xff]
      %v997 = vld [vmem:[%s1 + $0x200] sm:$0xff]
      %v998 = vld [vmem:[%s1 + $0x208] sm:$0xff]
      %v999 = vld [vmem:[%s1 + $0x210] sm:$0xff]
      %v1000 = vld [vmem:[%s1 + $0x218] sm:$0xff]
      %v1001 = vld [vmem:[%s1 + $0x220] sm:$0xff]
      %v1002 = vld [vmem:[%s1 + $0x228] sm:$0xff]
      %v1003 = vld [vmem:[%s1 + $0x230] sm:$0xff]
      %v1004 = vld [vmem:[%s1 + $0x238] sm:$0xff]
      %v1005 = vld [vmem:[%s1 + $0x240] sm:$0xff]
      %v1006 = vld [vmem:[%s1 + $0x248] sm:$0xff]
      %v1007 = vld [vmem:[%s1 + $0x250] sm:$0xff]
      %v1008 = vld [vmem:[%s1 + $0x258] sm:$0xff]
      %v1009 = vld [vmem:[%s1 + $0x260] sm:$0xff]
      %v1010 = vld [vmem:[%s1 + $0x268] sm:$0xff]
      %v1011 = vld [vmem:[%s1 + $0x270] sm:$0xff]
      %v1012 = vld [vmem:[%s1 + $0x278] sm:$0xff]
      %v1013 = vld [vmem:[%s1 + $0x280] sm:$0xff]
      %v1014 = vld [vmem:[%s1 + $0x288] sm:$0xff]
      %v1015 = vld [vmem:[%s1 + $0x290] sm:$0xff]
      %v1016 = vld [vmem:[%s1 + $0x298] sm:$0xff]
      %v1017 = vld [vmem:[%s1 + $0x2a0] sm:$0xff]
      %v1018 = vld [vmem:[%s1 + $0x2a8] sm:$0xff]
      %v1019 = vld [vmem:[%s1 + $0x2b0] sm:$0xff]
      %v1020 = vld [vmem:[%s1 + $0x2b8] sm:$0xff]
      %v1021 = vld [vmem:[%s1 + $0x2c0] sm:$0xff]
      %v1022 = vld [vmem:[%s1 + $0x2c8] sm:$0xff]
      %v1023 = vld [vmem:[%s1 + $0x2d0] sm:$0xff]
      %v1024 = vld [vmem:[%s1 + $0x2d8] sm:$0xff]
      %v1025 = vld [vmem:[%s1 + $0x2e0] sm:$0xff]
      %v1026 = vld [vmem:[%s1 + $0x2e8] sm:$0xff]
      %v1027 = vld [vmem:[%s1 + $0x2f0] sm:$0xff]
      %v1028 = vld [vmem:[%s1 + $0x2f8] sm:$0xff]
      %v1029 = vld [vmem:[%s1 + $0x300] sm:$0xff]
      %v1030 = vld [vmem:[%s1 + $0x308] sm:$0xff]
      %v1031 = vld [vmem:[%s1 + $0x310] sm:$0xff]
      %v1032 = vld [vmem:[%s1 + $0x318] sm:$0xff]
      %v1033 = vld [vmem:[%s1 + $0x320] sm:$0xff]
      %v1034 = vld [vmem:[%s1 + $0x328] sm:$0xff]
      %v1035 = vld [vmem:[%s1 + $0x330] sm:$0xff]
      %v1036 = vld [vmem:[%s1 + $0x338] sm:$0xff]
      %v1037 = vld [vmem:[%s1 + $0x340] sm:$0xff]
      %v1038 = vld [vmem:[%s1 + $0x348] sm:$0xff]
      %v1039 = vld [vmem:[%s1 + $0x350] sm:$0xff]
      %v1040 = vld [vmem:[%s1 + $0x358] sm:$0xff]
      %v1041 = vld [vmem:[%s1 + $0x360] sm:$0xff]
      %v1042 = vld [vmem:[%s1 + $0x368] sm:$0xff]
      %v1043 = vld [vmem:[%s1 + $0x370] sm:$0xff]
      %v1044 = vld [vmem:[%s1 + $0x378] sm:$0xff]
      %v1045 = vld [vmem:[%s1 + $0x380] sm:$0xff]
      %v1046 = vld [vmem:[%s1 + $0x388] sm:$0xff]
      %v1047 = vld [vmem:[%s1 + $0x390] sm:$0xff]
      %v1048 = vld [vmem:[%s1 + $0x398] sm:$0xff]
      %v1049 = vld [vmem:[%s1 + $0x3a0] sm:$0xff]
      %v1050 = vld [vmem:[%s1 + $0x3a8] sm:$0xff]
      %v1051 = vld [vmem:[%s1 + $0x3b0] sm:$0xff]
      %v1052 = vld [vmem:[%s1 + $0x3b8] sm:$0xff]
      %v1053 = vld [vmem:[%s1 + $0x3c0] sm:$0xff]
      %v1054 = vld [vmem:[%s1 + $0x3c8] sm:$0xff]
      %v1055 = vld [vmem:[%s1 + $0x3d0] sm:$0xff]
      %v1056 = vld [vmem:[%s1 + $0x3d8] sm:$0xff]
      %v1057 = vld [vmem:[%s1 + $0x3e0] sm:$0xff]
      %v1058 = vld [vmem:[%s1 + $0x3e8] sm:$0xff]
      %v1059 = vld [vmem:[%s1 + $0x3f0] sm:$0xff]
      %v1060 = vld [vmem:[%s1 + $0x3f8] sm:$0xff]
      %v1061 = vld [vmem:[%s1 + $0x400] sm:$0xff]
      %v1062 = vld [vmem:[%s1 + $0x408] sm:$0xff]
      %v1063 = vld [vmem:[%s1 + $0x410] sm:$0xff]
      %v1064 = vld [vmem:[%s1 + $0x418] sm:$0xff]
      %v1065 = vld [vmem:[%s1 + $0x420] sm:$0xff]
      %v1066 = vld [vmem:[%s1 + $0x428] sm:$0xff]
      %v1067 = vld [vmem:[%s1 + $0x430] sm:$0xff]
      %v1068 = vld [vmem:[%s1 + $0x438] sm:$0xff]
      %v1069 = vld [vmem:[%s1 + $0x440] sm:$0xff]
      %v1070 = vld [vmem:[%s1 + $0x448] sm:$0xff]
      %v1071 = vld [vmem:[%s1 + $0x450] sm:$0xff]
      %v1072 = vld [vmem:[%s1 + $0x458] sm:$0xff]
      %v1073 = vld [vmem:[%s1 + $0x460] sm:$0xff]
      %v1074 = vld [vmem:[%s1 + $0x468] sm:$0xff]
      %v1075 = vld [vmem:[%s1 + $0x470] sm:$0xff]
      %v1076 = vld [vmem:[%s1 + $0x478] sm:$0xff]
      %v1077 = vld [vmem:[%s1 + $0x480] sm:$0xff]
      %v1078 = vld [vmem:[%s1 + $0x488] sm:$0xff]
      %v1079 = vld [vmem:[%s1 + $0x490] sm:$0xff]
      %v1080 = vld [vmem:[%s1 + $0x498] sm:$0xff]
      %v1081 = vld [vmem:[%s1 + $0x4a0] sm:$0xff]
      %v1082 = vld [vmem:[%s1 + $0x4a8] sm:$0xff]
      %v1083 = vld [vmem:[%s1 + $0x4b0] sm:$0xff]
      %v1084 = vld [vmem:[%s1 + $0x4b8] sm:$0xff]
      %v1085 = vld [vmem:[%s1 + $0x4c0] sm:$0xff]
      %v1086 = vld [vmem:[%s1 + $0x4c8] sm:$0xff]
      %v1087 = vld [vmem:[%s1 + $0x4d0] sm:$0xff]
      %v1088 = vld [vmem:[%s1 + $0x4d8] sm:$0xff]
      %v1089 = vld [vmem:[%s1 + $0x4e0] sm:$0xff]
      %v1090 = vld [vmem:[%s1 + $0x4e8] sm:$0xff]
      %v1091 = vld [vmem:[%s1 + $0x4f0] sm:$0xff]
      %v1092 = vld [vmem:[%s1 + $0x4f8] sm:$0xff]
      %v1093 = vld [vmem:[%s1 + $0x500] sm:$0xff]
      %v1094 = vld [vmem:[%s1 + $0x508] sm:$0xff]
      %v1095 = vld [vmem:[%s1 + $0x510] sm:$0xff]
      %v1096 = vld [vmem:[%s1 + $0x518] sm:$0xff]
      %v1097 = vld [vmem:[%s1 + $0x520] sm:$0xff]
      %v1098 = vld [vmem:[%s1 + $0x528] sm:$0xff]
      %v1099 = vld [vmem:[%s1 + $0x530] sm:$0xff]
      %v1100 = vld [vmem:[%s1 + $0x538] sm:$0xff]
      %v1101 = vld [vmem:[%s1 + $0x540] sm:$0xff]
      %v1102 = vld [vmem:[%s1 + $0x548] sm:$0xff]
      %v1103 = vld [vmem:[%s1 + $0x550] sm:$0xff]
      %v1104 = vld [vmem:[%s1 + $0x558] sm:$0xff]
      %v1105 = vld [vmem:[%s1 + $0x560] sm:$0xff]
      %v1106 = vld [vmem:[%s1 + $0x568] sm:$0xff]
      %v1107 = vld [vmem:[%s1 + $0x570] sm:$0xff]
      %v1108 = vld [vmem:[%s1 + $0x578] sm:$0xff]
      %v1109 = vld [vmem:[%s1 + $0x580] sm:$0xff]
      %v1110 = vld [vmem:[%s1 + $0x588] sm:$0xff]
      %v1111 = vld [vmem:[%s1 + $0x590] sm:$0xff]
      %v1112 = vld [vmem:[%s1 + $0x598] sm:$0xff]
      %v1113 = vld [vmem:[%s1 + $0x5a0] sm:$0xff]
      %v1114 = vld [vmem:[%s1 + $0x5a8] sm:$0xff]
      %v1115 = vld [vmem:[%s1 + $0x5b0] sm:$0xff]
      %v1116 = vld [vmem:[%s1 + $0x5b8] sm:$0xff]
      %v1117 = vld [vmem:[%s1 + $0x5c0] sm:$0xff]
      %v1118 = vld [vmem:[%s1 + $0x5c8] sm:$0xff]
      %v1119 = vld [vmem:[%s1 + $0x5d0] sm:$0xff]
      %v1120 = vld [vmem:[%s1 + $0x5d8] sm:$0xff]
      %v1121 = vld [vmem:[%s1 + $0x5e0] sm:$0xff]
      %v1122 = vld [vmem:[%s1 + $0x5e8] sm:$0xff]
      %v1123 = vld [vmem:[%s1 + $0x5f0] sm:$0xff]
      %v1124 = vld [vmem:[%s1 + $0x5f8] sm:$0xff]
      %v1125 = vld [vmem:[%s1 + $0x600] sm:$0xff]
      %v1126 = vld [vmem:[%s1 + $0x608] sm:$0xff]
      %v1127 = vld [vmem:[%s1 + $0x610] sm:$0xff]
      %v1128 = vld [vmem:[%s1 + $0x618] sm:$0xff]
      %v1129 = vld [vmem:[%s1 + $0x620] sm:$0xff]
      %v1130 = vld [vmem:[%s1 + $0x628] sm:$0xff]
      %v1131 = vld [vmem:[%s1 + $0x630] sm:$0xff]
      %v1132 = vld [vmem:[%s1 + $0x638] sm:$0xff]
      %v1133 = vld [vmem:[%s1 + $0x640] sm:$0xff]
      %v1134 = vld [vmem:[%s1 + $0x648] sm:$0xff]
      %v1135 = vld [vmem:[%s1 + $0x650] sm:$0xff]
      %v1136 = vld [vmem:[%s1 + $0x658] sm:$0xff]
      %v1137 = vld [vmem:[%s1 + $0x660] sm:$0xff]
      %v1138 = vld [vmem:[%s1 + $0x668] sm:$0xff]
      %v1139 = vld [vmem:[%s1 + $0x670] sm:$0xff]
      %v1140 = vld [vmem:[%s1 + $0x678] sm:$0xff]
      %v1141 = vld [vmem:[%s1 + $0x680] sm:$0xff]
      %v1142 = vld [vmem:[%s1 + $0x688] sm:$0xff]
      %v1143 = vld [vmem:[%s1 + $0x690] sm:$0xff]
      %v1144 = vld [vmem:[%s1 + $0x698] sm:$0xff]
      %v1145 = vld [vmem:[%s1 + $0x6a0] sm:$0xff]
      %v1146 = vld [vmem:[%s1 + $0x6a8] sm:$0xff]
      %v1147 = vld [vmem:[%s1 + $0x6b0] sm:$0xff]
      %v1148 = vld [vmem:[%s1 + $0x6b8] sm:$0xff]
      %v1149 = vld [vmem:[%s1 + $0x6c0] sm:$0xff]
      %v1150 = vld [vmem:[%s1 + $0x6c8] sm:$0xff]
      %v1151 = vld [vmem:[%s1 + $0x6d0] sm:$0xff]
      %v1152 = vld [vmem:[%s1 + $0x6d8] sm:$0xff]
      %v1153 = vld [vmem:[%s1 + $0x6e0] sm:$0xff]
      %v1154 = vld [vmem:[%s1 + $0x6e8] sm:$0xff]
      %v1155 = vld [vmem:[%s1 + $0x6f0] sm:$0xff]
      %v1156 = vld [vmem:[%s1 + $0x6f8] sm:$0xff]
      %v1157 = vld [vmem:[%s1 + $0x700] sm:$0xff]
      %v1158 = vld [vmem:[%s1 + $0x708] sm:$0xff]
      %v1159 = vld [vmem:[%s1 + $0x710] sm:$0xff]
      %v1160 = vld [vmem:[%s1 + $0x718] sm:$0xff]
      %v1161 = vld [vmem:[%s1 + $0x720] sm:$0xff]
      %v1162 = vld [vmem:[%s1 + $0x728] sm:$0xff]
      %v1163 = vld [vmem:[%s1 + $0x730] sm:$0xff]
      %v1164 = vld [vmem:[%s1 + $0x738] sm:$0xff]
      %v1165 = vld [vmem:[%s1 + $0x740] sm:$0xff]
      %v1166 = vld [vmem:[%s1 + $0x748] sm:$0xff]
      %v1167 = vld [vmem:[%s1 + $0x750] sm:$0xff]
      %v1168 = vld [vmem:[%s1 + $0x758] sm:$0xff]
      %v1169 = vld [vmem:[%s1 + $0x760] sm:$0xff]
      %v1170 = vld [vmem:[%s1 + $0x768] sm:$0xff]
      %v1171 = vld [vmem:[%s1 + $0x770] sm:$0xff]
      %v1172 = vld [vmem:[%s1 + $0x778] sm:$0xff]
      %v1173 = vld [vmem:[%s1 + $0x780] sm:$0xff]
      %v1174 = vld [vmem:[%s1 + $0x788] sm:$0xff]
      %v1175 = vld [vmem:[%s1 + $0x790] sm:$0xff]
      %v1176 = vld [vmem:[%s1 + $0x798] sm:$0xff]
      %v1177 = vld [vmem:[%s1 + $0x7a0] sm:$0xff]
      %v1178 = vld [vmem:[%s1 + $0x7a8] sm:$0xff]
      %v1179 = vld [vmem:[%s1 + $0x7b0] sm:$0xff]
      %v1180 = vld [vmem:[%s1 + $0x7b8] sm:$0xff]
      %v1181 = vld [vmem:[%s1 + $0x7c0] sm:$0xff]
      %v1182 = vld [vmem:[%s1 + $0x7c8] sm:$0xff]
      %v1183 = vld [vmem:[%s1 + $0x7d0] sm:$0xff]
      %v1184 = vld [vmem:[%s1 + $0x7d8] sm:$0xff]
      %v1185 = vld [vmem:[%s1 + $0x7e0] sm:$0xff]
      %v1186 = vld [vmem:[%s1 + $0x7e8] sm:$0xff]
      %v1187 = vld [vmem:[%s1 + $0x7f0] sm:$0xff]
      %v1188 = vld [vmem:[%s1 + $0x7f8] sm:$0xff]
      %v1189 = vld [vmem:[%s1 + $0x800] sm:$0xff]
      %v1190 = vld [vmem:[%s1 + $0x808] sm:$0xff]
      %v1191 = vld [vmem:[%s1 + $0x810] sm:$0xff]
      %v1192 = vld [vmem:[%s1 + $0x818] sm:$0xff]
      %v1193 = vld [vmem:[%s1 + $0x820] sm:$0xff]
      %v1194 = vld [vmem:[%s1 + $0x828] sm:$0xff]
      %v1195 = vld [vmem:[%s1 + $0x830] sm:$0xff]
      %v1196 = vld [vmem:[%s1 + $0x838] sm:$0xff]
      %v1197 = vld [vmem:[%s1 + $0x840] sm:$0xff]
      %v1198 = vld [vmem:[%s1 + $0x848] sm:$0xff]
      %v1199 = vld [vmem:[%s1 + $0x850] sm:$0xff]
      %v1200 = vld [vmem:[%s1 + $0x858] sm:$0xff]
      %v1201 = vld [vmem:[%s1 + $0x860] sm:$0xff]
      %v1202 = vld [vmem:[%s1 + $0x868] sm:$0xff]
      %v1203 = vld [vmem:[%s1 + $0x870] sm:$0xff]
      %v1204 = vld [vmem:[%s1 + $0x878] sm:$0xff]
      %v1205 = vld [vmem:[%s1 + $0x880] sm:$0xff]
      %v1206 = vld [vmem:[%s1 + $0x888] sm:$0xff]
      %v1207 = vld [vmem:[%s1 + $0x890] sm:$0xff]
      %v1208 = vld [vmem:[%s1 + $0x898] sm:$0xff]
      %v1209 = vld [vmem:[%s1 + $0x8a0] sm:$0xff]
      %v1210 = vld [vmem:[%s1 + $0x8a8] sm:$0xff]
      %v1211 = vld [vmem:[%s1 + $0x8b0] sm:$0xff]
      %v1212 = vld [vmem:[%s1 + $0x8b8] sm:$0xff]
      %v1213 = vld [vmem:[%s1 + $0x8c0] sm:$0xff]
      %v1214 = vld [vmem:[%s1 + $0x8c8] sm:$0xff]
      %v1215 = vld [vmem:[%s1 + $0x8d0] sm:$0xff]
      %v1216 = vld [vmem:[%s1 + $0x8d8] sm:$0xff]
      %v1217 = vld [vmem:[%s1 + $0x8e0] sm:$0xff]
      %v1218 = vld [vmem:[%s1 + $0x8e8] sm:$0xff]
      %v1219 = vld [vmem:[%s1 + $0x8f0] sm:$0xff]
      %v1220 = vld [vmem:[%s1 + $0x8f8] sm:$0xff]
      %v1221 = vld [vmem:[%s1 + $0x900] sm:$0xff]
      %v1222 = vld [vmem:[%s1 + $0x908] sm:$0xff]
      %v1223 = vld [vmem:[%s1 + $0x910] sm:$0xff]
      %v1224 = vld [vmem:[%s1 + $0x918] sm:$0xff]
      %v1225 = vld [vmem:[%s1 + $0x920] sm:$0xff]
      %v1226 = vld [vmem:[%s1 + $0x928] sm:$0xff]
      %v1227 = vld [vmem:[%s1 + $0x930] sm:$0xff]
      %v1228 = vld [vmem:[%s1 + $0x938] sm:$0xff]
      %v1229 = vld [vmem:[%s1 + $0x940] sm:$0xff]
      %v1230 = vld [vmem:[%s1 + $0x948] sm:$0xff]
      %v1231 = vld [vmem:[%s1 + $0x950] sm:$0xff]
      %v1232 = vld [vmem:[%s1 + $0x958] sm:$0xff]
      %v1233 = vld [vmem:[%s1 + $0x960] sm:$0xff]
      %v1234 = vld [vmem:[%s1 + $0x968] sm:$0xff]
      %v1235 = vld [vmem:[%s1 + $0x970] sm:$0xff]
      %v1236 = vld [vmem:[%s1 + $0x978] sm:$0xff]
      %v1237 = vld [vmem:[%s1 + $0x980] sm:$0xff]
      %v1238 = vld [vmem:[%s1 + $0x988] sm:$0xff]
      %v1239 = vld [vmem:[%s1 + $0x990] sm:$0xff]
      %v1240 = vld [vmem:[%s1 + $0x998] sm:$0xff]
      %v1241 = vld [vmem:[%s1 + $0x9a0] sm:$0xff]
      %v1242 = vld [vmem:[%s1 + $0x9a8] sm:$0xff]
      %v1243 = vld [vmem:[%s1 + $0x9b0] sm:$0xff]
      %v1244 = vld [vmem:[%s1 + $0x9b8] sm:$0xff]
      %v1245 = vld [vmem:[%s1 + $0x9c0] sm:$0xff]
      %v1246 = vld [vmem:[%s1 + $0x9c8] sm:$0xff]
      %v1247 = vld [vmem:[%s1 + $0x9d0] sm:$0xff]
      %v1248 = vld [vmem:[%s1 + $0x9d8] sm:$0xff]
      %v1249 = vld [vmem:[%s1 + $0x9e0] sm:$0xff]
      %v1250 = vld [vmem:[%s1 + $0x9e8] sm:$0xff]
      %v1251 = vld [vmem:[%s1 + $0x9f0] sm:$0xff]
      %v1252 = vld [vmem:[%s1 + $0x9f8] sm:$0xff]
      %v1253 = vld [vmem:[%s1 + $0xa00] sm:$0xff]
      %v1254 = vld [vmem:[%s1 + $0xa08] sm:$0xff]
      %v1255 = vld [vmem:[%s1 + $0xa10] sm:$0xff]
      %v1256 = vld [vmem:[%s1 + $0xa18] sm:$0xff]
      %v1257 = vld [vmem:[%s2] sm:$0x1]
      %v1259 = vlaneseq
      %v1260 = vshrl.u32 %v1259, 7
      %v1261 = vsub.s32 0, %v1260
      %v1262 = vrot.slane %v1257, %v1261
      %vm1264 = vcmask 261120
      %v1266 = vsel %vm1264, %v197, 0
      %v1269 = vsel %vm1264, %v218, 0
      %v1272 = vsel %vm1264, %v239, 0
      %v1275 = vsel %vm1264, %v260, 0
      %v1278 = vsel %vm1264, %v281, 0
      %v1281 = vsel %vm1264, %v302, 0
      %v1284 = vsel %vm1264, %v323, 0
      %v1287 = vsel %vm1264, %v344, 0
      %v1290 = vsel %vm1264, %v365, 0
      %v1293 = vsel %vm1264, %v386, 0
      %v1296 = vsel %vm1264, %v407, 0
      %v1299 = vsel %vm1264, %v428, 0
      %v1302 = vsel %vm1264, %v449, 0
      %v1305 = vsel %vm1264, %v470, 0
      %v1308 = vsel %vm1264, %v491, 0
      %v1311 = vsel %vm1264, %v512, 0
      %v1314 = vsel %vm1264, %v533, 0
      %v1317 = vsel %vm1264, %v554, 0
      %v1320 = vsel %vm1264, %v575, 0
      %v1323 = vsel %vm1264, %v596, 0
      %v1326 = vsel %vm1264, %v617, 0
      %v1329 = vsel %vm1264, %v638, 0
      %v1332 = vsel %vm1264, %v659, 0
      %v1335 = vsel %vm1264, %v680, 0
      %v1338 = vsel %vm1264, %v701, 0
      %v1341 = vsel %vm1264, %v722, 0
      %v1344 = vsel %vm1264, %v743, 0
      %v1347 = vsel %vm1264, %v764, 0
      %v1350 = vsel %vm1264, %v785, 0
      %v1353 = vsel %vm1264, %v806, 0
      %v1356 = vsel %vm1264, %v827, 0
      %v1359 = vsel %vm1264, %v848, 0
      %v1362 = vsel %vm1264, %v869, 0
      %v1365 = vsel %vm1264, %v890, 0
      %v1368 = vsel %vm1264, %v911, 0
      %v1371 = vsel %vm1264, %v932, 0
      %1373 = vmatprep.subr.mxu0 0.0
      %1374 = vmatpush1.msra.mxu0 %v933
      %1375 = vmatprep.subr.mxu0 0.0
      %1376 = vmatpush1.msra.mxu0 %v934
      %1377 = vmatprep.subr.mxu0 0.0
      %1378 = vmatpush1.msra.mxu0 %v935
      %1379 = vmatprep.subr.mxu0 0.0
      %1380 = vmatpush1.msra.mxu0 %v936
      %1381 = vmatprep.subr.mxu0 0.0
      %1382 = vmatpush1.msra.mxu0 %v937
      %1383 = vmatprep.subr.mxu0 0.0
      %1384 = vmatpush1.msra.mxu0 %v938
      %1385 = vmatprep.subr.mxu0 0.0
      %1386 = vmatpush1.msra.mxu0 %v939
      %1387 = vmatprep.subr.mxu0 0.0
      %1388 = vmatpush1.msra.mxu0 %v940
      %1389 = vmatprep.subr.mxu0 0.0
      %1390 = vmatpush1.msra.mxu0 %v941
      %1391 = vmatprep.subr.mxu0 0.0
      %1392 = vmatpush1.msra.mxu0 %v942
      %1393 = vmatprep.subr.mxu0 0.0
      %1394 = vmatpush1.msra.mxu0 %v943
      %1395 = vmatprep.subr.mxu0 0.0
      %1396 = vmatpush1.msra.mxu0 %v944
      %1397 = vmatprep.subr.mxu0 0.0
      %1398 = vmatpush1.msra.mxu0 %v945
      %1399 = vmatprep.subr.mxu0 0.0
      %1400 = vmatpush1.msra.mxu0 %v946
      %1401 = vmatprep.subr.mxu0 0.0
      %1402 = vmatpush1.msra.mxu0 %v947
      %1403 = vmatprep.subr.mxu0 0.0
      %1404 = vmatpush1.msra.mxu0 %v948
      %1405 = vmatprep.subr.mxu0 0.0
      %1406 = vmatpush1.msra.mxu0 %v949
      %1407 = vmatprep.subr.mxu0 0.0
      %1408 = vmatpush1.msra.mxu0 %v950
      %1409 = vmatprep.subr.mxu0 0.0
      %1410 = vmatpush1.msra.mxu0 %v951
      %1411 = vmatprep.subr.mxu0 0.0
      %1412 = vmatpush1.msra.mxu0 %v952
      %1413 = vmatprep.subr.mxu0 0.0
      %1414 = vmatpush1.msra.mxu0 %v953
      %1415 = vmatprep.subr.mxu0 0.0
      %1416 = vmatpush1.msra.mxu0 %v954
      %1417 = vmatprep.subr.mxu0 0.0
      %1418 = vmatpush1.msra.mxu0 %v955
      %1419 = vmatprep.subr.mxu0 0.0
      %1420 = vmatpush1.msra.mxu0 %v956
      %1421 = vmatprep.subr.mxu0 0.0
      %1422 = vmatpush1.msra.mxu0 %v957
      %1423 = vmatprep.subr.mxu0 0.0
      %1424 = vmatpush1.msra.mxu0 %v958
      %1425 = vmatprep.subr.mxu0 0.0
      %1426 = vmatpush1.msra.mxu0 %v959
      %1427 = vmatprep.subr.mxu0 0.0
      %1428 = vmatpush1.msra.mxu0 %v960
      %1429 = vmatprep.subr.mxu0 0.0
      %1430 = vmatpush1.msra.mxu0 %v961
      %1431 = vmatprep.subr.mxu0 0.0
      %1432 = vmatpush1.msra.mxu0 %v962
      %1433 = vmatprep.subr.mxu0 0.0
      %1434 = vmatpush1.msra.mxu0 %v963
      %1435 = vmatprep.subr.mxu0 0.0
      %1436 = vmatpush1.msra.mxu0 %v964
      %1437 = vmatprep.mubr.f32.mxu0 %v178
      %1438 = vmatmul.mubr.f32.gmra.mrb[0].mxu0 %v177
      %v1439 = vpop.f32.mrb[0].mxu0
      %v1440 = vadd.f32 %v1262, %v1439
      %v1441 = vpop.f32.mrb[0].mxu0
      %1442 = vmatprep.mubr.f32.mxu0 %v199
      %1443 = vmatmul.mubr.f32.gmra.mrb[0].mxu0 %v198
      %v1444 = vpop.f32.mrb[0].mxu0
      %v1445 = vadd.f32 %v1262, %v1444
      %v1446 = vpop.f32.mrb[0].mxu0
      %1447 = vmatprep.mubr.f32.mxu0 %v220
      %1448 = vmatmul.mubr.f32.gmra.mrb[0].mxu0 %v219
      %v1449 = vpop.f32.mrb[0].mxu0
      %v1450 = vadd.f32 %v1262, %v1449
      %v1451 = vpop.f32.mrb[0].mxu0
      %1452 = vmatprep.mubr.f32.mxu0 %v241
      %1453 = vmatmul.mubr.f32.gmra.mrb[0].mxu0 %v240
      %v1454 = vpop.f32.mrb[0].mxu0
      %v1455 = vadd.f32 %v1262, %v1454
      %v1456 = vpop.f32.mrb[0].mxu0
      %1457 = vmatprep.mubr.f32.mxu0 %v262
      %1458 = vmatmul.mubr.f32.gmra.mrb[0].mxu0 %v261
      %v1459 = vpop.f32.mrb[0].mxu0
      %v1460 = vadd.f32 %v1262, %v1459
      %v1461 = vpop.f32.mrb[0].mxu0
      %1462 = vmatprep.mubr.f32.mxu0 %v283
      %1463 = vmatmul.mubr.f32.gmra.mrb[0].mxu0 %v282
      %v1464 = vpop.f32.mrb[0].mxu0
      %v1465 = vadd.f32 %v1262, %v1464
      %v1466 = vpop.f32.mrb[0].mxu0
      %1467 = vmatprep.mubr.f32.mxu0 %v304
      %1468 = vmatmul.mubr.f32.gmra.mrb[0].mxu0 %v303
      %v1469 = vpop.f32.mrb[0].mxu0
      %v1470 = vadd.f32 %v1262, %v1469
      %v1471 = vpop.f32.mrb[0].mxu0
      %1472 = vmatprep.mubr.f32.mxu0 %v325
      %1473 = vmatmul.mubr.f32.gmra.mrb[0].mxu0 %v324
      %v1474 = vpop.f32.mrb[0].mxu0
      %v1475 = vadd.f32 %v1262, %v1474
      %v1476 = vpop.f32.mrb[0].mxu0
      %1477 = vmatprep.mubr.f32.mxu0 %v346
      %1478 = vmatmul.mubr.f32.gmra.mrb[0].mxu0 %v345
      %v1479 = vpop.f32.mrb[0].mxu0
      %v1480 = vadd.f32 %v1262, %v1479
      %v1481 = vpop.f32.mrb[0].mxu0
      %1482 = vmatprep.mubr.f32.mxu0 %v367
      %1483 = vmatmul.mubr.f32.gmra.mrb[0].mxu0 %v366
      %v1484 = vpop.f32.mrb[0].mxu0
      %v1485 = vadd.f32 %v1262, %v1484
      %v1486 = vpop.f32.mrb[0].mxu0
      %1487 = vmatprep.mubr.f32.mxu0 %v388
      %1488 = vmatmul.mubr.f32.gmra.mrb[0].mxu0 %v387
      %v1489 = vpop.f32.mrb[0].mxu0
      %v1490 = vadd.f32 %v1262, %v1489
      %v1491 = vpop.f32.mrb[0].mxu0
      %1492 = vmatprep.mubr.f32.mxu0 %v409
      %1493 = vmatmul.mubr.f32.gmra.mrb[0].mxu0 %v408
      %v1494 = vpop.f32.mrb[0].mxu0
      %v1495 = vadd.f32 %v1262, %v1494
      %v1496 = vpop.f32.mrb[0].mxu0
      %1497 = vmatprep.mubr.f32.mxu0 %v430
      %1498 = vmatmul.mubr.f32.gmra.mrb[0].mxu0 %v429
      %v1499 = vpop.f32.mrb[0].mxu0
      %v1500 = vadd.f32 %v1262, %v1499
      %v1501 = vpop.f32.mrb[0].mxu0
      %1502 = vmatprep.mubr.f32.mxu0 %v451
      %1503 = vmatmul.mubr.f32.gmra.mrb[0].mxu0 %v450
      %v1504 = vpop.f32.mrb[0].mxu0
      %v1505 = vadd.f32 %v1262, %v1504
      %v1506 = vpop.f32.mrb[0].mxu0
      %1507 = vmatprep.mubr.f32.mxu0 %v472
      %1508 = vmatmul.mubr.f32.gmra.mrb[0].mxu0 %v471
      %v1509 = vpop.f32.mrb[0].mxu0
      %v1510 = vadd.f32 %v1262, %v1509
      %v1511 = vpop.f32.mrb[0].mxu0
      %1512 = vmatprep.mubr.f32.mxu0 %v493
      %1513 = vmatmul.mubr.f32.gmra.mrb[0].mxu0 %v492
      %v1514 = vpop.f32.mrb[0].mxu0
      %v1515 = vadd.f32 %v1262, %v1514
      %v1516 = vpop.f32.mrb[0].mxu0
      %1517 = vmatprep.mubr.f32.mxu0 %v514
      %1518 = vmatmul.mubr.f32.gmra.mrb[0].mxu0 %v513
      %v1519 = vpop.f32.mrb[0].mxu0
      %v1520 = vadd.f32 %v1262, %v1519
      %v1521 = vpop.f32.mrb[0].mxu0
      %1522 = vmatprep.mubr.f32.mxu0 %v535
      %1523 = vmatmul.mubr.f32.gmra.mrb[0].mxu0 %v534
      %v1524 = vpop.f32.mrb[0].mxu0
      %v1525 = vadd.f32 %v1262, %v1524
      %v1526 = vpop.f32.mrb[0].mxu0
      %1527 = vmatprep.mubr.f32.mxu0 %v556
      %1528 = vmatmul.mubr.f32.gmra.mrb[0].mxu0 %v555
      %v1529 = vpop.f32.mrb[0].mxu0
      %v1530 = vadd.f32 %v1262, %v1529
      %v1531 = vpop.f32.mrb[0].mxu0
      %1532 = vmatprep.mubr.f32.mxu0 %v577
      %1533 = vmatmul.mubr.f32.gmra.mrb[0].mxu0 %v576
      %v1534 = vpop.f32.mrb[0].mxu0
      %v1535 = vadd.f32 %v1262, %v1534
      %v1536 = vpop.f32.mrb[0].mxu0
      %1537 = vmatprep.mubr.f32.mxu0 %v598
      %1538 = vmatmul.mubr.f32.gmra.mrb[0].mxu0 %v597
      %v1539 = vpop.f32.mrb[0].mxu0
      %v1540 = vadd.f32 %v1262, %v1539
      %v1541 = vpop.f32.mrb[0].mxu0
      %1542 = vmatprep.mubr.f32.mxu0 %v619
      %1543 = vmatmul.mubr.f32.gmra.mrb[0].mxu0 %v618
      %v1544 = vpop.f32.mrb[0].mxu0
      %v1545 = vadd.f32 %v1262, %v1544
      %v1546 = vpop.f32.mrb[0].mxu0
      %1547 = vmatprep.mubr.f32.mxu0 %v640
      %1548 = vmatmul.mubr.f32.gmra.mrb[0].mxu0 %v639
      %v1549 = vpop.f32.mrb[0].mxu0
      %v1550 = vadd.f32 %v1262, %v1549
      %v1551 = vpop.f32.mrb[0].mxu0
      %1552 = vmatprep.mubr.f32.mxu0 %v661
      %1553 = vmatmul.mubr.f32.gmra.mrb[0].mxu0 %v660
      %v1554 = vpop.f32.mrb[0].mxu0
      %v1555 = vadd.f32 %v1262, %v1554
      %v1556 = vpop.f32.mrb[0].mxu0
      %1557 = vmatprep.mubr.f32.mxu0 %v682
      %1558 = vmatmul.mubr.f32.gmra.mrb[0].mxu0 %v681
      %v1559 = vpop.f32.mrb[0].mxu0
      %v1560 = vadd.f32 %v1262, %v1559
      %v1561 = vpop.f32.mrb[0].mxu0
      %1562 = vmatprep.mubr.f32.mxu0 %v703
      %1563 = vmatmul.mubr.f32.gmra.mrb[0].mxu0 %v702
      %v1564 = vpop.f32.mrb[0].mxu0
      %v1565 = vadd.f32 %v1262, %v1564
      %v1566 = vpop.f32.mrb[0].mxu0
      %1567 = vmatprep.mubr.f32.mxu0 %v724
      %1568 = vmatmul.mubr.f32.gmra.mrb[0].mxu0 %v723
      %v1569 = vpop.f32.mrb[0].mxu0
      %v1570 = vadd.f32 %v1262, %v1569
      %v1571 = vpop.f32.mrb[0].mxu0
      %1572 = vmatprep.mubr.f32.mxu0 %v745
      %1573 = vmatmul.mubr.f32.gmra.mrb[0].mxu0 %v744
      %v1574 = vpop.f32.mrb[0].mxu0
      %v1575 = vadd.f32 %v1262, %v1574
      %v1576 = vpop.f32.mrb[0].mxu0
      %1577 = vmatprep.mubr.f32.mxu0 %v766
      %1578 = vmatmul.mubr.f32.gmra.mrb[0].mxu0 %v765
      %v1579 = vpop.f32.mrb[0].mxu0
      %v1580 = vadd.f32 %v1262, %v1579
      %v1581 = vpop.f32.mrb[0].mxu0
      %1582 = vmatprep.mubr.f32.mxu0 %v787
      %1583 = vmatmul.mubr.f32.gmra.mrb[0].mxu0 %v786
      %v1584 = vpop.f32.mrb[0].mxu0
      %v1585 = vadd.f32 %v1262, %v1584
      %v1586 = vpop.f32.mrb[0].mxu0
      %1587 = vmatprep.mubr.f32.mxu0 %v808
      %1588 = vmatmul.mubr.f32.gmra.mrb[0].mxu0 %v807
      %v1589 = vpop.f32.mrb[0].mxu0
      %v1590 = vadd.f32 %v1262, %v1589
      %v1591 = vpop.f32.mrb[0].mxu0
      %1592 = vmatprep.mubr.f32.mxu0 %v829
      %1593 = vmatmul.mubr.f32.gmra.mrb[0].mxu0 %v828
      %v1594 = vpop.f32.mrb[0].mxu0
      %v1595 = vadd.f32 %v1262, %v1594
      %v1596 = vpop.f32.mrb[0].mxu0
      %1597 = vmatprep.mubr.f32.mxu0 %v850
      %1598 = vmatmul.mubr.f32.gmra.mrb[0].mxu0 %v849
      %v1599 = vpop.f32.mrb[0].mxu0
      %v1600 = vadd.f32 %v1262, %v1599
      %v1601 = vpop.f32.mrb[0].mxu0
      %1602 = vmatprep.mubr.f32.mxu0 %v871
      %1603 = vmatmul.mubr.f32.gmra.mrb[0].mxu0 %v870
      %v1604 = vpop.f32.mrb[0].mxu0
      %v1605 = vadd.f32 %v1262, %v1604
      %v1606 = vpop.f32.mrb[0].mxu0
      %1607 = vmatprep.mubr.f32.mxu0 %v892
      %1608 = vmatmul.mubr.f32.gmra.mrb[0].mxu0 %v891
      %v1609 = vpop.f32.mrb[0].mxu0
      %v1610 = vadd.f32 %v1262, %v1609
      %v1611 = vpop.f32.mrb[0].mxu0
      %1612 = vmatprep.mubr.f32.mxu0 %v913
      %1613 = vmatmul.mubr.f32.gmra.mrb[0].mxu0 %v912
      %v1614 = vpop.f32.mrb[0].mxu0
      %v1615 = vadd.f32 %v1262, %v1614
      %v1616 = vpop.f32.mrb[0].mxu0
      %1617 = vdwg.mxu0
      %1618 = vmatprep.subr.mxu0 0.0
      %1619 = vmatpush1.msra.mxu0 %v965
      %1620 = vmatprep.subr.mxu0 0.0
      %1621 = vmatpush1.msra.mxu0 %v966
      %1622 = vmatprep.subr.mxu0 0.0
      %1623 = vmatpush1.msra.mxu0 %v967
      %1624 = vmatprep.subr.mxu0 0.0
      %1625 = vmatpush1.msra.mxu0 %v968
      %1626 = vmatprep.subr.mxu0 0.0
      %1627 = vmatpush1.msra.mxu0 %v969
      %1628 = vmatprep.subr.mxu0 0.0
      %1629 = vmatpush1.msra.mxu0 %v970
      %1630 = vmatprep.subr.mxu0 0.0
      %1631 = vmatpush1.msra.mxu0 %v971
      %1632 = vmatprep.subr.mxu0 0.0
      %1633 = vmatpush1.msra.mxu0 %v972
      %1634 = vmatprep.subr.mxu0 0.0
      %1635 = vmatpush1.msra.mxu0 %v973
      %1636 = vmatprep.subr.mxu0 0.0
      %1637 = vmatpush1.msra.mxu0 %v974
      %1638 = vmatprep.subr.mxu0 0.0
      %1639 = vmatpush1.msra.mxu0 %v975
      %1640 = vmatprep.subr.mxu0 0.0
      %1641 = vmatpush1.msra.mxu0 %v976
      %1642 = vmatprep.subr.mxu0 0.0
      %1643 = vmatpush1.msra.mxu0 %v977
      %1644 = vmatprep.subr.mxu0 0.0
      %1645 = vmatpush1.msra.mxu0 %v978
      %1646 = vmatprep.subr.mxu0 0.0
      %1647 = vmatpush1.msra.mxu0 %v979
      %1648 = vmatprep.subr.mxu0 0.0
      %1649 = vmatpush1.msra.mxu0 %v980
      %1650 = vmatprep.subr.mxu0 0.0
      %1651 = vmatpush1.msra.mxu0 %v981
      %1652 = vmatprep.subr.mxu0 0.0
      %1653 = vmatpush1.msra.mxu0 %v982
      %1654 = vmatprep.subr.mxu0 0.0
      %1655 = vmatpush1.msra.mxu0 %v983
      %1656 = vmatprep.subr.mxu0 0.0
      %1657 = vmatpush1.msra.mxu0 %v984
      %1658 = vmatprep.subr.mxu0 0.0
      %1659 = vmatpush1.msra.mxu0 %v985
      %1660 = vmatprep.subr.mxu0 0.0
      %1661 = vmatpush1.msra.mxu0 %v986
      %1662 = vmatprep.subr.mxu0 0.0
      %1663 = vmatpush1.msra.mxu0 %v987
      %1664 = vmatprep.subr.mxu0 0.0
      %1665 = vmatpush1.msra.mxu0 %v988
      %1666 = vmatprep.subr.mxu0 0.0
      %1667 = vmatpush1.msra.mxu0 %v989
      %1668 = vmatprep.subr.mxu0 0.0
      %1669 = vmatpush1.msra.mxu0 %v990
      %1670 = vmatprep.subr.mxu0 0.0
      %1671 = vmatpush1.msra.mxu0 %v991
      %1672 = vmatprep.subr.mxu0 0.0
      %1673 = vmatpush1.msra.mxu0 %v992
      %1674 = vmatprep.subr.mxu0 0.0
      %1675 = vmatpush1.msra.mxu0 %v993
      %1676 = vmatprep.subr.mxu0 0.0
      %1677 = vmatpush1.msra.mxu0 %v994
      %1678 = vmatprep.subr.mxu0 0.0
      %1679 = vmatpush1.msra.mxu0 %v995
      %1680 = vmatprep.subr.mxu0 0.0
      %1681 = vmatpush1.msra.mxu0 %v996
      %1682 = vmatprep.mubr.f32.mxu0 %v180
      %1683 = vmatmul.mubr.f32.gmra.mrb[0].mxu0 %v179
      %v1684 = vpop.f32.mrb[0].mxu0
      %v1685 = vadd.f32 %v1440, %v1684
      %v1686 = vpop.f32.mrb[0].mxu0
      %1687 = vmatprep.mubr.f32.mxu0 %v201
      %1688 = vmatmul.mubr.f32.gmra.mrb[0].mxu0 %v200
      %v1689 = vpop.f32.mrb[0].mxu0
      %v1690 = vadd.f32 %v1445, %v1689
      %v1691 = vpop.f32.mrb[0].mxu0
      %1692 = vmatprep.mubr.f32.mxu0 %v222
      %1693 = vmatmul.mubr.f32.gmra.mrb[0].mxu0 %v221
      %v1694 = vpop.f32.mrb[0].mxu0
      %v1695 = vadd.f32 %v1450, %v1694
      %v1696 = vpop.f32.mrb[0].mxu0
      %1697 = vmatprep.mubr.f32.mxu0 %v243
      %1698 = vmatmul.mubr.f32.gmra.mrb[0].mxu0 %v242
      %v1699 = vpop.f32.mrb[0].mxu0
      %v1700 = vadd.f32 %v1455, %v1699
      %v1701 = vpop.f32.mrb[0].mxu0
      %1702 = vmatprep.mubr.f32.mxu0 %v264
      %1703 = vmatmul.mubr.f32.gmra.mrb[0].mxu0 %v263
      %v1704 = vpop.f32.mrb[0].mxu0
      %v1705 = vadd.f32 %v1460, %v1704
      %v1706 = vpop.f32.mrb[0].mxu0
      %1707 = vmatprep.mubr.f32.mxu0 %v285
      %1708 = vmatmul.mubr.f32.gmra.mrb[0].mxu0 %v284
      %v1709 = vpop.f32.mrb[0].mxu0
      %v1710 = vadd.f32 %v1465, %v1709
      %v1711 = vpop.f32.mrb[0].mxu0
      %1712 = vmatprep.mubr.f32.mxu0 %v306
      %1713 = vmatmul.mubr.f32.gmra.mrb[0].mxu0 %v305
      %v1714 = vpop.f32.mrb[0].mxu0
      %v1715 = vadd.f32 %v1470, %v1714
      %v1716 = vpop.f32.mrb[0].mxu0
      %1717 = vmatprep.mubr.f32.mxu0 %v327
      %1718 = vmatmul.mubr.f32.gmra.mrb[0].mxu0 %v326
      %v1719 = vpop.f32.mrb[0].mxu0
      %v1720 = vadd.f32 %v1475, %v1719
      %v1721 = vpop.f32.mrb[0].mxu0
      %1722 = vmatprep.mubr.f32.mxu0 %v348
      %1723 = vmatmul.mubr.f32.gmra.mrb[0].mxu0 %v347
      %v1724 = vpop.f32.mrb[0].mxu0
      %v1725 = vadd.f32 %v1480, %v1724
      %v1726 = vpop.f32.mrb[0].mxu0
      %1727 = vmatprep.mubr.f32.mxu0 %v369
      %1728 = vmatmul.mubr.f32.gmra.mrb[0].mxu0 %v368
      %v1729 = vpop.f32.mrb[0].mxu0
      %v1730 = vadd.f32 %v1485, %v1729
      %v1731 = vpop.f32.mrb[0].mxu0
      %1732 = vmatprep.mubr.f32.mxu0 %v390
      %1733 = vmatmul.mubr.f32.gmra.mrb[0].mxu0 %v389
      %v1734 = vpop.f32.mrb[0].mxu0
      %v1735 = vadd.f32 %v1490, %v1734
      %v1736 = vpop.f32.mrb[0].mxu0
      %1737 = vmatprep.mubr.f32.mxu0 %v411
      %1738 = vmatmul.mubr.f32.gmra.mrb[0].mxu0 %v410
      %v1739 = vpop.f32.mrb[0].mxu0
      %v1740 = vadd.f32 %v1495, %v1739
      %v1741 = vpop.f32.mrb[0].mxu0
      %1742 = vmatprep.mubr.f32.mxu0 %v432
      %1743 = vmatmul.mubr.f32.gmra.mrb[0].mxu0 %v431
      %v1744 = vpop.f32.mrb[0].mxu0
      %v1745 = vadd.f32 %v1500, %v1744
      %v1746 = vpop.f32.mrb[0].mxu0
      %1747 = vmatprep.mubr.f32.mxu0 %v453
      %1748 = vmatmul.mubr.f32.gmra.mrb[0].mxu0 %v452
      %v1749 = vpop.f32.mrb[0].mxu0
      %v1750 = vadd.f32 %v1505, %v1749
      %v1751 = vpop.f32.mrb[0].mxu0
      %1752 = vmatprep.mubr.f32.mxu0 %v474
      %1753 = vmatmul.mubr.f32.gmra.mrb[0].mxu0 %v473
      %v1754 = vpop.f32.mrb[0].mxu0
      %v1755 = vadd.f32 %v1510, %v1754
      %v1756 = vpop.f32.mrb[0].mxu0
      %1757 = vmatprep.mubr.f32.mxu0 %v495
      %1758 = vmatmul.mubr.f32.gmra.mrb[0].mxu0 %v494
      %v1759 = vpop.f32.mrb[0].mxu0
      %v1760 = vadd.f32 %v1515, %v1759
      %v1761 = vpop.f32.mrb[0].mxu0
      %1762 = vmatprep.mubr.f32.mxu0 %v516
      %1763 = vmatmul.mubr.f32.gmra.mrb[0].mxu0 %v515
      %v1764 = vpop.f32.mrb[0].mxu0
      %v1765 = vadd.f32 %v1520, %v1764
      %v1766 = vpop.f32.mrb[0].mxu0
      %1767 = vmatprep.mubr.f32.mxu0 %v537
      %1768 = vmatmul.mubr.f32.gmra.mrb[0].mxu0 %v536
      %v1769 = vpop.f32.mrb[0].mxu0
      %v1770 = vadd.f32 %v1525, %v1769
      %v1771 = vpop.f32.mrb[0].mxu0
      %1772 = vmatprep.mubr.f32.mxu0 %v558
      %1773 = vmatmul.mubr.f32.gmra.mrb[0].mxu0 %v557
      %v1774 = vpop.f32.mrb[0].mxu0
      %v1775 = vadd.f32 %v1530, %v1774
      %v1776 = vpop.f32.mrb[0].mxu0
      %1777 = vmatprep.mubr.f32.mxu0 %v579
      %1778 = vmatmul.mubr.f32.gmra.mrb[0].mxu0 %v578
      %v1779 = vpop.f32.mrb[0].mxu0
      %v1780 = vadd.f32 %v1535, %v1779
      %v1781 = vpop.f32.mrb[0].mxu0
      %1782 = vmatprep.mubr.f32.mxu0 %v600
      %1783 = vmatmul.mubr.f32.gmra.mrb[0].mxu0 %v599
      %v1784 = vpop.f32.mrb[0].mxu0
      %v1785 = vadd.f32 %v1540, %v1784
      %v1786 = vpop.f32.mrb[0].mxu0
      %1787 = vmatprep.mubr.f32.mxu0 %v621
      %1788 = vmatmul.mubr.f32.gmra.mrb[0].mxu0 %v620
      %v1789 = vpop.f32.mrb[0].mxu0
      %v1790 = vadd.f32 %v1545, %v1789
      %v1791 = vpop.f32.mrb[0].mxu0
      %1792 = vmatprep.mubr.f32.mxu0 %v642
      %1793 = vmatmul.mubr.f32.gmra.mrb[0].mxu0 %v641
      %v1794 = vpop.f32.mrb[0].mxu0
      %v1795 = vadd.f32 %v1550, %v1794
      %v1796 = vpop.f32.mrb[0].mxu0
      %1797 = vmatprep.mubr.f32.mxu0 %v663
      %1798 = vmatmul.mubr.f32.gmra.mrb[0].mxu0 %v662
      %v1799 = vpop.f32.mrb[0].mxu0
      %v1800 = vadd.f32 %v1555, %v1799
      %v1801 = vpop.f32.mrb[0].mxu0
      %1802 = vmatprep.mubr.f32.mxu0 %v684
      %1803 = vmatmul.mubr.f32.gmra.mrb[0].mxu0 %v683
      %v1804 = vpop.f32.mrb[0].mxu0
      %v1805 = vadd.f32 %v1560, %v1804
      %v1806 = vpop.f32.mrb[0].mxu0
      %1807 = vmatprep.mubr.f32.mxu0 %v705
      %1808 = vmatmul.mubr.f32.gmra.mrb[0].mxu0 %v704
      %v1809 = vpop.f32.mrb[0].mxu0
      %v1810 = vadd.f32 %v1565, %v1809
      %v1811 = vpop.f32.mrb[0].mxu0
      %1812 = vmatprep.mubr.f32.mxu0 %v726
      %1813 = vmatmul.mubr.f32.gmra.mrb[0].mxu0 %v725
      %v1814 = vpop.f32.mrb[0].mxu0
      %v1815 = vadd.f32 %v1570, %v1814
      %v1816 = vpop.f32.mrb[0].mxu0
      %1817 = vmatprep.mubr.f32.mxu0 %v747
      %1818 = vmatmul.mubr.f32.gmra.mrb[0].mxu0 %v746
      %v1819 = vpop.f32.mrb[0].mxu0
      %v1820 = vadd.f32 %v1575, %v1819
      %v1821 = vpop.f32.mrb[0].mxu0
      %1822 = vmatprep.mubr.f32.mxu0 %v768
      %1823 = vmatmul.mubr.f32.gmra.mrb[0].mxu0 %v767
      %v1824 = vpop.f32.mrb[0].mxu0
      %v1825 = vadd.f32 %v1580, %v1824
      %v1826 = vpop.f32.mrb[0].mxu0
      %1827 = vmatprep.mubr.f32.mxu0 %v789
      %1828 = vmatmul.mubr.f32.gmra.mrb[0].mxu0 %v788
      %v1829 = vpop.f32.mrb[0].mxu0
      %v1830 = vadd.f32 %v1585, %v1829
      %v1831 = vpop.f32.mrb[0].mxu0
      %1832 = vmatprep.mubr.f32.mxu0 %v810
      %1833 = vmatmul.mubr.f32.gmra.mrb[0].mxu0 %v809
      %v1834 = vpop.f32.mrb[0].mxu0
      %v1835 = vadd.f32 %v1590, %v1834
      %v1836 = vpop.f32.mrb[0].mxu0
      %1837 = vmatprep.mubr.f32.mxu0 %v831
      %1838 = vmatmul.mubr.f32.gmra.mrb[0].mxu0 %v830
      %v1839 = vpop.f32.mrb[0].mxu0
      %v1840 = vadd.f32 %v1595, %v1839
      %v1841 = vpop.f32.mrb[0].mxu0
      %1842 = vmatprep.mubr.f32.mxu0 %v852
      %1843 = vmatmul.mubr.f32.gmra.mrb[0].mxu0 %v851
      %v1844 = vpop.f32.mrb[0].mxu0
      %v1845 = vadd.f32 %v1600, %v1844
      %v1846 = vpop.f32.mrb[0].mxu0
      %1847 = vmatprep.mubr.f32.mxu0 %v873
      %1848 = vmatmul.mubr.f32.gmra.mrb[0].mxu0 %v872
      %v1849 = vpop.f32.mrb[0].mxu0
      %v1850 = vadd.f32 %v1605, %v1849
      %v1851 = vpop.f32.mrb[0].mxu0
      %1852 = vmatprep.mubr.f32.mxu0 %v894
      %1853 = vmatmul.mubr.f32.gmra.mrb[0].mxu0 %v893
      %v1854 = vpop.f32.mrb[0].mxu0
      %v1855 = vadd.f32 %v1610, %v1854
      %v1856 = vpop.f32.mrb[0].mxu0
      %1857 = vmatprep.mubr.f32.mxu0 %v915
      %1858 = vmatmul.mubr.f32.gmra.mrb[0].mxu0 %v914
      %v1859 = vpop.f32.mrb[0].mxu0
      %v1860 = vadd.f32 %v1615, %v1859
      %v1861 = vpop.f32.mrb[0].mxu0
      %1862 = vdwg.mxu0
      %1863 = vmatprep.subr.mxu0 0.0
      %1864 = vmatpush1.msra.mxu0 %v997
      %1865 = vmatprep.subr.mxu0 0.0
      %1866 = vmatpush1.msra.mxu0 %v998
      %1867 = vmatprep.subr.mxu0 0.0
      %1868 = vmatpush1.msra.mxu0 %v999
      %1869 = vmatprep.subr.mxu0 0.0
      %1870 = vmatpush1.msra.mxu0 %v1000
      %1871 = vmatprep.subr.mxu0 0.0
      %1872 = vmatpush1.msra.mxu0 %v1001
      %1873 = vmatprep.subr.mxu0 0.0
      %1874 = vmatpush1.msra.mxu0 %v1002
      %1875 = vmatprep.subr.mxu0 0.0
      %1876 = vmatpush1.msra.mxu0 %v1003
      %1877 = vmatprep.subr.mxu0 0.0
      %1878 = vmatpush1.msra.mxu0 %v1004
      %1879 = vmatprep.subr.mxu0 0.0
      %1880 = vmatpush1.msra.mxu0 %v1005
      %1881 = vmatprep.subr.mxu0 0.0
      %1882 = vmatpush1.msra.mxu0 %v1006
      %1883 = vmatprep.subr.mxu0 0.0
      %1884 = vmatpush1.msra.mxu0 %v1007
      %1885 = vmatprep.subr.mxu0 0.0
      %1886 = vmatpush1.msra.mxu0 %v1008
      %1887 = vmatprep.subr.mxu0 0.0
      %1888 = vmatpush1.msra.mxu0 %v1009
      %1889 = vmatprep.subr.mxu0 0.0
      %1890 = vmatpush1.msra.mxu0 %v1010
      %1891 = vmatprep.subr.mxu0 0.0
      %1892 = vmatpush1.msra.mxu0 %v1011
      %1893 = vmatprep.subr.mxu0 0.0
      %1894 = vmatpush1.msra.mxu0 %v1012
      %1895 = vmatprep.subr.mxu0 0.0
      %1896 = vmatpush1.msra.mxu0 %v1013
      %1897 = vmatprep.subr.mxu0 0.0
      %1898 = vmatpush1.msra.mxu0 %v1014
      %1899 = vmatprep.subr.mxu0 0.0
      %1900 = vmatpush1.msra.mxu0 %v1015
      %1901 = vmatprep.subr.mxu0 0.0
      %1902 = vmatpush1.msra.mxu0 %v1016
      %1903 = vmatprep.subr.mxu0 0.0
      %1904 = vmatpush1.msra.mxu0 %v1017
      %1905 = vmatprep.subr.mxu0 0.0
      %1906 = vmatpush1.msra.mxu0 %v1018
      %1907 = vmatprep.subr.mxu0 0.0
      %1908 = vmatpush1.msra.mxu0 %v1019
      %1909 = vmatprep.subr.mxu0 0.0
      %1910 = vmatpush1.msra.mxu0 %v1020
      %1911 = vmatprep.subr.mxu0 0.0
      %1912 = vmatpush1.msra.mxu0 %v1021
      %1913 = vmatprep.subr.mxu0 0.0
      %1914 = vmatpush1.msra.mxu0 %v1022
      %1915 = vmatprep.subr.mxu0 0.0
      %1916 = vmatpush1.msra.mxu0 %v1023
      %1917 = vmatprep.subr.mxu0 0.0
      %1918 = vmatpush1.msra.mxu0 %v1024
      %1919 = vmatprep.subr.mxu0 0.0
      %1920 = vmatpush1.msra.mxu0 %v1025
      %1921 = vmatprep.subr.mxu0 0.0
      %1922 = vmatpush1.msra.mxu0 %v1026
      %1923 = vmatprep.subr.mxu0 0.0
      %1924 = vmatpush1.msra.mxu0 %v1027
      %1925 = vmatprep.subr.mxu0 0.0
      %1926 = vmatpush1.msra.mxu0 %v1028
      %1927 = vmatprep.mubr.f32.mxu0 %v182
      %1928 = vmatmul.mubr.f32.gmra.mrb[0].mxu0 %v181
      %v1929 = vpop.f32.mrb[0].mxu0
      %v1930 = vadd.f32 %v1685, %v1929
      %v1931 = vpop.f32.mrb[0].mxu0
      %1932 = vmatprep.mubr.f32.mxu0 %v203
      %1933 = vmatmul.mubr.f32.gmra.mrb[0].mxu0 %v202
      %v1934 = vpop.f32.mrb[0].mxu0
      %v1935 = vadd.f32 %v1690, %v1934
      %v1936 = vpop.f32.mrb[0].mxu0
      %1937 = vmatprep.mubr.f32.mxu0 %v224
      %1938 = vmatmul.mubr.f32.gmra.mrb[0].mxu0 %v223
      %v1939 = vpop.f32.mrb[0].mxu0
      %v1940 = vadd.f32 %v1695, %v1939
      %v1941 = vpop.f32.mrb[0].mxu0
      %1942 = vmatprep.mubr.f32.mxu0 %v245
      %1943 = vmatmul.mubr.f32.gmra.mrb[0].mxu0 %v244
      %v1944 = vpop.f32.mrb[0].mxu0
      %v1945 = vadd.f32 %v1700, %v1944
      %v1946 = vpop.f32.mrb[0].mxu0
      %1947 = vmatprep.mubr.f32.mxu0 %v266
      %1948 = vmatmul.mubr.f32.gmra.mrb[0].mxu0 %v265
      %v1949 = vpop.f32.mrb[0].mxu0
      %v1950 = vadd.f32 %v1705, %v1949
      %v1951 = vpop.f32.mrb[0].mxu0
      %1952 = vmatprep.mubr.f32.mxu0 %v287
      %1953 = vmatmul.mubr.f32.gmra.mrb[0].mxu0 %v286
      %v1954 = vpop.f32.mrb[0].mxu0
      %v1955 = vadd.f32 %v1710, %v1954
      %v1956 = vpop.f32.mrb[0].mxu0
      %1957 = vmatprep.mubr.f32.mxu0 %v308
      %1958 = vmatmul.mubr.f32.gmra.mrb[0].mxu0 %v307
      %v1959 = vpop.f32.mrb[0].mxu0
      %v1960 = vadd.f32 %v1715, %v1959
      %v1961 = vpop.f32.mrb[0].mxu0
      %1962 = vmatprep.mubr.f32.mxu0 %v329
      %1963 = vmatmul.mubr.f32.gmra.mrb[0].mxu0 %v328
      %v1964 = vpop.f32.mrb[0].mxu0
      %v1965 = vadd.f32 %v1720, %v1964
      %v1966 = vpop.f32.mrb[0].mxu0
      %1967 = vmatprep.mubr.f32.mxu0 %v350
      %1968 = vmatmul.mubr.f32.gmra.mrb[0].mxu0 %v349
      %v1969 = vpop.f32.mrb[0].mxu0
      %v1970 = vadd.f32 %v1725, %v1969
      %v1971 = vpop.f32.mrb[0].mxu0
      %1972 = vmatprep.mubr.f32.mxu0 %v371
      %1973 = vmatmul.mubr.f32.gmra.mrb[0].mxu0 %v370
      %v1974 = vpop.f32.mrb[0].mxu0
      %v1975 = vadd.f32 %v1730, %v1974
      %v1976 = vpop.f32.mrb[0].mxu0
      %1977 = vmatprep.mubr.f32.mxu0 %v392
      %1978 = vmatmul.mubr.f32.gmra.mrb[0].mxu0 %v391
      %v1979 = vpop.f32.mrb[0].mxu0
      %v1980 = vadd.f32 %v1735, %v1979
      %v1981 = vpop.f32.mrb[0].mxu0
      %1982 = vmatprep.mubr.f32.mxu0 %v413
      %1983 = vmatmul.mubr.f32.gmra.mrb[0].mxu0 %v412
      %v1984 = vpop.f32.mrb[0].mxu0
      %v1985 = vadd.f32 %v1740, %v1984
      %v1986 = vpop.f32.mrb[0].mxu0
      %1987 = vmatprep.mubr.f32.mxu0 %v434
      %1988 = vmatmul.mubr.f32.gmra.mrb[0].mxu0 %v433
      %v1989 = vpop.f32.mrb[0].mxu0
      %v1990 = vadd.f32 %v1745, %v1989
      %v1991 = vpop.f32.mrb[0].mxu0
      %1992 = vmatprep.mubr.f32.mxu0 %v455
      %1993 = vmatmul.mubr.f32.gmra.mrb[0].mxu0 %v454
      %v1994 = vpop.f32.mrb[0].mxu0
      %v1995 = vadd.f32 %v1750, %v1994
      %v1996 = vpop.f32.mrb[0].mxu0
      %1997 = vmatprep.mubr.f32.mxu0 %v476
      %1998 = vmatmul.mubr.f32.gmra.mrb[0].mxu0 %v475
      %v1999 = vpop.f32.mrb[0].mxu0
      %v2000 = vadd.f32 %v1755, %v1999
      %v2001 = vpop.f32.mrb[0].mxu0
      %2002 = vmatprep.mubr.f32.mxu0 %v497
      %2003 = vmatmul.mubr.f32.gmra.mrb[0].mxu0 %v496
      %v2004 = vpop.f32.mrb[0].mxu0
      %v2005 = vadd.f32 %v1760, %v2004
      %v2006 = vpop.f32.mrb[0].mxu0
      %2007 = vmatprep.mubr.f32.mxu0 %v518
      %2008 = vmatmul.mubr.f32.gmra.mrb[0].mxu0 %v517
      %v2009 = vpop.f32.mrb[0].mxu0
      %v2010 = vadd.f32 %v1765, %v2009
      %v2011 = vpop.f32.mrb[0].mxu0
      %2012 = vmatprep.mubr.f32.mxu0 %v539
      %2013 = vmatmul.mubr.f32.gmra.mrb[0].mxu0 %v538
      %v2014 = vpop.f32.mrb[0].mxu0
      %v2015 = vadd.f32 %v1770, %v2014
      %v2016 = vpop.f32.mrb[0].mxu0
      %2017 = vmatprep.mubr.f32.mxu0 %v560
      %2018 = vmatmul.mubr.f32.gmra.mrb[0].mxu0 %v559
      %v2019 = vpop.f32.mrb[0].mxu0
      %v2020 = vadd.f32 %v1775, %v2019
      %v2021 = vpop.f32.mrb[0].mxu0
      %2022 = vmatprep.mubr.f32.mxu0 %v581
      %2023 = vmatmul.mubr.f32.gmra.mrb[0].mxu0 %v580
      %v2024 = vpop.f32.mrb[0].mxu0
      %v2025 = vadd.f32 %v1780, %v2024
      %v2026 = vpop.f32.mrb[0].mxu0
      %2027 = vmatprep.mubr.f32.mxu0 %v602
      %2028 = vmatmul.mubr.f32.gmra.mrb[0].mxu0 %v601
      %v2029 = vpop.f32.mrb[0].mxu0
      %v2030 = vadd.f32 %v1785, %v2029
      %v2031 = vpop.f32.mrb[0].mxu0
      %2032 = vmatprep.mubr.f32.mxu0 %v623
      %2033 = vmatmul.mubr.f32.gmra.mrb[0].mxu0 %v622
      %v2034 = vpop.f32.mrb[0].mxu0
      %v2035 = vadd.f32 %v1790, %v2034
      %v2036 = vpop.f32.mrb[0].mxu0
      %2037 = vmatprep.mubr.f32.mxu0 %v644
      %2038 = vmatmul.mubr.f32.gmra.mrb[0].mxu0 %v643
      %v2039 = vpop.f32.mrb[0].mxu0
      %v2040 = vadd.f32 %v1795, %v2039
      %v2041 = vpop.f32.mrb[0].mxu0
      %2042 = vmatprep.mubr.f32.mxu0 %v665
      %2043 = vmatmul.mubr.f32.gmra.mrb[0].mxu0 %v664
      %v2044 = vpop.f32.mrb[0].mxu0
      %v2045 = vadd.f32 %v1800, %v2044
      %v2046 = vpop.f32.mrb[0].mxu0
      %2047 = vmatprep.mubr.f32.mxu0 %v686
      %2048 = vmatmul.mubr.f32.gmra.mrb[0].mxu0 %v685
      %v2049 = vpop.f32.mrb[0].mxu0
      %v2050 = vadd.f32 %v1805, %v2049
      %v2051 = vpop.f32.mrb[0].mxu0
      %2052 = vmatprep.mubr.f32.mxu0 %v707
      %2053 = vmatmul.mubr.f32.gmra.mrb[0].mxu0 %v706
      %v2054 = vpop.f32.mrb[0].mxu0
      %v2055 = vadd.f32 %v1810, %v2054
      %v2056 = vpop.f32.mrb[0].mxu0
      %2057 = vmatprep.mubr.f32.mxu0 %v728
      %2058 = vmatmul.mubr.f32.gmra.mrb[0].mxu0 %v727
      %v2059 = vpop.f32.mrb[0].mxu0
      %v2060 = vadd.f32 %v1815, %v2059
      %v2061 = vpop.f32.mrb[0].mxu0
      %2062 = vmatprep.mubr.f32.mxu0 %v749
      %2063 = vmatmul.mubr.f32.gmra.mrb[0].mxu0 %v748
      %v2064 = vpop.f32.mrb[0].mxu0
      %v2065 = vadd.f32 %v1820, %v2064
      %v2066 = vpop.f32.mrb[0].mxu0
      %2067 = vmatprep.mubr.f32.mxu0 %v770
      %2068 = vmatmul.mubr.f32.gmra.mrb[0].mxu0 %v769
      %v2069 = vpop.f32.mrb[0].mxu0
      %v2070 = vadd.f32 %v1825, %v2069
      %v2071 = vpop.f32.mrb[0].mxu0
      %2072 = vmatprep.mubr.f32.mxu0 %v791
      %2073 = vmatmul.mubr.f32.gmra.mrb[0].mxu0 %v790
      %v2074 = vpop.f32.mrb[0].mxu0
      %v2075 = vadd.f32 %v1830, %v2074
      %v2076 = vpop.f32.mrb[0].mxu0
      %2077 = vmatprep.mubr.f32.mxu0 %v812
      %2078 = vmatmul.mubr.f32.gmra.mrb[0].mxu0 %v811
      %v2079 = vpop.f32.mrb[0].mxu0
      %v2080 = vadd.f32 %v1835, %v2079
      %v2081 = vpop.f32.mrb[0].mxu0
      %2082 = vmatprep.mubr.f32.mxu0 %v833
      %2083 = vmatmul.mubr.f32.gmra.mrb[0].mxu0 %v832
      %v2084 = vpop.f32.mrb[0].mxu0
      %v2085 = vadd.f32 %v1840, %v2084
      %v2086 = vpop.f32.mrb[0].mxu0
      %2087 = vmatprep.mubr.f32.mxu0 %v854
      %2088 = vmatmul.mubr.f32.gmra.mrb[0].mxu0 %v853
      %v2089 = vpop.f32.mrb[0].mxu0
      %v2090 = vadd.f32 %v1845, %v2089
      %v2091 = vpop.f32.mrb[0].mxu0
      %2092 = vmatprep.mubr.f32.mxu0 %v875
      %2093 = vmatmul.mubr.f32.gmra.mrb[0].mxu0 %v874
      %v2094 = vpop.f32.mrb[0].mxu0
      %v2095 = vadd.f32 %v1850, %v2094
      %v2096 = vpop.f32.mrb[0].mxu0
      %2097 = vmatprep.mubr.f32.mxu0 %v896
      %2098 = vmatmul.mubr.f32.gmra.mrb[0].mxu0 %v895
      %v2099 = vpop.f32.mrb[0].mxu0
      %v2100 = vadd.f32 %v1855, %v2099
      %v2101 = vpop.f32.mrb[0].mxu0
      %2102 = vmatprep.mubr.f32.mxu0 %v917
      %2103 = vmatmul.mubr.f32.gmra.mrb[0].mxu0 %v916
      %v2104 = vpop.f32.mrb[0].mxu0
      %v2105 = vadd.f32 %v1860, %v2104
      %v2106 = vpop.f32.mrb[0].mxu0
      %2107 = vdwg.mxu0
      %2108 = vmatprep.subr.mxu0 0.0
      %2109 = vmatpush1.msra.mxu0 %v1029
      %2110 = vmatprep.subr.mxu0 0.0
      %2111 = vmatpush1.msra.mxu0 %v1030
      %2112 = vmatprep.subr.mxu0 0.0
      %2113 = vmatpush1.msra.mxu0 %v1031
      %2114 = vmatprep.subr.mxu0 0.0
      %2115 = vmatpush1.msra.mxu0 %v1032
      %2116 = vmatprep.subr.mxu0 0.0
      %2117 = vmatpush1.msra.mxu0 %v1033
      %2118 = vmatprep.subr.mxu0 0.0
      %2119 = vmatpush1.msra.mxu0 %v1034
      %2120 = vmatprep.subr.mxu0 0.0
      %2121 = vmatpush1.msra.mxu0 %v1035
      %2122 = vmatprep.subr.mxu0 0.0
      %2123 = vmatpush1.msra.mxu0 %v1036
      %2124 = vmatprep.subr.mxu0 0.0
      %2125 = vmatpush1.msra.mxu0 %v1037
      %2126 = vmatprep.subr.mxu0 0.0
      %2127 = vmatpush1.msra.mxu0 %v1038
      %2128 = vmatprep.subr.mxu0 0.0
      %2129 = vmatpush1.msra.mxu0 %v1039
      %2130 = vmatprep.subr.mxu0 0.0
      %2131 = vmatpush1.msra.mxu0 %v1040
      %2132 = vmatprep.subr.mxu0 0.0
      %2133 = vmatpush1.msra.mxu0 %v1041
      %2134 = vmatprep.subr.mxu0 0.0
      %2135 = vmatpush1.msra.mxu0 %v1042
      %2136 = vmatprep.subr.mxu0 0.0
      %2137 = vmatpush1.msra.mxu0 %v1043
      %2138 = vmatprep.subr.mxu0 0.0
      %2139 = vmatpush1.msra.mxu0 %v1044
      %2140 = vmatprep.subr.mxu0 0.0
      %2141 = vmatpush1.msra.mxu0 %v1045
      %2142 = vmatprep.subr.mxu0 0.0
      %2143 = vmatpush1.msra.mxu0 %v1046
      %2144 = vmatprep.subr.mxu0 0.0
      %2145 = vmatpush1.msra.mxu0 %v1047
      %2146 = vmatprep.subr.mxu0 0.0
      %2147 = vmatpush1.msra.mxu0 %v1048
      %2148 = vmatprep.subr.mxu0 0.0
      %2149 = vmatpush1.msra.mxu0 %v1049
      %2150 = vmatprep.subr.mxu0 0.0
      %2151 = vmatpush1.msra.mxu0 %v1050
      %2152 = vmatprep.subr.mxu0 0.0
      %2153 = vmatpush1.msra.mxu0 %v1051
      %2154 = vmatprep.subr.mxu0 0.0
      %2155 = vmatpush1.msra.mxu0 %v1052
      %2156 = vmatprep.subr.mxu0 0.0
      %2157 = vmatpush1.msra.mxu0 %v1053
      %2158 = vmatprep.subr.mxu0 0.0
      %2159 = vmatpush1.msra.mxu0 %v1054
      %2160 = vmatprep.subr.mxu0 0.0
      %2161 = vmatpush1.msra.mxu0 %v1055
      %2162 = vmatprep.subr.mxu0 0.0
      %2163 = vmatpush1.msra.mxu0 %v1056
      %2164 = vmatprep.subr.mxu0 0.0
      %2165 = vmatpush1.msra.mxu0 %v1057
      %2166 = vmatprep.subr.mxu0 0.0
      %2167 = vmatpush1.msra.mxu0 %v1058
      %2168 = vmatprep.subr.mxu0 0.0
      %2169 = vmatpush1.msra.mxu0 %v1059
      %2170 = vmatprep.subr.mxu0 0.0
      %2171 = vmatpush1.msra.mxu0 %v1060
      %2172 = vmatprep.mubr.f32.mxu0 %v184
      %2173 = vmatmul.mubr.f32.gmra.mrb[0].mxu0 %v183
      %v2174 = vpop.f32.mrb[0].mxu0
      %v2175 = vadd.f32 %v1930, %v2174
      %v2176 = vpop.f32.mrb[0].mxu0
      %2177 = vmatprep.mubr.f32.mxu0 %v205
      %2178 = vmatmul.mubr.f32.gmra.mrb[0].mxu0 %v204
      %v2179 = vpop.f32.mrb[0].mxu0
      %v2180 = vadd.f32 %v1935, %v2179
      %v2181 = vpop.f32.mrb[0].mxu0
      %2182 = vmatprep.mubr.f32.mxu0 %v226
      %2183 = vmatmul.mubr.f32.gmra.mrb[0].mxu0 %v225
      %v2184 = vpop.f32.mrb[0].mxu0
      %v2185 = vadd.f32 %v1940, %v2184
      %v2186 = vpop.f32.mrb[0].mxu0
      %2187 = vmatprep.mubr.f32.mxu0 %v247
      %2188 = vmatmul.mubr.f32.gmra.mrb[0].mxu0 %v246
      %v2189 = vpop.f32.mrb[0].mxu0
      %v2190 = vadd.f32 %v1945, %v2189
      %v2191 = vpop.f32.mrb[0].mxu0
      %2192 = vmatprep.mubr.f32.mxu0 %v268
      %2193 = vmatmul.mubr.f32.gmra.mrb[0].mxu0 %v267
      %v2194 = vpop.f32.mrb[0].mxu0
      %v2195 = vadd.f32 %v1950, %v2194
      %v2196 = vpop.f32.mrb[0].mxu0
      %2197 = vmatprep.mubr.f32.mxu0 %v289
      %2198 = vmatmul.mubr.f32.gmra.mrb[0].mxu0 %v288
      %v2199 = vpop.f32.mrb[0].mxu0
      %v2200 = vadd.f32 %v1955, %v2199
      %v2201 = vpop.f32.mrb[0].mxu0
      %2202 = vmatprep.mubr.f32.mxu0 %v310
      %2203 = vmatmul.mubr.f32.gmra.mrb[0].mxu0 %v309
      %v2204 = vpop.f32.mrb[0].mxu0
      %v2205 = vadd.f32 %v1960, %v2204
      %v2206 = vpop.f32.mrb[0].mxu0
      %2207 = vmatprep.mubr.f32.mxu0 %v331
      %2208 = vmatmul.mubr.f32.gmra.mrb[0].mxu0 %v330
      %v2209 = vpop.f32.mrb[0].mxu0
      %v2210 = vadd.f32 %v1965, %v2209
      %v2211 = vpop.f32.mrb[0].mxu0
      %2212 = vmatprep.mubr.f32.mxu0 %v352
      %2213 = vmatmul.mubr.f32.gmra.mrb[0].mxu0 %v351
      %v2214 = vpop.f32.mrb[0].mxu0
      %v2215 = vadd.f32 %v1970, %v2214
      %v2216 = vpop.f32.mrb[0].mxu0
      %2217 = vmatprep.mubr.f32.mxu0 %v373
      %2218 = vmatmul.mubr.f32.gmra.mrb[0].mxu0 %v372
      %v2219 = vpop.f32.mrb[0].mxu0
      %v2220 = vadd.f32 %v1975, %v2219
      %v2221 = vpop.f32.mrb[0].mxu0
      %2222 = vmatprep.mubr.f32.mxu0 %v394
      %2223 = vmatmul.mubr.f32.gmra.mrb[0].mxu0 %v393
      %v2224 = vpop.f32.mrb[0].mxu0
      %v2225 = vadd.f32 %v1980, %v2224
      %v2226 = vpop.f32.mrb[0].mxu0
      %2227 = vmatprep.mubr.f32.mxu0 %v415
      %2228 = vmatmul.mubr.f32.gmra.mrb[0].mxu0 %v414
      %v2229 = vpop.f32.mrb[0].mxu0
      %v2230 = vadd.f32 %v1985, %v2229
      %v2231 = vpop.f32.mrb[0].mxu0
      %2232 = vmatprep.mubr.f32.mxu0 %v436
      %2233 = vmatmul.mubr.f32.gmra.mrb[0].mxu0 %v435
      %v2234 = vpop.f32.mrb[0].mxu0
      %v2235 = vadd.f32 %v1990, %v2234
      %v2236 = vpop.f32.mrb[0].mxu0
      %2237 = vmatprep.mubr.f32.mxu0 %v457
      %2238 = vmatmul.mubr.f32.gmra.mrb[0].mxu0 %v456
      %v2239 = vpop.f32.mrb[0].mxu0
      %v2240 = vadd.f32 %v1995, %v2239
      %v2241 = vpop.f32.mrb[0].mxu0
      %2242 = vmatprep.mubr.f32.mxu0 %v478
      %2243 = vmatmul.mubr.f32.gmra.mrb[0].mxu0 %v477
      %v2244 = vpop.f32.mrb[0].mxu0
      %v2245 = vadd.f32 %v2000, %v2244
      %v2246 = vpop.f32.mrb[0].mxu0
      %2247 = vmatprep.mubr.f32.mxu0 %v499
      %2248 = vmatmul.mubr.f32.gmra.mrb[0].mxu0 %v498
      %v2249 = vpop.f32.mrb[0].mxu0
      %v2250 = vadd.f32 %v2005, %v2249
      %v2251 = vpop.f32.mrb[0].mxu0
      %2252 = vmatprep.mubr.f32.mxu0 %v520
      %2253 = vmatmul.mubr.f32.gmra.mrb[0].mxu0 %v519
      %v2254 = vpop.f32.mrb[0].mxu0
      %v2255 = vadd.f32 %v2010, %v2254
      %v2256 = vpop.f32.mrb[0].mxu0
      %2257 = vmatprep.mubr.f32.mxu0 %v541
      %2258 = vmatmul.mubr.f32.gmra.mrb[0].mxu0 %v540
      %v2259 = vpop.f32.mrb[0].mxu0
      %v2260 = vadd.f32 %v2015, %v2259
      %v2261 = vpop.f32.mrb[0].mxu0
      %2262 = vmatprep.mubr.f32.mxu0 %v562
      %2263 = vmatmul.mubr.f32.gmra.mrb[0].mxu0 %v561
      %v2264 = vpop.f32.mrb[0].mxu0
      %v2265 = vadd.f32 %v2020, %v2264
      %v2266 = vpop.f32.mrb[0].mxu0
      %2267 = vmatprep.mubr.f32.mxu0 %v583
      %2268 = vmatmul.mubr.f32.gmra.mrb[0].mxu0 %v582
      %v2269 = vpop.f32.mrb[0].mxu0
      %v2270 = vadd.f32 %v2025, %v2269
      %v2271 = vpop.f32.mrb[0].mxu0
      %2272 = vmatprep.mubr.f32.mxu0 %v604
      %2273 = vmatmul.mubr.f32.gmra.mrb[0].mxu0 %v603
      %v2274 = vpop.f32.mrb[0].mxu0
      %v2275 = vadd.f32 %v2030, %v2274
      %v2276 = vpop.f32.mrb[0].mxu0
      %2277 = vmatprep.mubr.f32.mxu0 %v625
      %2278 = vmatmul.mubr.f32.gmra.mrb[0].mxu0 %v624
      %v2279 = vpop.f32.mrb[0].mxu0
      %v2280 = vadd.f32 %v2035, %v2279
      %v2281 = vpop.f32.mrb[0].mxu0
      %2282 = vmatprep.mubr.f32.mxu0 %v646
      %2283 = vmatmul.mubr.f32.gmra.mrb[0].mxu0 %v645
      %v2284 = vpop.f32.mrb[0].mxu0
      %v2285 = vadd.f32 %v2040, %v2284
      %v2286 = vpop.f32.mrb[0].mxu0
      %2287 = vmatprep.mubr.f32.mxu0 %v667
      %2288 = vmatmul.mubr.f32.gmra.mrb[0].mxu0 %v666
      %v2289 = vpop.f32.mrb[0].mxu0
      %v2290 = vadd.f32 %v2045, %v2289
      %v2291 = vpop.f32.mrb[0].mxu0
      %2292 = vmatprep.mubr.f32.mxu0 %v688
      %2293 = vmatmul.mubr.f32.gmra.mrb[0].mxu0 %v687
      %v2294 = vpop.f32.mrb[0].mxu0
      %v2295 = vadd.f32 %v2050, %v2294
      %v2296 = vpop.f32.mrb[0].mxu0
      %2297 = vmatprep.mubr.f32.mxu0 %v709
      %2298 = vmatmul.mubr.f32.gmra.mrb[0].mxu0 %v708
      %v2299 = vpop.f32.mrb[0].mxu0
      %v2300 = vadd.f32 %v2055, %v2299
      %v2301 = vpop.f32.mrb[0].mxu0
      %2302 = vmatprep.mubr.f32.mxu0 %v730
      %2303 = vmatmul.mubr.f32.gmra.mrb[0].mxu0 %v729
      %v2304 = vpop.f32.mrb[0].mxu0
      %v2305 = vadd.f32 %v2060, %v2304
      %v2306 = vpop.f32.mrb[0].mxu0
      %2307 = vmatprep.mubr.f32.mxu0 %v751
      %2308 = vmatmul.mubr.f32.gmra.mrb[0].mxu0 %v750
      %v2309 = vpop.f32.mrb[0].mxu0
      %v2310 = vadd.f32 %v2065, %v2309
      %v2311 = vpop.f32.mrb[0].mxu0
      %2312 = vmatprep.mubr.f32.mxu0 %v772
      %2313 = vmatmul.mubr.f32.gmra.mrb[0].mxu0 %v771
      %v2314 = vpop.f32.mrb[0].mxu0
      %v2315 = vadd.f32 %v2070, %v2314
      %v2316 = vpop.f32.mrb[0].mxu0
      %2317 = vmatprep.mubr.f32.mxu0 %v793
      %2318 = vmatmul.mubr.f32.gmra.mrb[0].mxu0 %v792
      %v2319 = vpop.f32.mrb[0].mxu0
      %v2320 = vadd.f32 %v2075, %v2319
      %v2321 = vpop.f32.mrb[0].mxu0
      %2322 = vmatprep.mubr.f32.mxu0 %v814
      %2323 = vmatmul.mubr.f32.gmra.mrb[0].mxu0 %v813
      %v2324 = vpop.f32.mrb[0].mxu0
      %v2325 = vadd.f32 %v2080, %v2324
      %v2326 = vpop.f32.mrb[0].mxu0
      %2327 = vmatprep.mubr.f32.mxu0 %v835
      %2328 = vmatmul.mubr.f32.gmra.mrb[0].mxu0 %v834
      %v2329 = vpop.f32.mrb[0].mxu0
      %v2330 = vadd.f32 %v2085, %v2329
      %v2331 = vpop.f32.mrb[0].mxu0
      %2332 = vmatprep.mubr.f32.mxu0 %v856
      %2333 = vmatmul.mubr.f32.gmra.mrb[0].mxu0 %v855
      %v2334 = vpop.f32.mrb[0].mxu0
      %v2335 = vadd.f32 %v2090, %v2334
      %v2336 = vpop.f32.mrb[0].mxu0
      %2337 = vmatprep.mubr.f32.mxu0 %v877
      %2338 = vmatmul.mubr.f32.gmra.mrb[0].mxu0 %v876
      %v2339 = vpop.f32.mrb[0].mxu0
      %v2340 = vadd.f32 %v2095, %v2339
      %v2341 = vpop.f32.mrb[0].mxu0
      %2342 = vmatprep.mubr.f32.mxu0 %v898
      %2343 = vmatmul.mubr.f32.gmra.mrb[0].mxu0 %v897
      %v2344 = vpop.f32.mrb[0].mxu0
      %v2345 = vadd.f32 %v2100, %v2344
      %v2346 = vpop.f32.mrb[0].mxu0
      %2347 = vmatprep.mubr.f32.mxu0 %v919
      %2348 = vmatmul.mubr.f32.gmra.mrb[0].mxu0 %v918
      %v2349 = vpop.f32.mrb[0].mxu0
      %v2350 = vadd.f32 %v2105, %v2349
      %v2351 = vpop.f32.mrb[0].mxu0
      %2352 = vdwg.mxu0
      %2353 = vmatprep.subr.mxu0 0.0
      %2354 = vmatpush1.msra.mxu0 %v1061
      %2355 = vmatprep.subr.mxu0 0.0
      %2356 = vmatpush1.msra.mxu0 %v1062
      %2357 = vmatprep.subr.mxu0 0.0
      %2358 = vmatpush1.msra.mxu0 %v1063
      %2359 = vmatprep.subr.mxu0 0.0
      %2360 = vmatpush1.msra.mxu0 %v1064
      %2361 = vmatprep.subr.mxu0 0.0
      %2362 = vmatpush1.msra.mxu0 %v1065
      %2363 = vmatprep.subr.mxu0 0.0
      %2364 = vmatpush1.msra.mxu0 %v1066
      %2365 = vmatprep.subr.mxu0 0.0
      %2366 = vmatpush1.msra.mxu0 %v1067
      %2367 = vmatprep.subr.mxu0 0.0
      %2368 = vmatpush1.msra.mxu0 %v1068
      %2369 = vmatprep.subr.mxu0 0.0
      %2370 = vmatpush1.msra.mxu0 %v1069
      %2371 = vmatprep.subr.mxu0 0.0
      %2372 = vmatpush1.msra.mxu0 %v1070
      %2373 = vmatprep.subr.mxu0 0.0
      %2374 = vmatpush1.msra.mxu0 %v1071
      %2375 = vmatprep.subr.mxu0 0.0
      %2376 = vmatpush1.msra.mxu0 %v1072
      %2377 = vmatprep.subr.mxu0 0.0
      %2378 = vmatpush1.msra.mxu0 %v1073
      %2379 = vmatprep.subr.mxu0 0.0
      %2380 = vmatpush1.msra.mxu0 %v1074
      %2381 = vmatprep.subr.mxu0 0.0
      %2382 = vmatpush1.msra.mxu0 %v1075
      %2383 = vmatprep.subr.mxu0 0.0
      %2384 = vmatpush1.msra.mxu0 %v1076
      %2385 = vmatprep.subr.mxu0 0.0
      %2386 = vmatpush1.msra.mxu0 %v1077
      %2387 = vmatprep.subr.mxu0 0.0
      %2388 = vmatpush1.msra.mxu0 %v1078
      %2389 = vmatprep.subr.mxu0 0.0
      %2390 = vmatpush1.msra.mxu0 %v1079
      %2391 = vmatprep.subr.mxu0 0.0
      %2392 = vmatpush1.msra.mxu0 %v1080
      %2393 = vmatprep.subr.mxu0 0.0
      %2394 = vmatpush1.msra.mxu0 %v1081
      %2395 = vmatprep.subr.mxu0 0.0
      %2396 = vmatpush1.msra.mxu0 %v1082
      %2397 = vmatprep.subr.mxu0 0.0
      %2398 = vmatpush1.msra.mxu0 %v1083
      %2399 = vmatprep.subr.mxu0 0.0
      %2400 = vmatpush1.msra.mxu0 %v1084
      %2401 = vmatprep.subr.mxu0 0.0
      %2402 = vmatpush1.msra.mxu0 %v1085
      %2403 = vmatprep.subr.mxu0 0.0
      %2404 = vmatpush1.msra.mxu0 %v1086
      %2405 = vmatprep.subr.mxu0 0.0
      %2406 = vmatpush1.msra.mxu0 %v1087
      %2407 = vmatprep.subr.mxu0 0.0
      %2408 = vmatpush1.msra.mxu0 %v1088
      %2409 = vmatprep.subr.mxu0 0.0
      %2410 = vmatpush1.msra.mxu0 %v1089
      %2411 = vmatprep.subr.mxu0 0.0
      %2412 = vmatpush1.msra.mxu0 %v1090
      %2413 = vmatprep.subr.mxu0 0.0
      %2414 = vmatpush1.msra.mxu0 %v1091
      %2415 = vmatprep.subr.mxu0 0.0
      %2416 = vmatpush1.msra.mxu0 %v1092
      %2417 = vmatprep.mubr.f32.mxu0 %v186
      %2418 = vmatmul.mubr.f32.gmra.mrb[0].mxu0 %v185
      %v2419 = vpop.f32.mrb[0].mxu0
      %v2420 = vadd.f32 %v2175, %v2419
      %v2421 = vpop.f32.mrb[0].mxu0
      %2422 = vmatprep.mubr.f32.mxu0 %v207
      %2423 = vmatmul.mubr.f32.gmra.mrb[0].mxu0 %v206
      %v2424 = vpop.f32.mrb[0].mxu0
      %v2425 = vadd.f32 %v2180, %v2424
      %v2426 = vpop.f32.mrb[0].mxu0
      %2427 = vmatprep.mubr.f32.mxu0 %v228
      %2428 = vmatmul.mubr.f32.gmra.mrb[0].mxu0 %v227
      %v2429 = vpop.f32.mrb[0].mxu0
      %v2430 = vadd.f32 %v2185, %v2429
      %v2431 = vpop.f32.mrb[0].mxu0
      %2432 = vmatprep.mubr.f32.mxu0 %v249
      %2433 = vmatmul.mubr.f32.gmra.mrb[0].mxu0 %v248
      %v2434 = vpop.f32.mrb[0].mxu0
      %v2435 = vadd.f32 %v2190, %v2434
      %v2436 = vpop.f32.mrb[0].mxu0
      %2437 = vmatprep.mubr.f32.mxu0 %v270
      %2438 = vmatmul.mubr.f32.gmra.mrb[0].mxu0 %v269
      %v2439 = vpop.f32.mrb[0].mxu0
      %v2440 = vadd.f32 %v2195, %v2439
      %v2441 = vpop.f32.mrb[0].mxu0
      %2442 = vmatprep.mubr.f32.mxu0 %v291
      %2443 = vmatmul.mubr.f32.gmra.mrb[0].mxu0 %v290
      %v2444 = vpop.f32.mrb[0].mxu0
      %v2445 = vadd.f32 %v2200, %v2444
      %v2446 = vpop.f32.mrb[0].mxu0
      %2447 = vmatprep.mubr.f32.mxu0 %v312
      %2448 = vmatmul.mubr.f32.gmra.mrb[0].mxu0 %v311
      %v2449 = vpop.f32.mrb[0].mxu0
      %v2450 = vadd.f32 %v2205, %v2449
      %v2451 = vpop.f32.mrb[0].mxu0
      %2452 = vmatprep.mubr.f32.mxu0 %v333
      %2453 = vmatmul.mubr.f32.gmra.mrb[0].mxu0 %v332
      %v2454 = vpop.f32.mrb[0].mxu0
      %v2455 = vadd.f32 %v2210, %v2454
      %v2456 = vpop.f32.mrb[0].mxu0
      %2457 = vmatprep.mubr.f32.mxu0 %v354
      %2458 = vmatmul.mubr.f32.gmra.mrb[0].mxu0 %v353
      %v2459 = vpop.f32.mrb[0].mxu0
      %v2460 = vadd.f32 %v2215, %v2459
      %v2461 = vpop.f32.mrb[0].mxu0
      %2462 = vmatprep.mubr.f32.mxu0 %v375
      %2463 = vmatmul.mubr.f32.gmra.mrb[0].mxu0 %v374
      %v2464 = vpop.f32.mrb[0].mxu0
      %v2465 = vadd.f32 %v2220, %v2464
      %v2466 = vpop.f32.mrb[0].mxu0
      %2467 = vmatprep.mubr.f32.mxu0 %v396
      %2468 = vmatmul.mubr.f32.gmra.mrb[0].mxu0 %v395
      %v2469 = vpop.f32.mrb[0].mxu0
      %v2470 = vadd.f32 %v2225, %v2469
      %v2471 = vpop.f32.mrb[0].mxu0
      %2472 = vmatprep.mubr.f32.mxu0 %v417
      %2473 = vmatmul.mubr.f32.gmra.mrb[0].mxu0 %v416
      %v2474 = vpop.f32.mrb[0].mxu0
      %v2475 = vadd.f32 %v2230, %v2474
      %v2476 = vpop.f32.mrb[0].mxu0
      %2477 = vmatprep.mubr.f32.mxu0 %v438
      %2478 = vmatmul.mubr.f32.gmra.mrb[0].mxu0 %v437
      %v2479 = vpop.f32.mrb[0].mxu0
      %v2480 = vadd.f32 %v2235, %v2479
      %v2481 = vpop.f32.mrb[0].mxu0
      %2482 = vmatprep.mubr.f32.mxu0 %v459
      %2483 = vmatmul.mubr.f32.gmra.mrb[0].mxu0 %v458
      %v2484 = vpop.f32.mrb[0].mxu0
      %v2485 = vadd.f32 %v2240, %v2484
      %v2486 = vpop.f32.mrb[0].mxu0
      %2487 = vmatprep.mubr.f32.mxu0 %v480
      %2488 = vmatmul.mubr.f32.gmra.mrb[0].mxu0 %v479
      %v2489 = vpop.f32.mrb[0].mxu0
      %v2490 = vadd.f32 %v2245, %v2489
      %v2491 = vpop.f32.mrb[0].mxu0
      %2492 = vmatprep.mubr.f32.mxu0 %v501
      %2493 = vmatmul.mubr.f32.gmra.mrb[0].mxu0 %v500
      %v2494 = vpop.f32.mrb[0].mxu0
      %v2495 = vadd.f32 %v2250, %v2494
      %v2496 = vpop.f32.mrb[0].mxu0
      %2497 = vmatprep.mubr.f32.mxu0 %v522
      %2498 = vmatmul.mubr.f32.gmra.mrb[0].mxu0 %v521
      %v2499 = vpop.f32.mrb[0].mxu0
      %v2500 = vadd.f32 %v2255, %v2499
      %v2501 = vpop.f32.mrb[0].mxu0
      %2502 = vmatprep.mubr.f32.mxu0 %v543
      %2503 = vmatmul.mubr.f32.gmra.mrb[0].mxu0 %v542
      %v2504 = vpop.f32.mrb[0].mxu0
      %v2505 = vadd.f32 %v2260, %v2504
      %v2506 = vpop.f32.mrb[0].mxu0
      %2507 = vmatprep.mubr.f32.mxu0 %v564
      %2508 = vmatmul.mubr.f32.gmra.mrb[0].mxu0 %v563
      %v2509 = vpop.f32.mrb[0].mxu0
      %v2510 = vadd.f32 %v2265, %v2509
      %v2511 = vpop.f32.mrb[0].mxu0
      %2512 = vmatprep.mubr.f32.mxu0 %v585
      %2513 = vmatmul.mubr.f32.gmra.mrb[0].mxu0 %v584
      %v2514 = vpop.f32.mrb[0].mxu0
      %v2515 = vadd.f32 %v2270, %v2514
      %v2516 = vpop.f32.mrb[0].mxu0
      %2517 = vmatprep.mubr.f32.mxu0 %v606
      %2518 = vmatmul.mubr.f32.gmra.mrb[0].mxu0 %v605
      %v2519 = vpop.f32.mrb[0].mxu0
      %v2520 = vadd.f32 %v2275, %v2519
      %v2521 = vpop.f32.mrb[0].mxu0
      %2522 = vmatprep.mubr.f32.mxu0 %v627
      %2523 = vmatmul.mubr.f32.gmra.mrb[0].mxu0 %v626
      %v2524 = vpop.f32.mrb[0].mxu0
      %v2525 = vadd.f32 %v2280, %v2524
      %v2526 = vpop.f32.mrb[0].mxu0
      %2527 = vmatprep.mubr.f32.mxu0 %v648
      %2528 = vmatmul.mubr.f32.gmra.mrb[0].mxu0 %v647
      %v2529 = vpop.f32.mrb[0].mxu0
      %v2530 = vadd.f32 %v2285, %v2529
      %v2531 = vpop.f32.mrb[0].mxu0
      %2532 = vmatprep.mubr.f32.mxu0 %v669
      %2533 = vmatmul.mubr.f32.gmra.mrb[0].mxu0 %v668
      %v2534 = vpop.f32.mrb[0].mxu0
      %v2535 = vadd.f32 %v2290, %v2534
      %v2536 = vpop.f32.mrb[0].mxu0
      %2537 = vmatprep.mubr.f32.mxu0 %v690
      %2538 = vmatmul.mubr.f32.gmra.mrb[0].mxu0 %v689
      %v2539 = vpop.f32.mrb[0].mxu0
      %v2540 = vadd.f32 %v2295, %v2539
      %v2541 = vpop.f32.mrb[0].mxu0
      %2542 = vmatprep.mubr.f32.mxu0 %v711
      %2543 = vmatmul.mubr.f32.gmra.mrb[0].mxu0 %v710
      %v2544 = vpop.f32.mrb[0].mxu0
      %v2545 = vadd.f32 %v2300, %v2544
      %v2546 = vpop.f32.mrb[0].mxu0
      %2547 = vmatprep.mubr.f32.mxu0 %v732
      %2548 = vmatmul.mubr.f32.gmra.mrb[0].mxu0 %v731
      %v2549 = vpop.f32.mrb[0].mxu0
      %v2550 = vadd.f32 %v2305, %v2549
      %v2551 = vpop.f32.mrb[0].mxu0
      %2552 = vmatprep.mubr.f32.mxu0 %v753
      %2553 = vmatmul.mubr.f32.gmra.mrb[0].mxu0 %v752
      %v2554 = vpop.f32.mrb[0].mxu0
      %v2555 = vadd.f32 %v2310, %v2554
      %v2556 = vpop.f32.mrb[0].mxu0
      %2557 = vmatprep.mubr.f32.mxu0 %v774
      %2558 = vmatmul.mubr.f32.gmra.mrb[0].mxu0 %v773
      %v2559 = vpop.f32.mrb[0].mxu0
      %v2560 = vadd.f32 %v2315, %v2559
      %v2561 = vpop.f32.mrb[0].mxu0
      %2562 = vmatprep.mubr.f32.mxu0 %v795
      %2563 = vmatmul.mubr.f32.gmra.mrb[0].mxu0 %v794
      %v2564 = vpop.f32.mrb[0].mxu0
      %v2565 = vadd.f32 %v2320, %v2564
      %v2566 = vpop.f32.mrb[0].mxu0
      %2567 = vmatprep.mubr.f32.mxu0 %v816
      %2568 = vmatmul.mubr.f32.gmra.mrb[0].mxu0 %v815
      %v2569 = vpop.f32.mrb[0].mxu0
      %v2570 = vadd.f32 %v2325, %v2569
      %v2571 = vpop.f32.mrb[0].mxu0
      %2572 = vmatprep.mubr.f32.mxu0 %v837
      %2573 = vmatmul.mubr.f32.gmra.mrb[0].mxu0 %v836
      %v2574 = vpop.f32.mrb[0].mxu0
      %v2575 = vadd.f32 %v2330, %v2574
      %v2576 = vpop.f32.mrb[0].mxu0
      %2577 = vmatprep.mubr.f32.mxu0 %v858
      %2578 = vmatmul.mubr.f32.gmra.mrb[0].mxu0 %v857
      %v2579 = vpop.f32.mrb[0].mxu0
      %v2580 = vadd.f32 %v2335, %v2579
      %v2581 = vpop.f32.mrb[0].mxu0
      %2582 = vmatprep.mubr.f32.mxu0 %v879
      %2583 = vmatmul.mubr.f32.gmra.mrb[0].mxu0 %v878
      %v2584 = vpop.f32.mrb[0].mxu0
      %v2585 = vadd.f32 %v2340, %v2584
      %v2586 = vpop.f32.mrb[0].mxu0
      %2587 = vmatprep.mubr.f32.mxu0 %v900
      %2588 = vmatmul.mubr.f32.gmra.mrb[0].mxu0 %v899
      %v2589 = vpop.f32.mrb[0].mxu0
      %v2590 = vadd.f32 %v2345, %v2589
      %v2591 = vpop.f32.mrb[0].mxu0
      %2592 = vmatprep.mubr.f32.mxu0 %v921
      %2593 = vmatmul.mubr.f32.gmra.mrb[0].mxu0 %v920
      %v2594 = vpop.f32.mrb[0].mxu0
      %v2595 = vadd.f32 %v2350, %v2594
      %v2596 = vpop.f32.mrb[0].mxu0
      %2597 = vdwg.mxu0
      %2598 = vmatprep.subr.mxu0 0.0
      %2599 = vmatpush1.msra.mxu0 %v1093
      %2600 = vmatprep.subr.mxu0 0.0
      %2601 = vmatpush1.msra.mxu0 %v1094
      %2602 = vmatprep.subr.mxu0 0.0
      %2603 = vmatpush1.msra.mxu0 %v1095
      %2604 = vmatprep.subr.mxu0 0.0
      %2605 = vmatpush1.msra.mxu0 %v1096
      %2606 = vmatprep.subr.mxu0 0.0
      %2607 = vmatpush1.msra.mxu0 %v1097
      %2608 = vmatprep.subr.mxu0 0.0
      %2609 = vmatpush1.msra.mxu0 %v1098
      %2610 = vmatprep.subr.mxu0 0.0
      %2611 = vmatpush1.msra.mxu0 %v1099
      %2612 = vmatprep.subr.mxu0 0.0
      %2613 = vmatpush1.msra.mxu0 %v1100
      %2614 = vmatprep.subr.mxu0 0.0
      %2615 = vmatpush1.msra.mxu0 %v1101
      %2616 = vmatprep.subr.mxu0 0.0
      %2617 = vmatpush1.msra.mxu0 %v1102
      %2618 = vmatprep.subr.mxu0 0.0
      %2619 = vmatpush1.msra.mxu0 %v1103
      %2620 = vmatprep.subr.mxu0 0.0
      %2621 = vmatpush1.msra.mxu0 %v1104
      %2622 = vmatprep.subr.mxu0 0.0
      %2623 = vmatpush1.msra.mxu0 %v1105
      %2624 = vmatprep.subr.mxu0 0.0
      %2625 = vmatpush1.msra.mxu0 %v1106
      %2626 = vmatprep.subr.mxu0 0.0
      %2627 = vmatpush1.msra.mxu0 %v1107
      %2628 = vmatprep.subr.mxu0 0.0
      %2629 = vmatpush1.msra.mxu0 %v1108
      %2630 = vmatprep.subr.mxu0 0.0
      %2631 = vmatpush1.msra.mxu0 %v1109
      %2632 = vmatprep.subr.mxu0 0.0
      %2633 = vmatpush1.msra.mxu0 %v1110
      %2634 = vmatprep.subr.mxu0 0.0
      %2635 = vmatpush1.msra.mxu0 %v1111
      %2636 = vmatprep.subr.mxu0 0.0
      %2637 = vmatpush1.msra.mxu0 %v1112
      %2638 = vmatprep.subr.mxu0 0.0
      %2639 = vmatpush1.msra.mxu0 %v1113
      %2640 = vmatprep.subr.mxu0 0.0
      %2641 = vmatpush1.msra.mxu0 %v1114
      %2642 = vmatprep.subr.mxu0 0.0
      %2643 = vmatpush1.msra.mxu0 %v1115
      %2644 = vmatprep.subr.mxu0 0.0
      %2645 = vmatpush1.msra.mxu0 %v1116
      %2646 = vmatprep.subr.mxu0 0.0
      %2647 = vmatpush1.msra.mxu0 %v1117
      %2648 = vmatprep.subr.mxu0 0.0
      %2649 = vmatpush1.msra.mxu0 %v1118
      %2650 = vmatprep.subr.mxu0 0.0
      %2651 = vmatpush1.msra.mxu0 %v1119
      %2652 = vmatprep.subr.mxu0 0.0
      %2653 = vmatpush1.msra.mxu0 %v1120
      %2654 = vmatprep.subr.mxu0 0.0
      %2655 = vmatpush1.msra.mxu0 %v1121
      %2656 = vmatprep.subr.mxu0 0.0
      %2657 = vmatpush1.msra.mxu0 %v1122
      %2658 = vmatprep.subr.mxu0 0.0
      %2659 = vmatpush1.msra.mxu0 %v1123
      %2660 = vmatprep.subr.mxu0 0.0
      %2661 = vmatpush1.msra.mxu0 %v1124
      %2662 = vmatprep.mubr.f32.mxu0 %v188
      %2663 = vmatmul.mubr.f32.gmra.mrb[0].mxu0 %v187
      %v2664 = vpop.f32.mrb[0].mxu0
      %v2665 = vadd.f32 %v2420, %v2664
      %v2666 = vpop.f32.mrb[0].mxu0
      %2667 = vmatprep.mubr.f32.mxu0 %v209
      %2668 = vmatmul.mubr.f32.gmra.mrb[0].mxu0 %v208
      %v2669 = vpop.f32.mrb[0].mxu0
      %v2670 = vadd.f32 %v2425, %v2669
      %v2671 = vpop.f32.mrb[0].mxu0
      %2672 = vmatprep.mubr.f32.mxu0 %v230
      %2673 = vmatmul.mubr.f32.gmra.mrb[0].mxu0 %v229
      %v2674 = vpop.f32.mrb[0].mxu0
      %v2675 = vadd.f32 %v2430, %v2674
      %v2676 = vpop.f32.mrb[0].mxu0
      %2677 = vmatprep.mubr.f32.mxu0 %v251
      %2678 = vmatmul.mubr.f32.gmra.mrb[0].mxu0 %v250
      %v2679 = vpop.f32.mrb[0].mxu0
      %v2680 = vadd.f32 %v2435, %v2679
      %v2681 = vpop.f32.mrb[0].mxu0
      %2682 = vmatprep.mubr.f32.mxu0 %v272
      %2683 = vmatmul.mubr.f32.gmra.mrb[0].mxu0 %v271
      %v2684 = vpop.f32.mrb[0].mxu0
      %v2685 = vadd.f32 %v2440, %v2684
      %v2686 = vpop.f32.mrb[0].mxu0
      %2687 = vmatprep.mubr.f32.mxu0 %v293
      %2688 = vmatmul.mubr.f32.gmra.mrb[0].mxu0 %v292
      %v2689 = vpop.f32.mrb[0].mxu0
      %v2690 = vadd.f32 %v2445, %v2689
      %v2691 = vpop.f32.mrb[0].mxu0
      %2692 = vmatprep.mubr.f32.mxu0 %v314
      %2693 = vmatmul.mubr.f32.gmra.mrb[0].mxu0 %v313
      %v2694 = vpop.f32.mrb[0].mxu0
      %v2695 = vadd.f32 %v2450, %v2694
      %v2696 = vpop.f32.mrb[0].mxu0
      %2697 = vmatprep.mubr.f32.mxu0 %v335
      %2698 = vmatmul.mubr.f32.gmra.mrb[0].mxu0 %v334
      %v2699 = vpop.f32.mrb[0].mxu0
      %v2700 = vadd.f32 %v2455, %v2699
      %v2701 = vpop.f32.mrb[0].mxu0
      %2702 = vmatprep.mubr.f32.mxu0 %v356
      %2703 = vmatmul.mubr.f32.gmra.mrb[0].mxu0 %v355
      %v2704 = vpop.f32.mrb[0].mxu0
      %v2705 = vadd.f32 %v2460, %v2704
      %v2706 = vpop.f32.mrb[0].mxu0
      %2707 = vmatprep.mubr.f32.mxu0 %v377
      %2708 = vmatmul.mubr.f32.gmra.mrb[0].mxu0 %v376
      %v2709 = vpop.f32.mrb[0].mxu0
      %v2710 = vadd.f32 %v2465, %v2709
      %v2711 = vpop.f32.mrb[0].mxu0
      %2712 = vmatprep.mubr.f32.mxu0 %v398
      %2713 = vmatmul.mubr.f32.gmra.mrb[0].mxu0 %v397
      %v2714 = vpop.f32.mrb[0].mxu0
      %v2715 = vadd.f32 %v2470, %v2714
      %v2716 = vpop.f32.mrb[0].mxu0
      %2717 = vmatprep.mubr.f32.mxu0 %v419
      %2718 = vmatmul.mubr.f32.gmra.mrb[0].mxu0 %v418
      %v2719 = vpop.f32.mrb[0].mxu0
      %v2720 = vadd.f32 %v2475, %v2719
      %v2721 = vpop.f32.mrb[0].mxu0
      %2722 = vmatprep.mubr.f32.mxu0 %v440
      %2723 = vmatmul.mubr.f32.gmra.mrb[0].mxu0 %v439
      %v2724 = vpop.f32.mrb[0].mxu0
      %v2725 = vadd.f32 %v2480, %v2724
      %v2726 = vpop.f32.mrb[0].mxu0
      %2727 = vmatprep.mubr.f32.mxu0 %v461
      %2728 = vmatmul.mubr.f32.gmra.mrb[0].mxu0 %v460
      %v2729 = vpop.f32.mrb[0].mxu0
      %v2730 = vadd.f32 %v2485, %v2729
      %v2731 = vpop.f32.mrb[0].mxu0
      %2732 = vmatprep.mubr.f32.mxu0 %v482
      %2733 = vmatmul.mubr.f32.gmra.mrb[0].mxu0 %v481
      %v2734 = vpop.f32.mrb[0].mxu0
      %v2735 = vadd.f32 %v2490, %v2734
      %v2736 = vpop.f32.mrb[0].mxu0
      %2737 = vmatprep.mubr.f32.mxu0 %v503
      %2738 = vmatmul.mubr.f32.gmra.mrb[0].mxu0 %v502
      %v2739 = vpop.f32.mrb[0].mxu0
      %v2740 = vadd.f32 %v2495, %v2739
      %v2741 = vpop.f32.mrb[0].mxu0
      %2742 = vmatprep.mubr.f32.mxu0 %v524
      %2743 = vmatmul.mubr.f32.gmra.mrb[0].mxu0 %v523
      %v2744 = vpop.f32.mrb[0].mxu0
      %v2745 = vadd.f32 %v2500, %v2744
      %v2746 = vpop.f32.mrb[0].mxu0
      %2747 = vmatprep.mubr.f32.mxu0 %v545
      %2748 = vmatmul.mubr.f32.gmra.mrb[0].mxu0 %v544
      %v2749 = vpop.f32.mrb[0].mxu0
      %v2750 = vadd.f32 %v2505, %v2749
      %v2751 = vpop.f32.mrb[0].mxu0
      %2752 = vmatprep.mubr.f32.mxu0 %v566
      %2753 = vmatmul.mubr.f32.gmra.mrb[0].mxu0 %v565
      %v2754 = vpop.f32.mrb[0].mxu0
      %v2755 = vadd.f32 %v2510, %v2754
      %v2756 = vpop.f32.mrb[0].mxu0
      %2757 = vmatprep.mubr.f32.mxu0 %v587
      %2758 = vmatmul.mubr.f32.gmra.mrb[0].mxu0 %v586
      %v2759 = vpop.f32.mrb[0].mxu0
      %v2760 = vadd.f32 %v2515, %v2759
      %v2761 = vpop.f32.mrb[0].mxu0
      %2762 = vmatprep.mubr.f32.mxu0 %v608
      %2763 = vmatmul.mubr.f32.gmra.mrb[0].mxu0 %v607
      %v2764 = vpop.f32.mrb[0].mxu0
      %v2765 = vadd.f32 %v2520, %v2764
      %v2766 = vpop.f32.mrb[0].mxu0
      %2767 = vmatprep.mubr.f32.mxu0 %v629
      %2768 = vmatmul.mubr.f32.gmra.mrb[0].mxu0 %v628
      %v2769 = vpop.f32.mrb[0].mxu0
      %v2770 = vadd.f32 %v2525, %v2769
      %v2771 = vpop.f32.mrb[0].mxu0
      %2772 = vmatprep.mubr.f32.mxu0 %v650
      %2773 = vmatmul.mubr.f32.gmra.mrb[0].mxu0 %v649
      %v2774 = vpop.f32.mrb[0].mxu0
      %v2775 = vadd.f32 %v2530, %v2774
      %v2776 = vpop.f32.mrb[0].mxu0
      %2777 = vmatprep.mubr.f32.mxu0 %v671
      %2778 = vmatmul.mubr.f32.gmra.mrb[0].mxu0 %v670
      %v2779 = vpop.f32.mrb[0].mxu0
      %v2780 = vadd.f32 %v2535, %v2779
      %v2781 = vpop.f32.mrb[0].mxu0
      %2782 = vmatprep.mubr.f32.mxu0 %v692
      %2783 = vmatmul.mubr.f32.gmra.mrb[0].mxu0 %v691
      %v2784 = vpop.f32.mrb[0].mxu0
      %v2785 = vadd.f32 %v2540, %v2784
      %v2786 = vpop.f32.mrb[0].mxu0
      %2787 = vmatprep.mubr.f32.mxu0 %v713
      %2788 = vmatmul.mubr.f32.gmra.mrb[0].mxu0 %v712
      %v2789 = vpop.f32.mrb[0].mxu0
      %v2790 = vadd.f32 %v2545, %v2789
      %v2791 = vpop.f32.mrb[0].mxu0
      %2792 = vmatprep.mubr.f32.mxu0 %v734
      %2793 = vmatmul.mubr.f32.gmra.mrb[0].mxu0 %v733
      %v2794 = vpop.f32.mrb[0].mxu0
      %v2795 = vadd.f32 %v2550, %v2794
      %v2796 = vpop.f32.mrb[0].mxu0
      %2797 = vmatprep.mubr.f32.mxu0 %v755
      %2798 = vmatmul.mubr.f32.gmra.mrb[0].mxu0 %v754
      %v2799 = vpop.f32.mrb[0].mxu0
      %v2800 = vadd.f32 %v2555, %v2799
      %v2801 = vpop.f32.mrb[0].mxu0
      %2802 = vmatprep.mubr.f32.mxu0 %v776
      %2803 = vmatmul.mubr.f32.gmra.mrb[0].mxu0 %v775
      %v2804 = vpop.f32.mrb[0].mxu0
      %v2805 = vadd.f32 %v2560, %v2804
      %v2806 = vpop.f32.mrb[0].mxu0
      %2807 = vmatprep.mubr.f32.mxu0 %v797
      %2808 = vmatmul.mubr.f32.gmra.mrb[0].mxu0 %v796
      %v2809 = vpop.f32.mrb[0].mxu0
      %v2810 = vadd.f32 %v2565, %v2809
      %v2811 = vpop.f32.mrb[0].mxu0
      %2812 = vmatprep.mubr.f32.mxu0 %v818
      %2813 = vmatmul.mubr.f32.gmra.mrb[0].mxu0 %v817
      %v2814 = vpop.f32.mrb[0].mxu0
      %v2815 = vadd.f32 %v2570, %v2814
      %v2816 = vpop.f32.mrb[0].mxu0
      %2817 = vmatprep.mubr.f32.mxu0 %v839
      %2818 = vmatmul.mubr.f32.gmra.mrb[0].mxu0 %v838
      %v2819 = vpop.f32.mrb[0].mxu0
      %v2820 = vadd.f32 %v2575, %v2819
      %v2821 = vpop.f32.mrb[0].mxu0
      %2822 = vmatprep.mubr.f32.mxu0 %v860
      %2823 = vmatmul.mubr.f32.gmra.mrb[0].mxu0 %v859
      %v2824 = vpop.f32.mrb[0].mxu0
      %v2825 = vadd.f32 %v2580, %v2824
      %v2826 = vpop.f32.mrb[0].mxu0
      %2827 = vmatprep.mubr.f32.mxu0 %v881
      %2828 = vmatmul.mubr.f32.gmra.mrb[0].mxu0 %v880
      %v2829 = vpop.f32.mrb[0].mxu0
      %v2830 = vadd.f32 %v2585, %v2829
      %v2831 = vpop.f32.mrb[0].mxu0
      %2832 = vmatprep.mubr.f32.mxu0 %v902
      %2833 = vmatmul.mubr.f32.gmra.mrb[0].mxu0 %v901
      %v2834 = vpop.f32.mrb[0].mxu0
      %v2835 = vadd.f32 %v2590, %v2834
      %v2836 = vpop.f32.mrb[0].mxu0
      %2837 = vmatprep.mubr.f32.mxu0 %v923
      %2838 = vmatmul.mubr.f32.gmra.mrb[0].mxu0 %v922
      %v2839 = vpop.f32.mrb[0].mxu0
      %v2840 = vadd.f32 %v2595, %v2839
      %v2841 = vpop.f32.mrb[0].mxu0
      %2842 = vdwg.mxu0
      %2843 = vmatprep.subr.mxu0 0.0
      %2844 = vmatpush1.msra.mxu0 %v1125
      %2845 = vmatprep.subr.mxu0 0.0
      %2846 = vmatpush1.msra.mxu0 %v1126
      %2847 = vmatprep.subr.mxu0 0.0
      %2848 = vmatpush1.msra.mxu0 %v1127
      %2849 = vmatprep.subr.mxu0 0.0
      %2850 = vmatpush1.msra.mxu0 %v1128
      %2851 = vmatprep.subr.mxu0 0.0
      %2852 = vmatpush1.msra.mxu0 %v1129
      %2853 = vmatprep.subr.mxu0 0.0
      %2854 = vmatpush1.msra.mxu0 %v1130
      %2855 = vmatprep.subr.mxu0 0.0
      %2856 = vmatpush1.msra.mxu0 %v1131
      %2857 = vmatprep.subr.mxu0 0.0
      %2858 = vmatpush1.msra.mxu0 %v1132
      %2859 = vmatprep.subr.mxu0 0.0
      %2860 = vmatpush1.msra.mxu0 %v1133
      %2861 = vmatprep.subr.mxu0 0.0
      %2862 = vmatpush1.msra.mxu0 %v1134
      %2863 = vmatprep.subr.mxu0 0.0
      %2864 = vmatpush1.msra.mxu0 %v1135
      %2865 = vmatprep.subr.mxu0 0.0
      %2866 = vmatpush1.msra.mxu0 %v1136
      %2867 = vmatprep.subr.mxu0 0.0
      %2868 = vmatpush1.msra.mxu0 %v1137
      %2869 = vmatprep.subr.mxu0 0.0
      %2870 = vmatpush1.msra.mxu0 %v1138
      %2871 = vmatprep.subr.mxu0 0.0
      %2872 = vmatpush1.msra.mxu0 %v1139
      %2873 = vmatprep.subr.mxu0 0.0
      %2874 = vmatpush1.msra.mxu0 %v1140
      %2875 = vmatprep.subr.mxu0 0.0
      %2876 = vmatpush1.msra.mxu0 %v1141
      %2877 = vmatprep.subr.mxu0 0.0
      %2878 = vmatpush1.msra.mxu0 %v1142
      %2879 = vmatprep.subr.mxu0 0.0
      %2880 = vmatpush1.msra.mxu0 %v1143
      %2881 = vmatprep.subr.mxu0 0.0
      %2882 = vmatpush1.msra.mxu0 %v1144
      %2883 = vmatprep.subr.mxu0 0.0
      %2884 = vmatpush1.msra.mxu0 %v1145
      %2885 = vmatprep.subr.mxu0 0.0
      %2886 = vmatpush1.msra.mxu0 %v1146
      %2887 = vmatprep.subr.mxu0 0.0
      %2888 = vmatpush1.msra.mxu0 %v1147
      %2889 = vmatprep.subr.mxu0 0.0
      %2890 = vmatpush1.msra.mxu0 %v1148
      %2891 = vmatprep.subr.mxu0 0.0
      %2892 = vmatpush1.msra.mxu0 %v1149
      %2893 = vmatprep.subr.mxu0 0.0
      %2894 = vmatpush1.msra.mxu0 %v1150
      %2895 = vmatprep.subr.mxu0 0.0
      %2896 = vmatpush1.msra.mxu0 %v1151
      %2897 = vmatprep.subr.mxu0 0.0
      %2898 = vmatpush1.msra.mxu0 %v1152
      %2899 = vmatprep.subr.mxu0 0.0
      %2900 = vmatpush1.msra.mxu0 %v1153
      %2901 = vmatprep.subr.mxu0 0.0
      %2902 = vmatpush1.msra.mxu0 %v1154
      %2903 = vmatprep.subr.mxu0 0.0
      %2904 = vmatpush1.msra.mxu0 %v1155
      %2905 = vmatprep.subr.mxu0 0.0
      %2906 = vmatpush1.msra.mxu0 %v1156
      %2907 = vmatprep.mubr.f32.mxu0 %v190
      %2908 = vmatmul.mubr.f32.gmra.mrb[0].mxu0 %v189
      %v2909 = vpop.f32.mrb[0].mxu0
      %v2910 = vadd.f32 %v2665, %v2909
      %v2911 = vpop.f32.mrb[0].mxu0
      %2912 = vmatprep.mubr.f32.mxu0 %v211
      %2913 = vmatmul.mubr.f32.gmra.mrb[0].mxu0 %v210
      %v2914 = vpop.f32.mrb[0].mxu0
      %v2915 = vadd.f32 %v2670, %v2914
      %v2916 = vpop.f32.mrb[0].mxu0
      %2917 = vmatprep.mubr.f32.mxu0 %v232
      %2918 = vmatmul.mubr.f32.gmra.mrb[0].mxu0 %v231
      %v2919 = vpop.f32.mrb[0].mxu0
      %v2920 = vadd.f32 %v2675, %v2919
      %v2921 = vpop.f32.mrb[0].mxu0
      %2922 = vmatprep.mubr.f32.mxu0 %v253
      %2923 = vmatmul.mubr.f32.gmra.mrb[0].mxu0 %v252
      %v2924 = vpop.f32.mrb[0].mxu0
      %v2925 = vadd.f32 %v2680, %v2924
      %v2926 = vpop.f32.mrb[0].mxu0
      %2927 = vmatprep.mubr.f32.mxu0 %v274
      %2928 = vmatmul.mubr.f32.gmra.mrb[0].mxu0 %v273
      %v2929 = vpop.f32.mrb[0].mxu0
      %v2930 = vadd.f32 %v2685, %v2929
      %v2931 = vpop.f32.mrb[0].mxu0
      %2932 = vmatprep.mubr.f32.mxu0 %v295
      %2933 = vmatmul.mubr.f32.gmra.mrb[0].mxu0 %v294
      %v2934 = vpop.f32.mrb[0].mxu0
      %v2935 = vadd.f32 %v2690, %v2934
      %v2936 = vpop.f32.mrb[0].mxu0
      %2937 = vmatprep.mubr.f32.mxu0 %v316
      %2938 = vmatmul.mubr.f32.gmra.mrb[0].mxu0 %v315
      %v2939 = vpop.f32.mrb[0].mxu0
      %v2940 = vadd.f32 %v2695, %v2939
      %v2941 = vpop.f32.mrb[0].mxu0
      %2942 = vmatprep.mubr.f32.mxu0 %v337
      %2943 = vmatmul.mubr.f32.gmra.mrb[0].mxu0 %v336
      %v2944 = vpop.f32.mrb[0].mxu0
      %v2945 = vadd.f32 %v2700, %v2944
      %v2946 = vpop.f32.mrb[0].mxu0
      %2947 = vmatprep.mubr.f32.mxu0 %v358
      %2948 = vmatmul.mubr.f32.gmra.mrb[0].mxu0 %v357
      %v2949 = vpop.f32.mrb[0].mxu0
      %v2950 = vadd.f32 %v2705, %v2949
      %v2951 = vpop.f32.mrb[0].mxu0
      %2952 = vmatprep.mubr.f32.mxu0 %v379
      %2953 = vmatmul.mubr.f32.gmra.mrb[0].mxu0 %v378
      %v2954 = vpop.f32.mrb[0].mxu0
      %v2955 = vadd.f32 %v2710, %v2954
      %v2956 = vpop.f32.mrb[0].mxu0
      %2957 = vmatprep.mubr.f32.mxu0 %v400
      %2958 = vmatmul.mubr.f32.gmra.mrb[0].mxu0 %v399
      %v2959 = vpop.f32.mrb[0].mxu0
      %v2960 = vadd.f32 %v2715, %v2959
      %v2961 = vpop.f32.mrb[0].mxu0
      %2962 = vmatprep.mubr.f32.mxu0 %v421
      %2963 = vmatmul.mubr.f32.gmra.mrb[0].mxu0 %v420
      %v2964 = vpop.f32.mrb[0].mxu0
      %v2965 = vadd.f32 %v2720, %v2964
      %v2966 = vpop.f32.mrb[0].mxu0
      %2967 = vmatprep.mubr.f32.mxu0 %v442
      %2968 = vmatmul.mubr.f32.gmra.mrb[0].mxu0 %v441
      %v2969 = vpop.f32.mrb[0].mxu0
      %v2970 = vadd.f32 %v2725, %v2969
      %v2971 = vpop.f32.mrb[0].mxu0
      %2972 = vmatprep.mubr.f32.mxu0 %v463
      %2973 = vmatmul.mubr.f32.gmra.mrb[0].mxu0 %v462
      %v2974 = vpop.f32.mrb[0].mxu0
      %v2975 = vadd.f32 %v2730, %v2974
      %v2976 = vpop.f32.mrb[0].mxu0
      %2977 = vmatprep.mubr.f32.mxu0 %v484
      %2978 = vmatmul.mubr.f32.gmra.mrb[0].mxu0 %v483
      %v2979 = vpop.f32.mrb[0].mxu0
      %v2980 = vadd.f32 %v2735, %v2979
      %v2981 = vpop.f32.mrb[0].mxu0
      %2982 = vmatprep.mubr.f32.mxu0 %v505
      %2983 = vmatmul.mubr.f32.gmra.mrb[0].mxu0 %v504
      %v2984 = vpop.f32.mrb[0].mxu0
      %v2985 = vadd.f32 %v2740, %v2984
      %v2986 = vpop.f32.mrb[0].mxu0
      %2987 = vmatprep.mubr.f32.mxu0 %v526
      %2988 = vmatmul.mubr.f32.gmra.mrb[0].mxu0 %v525
      %v2989 = vpop.f32.mrb[0].mxu0
      %v2990 = vadd.f32 %v2745, %v2989
      %v2991 = vpop.f32.mrb[0].mxu0
      %2992 = vmatprep.mubr.f32.mxu0 %v547
      %2993 = vmatmul.mubr.f32.gmra.mrb[0].mxu0 %v546
      %v2994 = vpop.f32.mrb[0].mxu0
      %v2995 = vadd.f32 %v2750, %v2994
      %v2996 = vpop.f32.mrb[0].mxu0
      %2997 = vmatprep.mubr.f32.mxu0 %v568
      %2998 = vmatmul.mubr.f32.gmra.mrb[0].mxu0 %v567
      %v2999 = vpop.f32.mrb[0].mxu0
      %v3000 = vadd.f32 %v2755, %v2999
      %v3001 = vpop.f32.mrb[0].mxu0
      %3002 = vmatprep.mubr.f32.mxu0 %v589
      %3003 = vmatmul.mubr.f32.gmra.mrb[0].mxu0 %v588
      %v3004 = vpop.f32.mrb[0].mxu0
      %v3005 = vadd.f32 %v2760, %v3004
      %v3006 = vpop.f32.mrb[0].mxu0
      %3007 = vmatprep.mubr.f32.mxu0 %v610
      %3008 = vmatmul.mubr.f32.gmra.mrb[0].mxu0 %v609
      %v3009 = vpop.f32.mrb[0].mxu0
      %v3010 = vadd.f32 %v2765, %v3009
      %v3011 = vpop.f32.mrb[0].mxu0
      %3012 = vmatprep.mubr.f32.mxu0 %v631
      %3013 = vmatmul.mubr.f32.gmra.mrb[0].mxu0 %v630
      %v3014 = vpop.f32.mrb[0].mxu0
      %v3015 = vadd.f32 %v2770, %v3014
      %v3016 = vpop.f32.mrb[0].mxu0
      %3017 = vmatprep.mubr.f32.mxu0 %v652
      %3018 = vmatmul.mubr.f32.gmra.mrb[0].mxu0 %v651
      %v3019 = vpop.f32.mrb[0].mxu0
      %v3020 = vadd.f32 %v2775, %v3019
      %v3021 = vpop.f32.mrb[0].mxu0
      %3022 = vmatprep.mubr.f32.mxu0 %v673
      %3023 = vmatmul.mubr.f32.gmra.mrb[0].mxu0 %v672
      %v3024 = vpop.f32.mrb[0].mxu0
      %v3025 = vadd.f32 %v2780, %v3024
      %v3026 = vpop.f32.mrb[0].mxu0
      %3027 = vmatprep.mubr.f32.mxu0 %v694
      %3028 = vmatmul.mubr.f32.gmra.mrb[0].mxu0 %v693
      %v3029 = vpop.f32.mrb[0].mxu0
      %v3030 = vadd.f32 %v2785, %v3029
      %v3031 = vpop.f32.mrb[0].mxu0
      %3032 = vmatprep.mubr.f32.mxu0 %v715
      %3033 = vmatmul.mubr.f32.gmra.mrb[0].mxu0 %v714
      %v3034 = vpop.f32.mrb[0].mxu0
      %v3035 = vadd.f32 %v2790, %v3034
      %v3036 = vpop.f32.mrb[0].mxu0
      %3037 = vmatprep.mubr.f32.mxu0 %v736
      %3038 = vmatmul.mubr.f32.gmra.mrb[0].mxu0 %v735
      %v3039 = vpop.f32.mrb[0].mxu0
      %v3040 = vadd.f32 %v2795, %v3039
      %v3041 = vpop.f32.mrb[0].mxu0
      %3042 = vmatprep.mubr.f32.mxu0 %v757
      %3043 = vmatmul.mubr.f32.gmra.mrb[0].mxu0 %v756
      %v3044 = vpop.f32.mrb[0].mxu0
      %v3045 = vadd.f32 %v2800, %v3044
      %v3046 = vpop.f32.mrb[0].mxu0
      %3047 = vmatprep.mubr.f32.mxu0 %v778
      %3048 = vmatmul.mubr.f32.gmra.mrb[0].mxu0 %v777
      %v3049 = vpop.f32.mrb[0].mxu0
      %v3050 = vadd.f32 %v2805, %v3049
      %v3051 = vpop.f32.mrb[0].mxu0
      %3052 = vmatprep.mubr.f32.mxu0 %v799
      %3053 = vmatmul.mubr.f32.gmra.mrb[0].mxu0 %v798
      %v3054 = vpop.f32.mrb[0].mxu0
      %v3055 = vadd.f32 %v2810, %v3054
      %v3056 = vpop.f32.mrb[0].mxu0
      %3057 = vmatprep.mubr.f32.mxu0 %v820
      %3058 = vmatmul.mubr.f32.gmra.mrb[0].mxu0 %v819
      %v3059 = vpop.f32.mrb[0].mxu0
      %v3060 = vadd.f32 %v2815, %v3059
      %v3061 = vpop.f32.mrb[0].mxu0
      %3062 = vmatprep.mubr.f32.mxu0 %v841
      %3063 = vmatmul.mubr.f32.gmra.mrb[0].mxu0 %v840
      %v3064 = vpop.f32.mrb[0].mxu0
      %v3065 = vadd.f32 %v2820, %v3064
      %v3066 = vpop.f32.mrb[0].mxu0
      %3067 = vmatprep.mubr.f32.mxu0 %v862
      %3068 = vmatmul.mubr.f32.gmra.mrb[0].mxu0 %v861
      %v3069 = vpop.f32.mrb[0].mxu0
      %v3070 = vadd.f32 %v2825, %v3069
      %v3071 = vpop.f32.mrb[0].mxu0
      %3072 = vmatprep.mubr.f32.mxu0 %v883
      %3073 = vmatmul.mubr.f32.gmra.mrb[0].mxu0 %v882
      %v3074 = vpop.f32.mrb[0].mxu0
      %v3075 = vadd.f32 %v2830, %v3074
      %v3076 = vpop.f32.mrb[0].mxu0
      %3077 = vmatprep.mubr.f32.mxu0 %v904
      %3078 = vmatmul.mubr.f32.gmra.mrb[0].mxu0 %v903
      %v3079 = vpop.f32.mrb[0].mxu0
      %v3080 = vadd.f32 %v2835, %v3079
      %v3081 = vpop.f32.mrb[0].mxu0
      %3082 = vmatprep.mubr.f32.mxu0 %v925
      %3083 = vmatmul.mubr.f32.gmra.mrb[0].mxu0 %v924
      %v3084 = vpop.f32.mrb[0].mxu0
      %v3085 = vadd.f32 %v2840, %v3084
      %v3086 = vpop.f32.mrb[0].mxu0
      %3087 = vdwg.mxu0
      %3088 = vmatprep.subr.mxu0 0.0
      %3089 = vmatpush1.msra.mxu0 %v1157
      %3090 = vmatprep.subr.mxu0 0.0
      %3091 = vmatpush1.msra.mxu0 %v1158
      %3092 = vmatprep.subr.mxu0 0.0
      %3093 = vmatpush1.msra.mxu0 %v1159
      %3094 = vmatprep.subr.mxu0 0.0
      %3095 = vmatpush1.msra.mxu0 %v1160
      %3096 = vmatprep.subr.mxu0 0.0
      %3097 = vmatpush1.msra.mxu0 %v1161
      %3098 = vmatprep.subr.mxu0 0.0
      %3099 = vmatpush1.msra.mxu0 %v1162
      %3100 = vmatprep.subr.mxu0 0.0
      %3101 = vmatpush1.msra.mxu0 %v1163
      %3102 = vmatprep.subr.mxu0 0.0
      %3103 = vmatpush1.msra.mxu0 %v1164
      %3104 = vmatprep.subr.mxu0 0.0
      %3105 = vmatpush1.msra.mxu0 %v1165
      %3106 = vmatprep.subr.mxu0 0.0
      %3107 = vmatpush1.msra.mxu0 %v1166
      %3108 = vmatprep.subr.mxu0 0.0
      %3109 = vmatpush1.msra.mxu0 %v1167
      %3110 = vmatprep.subr.mxu0 0.0
      %3111 = vmatpush1.msra.mxu0 %v1168
      %3112 = vmatprep.subr.mxu0 0.0
      %3113 = vmatpush1.msra.mxu0 %v1169
      %3114 = vmatprep.subr.mxu0 0.0
      %3115 = vmatpush1.msra.mxu0 %v1170
      %3116 = vmatprep.subr.mxu0 0.0
      %3117 = vmatpush1.msra.mxu0 %v1171
      %3118 = vmatprep.subr.mxu0 0.0
      %3119 = vmatpush1.msra.mxu0 %v1172
      %3120 = vmatprep.subr.mxu0 0.0
      %3121 = vmatpush1.msra.mxu0 %v1173
      %3122 = vmatprep.subr.mxu0 0.0
      %3123 = vmatpush1.msra.mxu0 %v1174
      %3124 = vmatprep.subr.mxu0 0.0
      %3125 = vmatpush1.msra.mxu0 %v1175
      %3126 = vmatprep.subr.mxu0 0.0
      %3127 = vmatpush1.msra.mxu0 %v1176
      %3128 = vmatprep.subr.mxu0 0.0
      %3129 = vmatpush1.msra.mxu0 %v1177
      %3130 = vmatprep.subr.mxu0 0.0
      %3131 = vmatpush1.msra.mxu0 %v1178
      %3132 = vmatprep.subr.mxu0 0.0
      %3133 = vmatpush1.msra.mxu0 %v1179
      %3134 = vmatprep.subr.mxu0 0.0
      %3135 = vmatpush1.msra.mxu0 %v1180
      %3136 = vmatprep.subr.mxu0 0.0
      %3137 = vmatpush1.msra.mxu0 %v1181
      %3138 = vmatprep.subr.mxu0 0.0
      %3139 = vmatpush1.msra.mxu0 %v1182
      %3140 = vmatprep.subr.mxu0 0.0
      %3141 = vmatpush1.msra.mxu0 %v1183
      %3142 = vmatprep.subr.mxu0 0.0
      %3143 = vmatpush1.msra.mxu0 %v1184
      %3144 = vmatprep.subr.mxu0 0.0
      %3145 = vmatpush1.msra.mxu0 %v1185
      %3146 = vmatprep.subr.mxu0 0.0
      %3147 = vmatpush1.msra.mxu0 %v1186
      %3148 = vmatprep.subr.mxu0 0.0
      %3149 = vmatpush1.msra.mxu0 %v1187
      %3150 = vmatprep.subr.mxu0 0.0
      %3151 = vmatpush1.msra.mxu0 %v1188
      %3152 = vmatprep.mubr.f32.mxu0 %v192
      %3153 = vmatmul.mubr.f32.gmra.mrb[0].mxu0 %v191
      %v3154 = vpop.f32.mrb[0].mxu0
      %v3155 = vadd.f32 %v2910, %v3154
      %v3156 = vpop.f32.mrb[0].mxu0
      %3157 = vmatprep.mubr.f32.mxu0 %v213
      %3158 = vmatmul.mubr.f32.gmra.mrb[0].mxu0 %v212
      %v3159 = vpop.f32.mrb[0].mxu0
      %v3160 = vadd.f32 %v2915, %v3159
      %v3161 = vpop.f32.mrb[0].mxu0
      %3162 = vmatprep.mubr.f32.mxu0 %v234
      %3163 = vmatmul.mubr.f32.gmra.mrb[0].mxu0 %v233
      %v3164 = vpop.f32.mrb[0].mxu0
      %v3165 = vadd.f32 %v2920, %v3164
      %v3166 = vpop.f32.mrb[0].mxu0
      %3167 = vmatprep.mubr.f32.mxu0 %v255
      %3168 = vmatmul.mubr.f32.gmra.mrb[0].mxu0 %v254
      %v3169 = vpop.f32.mrb[0].mxu0
      %v3170 = vadd.f32 %v2925, %v3169
      %v3171 = vpop.f32.mrb[0].mxu0
      %3172 = vmatprep.mubr.f32.mxu0 %v276
      %3173 = vmatmul.mubr.f32.gmra.mrb[0].mxu0 %v275
      %v3174 = vpop.f32.mrb[0].mxu0
      %v3175 = vadd.f32 %v2930, %v3174
      %v3176 = vpop.f32.mrb[0].mxu0
      %3177 = vmatprep.mubr.f32.mxu0 %v297
      %3178 = vmatmul.mubr.f32.gmra.mrb[0].mxu0 %v296
      %v3179 = vpop.f32.mrb[0].mxu0
      %v3180 = vadd.f32 %v2935, %v3179
      %v3181 = vpop.f32.mrb[0].mxu0
      %3182 = vmatprep.mubr.f32.mxu0 %v318
      %3183 = vmatmul.mubr.f32.gmra.mrb[0].mxu0 %v317
      %v3184 = vpop.f32.mrb[0].mxu0
      %v3185 = vadd.f32 %v2940, %v3184
      %v3186 = vpop.f32.mrb[0].mxu0
      %3187 = vmatprep.mubr.f32.mxu0 %v339
      %3188 = vmatmul.mubr.f32.gmra.mrb[0].mxu0 %v338
      %v3189 = vpop.f32.mrb[0].mxu0
      %v3190 = vadd.f32 %v2945, %v3189
      %v3191 = vpop.f32.mrb[0].mxu0
      %3192 = vmatprep.mubr.f32.mxu0 %v360
      %3193 = vmatmul.mubr.f32.gmra.mrb[0].mxu0 %v359
      %v3194 = vpop.f32.mrb[0].mxu0
      %v3195 = vadd.f32 %v2950, %v3194
      %v3196 = vpop.f32.mrb[0].mxu0
      %3197 = vmatprep.mubr.f32.mxu0 %v381
      %3198 = vmatmul.mubr.f32.gmra.mrb[0].mxu0 %v380
      %v3199 = vpop.f32.mrb[0].mxu0
      %v3200 = vadd.f32 %v2955, %v3199
      %v3201 = vpop.f32.mrb[0].mxu0
      %3202 = vmatprep.mubr.f32.mxu0 %v402
      %3203 = vmatmul.mubr.f32.gmra.mrb[0].mxu0 %v401
      %v3204 = vpop.f32.mrb[0].mxu0
      %v3205 = vadd.f32 %v2960, %v3204
      %v3206 = vpop.f32.mrb[0].mxu0
      %3207 = vmatprep.mubr.f32.mxu0 %v423
      %3208 = vmatmul.mubr.f32.gmra.mrb[0].mxu0 %v422
      %v3209 = vpop.f32.mrb[0].mxu0
      %v3210 = vadd.f32 %v2965, %v3209
      %v3211 = vpop.f32.mrb[0].mxu0
      %3212 = vmatprep.mubr.f32.mxu0 %v444
      %3213 = vmatmul.mubr.f32.gmra.mrb[0].mxu0 %v443
      %v3214 = vpop.f32.mrb[0].mxu0
      %v3215 = vadd.f32 %v2970, %v3214
      %v3216 = vpop.f32.mrb[0].mxu0
      %3217 = vmatprep.mubr.f32.mxu0 %v465
      %3218 = vmatmul.mubr.f32.gmra.mrb[0].mxu0 %v464
      %v3219 = vpop.f32.mrb[0].mxu0
      %v3220 = vadd.f32 %v2975, %v3219
      %v3221 = vpop.f32.mrb[0].mxu0
      %3222 = vmatprep.mubr.f32.mxu0 %v486
      %3223 = vmatmul.mubr.f32.gmra.mrb[0].mxu0 %v485
      %v3224 = vpop.f32.mrb[0].mxu0
      %v3225 = vadd.f32 %v2980, %v3224
      %v3226 = vpop.f32.mrb[0].mxu0
      %3227 = vmatprep.mubr.f32.mxu0 %v507
      %3228 = vmatmul.mubr.f32.gmra.mrb[0].mxu0 %v506
      %v3229 = vpop.f32.mrb[0].mxu0
      %v3230 = vadd.f32 %v2985, %v3229
      %v3231 = vpop.f32.mrb[0].mxu0
      %3232 = vmatprep.mubr.f32.mxu0 %v528
      %3233 = vmatmul.mubr.f32.gmra.mrb[0].mxu0 %v527
      %v3234 = vpop.f32.mrb[0].mxu0
      %v3235 = vadd.f32 %v2990, %v3234
      %v3236 = vpop.f32.mrb[0].mxu0
      %3237 = vmatprep.mubr.f32.mxu0 %v549
      %3238 = vmatmul.mubr.f32.gmra.mrb[0].mxu0 %v548
      %v3239 = vpop.f32.mrb[0].mxu0
      %v3240 = vadd.f32 %v2995, %v3239
      %v3241 = vpop.f32.mrb[0].mxu0
      %3242 = vmatprep.mubr.f32.mxu0 %v570
      %3243 = vmatmul.mubr.f32.gmra.mrb[0].mxu0 %v569
      %v3244 = vpop.f32.mrb[0].mxu0
      %v3245 = vadd.f32 %v3000, %v3244
      %v3246 = vpop.f32.mrb[0].mxu0
      %3247 = vmatprep.mubr.f32.mxu0 %v591
      %3248 = vmatmul.mubr.f32.gmra.mrb[0].mxu0 %v590
      %v3249 = vpop.f32.mrb[0].mxu0
      %v3250 = vadd.f32 %v3005, %v3249
      %v3251 = vpop.f32.mrb[0].mxu0
      %3252 = vmatprep.mubr.f32.mxu0 %v612
      %3253 = vmatmul.mubr.f32.gmra.mrb[0].mxu0 %v611
      %v3254 = vpop.f32.mrb[0].mxu0
      %v3255 = vadd.f32 %v3010, %v3254
      %v3256 = vpop.f32.mrb[0].mxu0
      %3257 = vmatprep.mubr.f32.mxu0 %v633
      %3258 = vmatmul.mubr.f32.gmra.mrb[0].mxu0 %v632
      %v3259 = vpop.f32.mrb[0].mxu0
      %v3260 = vadd.f32 %v3015, %v3259
      %v3261 = vpop.f32.mrb[0].mxu0
      %3262 = vmatprep.mubr.f32.mxu0 %v654
      %3263 = vmatmul.mubr.f32.gmra.mrb[0].mxu0 %v653
      %v3264 = vpop.f32.mrb[0].mxu0
      %v3265 = vadd.f32 %v3020, %v3264
      %v3266 = vpop.f32.mrb[0].mxu0
      %3267 = vmatprep.mubr.f32.mxu0 %v675
      %3268 = vmatmul.mubr.f32.gmra.mrb[0].mxu0 %v674
      %v3269 = vpop.f32.mrb[0].mxu0
      %v3270 = vadd.f32 %v3025, %v3269
      %v3271 = vpop.f32.mrb[0].mxu0
      %3272 = vmatprep.mubr.f32.mxu0 %v696
      %3273 = vmatmul.mubr.f32.gmra.mrb[0].mxu0 %v695
      %v3274 = vpop.f32.mrb[0].mxu0
      %v3275 = vadd.f32 %v3030, %v3274
      %v3276 = vpop.f32.mrb[0].mxu0
      %3277 = vmatprep.mubr.f32.mxu0 %v717
      %3278 = vmatmul.mubr.f32.gmra.mrb[0].mxu0 %v716
      %v3279 = vpop.f32.mrb[0].mxu0
      %v3280 = vadd.f32 %v3035, %v3279
      %v3281 = vpop.f32.mrb[0].mxu0
      %3282 = vmatprep.mubr.f32.mxu0 %v738
      %3283 = vmatmul.mubr.f32.gmra.mrb[0].mxu0 %v737
      %v3284 = vpop.f32.mrb[0].mxu0
      %v3285 = vadd.f32 %v3040, %v3284
      %v3286 = vpop.f32.mrb[0].mxu0
      %3287 = vmatprep.mubr.f32.mxu0 %v759
      %3288 = vmatmul.mubr.f32.gmra.mrb[0].mxu0 %v758
      %v3289 = vpop.f32.mrb[0].mxu0
      %v3290 = vadd.f32 %v3045, %v3289
      %v3291 = vpop.f32.mrb[0].mxu0
      %3292 = vmatprep.mubr.f32.mxu0 %v780
      %3293 = vmatmul.mubr.f32.gmra.mrb[0].mxu0 %v779
      %v3294 = vpop.f32.mrb[0].mxu0
      %v3295 = vadd.f32 %v3050, %v3294
      %v3296 = vpop.f32.mrb[0].mxu0
      %3297 = vmatprep.mubr.f32.mxu0 %v801
      %3298 = vmatmul.mubr.f32.gmra.mrb[0].mxu0 %v800
      %v3299 = vpop.f32.mrb[0].mxu0
      %v3300 = vadd.f32 %v3055, %v3299
      %v3301 = vpop.f32.mrb[0].mxu0
      %3302 = vmatprep.mubr.f32.mxu0 %v822
      %3303 = vmatmul.mubr.f32.gmra.mrb[0].mxu0 %v821
      %v3304 = vpop.f32.mrb[0].mxu0
      %v3305 = vadd.f32 %v3060, %v3304
      %v3306 = vpop.f32.mrb[0].mxu0
      %3307 = vmatprep.mubr.f32.mxu0 %v843
      %3308 = vmatmul.mubr.f32.gmra.mrb[0].mxu0 %v842
      %v3309 = vpop.f32.mrb[0].mxu0
      %v3310 = vadd.f32 %v3065, %v3309
      %v3311 = vpop.f32.mrb[0].mxu0
      %3312 = vmatprep.mubr.f32.mxu0 %v864
      %3313 = vmatmul.mubr.f32.gmra.mrb[0].mxu0 %v863
      %v3314 = vpop.f32.mrb[0].mxu0
      %v3315 = vadd.f32 %v3070, %v3314
      %v3316 = vpop.f32.mrb[0].mxu0
      %3317 = vmatprep.mubr.f32.mxu0 %v885
      %3318 = vmatmul.mubr.f32.gmra.mrb[0].mxu0 %v884
      %v3319 = vpop.f32.mrb[0].mxu0
      %v3320 = vadd.f32 %v3075, %v3319
      %v3321 = vpop.f32.mrb[0].mxu0
      %3322 = vmatprep.mubr.f32.mxu0 %v906
      %3323 = vmatmul.mubr.f32.gmra.mrb[0].mxu0 %v905
      %v3324 = vpop.f32.mrb[0].mxu0
      %v3325 = vadd.f32 %v3080, %v3324
      %v3326 = vpop.f32.mrb[0].mxu0
      %3327 = vmatprep.mubr.f32.mxu0 %v927
      %3328 = vmatmul.mubr.f32.gmra.mrb[0].mxu0 %v926
      %v3329 = vpop.f32.mrb[0].mxu0
      %v3330 = vadd.f32 %v3085, %v3329
      %v3331 = vpop.f32.mrb[0].mxu0
      %3332 = vdwg.mxu0
      %3333 = vmatprep.subr.mxu0 0.0
      %3334 = vmatpush1.msra.mxu0 %v1189
      %3335 = vmatprep.subr.mxu0 0.0
      %3336 = vmatpush1.msra.mxu0 %v1190
      %3337 = vmatprep.subr.mxu0 0.0
      %3338 = vmatpush1.msra.mxu0 %v1191
      %3339 = vmatprep.subr.mxu0 0.0
      %3340 = vmatpush1.msra.mxu0 %v1192
      %3341 = vmatprep.subr.mxu0 0.0
      %3342 = vmatpush1.msra.mxu0 %v1193
      %3343 = vmatprep.subr.mxu0 0.0
      %3344 = vmatpush1.msra.mxu0 %v1194
      %3345 = vmatprep.subr.mxu0 0.0
      %3346 = vmatpush1.msra.mxu0 %v1195
      %3347 = vmatprep.subr.mxu0 0.0
      %3348 = vmatpush1.msra.mxu0 %v1196
      %3349 = vmatprep.subr.mxu0 0.0
      %3350 = vmatpush1.msra.mxu0 %v1197
      %3351 = vmatprep.subr.mxu0 0.0
      %3352 = vmatpush1.msra.mxu0 %v1198
      %3353 = vmatprep.subr.mxu0 0.0
      %3354 = vmatpush1.msra.mxu0 %v1199
      %3355 = vmatprep.subr.mxu0 0.0
      %3356 = vmatpush1.msra.mxu0 %v1200
      %3357 = vmatprep.subr.mxu0 0.0
      %3358 = vmatpush1.msra.mxu0 %v1201
      %3359 = vmatprep.subr.mxu0 0.0
      %3360 = vmatpush1.msra.mxu0 %v1202
      %3361 = vmatprep.subr.mxu0 0.0
      %3362 = vmatpush1.msra.mxu0 %v1203
      %3363 = vmatprep.subr.mxu0 0.0
      %3364 = vmatpush1.msra.mxu0 %v1204
      %3365 = vmatprep.subr.mxu0 0.0
      %3366 = vmatpush1.msra.mxu0 %v1205
      %3367 = vmatprep.subr.mxu0 0.0
      %3368 = vmatpush1.msra.mxu0 %v1206
      %3369 = vmatprep.subr.mxu0 0.0
      %3370 = vmatpush1.msra.mxu0 %v1207
      %3371 = vmatprep.subr.mxu0 0.0
      %3372 = vmatpush1.msra.mxu0 %v1208
      %3373 = vmatprep.subr.mxu0 0.0
      %3374 = vmatpush1.msra.mxu0 %v1209
      %3375 = vmatprep.subr.mxu0 0.0
      %3376 = vmatpush1.msra.mxu0 %v1210
      %3377 = vmatprep.subr.mxu0 0.0
      %3378 = vmatpush1.msra.mxu0 %v1211
      %3379 = vmatprep.subr.mxu0 0.0
      %3380 = vmatpush1.msra.mxu0 %v1212
      %3381 = vmatprep.subr.mxu0 0.0
      %3382 = vmatpush1.msra.mxu0 %v1213
      %3383 = vmatprep.subr.mxu0 0.0
      %3384 = vmatpush1.msra.mxu0 %v1214
      %3385 = vmatprep.subr.mxu0 0.0
      %3386 = vmatpush1.msra.mxu0 %v1215
      %3387 = vmatprep.subr.mxu0 0.0
      %3388 = vmatpush1.msra.mxu0 %v1216
      %3389 = vmatprep.subr.mxu0 0.0
      %3390 = vmatpush1.msra.mxu0 %v1217
      %3391 = vmatprep.subr.mxu0 0.0
      %3392 = vmatpush1.msra.mxu0 %v1218
      %3393 = vmatprep.subr.mxu0 0.0
      %3394 = vmatpush1.msra.mxu0 %v1219
      %3395 = vmatprep.subr.mxu0 0.0
      %3396 = vmatpush1.msra.mxu0 %v1220
      %3397 = vmatprep.mubr.f32.mxu0 %v194
      %3398 = vmatmul.mubr.f32.gmra.mrb[0].mxu0 %v193
      %v3399 = vpop.f32.mrb[0].mxu0
      %v3400 = vadd.f32 %v3155, %v3399
      %v3401 = vpop.f32.mrb[0].mxu0
      %3402 = vmatprep.mubr.f32.mxu0 %v215
      %3403 = vmatmul.mubr.f32.gmra.mrb[0].mxu0 %v214
      %v3404 = vpop.f32.mrb[0].mxu0
      %v3405 = vadd.f32 %v3160, %v3404
      %v3406 = vpop.f32.mrb[0].mxu0
      %3407 = vmatprep.mubr.f32.mxu0 %v236
      %3408 = vmatmul.mubr.f32.gmra.mrb[0].mxu0 %v235
      %v3409 = vpop.f32.mrb[0].mxu0
      %v3410 = vadd.f32 %v3165, %v3409
      %v3411 = vpop.f32.mrb[0].mxu0
      %3412 = vmatprep.mubr.f32.mxu0 %v257
      %3413 = vmatmul.mubr.f32.gmra.mrb[0].mxu0 %v256
      %v3414 = vpop.f32.mrb[0].mxu0
      %v3415 = vadd.f32 %v3170, %v3414
      %v3416 = vpop.f32.mrb[0].mxu0
      %3417 = vmatprep.mubr.f32.mxu0 %v278
      %3418 = vmatmul.mubr.f32.gmra.mrb[0].mxu0 %v277
      %v3419 = vpop.f32.mrb[0].mxu0
      %v3420 = vadd.f32 %v3175, %v3419
      %v3421 = vpop.f32.mrb[0].mxu0
      %3422 = vmatprep.mubr.f32.mxu0 %v299
      %3423 = vmatmul.mubr.f32.gmra.mrb[0].mxu0 %v298
      %v3424 = vpop.f32.mrb[0].mxu0
      %v3425 = vadd.f32 %v3180, %v3424
      %v3426 = vpop.f32.mrb[0].mxu0
      %3427 = vmatprep.mubr.f32.mxu0 %v320
      %3428 = vmatmul.mubr.f32.gmra.mrb[0].mxu0 %v319
      %v3429 = vpop.f32.mrb[0].mxu0
      %v3430 = vadd.f32 %v3185, %v3429
      %v3431 = vpop.f32.mrb[0].mxu0
      %3432 = vmatprep.mubr.f32.mxu0 %v341
      %3433 = vmatmul.mubr.f32.gmra.mrb[0].mxu0 %v340
      %v3434 = vpop.f32.mrb[0].mxu0
      %v3435 = vadd.f32 %v3190, %v3434
      %v3436 = vpop.f32.mrb[0].mxu0
      %3437 = vmatprep.mubr.f32.mxu0 %v362
      %3438 = vmatmul.mubr.f32.gmra.mrb[0].mxu0 %v361
      %v3439 = vpop.f32.mrb[0].mxu0
      %v3440 = vadd.f32 %v3195, %v3439
      %v3441 = vpop.f32.mrb[0].mxu0
      %3442 = vmatprep.mubr.f32.mxu0 %v383
      %3443 = vmatmul.mubr.f32.gmra.mrb[0].mxu0 %v382
      %v3444 = vpop.f32.mrb[0].mxu0
      %v3445 = vadd.f32 %v3200, %v3444
      %v3446 = vpop.f32.mrb[0].mxu0
      %3447 = vmatprep.mubr.f32.mxu0 %v404
      %3448 = vmatmul.mubr.f32.gmra.mrb[0].mxu0 %v403
      %v3449 = vpop.f32.mrb[0].mxu0
      %v3450 = vadd.f32 %v3205, %v3449
      %v3451 = vpop.f32.mrb[0].mxu0
      %3452 = vmatprep.mubr.f32.mxu0 %v425
      %3453 = vmatmul.mubr.f32.gmra.mrb[0].mxu0 %v424
      %v3454 = vpop.f32.mrb[0].mxu0
      %v3455 = vadd.f32 %v3210, %v3454
      %v3456 = vpop.f32.mrb[0].mxu0
      %3457 = vmatprep.mubr.f32.mxu0 %v446
      %3458 = vmatmul.mubr.f32.gmra.mrb[0].mxu0 %v445
      %v3459 = vpop.f32.mrb[0].mxu0
      %v3460 = vadd.f32 %v3215, %v3459
      %v3461 = vpop.f32.mrb[0].mxu0
      %3462 = vmatprep.mubr.f32.mxu0 %v467
      %3463 = vmatmul.mubr.f32.gmra.mrb[0].mxu0 %v466
      %v3464 = vpop.f32.mrb[0].mxu0
      %v3465 = vadd.f32 %v3220, %v3464
      %v3466 = vpop.f32.mrb[0].mxu0
      %3467 = vmatprep.mubr.f32.mxu0 %v488
      %3468 = vmatmul.mubr.f32.gmra.mrb[0].mxu0 %v487
      %v3469 = vpop.f32.mrb[0].mxu0
      %v3470 = vadd.f32 %v3225, %v3469
      %v3471 = vpop.f32.mrb[0].mxu0
      %3472 = vmatprep.mubr.f32.mxu0 %v509
      %3473 = vmatmul.mubr.f32.gmra.mrb[0].mxu0 %v508
      %v3474 = vpop.f32.mrb[0].mxu0
      %v3475 = vadd.f32 %v3230, %v3474
      %v3476 = vpop.f32.mrb[0].mxu0
      %3477 = vmatprep.mubr.f32.mxu0 %v530
      %3478 = vmatmul.mubr.f32.gmra.mrb[0].mxu0 %v529
      %v3479 = vpop.f32.mrb[0].mxu0
      %v3480 = vadd.f32 %v3235, %v3479
      %v3481 = vpop.f32.mrb[0].mxu0
      %3482 = vmatprep.mubr.f32.mxu0 %v551
      %3483 = vmatmul.mubr.f32.gmra.mrb[0].mxu0 %v550
      %v3484 = vpop.f32.mrb[0].mxu0
      %v3485 = vadd.f32 %v3240, %v3484
      %v3486 = vpop.f32.mrb[0].mxu0
      %3487 = vmatprep.mubr.f32.mxu0 %v572
      %3488 = vmatmul.mubr.f32.gmra.mrb[0].mxu0 %v571
      %v3489 = vpop.f32.mrb[0].mxu0
      %v3490 = vadd.f32 %v3245, %v3489
      %v3491 = vpop.f32.mrb[0].mxu0
      %3492 = vmatprep.mubr.f32.mxu0 %v593
      %3493 = vmatmul.mubr.f32.gmra.mrb[0].mxu0 %v592
      %v3494 = vpop.f32.mrb[0].mxu0
      %v3495 = vadd.f32 %v3250, %v3494
      %v3496 = vpop.f32.mrb[0].mxu0
      %3497 = vmatprep.mubr.f32.mxu0 %v614
      %3498 = vmatmul.mubr.f32.gmra.mrb[0].mxu0 %v613
      %v3499 = vpop.f32.mrb[0].mxu0
      %v3500 = vadd.f32 %v3255, %v3499
      %v3501 = vpop.f32.mrb[0].mxu0
      %3502 = vmatprep.mubr.f32.mxu0 %v635
      %3503 = vmatmul.mubr.f32.gmra.mrb[0].mxu0 %v634
      %v3504 = vpop.f32.mrb[0].mxu0
      %v3505 = vadd.f32 %v3260, %v3504
      %v3506 = vpop.f32.mrb[0].mxu0
      %3507 = vmatprep.mubr.f32.mxu0 %v656
      %3508 = vmatmul.mubr.f32.gmra.mrb[0].mxu0 %v655
      %v3509 = vpop.f32.mrb[0].mxu0
      %v3510 = vadd.f32 %v3265, %v3509
      %v3511 = vpop.f32.mrb[0].mxu0
      %3512 = vmatprep.mubr.f32.mxu0 %v677
      %3513 = vmatmul.mubr.f32.gmra.mrb[0].mxu0 %v676
      %v3514 = vpop.f32.mrb[0].mxu0
      %v3515 = vadd.f32 %v3270, %v3514
      %v3516 = vpop.f32.mrb[0].mxu0
      %3517 = vmatprep.mubr.f32.mxu0 %v698
      %3518 = vmatmul.mubr.f32.gmra.mrb[0].mxu0 %v697
      %v3519 = vpop.f32.mrb[0].mxu0
      %v3520 = vadd.f32 %v3275, %v3519
      %v3521 = vpop.f32.mrb[0].mxu0
      %3522 = vmatprep.mubr.f32.mxu0 %v719
      %3523 = vmatmul.mubr.f32.gmra.mrb[0].mxu0 %v718
      %v3524 = vpop.f32.mrb[0].mxu0
      %v3525 = vadd.f32 %v3280, %v3524
      %v3526 = vpop.f32.mrb[0].mxu0
      %3527 = vmatprep.mubr.f32.mxu0 %v740
      %3528 = vmatmul.mubr.f32.gmra.mrb[0].mxu0 %v739
      %v3529 = vpop.f32.mrb[0].mxu0
      %v3530 = vadd.f32 %v3285, %v3529
      %v3531 = vpop.f32.mrb[0].mxu0
      %3532 = vmatprep.mubr.f32.mxu0 %v761
      %3533 = vmatmul.mubr.f32.gmra.mrb[0].mxu0 %v760
      %v3534 = vpop.f32.mrb[0].mxu0
      %v3535 = vadd.f32 %v3290, %v3534
      %v3536 = vpop.f32.mrb[0].mxu0
      %3537 = vmatprep.mubr.f32.mxu0 %v782
      %3538 = vmatmul.mubr.f32.gmra.mrb[0].mxu0 %v781
      %v3539 = vpop.f32.mrb[0].mxu0
      %v3540 = vadd.f32 %v3295, %v3539
      %v3541 = vpop.f32.mrb[0].mxu0
      %3542 = vmatprep.mubr.f32.mxu0 %v803
      %3543 = vmatmul.mubr.f32.gmra.mrb[0].mxu0 %v802
      %v3544 = vpop.f32.mrb[0].mxu0
      %v3545 = vadd.f32 %v3300, %v3544
      %v3546 = vpop.f32.mrb[0].mxu0
      %3547 = vmatprep.mubr.f32.mxu0 %v824
      %3548 = vmatmul.mubr.f32.gmra.mrb[0].mxu0 %v823
      %v3549 = vpop.f32.mrb[0].mxu0
      %v3550 = vadd.f32 %v3305, %v3549
      %v3551 = vpop.f32.mrb[0].mxu0
      %3552 = vmatprep.mubr.f32.mxu0 %v845
      %3553 = vmatmul.mubr.f32.gmra.mrb[0].mxu0 %v844
      %v3554 = vpop.f32.mrb[0].mxu0
      %v3555 = vadd.f32 %v3310, %v3554
      %v3556 = vpop.f32.mrb[0].mxu0
      %3557 = vmatprep.mubr.f32.mxu0 %v866
      %3558 = vmatmul.mubr.f32.gmra.mrb[0].mxu0 %v865
      %v3559 = vpop.f32.mrb[0].mxu0
      %v3560 = vadd.f32 %v3315, %v3559
      %v3561 = vpop.f32.mrb[0].mxu0
      %3562 = vmatprep.mubr.f32.mxu0 %v887
      %3563 = vmatmul.mubr.f32.gmra.mrb[0].mxu0 %v886
      %v3564 = vpop.f32.mrb[0].mxu0
      %v3565 = vadd.f32 %v3320, %v3564
      %v3566 = vpop.f32.mrb[0].mxu0
      %3567 = vmatprep.mubr.f32.mxu0 %v908
      %3568 = vmatmul.mubr.f32.gmra.mrb[0].mxu0 %v907
      %v3569 = vpop.f32.mrb[0].mxu0
      %v3570 = vadd.f32 %v3325, %v3569
      %v3571 = vpop.f32.mrb[0].mxu0
      %3572 = vmatprep.mubr.f32.mxu0 %v929
      %3573 = vmatmul.mubr.f32.gmra.mrb[0].mxu0 %v928
      %v3574 = vpop.f32.mrb[0].mxu0
      %v3575 = vadd.f32 %v3330, %v3574
      %v3576 = vpop.f32.mrb[0].mxu0
      %3577 = vdwg.mxu0
      %3578 = vmatprep.subr.mxu0 0.0
      %3579 = vmatpush1.msra.mxu0 %v1221
      %3580 = vmatprep.subr.mxu0 0.0
      %3581 = vmatpush1.msra.mxu0 %v1222
      %3582 = vmatprep.subr.mxu0 0.0
      %3583 = vmatpush1.msra.mxu0 %v1223
      %3584 = vmatprep.subr.mxu0 0.0
      %3585 = vmatpush1.msra.mxu0 %v1224
      %3586 = vmatprep.subr.mxu0 0.0
      %3587 = vmatpush1.msra.mxu0 %v1225
      %3588 = vmatprep.subr.mxu0 0.0
      %3589 = vmatpush1.msra.mxu0 %v1226
      %3590 = vmatprep.subr.mxu0 0.0
      %3591 = vmatpush1.msra.mxu0 %v1227
      %3592 = vmatprep.subr.mxu0 0.0
      %3593 = vmatpush1.msra.mxu0 %v1228
      %3594 = vmatprep.subr.mxu0 0.0
      %3595 = vmatpush1.msra.mxu0 %v1229
      %3596 = vmatprep.subr.mxu0 0.0
      %3597 = vmatpush1.msra.mxu0 %v1230
      %3598 = vmatprep.subr.mxu0 0.0
      %3599 = vmatpush1.msra.mxu0 %v1231
      %3600 = vmatprep.subr.mxu0 0.0
      %3601 = vmatpush1.msra.mxu0 %v1232
      %3602 = vmatprep.subr.mxu0 0.0
      %3603 = vmatpush1.msra.mxu0 %v1233
      %3604 = vmatprep.subr.mxu0 0.0
      %3605 = vmatpush1.msra.mxu0 %v1234
      %3606 = vmatprep.subr.mxu0 0.0
      %3607 = vmatpush1.msra.mxu0 %v1235
      %3608 = vmatprep.subr.mxu0 0.0
      %3609 = vmatpush1.msra.mxu0 %v1236
      %3610 = vmatprep.subr.mxu0 0.0
      %3611 = vmatpush1.msra.mxu0 %v1237
      %3612 = vmatprep.subr.mxu0 0.0
      %3613 = vmatpush1.msra.mxu0 %v1238
      %3614 = vmatprep.subr.mxu0 0.0
      %3615 = vmatpush1.msra.mxu0 %v1239
      %3616 = vmatprep.subr.mxu0 0.0
      %3617 = vmatpush1.msra.mxu0 %v1240
      %3618 = vmatprep.subr.mxu0 0.0
      %3619 = vmatpush1.msra.mxu0 %v1241
      %3620 = vmatprep.subr.mxu0 0.0
      %3621 = vmatpush1.msra.mxu0 %v1242
      %3622 = vmatprep.subr.mxu0 0.0
      %3623 = vmatpush1.msra.mxu0 %v1243
      %3624 = vmatprep.subr.mxu0 0.0
      %3625 = vmatpush1.msra.mxu0 %v1244
      %3626 = vmatprep.subr.mxu0 0.0
      %3627 = vmatpush1.msra.mxu0 %v1245
      %3628 = vmatprep.subr.mxu0 0.0
      %3629 = vmatpush1.msra.mxu0 %v1246
      %3630 = vmatprep.subr.mxu0 0.0
      %3631 = vmatpush1.msra.mxu0 %v1247
      %3632 = vmatprep.subr.mxu0 0.0
      %3633 = vmatpush1.msra.mxu0 %v1248
      %3634 = vmatprep.subr.mxu0 0.0
      %3635 = vmatpush1.msra.mxu0 %v1249
      %3636 = vmatprep.subr.mxu0 0.0
      %3637 = vmatpush1.msra.mxu0 %v1250
      %3638 = vmatprep.subr.mxu0 0.0
      %3639 = vmatpush1.msra.mxu0 %v1251
      %3640 = vmatprep.subr.mxu0 0.0
      %3641 = vmatpush1.msra.mxu0 %v1252
      %3642 = vmatprep.mubr.f32.mxu0 %v196
      %3643 = vmatmul.mubr.f32.gmra.mrb[0].mxu0 %v195
      %v3644 = vpop.f32.mrb[0].mxu0
      %v3645 = vadd.f32 %v3400, %v3644
      %v3646 = vpop.f32.mrb[0].mxu0
      %3647 = vmatprep.mubr.f32.mxu0 %v217
      %3648 = vmatmul.mubr.f32.gmra.mrb[0].mxu0 %v216
      %v3649 = vpop.f32.mrb[0].mxu0
      %v3650 = vadd.f32 %v3405, %v3649
      %v3651 = vpop.f32.mrb[0].mxu0
      %3652 = vmatprep.mubr.f32.mxu0 %v238
      %3653 = vmatmul.mubr.f32.gmra.mrb[0].mxu0 %v237
      %v3654 = vpop.f32.mrb[0].mxu0
      %v3655 = vadd.f32 %v3410, %v3654
      %v3656 = vpop.f32.mrb[0].mxu0
      %3657 = vmatprep.mubr.f32.mxu0 %v259
      %3658 = vmatmul.mubr.f32.gmra.mrb[0].mxu0 %v258
      %v3659 = vpop.f32.mrb[0].mxu0
      %v3660 = vadd.f32 %v3415, %v3659
      %v3661 = vpop.f32.mrb[0].mxu0
      %3662 = vmatprep.mubr.f32.mxu0 %v280
      %3663 = vmatmul.mubr.f32.gmra.mrb[0].mxu0 %v279
      %v3664 = vpop.f32.mrb[0].mxu0
      %v3665 = vadd.f32 %v3420, %v3664
      %v3666 = vpop.f32.mrb[0].mxu0
      %3667 = vmatprep.mubr.f32.mxu0 %v301
      %3668 = vmatmul.mubr.f32.gmra.mrb[0].mxu0 %v300
      %v3669 = vpop.f32.mrb[0].mxu0
      %v3670 = vadd.f32 %v3425, %v3669
      %v3671 = vpop.f32.mrb[0].mxu0
      %3672 = vmatprep.mubr.f32.mxu0 %v322
      %3673 = vmatmul.mubr.f32.gmra.mrb[0].mxu0 %v321
      %v3674 = vpop.f32.mrb[0].mxu0
      %v3675 = vadd.f32 %v3430, %v3674
      %v3676 = vpop.f32.mrb[0].mxu0
      %3677 = vmatprep.mubr.f32.mxu0 %v343
      %3678 = vmatmul.mubr.f32.gmra.mrb[0].mxu0 %v342
      %v3679 = vpop.f32.mrb[0].mxu0
      %v3680 = vadd.f32 %v3435, %v3679
      %v3681 = vpop.f32.mrb[0].mxu0
      %3682 = vmatprep.mubr.f32.mxu0 %v364
      %3683 = vmatmul.mubr.f32.gmra.mrb[0].mxu0 %v363
      %v3684 = vpop.f32.mrb[0].mxu0
      %v3685 = vadd.f32 %v3440, %v3684
      %v3686 = vpop.f32.mrb[0].mxu0
      %3687 = vmatprep.mubr.f32.mxu0 %v385
      %3688 = vmatmul.mubr.f32.gmra.mrb[0].mxu0 %v384
      %v3689 = vpop.f32.mrb[0].mxu0
      %v3690 = vadd.f32 %v3445, %v3689
      %v3691 = vpop.f32.mrb[0].mxu0
      %3692 = vmatprep.mubr.f32.mxu0 %v406
      %3693 = vmatmul.mubr.f32.gmra.mrb[0].mxu0 %v405
      %v3694 = vpop.f32.mrb[0].mxu0
      %v3695 = vadd.f32 %v3450, %v3694
      %v3696 = vpop.f32.mrb[0].mxu0
      %3697 = vmatprep.mubr.f32.mxu0 %v427
      %3698 = vmatmul.mubr.f32.gmra.mrb[0].mxu0 %v426
      %v3699 = vpop.f32.mrb[0].mxu0
      %v3700 = vadd.f32 %v3455, %v3699
      %v3701 = vpop.f32.mrb[0].mxu0
      %3702 = vmatprep.mubr.f32.mxu0 %v448
      %3703 = vmatmul.mubr.f32.gmra.mrb[0].mxu0 %v447
      %v3704 = vpop.f32.mrb[0].mxu0
      %v3705 = vadd.f32 %v3460, %v3704
      %v3706 = vpop.f32.mrb[0].mxu0
      %3707 = vmatprep.mubr.f32.mxu0 %v469
      %3708 = vmatmul.mubr.f32.gmra.mrb[0].mxu0 %v468
      %v3709 = vpop.f32.mrb[0].mxu0
      %v3710 = vadd.f32 %v3465, %v3709
      %v3711 = vpop.f32.mrb[0].mxu0
      %3712 = vmatprep.mubr.f32.mxu0 %v490
      %3713 = vmatmul.mubr.f32.gmra.mrb[0].mxu0 %v489
      %v3714 = vpop.f32.mrb[0].mxu0
      %v3715 = vadd.f32 %v3470, %v3714
      %v3716 = vpop.f32.mrb[0].mxu0
      %3717 = vmatprep.mubr.f32.mxu0 %v511
      %3718 = vmatmul.mubr.f32.gmra.mrb[0].mxu0 %v510
      %v3719 = vpop.f32.mrb[0].mxu0
      %v3720 = vadd.f32 %v3475, %v3719
      %v3721 = vpop.f32.mrb[0].mxu0
      %3722 = vmatprep.mubr.f32.mxu0 %v532
      %3723 = vmatmul.mubr.f32.gmra.mrb[0].mxu0 %v531
      %v3724 = vpop.f32.mrb[0].mxu0
      %v3725 = vadd.f32 %v3480, %v3724
      %v3726 = vpop.f32.mrb[0].mxu0
      %3727 = vmatprep.mubr.f32.mxu0 %v553
      %3728 = vmatmul.mubr.f32.gmra.mrb[0].mxu0 %v552
      %v3729 = vpop.f32.mrb[0].mxu0
      %v3730 = vadd.f32 %v3485, %v3729
      %v3731 = vpop.f32.mrb[0].mxu0
      %3732 = vmatprep.mubr.f32.mxu0 %v574
      %3733 = vmatmul.mubr.f32.gmra.mrb[0].mxu0 %v573
      %v3734 = vpop.f32.mrb[0].mxu0
      %v3735 = vadd.f32 %v3490, %v3734
      %v3736 = vpop.f32.mrb[0].mxu0
      %3737 = vmatprep.mubr.f32.mxu0 %v595
      %3738 = vmatmul.mubr.f32.gmra.mrb[0].mxu0 %v594
      %v3739 = vpop.f32.mrb[0].mxu0
      %v3740 = vadd.f32 %v3495, %v3739
      %v3741 = vpop.f32.mrb[0].mxu0
      %3742 = vmatprep.mubr.f32.mxu0 %v616
      %3743 = vmatmul.mubr.f32.gmra.mrb[0].mxu0 %v615
      %v3744 = vpop.f32.mrb[0].mxu0
      %v3745 = vadd.f32 %v3500, %v3744
      %v3746 = vpop.f32.mrb[0].mxu0
      %3747 = vmatprep.mubr.f32.mxu0 %v637
      %3748 = vmatmul.mubr.f32.gmra.mrb[0].mxu0 %v636
      %v3749 = vpop.f32.mrb[0].mxu0
      %v3750 = vadd.f32 %v3505, %v3749
      %v3751 = vpop.f32.mrb[0].mxu0
      %3752 = vmatprep.mubr.f32.mxu0 %v658
      %3753 = vmatmul.mubr.f32.gmra.mrb[0].mxu0 %v657
      %v3754 = vpop.f32.mrb[0].mxu0
      %v3755 = vadd.f32 %v3510, %v3754
      %v3756 = vpop.f32.mrb[0].mxu0
      %3757 = vmatprep.mubr.f32.mxu0 %v679
      %3758 = vmatmul.mubr.f32.gmra.mrb[0].mxu0 %v678
      %v3759 = vpop.f32.mrb[0].mxu0
      %v3760 = vadd.f32 %v3515, %v3759
      %v3761 = vpop.f32.mrb[0].mxu0
      %3762 = vmatprep.mubr.f32.mxu0 %v700
      %3763 = vmatmul.mubr.f32.gmra.mrb[0].mxu0 %v699
      %v3764 = vpop.f32.mrb[0].mxu0
      %v3765 = vadd.f32 %v3520, %v3764
      %v3766 = vpop.f32.mrb[0].mxu0
      %3767 = vmatprep.mubr.f32.mxu0 %v721
      %3768 = vmatmul.mubr.f32.gmra.mrb[0].mxu0 %v720
      %v3769 = vpop.f32.mrb[0].mxu0
      %v3770 = vadd.f32 %v3525, %v3769
      %v3771 = vpop.f32.mrb[0].mxu0
      %3772 = vmatprep.mubr.f32.mxu0 %v742
      %3773 = vmatmul.mubr.f32.gmra.mrb[0].mxu0 %v741
      %v3774 = vpop.f32.mrb[0].mxu0
      %v3775 = vadd.f32 %v3530, %v3774
      %v3776 = vpop.f32.mrb[0].mxu0
      %3777 = vmatprep.mubr.f32.mxu0 %v763
      %3778 = vmatmul.mubr.f32.gmra.mrb[0].mxu0 %v762
      %v3779 = vpop.f32.mrb[0].mxu0
      %v3780 = vadd.f32 %v3535, %v3779
      %v3781 = vpop.f32.mrb[0].mxu0
      %3782 = vmatprep.mubr.f32.mxu0 %v784
      %3783 = vmatmul.mubr.f32.gmra.mrb[0].mxu0 %v783
      %v3784 = vpop.f32.mrb[0].mxu0
      %v3785 = vadd.f32 %v3540, %v3784
      %v3786 = vpop.f32.mrb[0].mxu0
      %3787 = vmatprep.mubr.f32.mxu0 %v805
      %3788 = vmatmul.mubr.f32.gmra.mrb[0].mxu0 %v804
      %v3789 = vpop.f32.mrb[0].mxu0
      %v3790 = vadd.f32 %v3545, %v3789
      %v3791 = vpop.f32.mrb[0].mxu0
      %3792 = vmatprep.mubr.f32.mxu0 %v826
      %3793 = vmatmul.mubr.f32.gmra.mrb[0].mxu0 %v825
      %v3794 = vpop.f32.mrb[0].mxu0
      %v3795 = vadd.f32 %v3550, %v3794
      %v3796 = vpop.f32.mrb[0].mxu0
      %3797 = vmatprep.mubr.f32.mxu0 %v847
      %3798 = vmatmul.mubr.f32.gmra.mrb[0].mxu0 %v846
      %v3799 = vpop.f32.mrb[0].mxu0
      %v3800 = vadd.f32 %v3555, %v3799
      %v3801 = vpop.f32.mrb[0].mxu0
      %3802 = vmatprep.mubr.f32.mxu0 %v868
      %3803 = vmatmul.mubr.f32.gmra.mrb[0].mxu0 %v867
      %v3804 = vpop.f32.mrb[0].mxu0
      %v3805 = vadd.f32 %v3560, %v3804
      %v3806 = vpop.f32.mrb[0].mxu0
      %3807 = vmatprep.mubr.f32.mxu0 %v889
      %3808 = vmatmul.mubr.f32.gmra.mrb[0].mxu0 %v888
      %v3809 = vpop.f32.mrb[0].mxu0
      %v3810 = vadd.f32 %v3565, %v3809
      %v3811 = vpop.f32.mrb[0].mxu0
      %3812 = vmatprep.mubr.f32.mxu0 %v910
      %3813 = vmatmul.mubr.f32.gmra.mrb[0].mxu0 %v909
      %v3814 = vpop.f32.mrb[0].mxu0
      %v3815 = vadd.f32 %v3570, %v3814
      %v3816 = vpop.f32.mrb[0].mxu0
      %3817 = vmatprep.mubr.f32.mxu0 %v931
      %3818 = vmatmul.mubr.f32.gmra.mrb[0].mxu0 %v930
      %v3819 = vpop.f32.mrb[0].mxu0
      %v3820 = vadd.f32 %v3575, %v3819
      %v3821 = vpop.f32.mrb[0].mxu0
      %3822 = vdwg.mxu0
      %3823 = vmatprep.subr.mxu0 0.0
      %3824 = vmatpush1.msra.mxu0 %v1253
      %3825 = vmatprep.subr.mxu0 0.0
      %3826 = vmatpush1.msra.mxu0 %v1254
      %3827 = vmatprep.subr.mxu0 0.0
      %3828 = vmatpush1.msra.mxu0 %v1255
      %3829 = vmatprep.subr.mxu0 0.0
      %3830 = vmatpush1.msra.mxu0 %v1256
      %3831 = vmatprep.subr.mxu0 0.0
      %3832 = vmatpush1.msra.mxu0 0.0
      %3833 = vmatprep.subr.mxu0 0.0
      %3834 = vmatpush1.msra.mxu0 0.0
      %3835 = vmatprep.subr.mxu0 0.0
      %3836 = vmatpush1.msra.mxu0 0.0
      %3837 = vmatprep.subr.mxu0 0.0
      %3838 = vmatpush1.msra.mxu0 0.0
      %3839 = vmatprep.subr.mxu0 0.0
      %3840 = vmatpush1.msra.mxu0 0.0
      %3841 = vmatprep.subr.mxu0 0.0
      %3842 = vmatpush1.msra.mxu0 0.0
      %3843 = vmatprep.subr.mxu0 0.0
      %3844 = vmatpush1.msra.mxu0 0.0
      %3845 = vmatprep.subr.mxu0 0.0
      %3846 = vmatpush1.msra.mxu0 0.0
      %3847 = vmatprep.subr.mxu0 0.0
      %3848 = vmatpush1.msra.mxu0 0.0
      %3849 = vmatprep.subr.mxu0 0.0
      %3850 = vmatpush1.msra.mxu0 0.0
      %3851 = vmatprep.subr.mxu0 0.0
      %3852 = vmatpush1.msra.mxu0 0.0
      %3853 = vmatprep.subr.mxu0 0.0
      %3854 = vmatpush1.msra.mxu0 0.0
      %3855 = vmatprep.subr.mxu0 0.0
      %3856 = vmatpush1.msra.mxu0 0.0
      %3857 = vmatprep.subr.mxu0 0.0
      %3858 = vmatpush1.msra.mxu0 0.0
      %3859 = vmatprep.subr.mxu0 0.0
      %3860 = vmatpush1.msra.mxu0 0.0
      %3861 = vmatprep.subr.mxu0 0.0
      %3862 = vmatpush1.msra.mxu0 0.0
      %3863 = vmatprep.subr.mxu0 0.0
      %3864 = vmatpush1.msra.mxu0 0.0
      %3865 = vmatprep.subr.mxu0 0.0
      %3866 = vmatpush1.msra.mxu0 0.0
      %3867 = vmatprep.subr.mxu0 0.0
      %3868 = vmatpush1.msra.mxu0 0.0
      %3869 = vmatprep.subr.mxu0 0.0
      %3870 = vmatpush1.msra.mxu0 0.0
      %3871 = vmatprep.subr.mxu0 0.0
      %3872 = vmatpush1.msra.mxu0 0.0
      %3873 = vmatprep.subr.mxu0 0.0
      %3874 = vmatpush1.msra.mxu0 0.0
      %3875 = vmatprep.subr.mxu0 0.0
      %3876 = vmatpush1.msra.mxu0 0.0
      %3877 = vmatprep.subr.mxu0 0.0
      %3878 = vmatpush1.msra.mxu0 0.0
      %3879 = vmatprep.subr.mxu0 0.0
      %3880 = vmatpush1.msra.mxu0 0.0
      %3881 = vmatprep.subr.mxu0 0.0
      %3882 = vmatpush1.msra.mxu0 0.0
      %3883 = vmatprep.subr.mxu0 0.0
      %3884 = vmatpush1.msra.mxu0 0.0
      %3885 = vmatprep.subr.mxu0 0.0
      %3886 = vmatpush1.msra.mxu0 0.0
      %3887 = vmatprep.mubr.f32.mxu0 0.0
      %3888 = vmatmul.mubr.f32.gmra.mrb[0].mxu0 %v1266
      %v3889 = vpop.f32.mrb[0].mxu0
      %v3890 = vadd.f32 %v3645, %v3889
      %v3891 = vpop.f32.mrb[0].mxu0
      %3892 = vmatprep.mubr.f32.mxu0 0.0
      %3893 = vmatmul.mubr.f32.gmra.mrb[0].mxu0 %v1269
      %v3894 = vpop.f32.mrb[0].mxu0
      %v3895 = vadd.f32 %v3650, %v3894
      %v3896 = vpop.f32.mrb[0].mxu0
      %3897 = vmatprep.mubr.f32.mxu0 0.0
      %3898 = vmatmul.mubr.f32.gmra.mrb[0].mxu0 %v1272
      %v3899 = vpop.f32.mrb[0].mxu0
      %v3900 = vadd.f32 %v3655, %v3899
      %v3901 = vpop.f32.mrb[0].mxu0
      %3902 = vmatprep.mubr.f32.mxu0 0.0
      %3903 = vmatmul.mubr.f32.gmra.mrb[0].mxu0 %v1275
      %v3904 = vpop.f32.mrb[0].mxu0
      %v3905 = vadd.f32 %v3660, %v3904
      %v3906 = vpop.f32.mrb[0].mxu0
      %3907 = vmatprep.mubr.f32.mxu0 0.0
      %3908 = vmatmul.mubr.f32.gmra.mrb[0].mxu0 %v1278
      %v3909 = vpop.f32.mrb[0].mxu0
      %v3910 = vadd.f32 %v3665, %v3909
      %v3911 = vpop.f32.mrb[0].mxu0
      %3912 = vmatprep.mubr.f32.mxu0 0.0
      %3913 = vmatmul.mubr.f32.gmra.mrb[0].mxu0 %v1281
      %v3914 = vpop.f32.mrb[0].mxu0
      %v3915 = vadd.f32 %v3670, %v3914
      %v3916 = vpop.f32.mrb[0].mxu0
      %3917 = vmatprep.mubr.f32.mxu0 0.0
      %3918 = vmatmul.mubr.f32.gmra.mrb[0].mxu0 %v1284
      %v3919 = vpop.f32.mrb[0].mxu0
      %v3920 = vadd.f32 %v3675, %v3919
      %v3921 = vpop.f32.mrb[0].mxu0
      %3922 = vmatprep.mubr.f32.mxu0 0.0
      %3923 = vmatmul.mubr.f32.gmra.mrb[0].mxu0 %v1287
      %v3924 = vpop.f32.mrb[0].mxu0
      %v3925 = vadd.f32 %v3680, %v3924
      %v3926 = vpop.f32.mrb[0].mxu0
      %3927 = vmatprep.mubr.f32.mxu0 0.0
      %3928 = vmatmul.mubr.f32.gmra.mrb[0].mxu0 %v1290
      %v3929 = vpop.f32.mrb[0].mxu0
      %v3930 = vadd.f32 %v3685, %v3929
      %v3931 = vpop.f32.mrb[0].mxu0
      %3932 = vmatprep.mubr.f32.mxu0 0.0
      %3933 = vmatmul.mubr.f32.gmra.mrb[0].mxu0 %v1293
      %v3934 = vpop.f32.mrb[0].mxu0
      %v3935 = vadd.f32 %v3690, %v3934
      %v3936 = vpop.f32.mrb[0].mxu0
      %3937 = vmatprep.mubr.f32.mxu0 0.0
      %3938 = vmatmul.mubr.f32.gmra.mrb[0].mxu0 %v1296
      %v3939 = vpop.f32.mrb[0].mxu0
      %v3940 = vadd.f32 %v3695, %v3939
      %v3941 = vpop.f32.mrb[0].mxu0
      %3942 = vmatprep.mubr.f32.mxu0 0.0
      %3943 = vmatmul.mubr.f32.gmra.mrb[0].mxu0 %v1299
      %v3944 = vpop.f32.mrb[0].mxu0
      %v3945 = vadd.f32 %v3700, %v3944
      %v3946 = vpop.f32.mrb[0].mxu0
      %3947 = vmatprep.mubr.f32.mxu0 0.0
      %3948 = vmatmul.mubr.f32.gmra.mrb[0].mxu0 %v1302
      %v3949 = vpop.f32.mrb[0].mxu0
      %v3950 = vadd.f32 %v3705, %v3949
      %v3951 = vpop.f32.mrb[0].mxu0
      %3952 = vmatprep.mubr.f32.mxu0 0.0
      %3953 = vmatmul.mubr.f32.gmra.mrb[0].mxu0 %v1305
      %v3954 = vpop.f32.mrb[0].mxu0
      %v3955 = vadd.f32 %v3710, %v3954
      %v3956 = vpop.f32.mrb[0].mxu0
      %3957 = vmatprep.mubr.f32.mxu0 0.0
      %3958 = vmatmul.mubr.f32.gmra.mrb[0].mxu0 %v1308
      %v3959 = vpop.f32.mrb[0].mxu0
      %v3960 = vadd.f32 %v3715, %v3959
      %v3961 = vpop.f32.mrb[0].mxu0
      %3962 = vmatprep.mubr.f32.mxu0 0.0
      %3963 = vmatmul.mubr.f32.gmra.mrb[0].mxu0 %v1311
      %v3964 = vpop.f32.mrb[0].mxu0
      %v3965 = vadd.f32 %v3720, %v3964
      %v3966 = vpop.f32.mrb[0].mxu0
      %3967 = vmatprep.mubr.f32.mxu0 0.0
      %3968 = vmatmul.mubr.f32.gmra.mrb[0].mxu0 %v1314
      %v3969 = vpop.f32.mrb[0].mxu0
      %v3970 = vadd.f32 %v3725, %v3969
      %v3971 = vpop.f32.mrb[0].mxu0
      %3972 = vmatprep.mubr.f32.mxu0 0.0
      %3973 = vmatmul.mubr.f32.gmra.mrb[0].mxu0 %v1317
      %v3974 = vpop.f32.mrb[0].mxu0
      %v3975 = vadd.f32 %v3730, %v3974
      %v3976 = vpop.f32.mrb[0].mxu0
      %3977 = vmatprep.mubr.f32.mxu0 0.0
      %3978 = vmatmul.mubr.f32.gmra.mrb[0].mxu0 %v1320
      %v3979 = vpop.f32.mrb[0].mxu0
      %v3980 = vadd.f32 %v3735, %v3979
      %v3981 = vpop.f32.mrb[0].mxu0
      %3982 = vmatprep.mubr.f32.mxu0 0.0
      %3983 = vmatmul.mubr.f32.gmra.mrb[0].mxu0 %v1323
      %v3984 = vpop.f32.mrb[0].mxu0
      %v3985 = vadd.f32 %v3740, %v3984
      %v3986 = vpop.f32.mrb[0].mxu0
      %3987 = vmatprep.mubr.f32.mxu0 0.0
      %3988 = vmatmul.mubr.f32.gmra.mrb[0].mxu0 %v1326
      %v3989 = vpop.f32.mrb[0].mxu0
      %v3990 = vadd.f32 %v3745, %v3989
      %v3991 = vpop.f32.mrb[0].mxu0
      %3992 = vmatprep.mubr.f32.mxu0 0.0
      %3993 = vmatmul.mubr.f32.gmra.mrb[0].mxu0 %v1329
      %v3994 = vpop.f32.mrb[0].mxu0
      %v3995 = vadd.f32 %v3750, %v3994
      %v3996 = vpop.f32.mrb[0].mxu0
      %3997 = vmatprep.mubr.f32.mxu0 0.0
      %3998 = vmatmul.mubr.f32.gmra.mrb[0].mxu0 %v1332
      %v3999 = vpop.f32.mrb[0].mxu0
      %v4000 = vadd.f32 %v3755, %v3999
      %v4001 = vpop.f32.mrb[0].mxu0
      %4002 = vmatprep.mubr.f32.mxu0 0.0
      %4003 = vmatmul.mubr.f32.gmra.mrb[0].mxu0 %v1335
      %v4004 = vpop.f32.mrb[0].mxu0
      %v4005 = vadd.f32 %v3760, %v4004
      %v4006 = vpop.f32.mrb[0].mxu0
      %4007 = vmatprep.mubr.f32.mxu0 0.0
      %4008 = vmatmul.mubr.f32.gmra.mrb[0].mxu0 %v1338
      %v4009 = vpop.f32.mrb[0].mxu0
      %v4010 = vadd.f32 %v3765, %v4009
      %v4011 = vpop.f32.mrb[0].mxu0
      %4012 = vmatprep.mubr.f32.mxu0 0.0
      %4013 = vmatmul.mubr.f32.gmra.mrb[0].mxu0 %v1341
      %v4014 = vpop.f32.mrb[0].mxu0
      %v4015 = vadd.f32 %v3770, %v4014
      %v4016 = vpop.f32.mrb[0].mxu0
      %4017 = vmatprep.mubr.f32.mxu0 0.0
      %4018 = vmatmul.mubr.f32.gmra.mrb[0].mxu0 %v1344
      %v4019 = vpop.f32.mrb[0].mxu0
      %v4020 = vadd.f32 %v3775, %v4019
      %v4021 = vpop.f32.mrb[0].mxu0
      %4022 = vmatprep.mubr.f32.mxu0 0.0
      %4023 = vmatmul.mubr.f32.gmra.mrb[0].mxu0 %v1347
      %v4024 = vpop.f32.mrb[0].mxu0
      %v4025 = vadd.f32 %v3780, %v4024
      %v4026 = vpop.f32.mrb[0].mxu0
      %4027 = vmatprep.mubr.f32.mxu0 0.0
      %4028 = vmatmul.mubr.f32.gmra.mrb[0].mxu0 %v1350
      %v4029 = vpop.f32.mrb[0].mxu0
      %v4030 = vadd.f32 %v3785, %v4029
      %v4031 = vpop.f32.mrb[0].mxu0
      %4032 = vmatprep.mubr.f32.mxu0 0.0
      %4033 = vmatmul.mubr.f32.gmra.mrb[0].mxu0 %v1353
      %v4034 = vpop.f32.mrb[0].mxu0
      %v4035 = vadd.f32 %v3790, %v4034
      %v4036 = vpop.f32.mrb[0].mxu0
      %4037 = vmatprep.mubr.f32.mxu0 0.0
      %4038 = vmatmul.mubr.f32.gmra.mrb[0].mxu0 %v1356
      %v4039 = vpop.f32.mrb[0].mxu0
      %v4040 = vadd.f32 %v3795, %v4039
      %v4041 = vpop.f32.mrb[0].mxu0
      %4042 = vmatprep.mubr.f32.mxu0 0.0
      %4043 = vmatmul.mubr.f32.gmra.mrb[0].mxu0 %v1359
      %v4044 = vpop.f32.mrb[0].mxu0
      %v4045 = vadd.f32 %v3800, %v4044
      %v4046 = vpop.f32.mrb[0].mxu0
      %4047 = vmatprep.mubr.f32.mxu0 0.0
      %4048 = vmatmul.mubr.f32.gmra.mrb[0].mxu0 %v1362
      %v4049 = vpop.f32.mrb[0].mxu0
      %v4050 = vadd.f32 %v3805, %v4049
      %v4051 = vpop.f32.mrb[0].mxu0
      %4052 = vmatprep.mubr.f32.mxu0 0.0
      %4053 = vmatmul.mubr.f32.gmra.mrb[0].mxu0 %v1365
      %v4054 = vpop.f32.mrb[0].mxu0
      %v4055 = vadd.f32 %v3810, %v4054
      %v4056 = vpop.f32.mrb[0].mxu0
      %4057 = vmatprep.mubr.f32.mxu0 0.0
      %4058 = vmatmul.mubr.f32.gmra.mrb[0].mxu0 %v1368
      %v4059 = vpop.f32.mrb[0].mxu0
      %v4060 = vadd.f32 %v3815, %v4059
      %v4061 = vpop.f32.mrb[0].mxu0
      %4062 = vmatprep.mubr.f32.mxu0 0.0
      %4063 = vmatmul.mubr.f32.gmra.mrb[0].mxu0 %v1371
      %v4064 = vpop.f32.mrb[0].mxu0
      %v4065 = vadd.f32 %v3820, %v4064
      %v4066 = vpop.f32.mrb[0].mxu0
      %4067 = vdwg.mxu0
      %v4068 = vmax.f32 %v3890, 0.0
      %v4069 = vmax.f32 %v3895, 0.0
      %v4070 = vmax.f32 %v3900, 0.0
      %v4071 = vmax.f32 %v3905, 0.0
      %v4072 = vmax.f32 %v3910, 0.0
      %v4073 = vmax.f32 %v3915, 0.0
      %v4074 = vmax.f32 %v3920, 0.0
      %v4075 = vmax.f32 %v3925, 0.0
      %v4076 = vmax.f32 %v3930, 0.0
      %v4077 = vmax.f32 %v3935, 0.0
      %v4078 = vmax.f32 %v3940, 0.0
      %v4079 = vmax.f32 %v3945, 0.0
      %v4080 = vmax.f32 %v3950, 0.0
      %v4081 = vmax.f32 %v3955, 0.0
      %v4082 = vmax.f32 %v3960, 0.0
      %v4083 = vmax.f32 %v3965, 0.0
      %v4084 = vmax.f32 %v3970, 0.0
      %v4085 = vmax.f32 %v3975, 0.0
      %v4086 = vmax.f32 %v3980, 0.0
      %v4087 = vmax.f32 %v3985, 0.0
      %v4088 = vmax.f32 %v3990, 0.0
      %v4089 = vmax.f32 %v3995, 0.0
      %v4090 = vmax.f32 %v4000, 0.0
      %v4091 = vmax.f32 %v4005, 0.0
      %v4092 = vmax.f32 %v4010, 0.0
      %v4093 = vmax.f32 %v4015, 0.0
      %v4094 = vmax.f32 %v4020, 0.0
      %v4095 = vmax.f32 %v4025, 0.0
      %v4096 = vmax.f32 %v4030, 0.0
      %v4097 = vmax.f32 %v4035, 0.0
      %v4098 = vmax.f32 %v4040, 0.0
      %v4099 = vmax.f32 %v4045, 0.0
      %v4100 = vmax.f32 %v4050, 0.0
      %v4101 = vmax.f32 %v4055, 0.0
      %v4102 = vmax.f32 %v4060, 0.0
      %v4103 = vmax.f32 %v4065, 0.0
      %4104 = vst [vmem:[%s175] sm:$0xff] %v4068
      %4105 = vst [vmem:[%s175 + $0x8] sm:$0xff] %v4069
      %4106 = vst [vmem:[%s175 + $0x10] sm:$0xff] %v4070
      %4107 = vst [vmem:[%s175 + $0x18] sm:$0xff] %v4071
      %4108 = vst [vmem:[%s175 + $0x20] sm:$0xff] %v4072
      %4109 = vst [vmem:[%s175 + $0x28] sm:$0xff] %v4073
      %4110 = vst [vmem:[%s175 + $0x30] sm:$0xff] %v4074
      %4111 = vst [vmem:[%s175 + $0x38] sm:$0xff] %v4075
      %4112 = vst [vmem:[%s175 + $0x40] sm:$0xff] %v4076
      %4113 = vst [vmem:[%s175 + $0x48] sm:$0xff] %v4077
      %4114 = vst [vmem:[%s175 + $0x50] sm:$0xff] %v4078
      %4115 = vst [vmem:[%s175 + $0x58] sm:$0xff] %v4079
      %4116 = vst [vmem:[%s175 + $0x60] sm:$0xff] %v4080
      %4117 = vst [vmem:[%s175 + $0x68] sm:$0xff] %v4081
      %4118 = vst [vmem:[%s175 + $0x70] sm:$0xff] %v4082
      %4119 = vst [vmem:[%s175 + $0x78] sm:$0xff] %v4083
      %4120 = vst [vmem:[%s175 + $0x80] sm:$0xff] %v4084
      %4121 = vst [vmem:[%s175 + $0x88] sm:$0xff] %v4085
      %4122 = vst [vmem:[%s175 + $0x90] sm:$0xff] %v4086
      %4123 = vst [vmem:[%s175 + $0x98] sm:$0xff] %v4087
      %4124 = vst [vmem:[%s175 + $0xa0] sm:$0xff] %v4088
      %4125 = vst [vmem:[%s175 + $0xa8] sm:$0xff] %v4089
      %4126 = vst [vmem:[%s175 + $0xb0] sm:$0xff] %v4090
      %4127 = vst [vmem:[%s175 + $0xb8] sm:$0xff] %v4091
      %4128 = vst [vmem:[%s175 + $0xc0] sm:$0xff] %v4092
      %4129 = vst [vmem:[%s175 + $0xc8] sm:$0xff] %v4093
      %4130 = vst [vmem:[%s175 + $0xd0] sm:$0xff] %v4094
      %4131 = vst [vmem:[%s175 + $0xd8] sm:$0xff] %v4095
      %4132 = vst [vmem:[%s175 + $0xe0] sm:$0xff] %v4096
      %4133 = vst [vmem:[%s175 + $0xe8] sm:$0xff] %v4097
      %4134 = vst [vmem:[%s175 + $0xf0] sm:$0xff] %v4098
      %4135 = vst [vmem:[%s175 + $0xf8] sm:$0xff] %v4099
      %4136 = vst [vmem:[%s175 + $0x100] sm:$0xff] %v4100
      %4137 = vst [vmem:[%s175 + $0x108] sm:$0xff] %v4101
      %4138 = vst [vmem:[%s175 + $0x110] sm:$0xff] %v4102
      %4139 = vst [vmem:[%s175 + $0x118] sm:$0xff] %v4103
      %s4140 = smul.u32 36, %s14
      %p4141 = scmp.lt.s32.totalorder %s4140, 71
      %s4142 = scalar_select %p4141, %s4140, 71
      %s4143 = smul.addr %s4142, 8
      %s4144 = scalar_lea.vmem %s3, %s4143
      // Predicated region
      $region33: #{capsnet_forward.4} parent=31 // pred_check
        %p4145 = pneg %p100
      $region34: #{capsnet_forward.4} parent=31 // pred_check_branch
        %4147 = sbr.rel (%p4145) target = $region36
      $region35: #{capsnet_forward.4} parent=31 // pred_region
        %s4148 = smul.u32 36, %s14
      $region36: #{capsnet_forward.4} parent=31 // pred_fallthru
        _
    $region32: #{capsnet_forward.4} parent=5 // pred_fallthru
      _
    %p4149 = scmp.le.s32.totalorder 2, %s9
    // Predicated region
    $region37: #{capsnet_forward.4} parent=5 // pred_check
      %p4150 = pneg %p4149
    $region38: #{capsnet_forward.4} parent=5 // pred_check_branch
      %4152 = sbr.rel (%p4150) target = $region40
    $region39: #{capsnet_forward.4} parent=5 // pred_region
      %s4153 = ssub.s32 %s9, 2
      // Predicated region
      $region41: #{capsnet_forward.4} parent=39 // pred_check
        %p4154 = pneg %p106
      $region42: #{capsnet_forward.4} parent=39 // pred_check_branch
        %4156 = sbr.rel (%p4154) target = $region44
      $region43: #{capsnet_forward.4} parent=39 // pred_region
        %s4157 = smul.u32 36, %s15
        %p4158 = scmp.lt.s32.totalorder %s4157, 71
        %s4159 = scalar_select %p4158, %s4157, 71
        %s4160 = smul.addr %s4159, 8
        %s4161 = scalar_lea.vmem %s3, %s4160
      $region44: #{capsnet_forward.4} parent=39 // pred_fallthru
        _
    $region40: #{capsnet_forward.4} parent=5 // pred_fallthru
      _
  $region6: #{capsnet_forward.4} parent=0 // loop_footer
    %s13 = sadd.s32 1, %s9
  $region7: #{capsnet_forward.4} parent=0 // loop_footer_branch
    %8 = sbr.rel target = $region3
  $region8: #{capsnet_forward.4} parent=0 // loop_exit
    _

// kernel: capsnet_forward.5
$region0: #{capsnet_forward.5}
  #allocation0 [shape = 'u32[]', space=smem, size = 0x4, offset = 0x4, fixed_abs, tag = 'smem constant byte address 0x4 - core index']
  #allocation1 [shape = 'u32[144,128]{1,0:T(1,128)}', space=vmem, size = 0x12000, scoped, tag = 'internal scratch']
  %s0 = inlined_call_operand.vmem [shape: f32[2,8,1152], index: 0, kind: input, shape index: {}]
  %s1 = inlined_call_operand.hbm [shape: f32[128,1152], index: 1, kind: input, shape index: {}]
  %s2 = inlined_call_operand.vmem [shape: f32[16,1152], index: 2, kind: input, shape index: {}]
  %s3 = inlined_call_operand.vmem [shape: f32[2,10,1], index: 3, kind: output, shape index: {}]
  %s4 = sld [smem:[#allocation0]]
  $region49: #{capsnet_forward.5} parent=0
    _
  %s6 = ssub.s32 1, %s4
  %s7 = scalar_select 0, %s6, %s4
  $region1: #{capsnet_forward.5} parent=0
    #allocation2 [shape = 'u8[589824]{0}', space=vmem, size = 0x90000, scoped, tag = 'input window, operand 1, single buffered']
    #allocation3 [shape = 's32[2]{0}', space=sflag, size = 0x8, scoped, tag = 'scoped memory for capsnet_forward.5']
    %8 = vsyncpa [#allocation3], 0
    loop: start=0, step=1, limit=4
    $region2: #{capsnet_forward.5} parent=1 // loop_pre_header
      _
    $region3: #{capsnet_forward.5} parent=1 // loop_header
      %s10 = sphi 0, %s14
      %p11 = scmp.ge.s32.totalorder %s10, 4
      %s20 = sphi 0, %s22
      %s23 = sphi 0, %s20
      %s24 = sphi 0, %s23
      %s40 = sphi 0, %s24
      %s44 = sphi 0, %s44
      %s46 = sphi 0, %s44
      %s47 = sphi 0, %s46
      %s61 = sphi 0, %s47
      %s65 = sphi 0, %s65
      %s67 = sphi 0, %s65
      %s68 = sphi 0, %s67
      %s82 = sphi 0, %s68
      %s88 = sphi 0, %s90
      %s91 = sphi 0, %s88
      %s92 = sphi 0, %s91
      %s108 = sphi 0, %s92
    $region4: #{capsnet_forward.5} parent=1 // loop_header_branch
      %13 = sbr.rel (%p11) target = $region8
    $region5: #{capsnet_forward.5} parent=1 // loop_body
      %s15 = ssub.s32 %s10, 1
      %s16 = ssub.s32 %s10, 2
      %s17 = sadd.s32 %s10, 1
      %s18 = ssub.s32 %s10, %s17
      %p19 = scmp.eq.s32.totalorder %s18, 0
      %s21 = sadd.s32 %s20, 1
      %s22 = scalar_select %p19, %s20, %s21
      %p25 = pneg %p19
      %p26 = scmp.eq.s32.totalorder %s10, 1
      %p27 = por %p25, %p26
      %p28 = scmp.ne.s32.totalorder %s20, %s23
      %p29 = scmp.eq.s32.totalorder %s10, 0
      %p30 = por %p28, %p29
      %p31 = scmp.ne.s32.totalorder %s20, %s23
      %p32 = scmp.eq.s32.totalorder %s15, 1
      %p33 = por %p31, %p32
      %p34 = scmp.ne.s32.totalorder %s23, %s24
      %p35 = scmp.eq.s32.totalorder %s15, 0
      %p36 = por %p34, %p35
      %p37 = scmp.ne.s32.totalorder %s23, %s24
      %p38 = scmp.eq.s32.totalorder %s16, 1
      %p39 = por %p37, %p38
      %p41 = scmp.ne.s32.totalorder %s24, %s40
      %p42 = scmp.eq.s32.totalorder %s16, 0
      %p43 = por %p41, %p42
      %s45 = sadd.s32 %s44, 1
      %p48 = scmp.eq.s32.totalorder %s10, 1
      %p49 = scmp.ne.s32.totalorder %s44, %s46
      %p50 = scmp.eq.s32.totalorder %s10, 0
      %p51 = por %p49, %p50
      %p52 = scmp.ne.s32.totalorder %s44, %s46
      %p53 = scmp.eq.s32.totalorder %s15, 1
      %p54 = por %p52, %p53
      %p55 = scmp.ne.s32.totalorder %s46, %s47
      %p56 = scmp.eq.s32.totalorder %s15, 0
      %p57 = por %p55, %p56
      %p58 = scmp.ne.s32.totalorder %s46, %s47
      %p59 = scmp.eq.s32.totalorder %s16, 1
      %p60 = por %p58, %p59
      %p62 = scmp.ne.s32.totalorder %s47, %s61
      %p63 = scmp.eq.s32.totalorder %s16, 0
      %p64 = por %p62, %p63
      %s66 = sadd.s32 %s65, 1
      %p69 = scmp.eq.s32.totalorder %s10, 1
      %p70 = scmp.ne.s32.totalorder %s65, %s67
      %p71 = scmp.eq.s32.totalorder %s10, 0
      %p72 = por %p70, %p71
      %p73 = scmp.ne.s32.totalorder %s65, %s67
      %p74 = scmp.eq.s32.totalorder %s15, 1
      %p75 = por %p73, %p74
      %p76 = scmp.ne.s32.totalorder %s67, %s68
      %p77 = scmp.eq.s32.totalorder %s15, 0
      %p78 = por %p76, %p77
      %p79 = scmp.ne.s32.totalorder %s67, %s68
      %p80 = scmp.eq.s32.totalorder %s16, 1
      %p81 = por %p79, %p80
      %p83 = scmp.ne.s32.totalorder %s68, %s82
      %p84 = scmp.eq.s32.totalorder %s16, 0
      %p85 = por %p83, %p84
      %s86 = ssub.s32 %s10, %s17
      %p87 = scmp.eq.s32.totalorder %s86, 0
      %s89 = sadd.s32 %s88, 1
      %s90 = scalar_select %p87, %s88, %s89
      %p93 = pneg %p87
      %p94 = scmp.eq.s32.totalorder %s10, 1
      %p95 = por %p93, %p94
      %p96 = scmp.ne.s32.totalorder %s88, %s91
      %p97 = scmp.eq.s32.totalorder %s10, 0
      %p98 = por %p96, %p97
      %p99 = scmp.ne.s32.totalorder %s88, %s91
      %p100 = scmp.eq.s32.totalorder %s15, 1
      %p101 = por %p99, %p100
      %p102 = scmp.ne.s32.totalorder %s91, %s92
      %p103 = scmp.eq.s32.totalorder %s15, 0
      %p104 = por %p102, %p103
      %p105 = scmp.ne.s32.totalorder %s91, %s92
      %p106 = scmp.eq.s32.totalorder %s16, 1
      %p107 = por %p105, %p106
      %p109 = scmp.ne.s32.totalorder %s92, %s108
      %p110 = scmp.eq.s32.totalorder %s16, 0
      %p111 = por %p109, %p110
      %p112 = scmp.le.s32.totalorder 1, %s10
      %p113 = scmp.lt.s32.totalorder %s10, 3
      %p114 = pnand %p112, %p113
      %p115 = pneg %p114
      // Predicated region
      $region9: #{capsnet_forward.5} parent=5 // pred_check
        _
      $region10: #{capsnet_forward.5} parent=5 // pred_check_branch
        %117 = sbr.rel (%p114) target = $region12
      $region11: #{capsnet_forward.5} parent=5 // pred_region
        %s118 = ssub.s32 %s10, 1
        // Predicated region
        $region13: #{capsnet_forward.5} parent=11 // pred_check
          %p119 = pneg %p57
        $region14: #{capsnet_forward.5} parent=11 // pred_check_branch
          %121 = sbr.rel (%p119) target = $region16
        $region15: #{capsnet_forward.5} parent=11 // pred_region
          %s123 = ssub.s32 18432, 18432
          %124 = vsyncadd [#allocation3], %s123
          %s125 = sshll.u32 [#allocation2], 4
          %s126 = int_to_ptr.vmem [resolvable:$true] %s125
          %131 = dma.hbm_to_vmem [thread:$0]  %s1, 18432, %s126, [#allocation3], 1152, 1152, 72
        $region16: #{capsnet_forward.5} parent=11 // pred_fallthru
          _
        // Predicated region
        $region17: #{capsnet_forward.5} parent=11 // pred_check
          %p132 = pneg %p78
        $region18: #{capsnet_forward.5} parent=11 // pred_check_branch
          %134 = sbr.rel (%p132) target = $region20
        $region19: #{capsnet_forward.5} parent=11 // pred_region
          _
        $region20: #{capsnet_forward.5} parent=11 // pred_fallthru
          _
      $region12: #{capsnet_forward.5} parent=5 // pred_fallthru
        _
      %p135 = scmp.lt.s32.totalorder %s10, 2
      // Predicated region
      $region21: #{capsnet_forward.5} parent=5 // pred_check
        %p136 = pneg %p135
      $region22: #{capsnet_forward.5} parent=5 // pred_check_branch
        %138 = sbr.rel (%p136) target = $region24
      $region23: #{capsnet_forward.5} parent=5 // pred_region
        // Predicated region
        $region25: #{capsnet_forward.5} parent=23 // pred_check
          %p139 = pneg %p30
        $region26: #{capsnet_forward.5} parent=23 // pred_check_branch
          %141 = sbr.rel (%p139) target = $region28
        $region27: #{capsnet_forward.5} parent=23 // pred_region
          %p142 = scmp.lt.s32.totalorder %s10, 1
          %s143 = scalar_select %p142, %s10, 1
          %s144 = smul.addr %s143, 9
          %s145 = smul.addr %s144, 8
          %s146 = scalar_lea.vmem %s0, %s145
        $region28: #{capsnet_forward.5} parent=23 // pred_fallthru
          _
      $region24: #{capsnet_forward.5} parent=5 // pred_fallthru
        _
      %p147 = scmp.le.s32.totalorder 1, %s10
      %p148 = scmp.lt.s32.totalorder %s10, 3
      %p149 = pnand %p147, %p148
      %p150 = pneg %p149
      // Predicated region
      $region29: #{capsnet_forward.5} parent=5 // pred_check
        _
      $region30: #{capsnet_forward.5} parent=5 // pred_check_branch
        %152 = sbr.rel (%p149) target = $region32
      $region31: #{capsnet_forward.5} parent=5 // pred_region
        %s153 = ssub.s32 %s10, 1
        // Predicated region
        $region33: #{capsnet_forward.5} parent=31 // pred_check
          %p154 = pneg %p57
        $region34: #{capsnet_forward.5} parent=31 // pred_check_branch
          %156 = sbr.rel (%p154) target = $region36
        $region35: #{capsnet_forward.5} parent=31 // pred_region
          %157 = dma.done [#allocation3], 18432
        $region36: #{capsnet_forward.5} parent=31 // pred_fallthru
          _
        %p158 = scmp.lt.s32.totalorder %s15, 1
        %s159 = scalar_select %p158, %s15, 1
        %s160 = smul.addr %s159, 9
        %s161 = smul.addr %s160, 8
        %s162 = scalar_lea.vmem %s0, %s161
        %p163 = pneg %p36
        %p164 = pneg %p33
        %p165 = pneg %p57
        %p166 = pneg %p54
        %p167 = pneg %p78
        %p168 = pneg %p75
        %p169 = pneg %p104
        %p170 = pneg %p101
        %p171 = scmp.lt.s32.totalorder %s15, 1
        %s172 = scalar_select %p171, %s15, 1
        %s173 = smul.addr %s172, 2
        %s174 = smul.addr %s173, 8
        %s175 = scalar_lea.vmem %s3, %s174
        %p176 = scmp.lt.s32.totalorder %s15, 1
        %s177 = scalar_select %p176, %s15, 1
        %s178 = smul.addr %s177, 9
        %s179 = smul.addr %s178, 8
        %s180 = scalar_lea.vmem %s0, %s179
        %p181 = scmp.lt.s32.totalorder %s15, 1
        %s182 = scalar_select %p181, %s15, 1
        %s183 = smul.addr %s182, 2
        %s184 = smul.addr %s183, 8
        %s185 = scalar_lea.vmem %s3, %s184
        %v186 = vld [vmem:[%s180] sm:$0xff]
        %v187 = vld [vmem:[%s180 + $0x8] sm:$0xff]
        %v188 = vld [vmem:[%s180 + $0x10] sm:$0xff]
        %v189 = vld [vmem:[%s180 + $0x18] sm:$0xff]
        %v190 = vld [vmem:[%s180 + $0x20] sm:$0xff]
        %v191 = vld [vmem:[%s180 + $0x28] sm:$0xff]
        %v192 = vld [vmem:[%s180 + $0x30] sm:$0xff]
        %v193 = vld [vmem:[%s180 + $0x38] sm:$0xff]
        %v194 = vld [vmem:[%s180 + $0x40] sm:$0xff]
        %v195 = vld [vmem:[#allocation2] sm:$0xff]
        %v196 = vld [vmem:[#allocation2 + $0x8] sm:$0xff]
        %v197 = vld [vmem:[#allocation2 + $0x10] sm:$0xff]
        %v198 = vld [vmem:[#allocation2 + $0x18] sm:$0xff]
        %v199 = vld [vmem:[#allocation2 + $0x20] sm:$0xff]
        %v200 = vld [vmem:[#allocation2 + $0x28] sm:$0xff]
        %v201 = vld [vmem:[#allocation2 + $0x30] sm:$0xff]
        %v202 = vld [vmem:[#allocation2 + $0x38] sm:$0xff]
        %v203 = vld [vmem:[#allocation2 + $0x40] sm:$0xff]
        %v204 = vld [vmem:[#allocation2 + $0x48] sm:$0xff]
        %v205 = vld [vmem:[#allocation2 + $0x50] sm:$0xff]
        %v206 = vld [vmem:[#allocation2 + $0x58] sm:$0xff]
        %v207 = vld [vmem:[#allocation2 + $0x60] sm:$0xff]
        %v208 = vld [vmem:[#allocation2 + $0x68] sm:$0xff]
        %v209 = vld [vmem:[#allocation2 + $0x70] sm:$0xff]
        %v210 = vld [vmem:[#allocation2 + $0x78] sm:$0xff]
        %v211 = vld [vmem:[#allocation2 + $0x80] sm:$0xff]
        %v212 = vld [vmem:[#allocation2 + $0x88] sm:$0xff]
        %v213 = vld [vmem:[#allocation2 + $0x90] sm:$0xff]
        %v214 = vld [vmem:[#allocation2 + $0x98] sm:$0xff]
        %v215 = vld [vmem:[#allocation2 + $0xa0] sm:$0xff]
        %v216 = vld [vmem:[#allocation2 + $0xa8] sm:$0xff]
        %v217 = vld [vmem:[#allocation2 + $0xb0] sm:$0xff]
        %v218 = vld [vmem:[#allocation2 + $0xb8] sm:$0xff]
        %v219 = vld [vmem:[#allocation2 + $0xc0] sm:$0xff]
        %v220 = vld [vmem:[#allocation2 + $0xc8] sm:$0xff]
        %v221 = vld [vmem:[#allocation2 + $0xd0] sm:$0xff]
        %v222 = vld [vmem:[#allocation2 + $0xd8] sm:$0xff]
        %v223 = vld [vmem:[#allocation2 + $0xe0] sm:$0xff]
        %v224 = vld [vmem:[#allocation2 + $0xe8] sm:$0xff]
        %v225 = vld [vmem:[#allocation2 + $0xf0] sm:$0xff]
        %v226 = vld [vmem:[#allocation2 + $0xf8] sm:$0xff]
        %v227 = vld [vmem:[#allocation2 + $0x100] sm:$0xff]
        %v228 = vld [vmem:[#allocation2 + $0x108] sm:$0xff]
        %v229 = vld [vmem:[#allocation2 + $0x110] sm:$0xff]
        %v230 = vld [vmem:[#allocation2 + $0x118] sm:$0xff]
        %v231 = vld [vmem:[#allocation2 + $0x120] sm:$0xff]
        %v232 = vld [vmem:[#allocation2 + $0x128] sm:$0xff]
        %v233 = vld [vmem:[#allocation2 + $0x130] sm:$0xff]
        %v234 = vld [vmem:[#allocation2 + $0x138] sm:$0xff]
        %v235 = vld [vmem:[#allocation2 + $0x140] sm:$0xff]
        %v236 = vld [vmem:[#allocation2 + $0x148] sm:$0xff]
        %v237 = vld [vmem:[#allocation2 + $0x150] sm:$0xff]
        %v238 = vld [vmem:[#allocation2 + $0x158] sm:$0xff]
        %v239 = vld [vmem:[#allocation2 + $0x160] sm:$0xff]
        %v240 = vld [vmem:[#allocation2 + $0x168] sm:$0xff]
        %v241 = vld [vmem:[#allocation2 + $0x170] sm:$0xff]
        %v242 = vld [vmem:[#allocation2 + $0x178] sm:$0xff]
        %v243 = vld [vmem:[#allocation2 + $0x180] sm:$0xff]
        %v244 = vld [vmem:[#allocation2 + $0x188] sm:$0xff]
        %v245 = vld [vmem:[#allocation2 + $0x190] sm:$0xff]
        %v246 = vld [vmem:[#allocation2 + $0x198] sm:$0xff]
        %v247 = vld [vmem:[#allocation2 + $0x1a0] sm:$0xff]
        %v248 = vld [vmem:[#allocation2 + $0x1a8] sm:$0xff]
        %v249 = vld [vmem:[#allocation2 + $0x1b0] sm:$0xff]
        %v250 = vld [vmem:[#allocation2 + $0x1b8] sm:$0xff]
        %v251 = vld [vmem:[#allocation2 + $0x1c0] sm:$0xff]
        %v252 = vld [vmem:[#allocation2 + $0x1c8] sm:$0xff]
        %v253 = vld [vmem:[#allocation2 + $0x1d0] sm:$0xff]
        %v254 = vld [vmem:[#allocation2 + $0x1d8] sm:$0xff]
        %v255 = vld [vmem:[#allocation2 + $0x1e0] sm:$0xff]
        %v256 = vld [vmem:[#allocation2 + $0x1e8] sm:$0xff]
        %v257 = vld [vmem:[#allocation2 + $0x1f0] sm:$0xff]
        %v258 = vld [vmem:[#allocation2 + $0x1f8] sm:$0xff]
        %v259 = vld [vmem:[#allocation2 + $0x200] sm:$0xff]
        %v260 = vld [vmem:[#allocation2 + $0x208] sm:$0xff]
        %v261 = vld [vmem:[#allocation2 + $0x210] sm:$0xff]
        %v262 = vld [vmem:[#allocation2 + $0x218] sm:$0xff]
        %v263 = vld [vmem:[#allocation2 + $0x220] sm:$0xff]
        %v264 = vld [vmem:[#allocation2 + $0x228] sm:$0xff]
        %v265 = vld [vmem:[#allocation2 + $0x230] sm:$0xff]
        %v266 = vld [vmem:[#allocation2 + $0x238] sm:$0xff]
        %v267 = vld [vmem:[#allocation2 + $0x240] sm:$0xff]
        %v268 = vld [vmem:[#allocation2 + $0x248] sm:$0xff]
        %v269 = vld [vmem:[#allocation2 + $0x250] sm:$0xff]
        %v270 = vld [vmem:[#allocation2 + $0x258] sm:$0xff]
        %v271 = vld [vmem:[#allocation2 + $0x260] sm:$0xff]
        %v272 = vld [vmem:[#allocation2 + $0x268] sm:$0xff]
        %v273 = vld [vmem:[#allocation2 + $0x270] sm:$0xff]
        %v274 = vld [vmem:[#allocation2 + $0x278] sm:$0xff]
        %v275 = vld [vmem:[#allocation2 + $0x280] sm:$0xff]
        %v276 = vld [vmem:[#allocation2 + $0x288] sm:$0xff]
        %v277 = vld [vmem:[#allocation2 + $0x290] sm:$0xff]
        %v278 = vld [vmem:[#allocation2 + $0x298] sm:$0xff]
        %v279 = vld [vmem:[#allocation2 + $0x2a0] sm:$0xff]
        %v280 = vld [vmem:[#allocation2 + $0x2a8] sm:$0xff]
        %v281 = vld [vmem:[#allocation2 + $0x2b0] sm:$0xff]
        %v282 = vld [vmem:[#allocation2 + $0x2b8] sm:$0xff]
        %v283 = vld [vmem:[#allocation2 + $0x2c0] sm:$0xff]
        %v284 = vld [vmem:[#allocation2 + $0x2c8] sm:$0xff]
        %v285 = vld [vmem:[#allocation2 + $0x2d0] sm:$0xff]
        %v286 = vld [vmem:[#allocation2 + $0x2d8] sm:$0xff]
        %v287 = vld [vmem:[#allocation2 + $0x2e0] sm:$0xff]
        %v288 = vld [vmem:[#allocation2 + $0x2e8] sm:$0xff]
        %v289 = vld [vmem:[#allocation2 + $0x2f0] sm:$0xff]
        %v290 = vld [vmem:[#allocation2 + $0x2f8] sm:$0xff]
        %v291 = vld [vmem:[#allocation2 + $0x300] sm:$0xff]
        %v292 = vld [vmem:[#allocation2 + $0x308] sm:$0xff]
        %v293 = vld [vmem:[#allocation2 + $0x310] sm:$0xff]
        %v294 = vld [vmem:[#allocation2 + $0x318] sm:$0xff]
        %v295 = vld [vmem:[#allocation2 + $0x320] sm:$0xff]
        %v296 = vld [vmem:[#allocation2 + $0x328] sm:$0xff]
        %v297 = vld [vmem:[#allocation2 + $0x330] sm:$0xff]
        %v298 = vld [vmem:[#allocation2 + $0x338] sm:$0xff]
        %v299 = vld [vmem:[#allocation2 + $0x340] sm:$0xff]
        %v300 = vld [vmem:[#allocation2 + $0x348] sm:$0xff]
        %v301 = vld [vmem:[#allocation2 + $0x350] sm:$0xff]
        %v302 = vld [vmem:[#allocation2 + $0x358] sm:$0xff]
        %v303 = vld [vmem:[#allocation2 + $0x360] sm:$0xff]
        %v304 = vld [vmem:[#allocation2 + $0x368] sm:$0xff]
        %v305 = vld [vmem:[#allocation2 + $0x370] sm:$0xff]
        %v306 = vld [vmem:[#allocation2 + $0x378] sm:$0xff]
        %v307 = vld [vmem:[#allocation2 + $0x380] sm:$0xff]
        %v308 = vld [vmem:[#allocation2 + $0x388] sm:$0xff]
        %v309 = vld [vmem:[#allocation2 + $0x390] sm:$0xff]
        %v310 = vld [vmem:[#allocation2 + $0x398] sm:$0xff]
        %v311 = vld [vmem:[#allocation2 + $0x3a0] sm:$0xff]
        %v312 = vld [vmem:[#allocation2 + $0x3a8] sm:$0xff]
        %v313 = vld [vmem:[#allocation2 + $0x3b0] sm:$0xff]
        %v314 = vld [vmem:[#allocation2 + $0x3b8] sm:$0xff]
        %v315 = vld [vmem:[#allocation2 + $0x3c0] sm:$0xff]
        %v316 = vld [vmem:[#allocation2 + $0x3c8] sm:$0xff]
        %v317 = vld [vmem:[#allocation2 + $0x3d0] sm:$0xff]
        %v318 = vld [vmem:[#allocation2 + $0x3d8] sm:$0xff]
        %v319 = vld [vmem:[#allocation2 + $0x3e0] sm:$0xff]
        %v320 = vld [vmem:[#allocation2 + $0x3e8] sm:$0xff]
        %v321 = vld [vmem:[#allocation2 + $0x3f0] sm:$0xff]
        %v322 = vld [vmem:[#allocation2 + $0x3f8] sm:$0xff]
        %v323 = vld [vmem:[#allocation2 + $0x400] sm:$0xff]
        %v324 = vld [vmem:[#allocation2 + $0x408] sm:$0xff]
        %v325 = vld [vmem:[#allocation2 + $0x410] sm:$0xff]
        %v326 = vld [vmem:[#allocation2 + $0x418] sm:$0xff]
        %v327 = vld [vmem:[#allocation2 + $0x420] sm:$0xff]
        %v328 = vld [vmem:[#allocation2 + $0x428] sm:$0xff]
        %v329 = vld [vmem:[#allocation2 + $0x430] sm:$0xff]
        %v330 = vld [vmem:[#allocation2 + $0x438] sm:$0xff]
        %v331 = vld [vmem:[#allocation2 + $0x440] sm:$0xff]
        %v332 = vld [vmem:[#allocation2 + $0x448] sm:$0xff]
        %v333 = vld [vmem:[#allocation2 + $0x450] sm:$0xff]
        %v334 = vld [vmem:[#allocation2 + $0x458] sm:$0xff]
        %v335 = vld [vmem:[#allocation2 + $0x460] sm:$0xff]
        %v336 = vld [vmem:[#allocation2 + $0x468] sm:$0xff]
        %v337 = vld [vmem:[#allocation2 + $0x470] sm:$0xff]
        %v338 = vld [vmem:[#allocation2 + $0x478] sm:$0xff]
        %v339 = vld [vmem:[%s2] sm:$0xff]
        %v340 = vld [vmem:[%s2 + $0x8] sm:$0xff]
        %v341 = vld [vmem:[%s2 + $0x10] sm:$0xff]
        %v342 = vld [vmem:[%s2 + $0x18] sm:$0xff]
        %v343 = vld [vmem:[%s2 + $0x20] sm:$0xff]
        %v344 = vld [vmem:[%s2 + $0x28] sm:$0xff]
        %v345 = vld [vmem:[%s2 + $0x30] sm:$0xff]
        %v346 = vld [vmem:[%s2 + $0x38] sm:$0xff]
        %v347 = vld [vmem:[%s2 + $0x40] sm:$0xff]
        %v348 = vld [vmem:[%s2 + $0x48] sm:$0xff]
        %v349 = vld [vmem:[%s2 + $0x50] sm:$0xff]
        %v350 = vld [vmem:[%s2 + $0x58] sm:$0xff]
        %v351 = vld [vmem:[%s2 + $0x60] sm:$0xff]
        %v352 = vld [vmem:[%s2 + $0x68] sm:$0xff]
        %v353 = vld [vmem:[%s2 + $0x70] sm:$0xff]
        %v354 = vld [vmem:[%s2 + $0x78] sm:$0xff]
        %v355 = vld [vmem:[%s2 + $0x80] sm:$0xff]
        %v356 = vld [vmem:[%s2 + $0x88] sm:$0xff]
        %v357 = vlaneseq
        %v358 = vshrl.u32 %v357, 7
        %v359 = vsub.s32 0, %v358
        %v360 = vrot.slane %v186, %v359
        %v361 = vlaneseq
        %v362 = vshrl.u32 %v361, 7
        %v363 = vsub.s32 0, %v362
        %v364 = vrot.slane %v187, %v363
        %v365 = vlaneseq
        %v366 = vshrl.u32 %v365, 7
        %v367 = vsub.s32 0, %v366
        %v368 = vrot.slane %v188, %v367
        %v369 = vlaneseq
        %v370 = vshrl.u32 %v369, 7
        %v371 = vsub.s32 0, %v370
        %v372 = vrot.slane %v189, %v371
        %v373 = vlaneseq
        %v374 = vshrl.u32 %v373, 7
        %v375 = vsub.s32 0, %v374
        %v376 = vrot.slane %v190, %v375
        %v377 = vlaneseq
        %v378 = vshrl.u32 %v377, 7
        %v379 = vsub.s32 0, %v378
        %v380 = vrot.slane %v191, %v379
        %v381 = vlaneseq
        %v382 = vshrl.u32 %v381, 7
        %v383 = vsub.s32 0, %v382
        %v384 = vrot.slane %v192, %v383
        %v385 = vlaneseq
        %v386 = vshrl.u32 %v385, 7
        %v387 = vsub.s32 0, %v386
        %v388 = vrot.slane %v193, %v387
        %v389 = vlaneseq
        %v390 = vshrl.u32 %v389, 7
        %v391 = vsub.s32 0, %v390
        %v392 = vrot.slane %v194, %v391
        %v393 = vmul.f32 %v360, %v195
        %v394 = vmul.f32 %v364, %v196
        %v395 = vmul.f32 %v368, %v197
        %v396 = vmul.f32 %v372, %v198
        %v397 = vmul.f32 %v376, %v199
        %v398 = vmul.f32 %v380, %v200
        %v399 = vmul.f32 %v384, %v201
        %v400 = vmul.f32 %v388, %v202
        %v401 = vmul.f32 %v392, %v203
        %v402 = vmul.f32 %v360, %v204
        %v403 = vmul.f32 %v364, %v205
        %v404 = vmul.f32 %v368, %v206
        %v405 = vmul.f32 %v372, %v207
        %v406 = vmul.f32 %v376, %v208
        %v407 = vmul.f32 %v380, %v209
        %v408 = vmul.f32 %v384, %v210
        %v409 = vmul.f32 %v388, %v211
        %v410 = vmul.f32 %v392, %v212
        %v411 = vadd.f32 %v339, %v393
        %v412 = vadd.f32 %v340, %v394
        %v413 = vadd.f32 %v341, %v395
        %v414 = vadd.f32 %v342, %v396
        %v415 = vadd.f32 %v343, %v397
        %v416 = vadd.f32 %v344, %v398
        %v417 = vadd.f32 %v345, %v399
        %v418 = vadd.f32 %v346, %v400
        %v419 = vadd.f32 %v347, %v401
        %v420 = vadd.f32 %v348, %v402
        %v421 = vadd.f32 %v349, %v403
        %v422 = vadd.f32 %v350, %v404
        %v423 = vadd.f32 %v351, %v405
        %v424 = vadd.f32 %v352, %v406
        %v425 = vadd.f32 %v353, %v407
        %v426 = vadd.f32 %v354, %v408
        %v427 = vadd.f32 %v355, %v409
        %v428 = vadd.f32 %v356, %v410
        %v429 = vlaneseq
        %v430 = vshrl.u32 %v429, 7
        %v431 = vsub.s32 1, %v430
        %v432 = vrot.slane %v186, %v431
        %v433 = vlaneseq
        %v434 = vshrl.u32 %v433, 7
        %v435 = vsub.s32 1, %v434
        %v436 = vrot.slane %v187, %v435
        %v437 = vlaneseq
        %v438 = vshrl.u32 %v437, 7
        %v439 = vsub.s32 1, %v438
        %v440 = vrot.slane %v188, %v439
        %v441 = vlaneseq
        %v442 = vshrl.u32 %v441, 7
        %v443 = vsub.s32 1, %v442
        %v444 = vrot.slane %v189, %v443
        %v445 = vlaneseq
        %v446 = vshrl.u32 %v445, 7
        %v447 = vsub.s32 1, %v446
        %v448 = vrot.slane %v190, %v447
        %v449 = vlaneseq
        %v450 = vshrl.u32 %v449, 7
        %v451 = vsub.s32 1, %v450
        %v452 = vrot.slane %v191, %v451
        %v453 = vlaneseq
        %v454 = vshrl.u32 %v453, 7
        %v455 = vsub.s32 1, %v454
        %v456 = vrot.slane %v192, %v455
        %v457 = vlaneseq
        %v458 = vshrl.u32 %v457, 7
        %v459 = vsub.s32 1, %v458
        %v460 = vrot.slane %v193, %v459
        %v461 = vlaneseq
        %v462 = vshrl.u32 %v461, 7
        %v463 = vsub.s32 1, %v462
        %v464 = vrot.slane %v194, %v463
        %v465 = vmul.f32 %v432, %v213
        %v466 = vmul.f32 %v436, %v214
        %v467 = vmul.f32 %v440, %v215
        %v468 = vmul.f32 %v444, %v216
        %v469 = vmul.f32 %v448, %v217
        %v470 = vmul.f32 %v452, %v218
        %v471 = vmul.f32 %v456, %v219
        %v472 = vmul.f32 %v460, %v220
        %v473 = vmul.f32 %v464, %v221
        %v474 = vmul.f32 %v432, %v222
        %v475 = vmul.f32 %v436, %v223
        %v476 = vmul.f32 %v440, %v224
        %v477 = vmul.f32 %v444, %v225
        %v478 = vmul.f32 %v448, %v226
        %v479 = vmul.f32 %v452, %v227
        %v480 = vmul.f32 %v456, %v228
        %v481 = vmul.f32 %v460, %v229
        %v482 = vmul.f32 %v464, %v230
        %v483 = vadd.f32 %v411, %v465
        %v484 = vadd.f32 %v412, %v466
        %v485 = vadd.f32 %v413, %v467
        %v486 = vadd.f32 %v414, %v468
        %v487 = vadd.f32 %v415, %v469
        %v488 = vadd.f32 %v416, %v470
        %v489 = vadd.f32 %v417, %v471
        %v490 = vadd.f32 %v418, %v472
        %v491 = vadd.f32 %v419, %v473
        %v492 = vadd.f32 %v420, %v474
        %v493 = vadd.f32 %v421, %v475
        %v494 = vadd.f32 %v422, %v476
        %v495 = vadd.f32 %v423, %v477
        %v496 = vadd.f32 %v424, %v478
        %v497 = vadd.f32 %v425, %v479
        %v498 = vadd.f32 %v426, %v480
        %v499 = vadd.f32 %v427, %v481
        %v500 = vadd.f32 %v428, %v482
        %v501 = vlaneseq
        %v502 = vshrl.u32 %v501, 7
        %v503 = vsub.s32 2, %v502
        %v504 = vrot.slane %v186, %v503
        %v505 = vlaneseq
        %v506 = vshrl.u32 %v505, 7
        %v507 = vsub.s32 2, %v506
        %v508 = vrot.slane %v187, %v507
        %v509 = vlaneseq
        %v510 = vshrl.u32 %v509, 7
        %v511 = vsub.s32 2, %v510
        %v512 = vrot.slane %v188, %v511
        %v513 = vlaneseq
        %v514 = vshrl.u32 %v513, 7
        %v515 = vsub.s32 2, %v514
        %v516 = vrot.slane %v189, %v515
        %v517 = vlaneseq
        %v518 = vshrl.u32 %v517, 7
        %v519 = vsub.s32 2, %v518
        %v520 = vrot.slane %v190, %v519
        %v521 = vlaneseq
        %v522 = vshrl.u32 %v521, 7
        %v523 = vsub.s32 2, %v522
        %v524 = vrot.slane %v191, %v523
        %v525 = vlaneseq
        %v526 = vshrl.u32 %v525, 7
        %v527 = vsub.s32 2, %v526
        %v528 = vrot.slane %v192, %v527
        %v529 = vlaneseq
        %v530 = vshrl.u32 %v529, 7
        %v531 = vsub.s32 2, %v530
        %v532 = vrot.slane %v193, %v531
        %v533 = vlaneseq
        %v534 = vshrl.u32 %v533, 7
        %v535 = vsub.s32 2, %v534
        %v536 = vrot.slane %v194, %v535
        %v537 = vmul.f32 %v504, %v231
        %v538 = vmul.f32 %v508, %v232
        %v539 = vmul.f32 %v512, %v233
        %v540 = vmul.f32 %v516, %v234
        %v541 = vmul.f32 %v520, %v235
        %v542 = vmul.f32 %v524, %v236
        %v543 = vmul.f32 %v528, %v237
        %v544 = vmul.f32 %v532, %v238
        %v545 = vmul.f32 %v536, %v239
        %v546 = vmul.f32 %v504, %v240
        %v547 = vmul.f32 %v508, %v241
        %v548 = vmul.f32 %v512, %v242
        %v549 = vmul.f32 %v516, %v243
        %v550 = vmul.f32 %v520, %v244
        %v551 = vmul.f32 %v524, %v245
        %v552 = vmul.f32 %v528, %v246
        %v553 = vmul.f32 %v532, %v247
        %v554 = vmul.f32 %v536, %v248
        %v555 = vadd.f32 %v483, %v537
        %v556 = vadd.f32 %v484, %v538
        %v557 = vadd.f32 %v485, %v539
        %v558 = vadd.f32 %v486, %v540
        %v559 = vadd.f32 %v487, %v541
        %v560 = vadd.f32 %v488, %v542
        %v561 = vadd.f32 %v489, %v543
        %v562 = vadd.f32 %v490, %v544
        %v563 = vadd.f32 %v491, %v545
        %v564 = vadd.f32 %v492, %v546
        %v565 = vadd.f32 %v493, %v547
        %v566 = vadd.f32 %v494, %v548
        %v567 = vadd.f32 %v495, %v549
        %v568 = vadd.f32 %v496, %v550
        %v569 = vadd.f32 %v497, %v551
        %v570 = vadd.f32 %v498, %v552
        %v571 = vadd.f32 %v499, %v553
        %v572 = vadd.f32 %v500, %v554
        %v573 = vlaneseq
        %v574 = vshrl.u32 %v573, 7
        %v575 = vsub.s32 3, %v574
        %v576 = vrot.slane %v186, %v575
        %v577 = vlaneseq
        %v578 = vshrl.u32 %v577, 7
        %v579 = vsub.s32 3, %v578
        %v580 = vrot.slane %v187, %v579
        %v581 = vlaneseq
        %v582 = vshrl.u32 %v581, 7
        %v583 = vsub.s32 3, %v582
        %v584 = vrot.slane %v188, %v583
        %v585 = vlaneseq
        %v586 = vshrl.u32 %v585, 7
        %v587 = vsub.s32 3, %v586
        %v588 = vrot.slane %v189, %v587
        %v589 = vlaneseq
        %v590 = vshrl.u32 %v589, 7
        %v591 = vsub.s32 3, %v590
        %v592 = vrot.slane %v190, %v591
        %v593 = vlaneseq
        %v594 = vshrl.u32 %v593, 7
        %v595 = vsub.s32 3, %v594
        %v596 = vrot.slane %v191, %v595
        %v597 = vlaneseq
        %v598 = vshrl.u32 %v597, 7
        %v599 = vsub.s32 3, %v598
        %v600 = vrot.slane %v192, %v599
        %v601 = vlaneseq
        %v602 = vshrl.u32 %v601, 7
        %v603 = vsub.s32 3, %v602
        %v604 = vrot.slane %v193, %v603
        %v605 = vlaneseq
        %v606 = vshrl.u32 %v605, 7
        %v607 = vsub.s32 3, %v606
        %v608 = vrot.slane %v194, %v607
        %v609 = vmul.f32 %v576, %v249
        %v610 = vmul.f32 %v580, %v250
        %v611 = vmul.f32 %v584, %v251
        %v612 = vmul.f32 %v588, %v252
        %v613 = vmul.f32 %v592, %v253
        %v614 = vmul.f32 %v596, %v254
        %v615 = vmul.f32 %v600, %v255
        %v616 = vmul.f32 %v604, %v256
        %v617 = vmul.f32 %v608, %v257
        %v618 = vmul.f32 %v576, %v258
        %v619 = vmul.f32 %v580, %v259
        %v620 = vmul.f32 %v584, %v260
        %v621 = vmul.f32 %v588, %v261
        %v622 = vmul.f32 %v592, %v262
        %v623 = vmul.f32 %v596, %v263
        %v624 = vmul.f32 %v600, %v264
        %v625 = vmul.f32 %v604, %v265
        %v626 = vmul.f32 %v608, %v266
        %v627 = vadd.f32 %v555, %v609
        %v628 = vadd.f32 %v556, %v610
        %v629 = vadd.f32 %v557, %v611
        %v630 = vadd.f32 %v558, %v612
        %v631 = vadd.f32 %v559, %v613
        %v632 = vadd.f32 %v560, %v614
        %v633 = vadd.f32 %v561, %v615
        %v634 = vadd.f32 %v562, %v616
        %v635 = vadd.f32 %v563, %v617
        %v636 = vadd.f32 %v564, %v618
        %v637 = vadd.f32 %v565, %v619
        %v638 = vadd.f32 %v566, %v620
        %v639 = vadd.f32 %v567, %v621
        %v640 = vadd.f32 %v568, %v622
        %v641 = vadd.f32 %v569, %v623
        %v642 = vadd.f32 %v570, %v624
        %v643 = vadd.f32 %v571, %v625
        %v644 = vadd.f32 %v572, %v626
        %v645 = vlaneseq
        %v646 = vshrl.u32 %v645, 7
        %v647 = vsub.s32 4, %v646
        %v648 = vrot.slane %v186, %v647
        %v649 = vlaneseq
        %v650 = vshrl.u32 %v649, 7
        %v651 = vsub.s32 4, %v650
        %v652 = vrot.slane %v187, %v651
        %v653 = vlaneseq
        %v654 = vshrl.u32 %v653, 7
        %v655 = vsub.s32 4, %v654
        %v656 = vrot.slane %v188, %v655
        %v657 = vlaneseq
        %v658 = vshrl.u32 %v657, 7
        %v659 = vsub.s32 4, %v658
        %v660 = vrot.slane %v189, %v659
        %v661 = vlaneseq
        %v662 = vshrl.u32 %v661, 7
        %v663 = vsub.s32 4, %v662
        %v664 = vrot.slane %v190, %v663
        %v665 = vlaneseq
        %v666 = vshrl.u32 %v665, 7
        %v667 = vsub.s32 4, %v666
        %v668 = vrot.slane %v191, %v667
        %v669 = vlaneseq
        %v670 = vshrl.u32 %v669, 7
        %v671 = vsub.s32 4, %v670
        %v672 = vrot.slane %v192, %v671
        %v673 = vlaneseq
        %v674 = vshrl.u32 %v673, 7
        %v675 = vsub.s32 4, %v674
        %v676 = vrot.slane %v193, %v675
        %v677 = vlaneseq
        %v678 = vshrl.u32 %v677, 7
        %v679 = vsub.s32 4, %v678
        %v680 = vrot.slane %v194, %v679
        %v681 = vmul.f32 %v648, %v267
        %v682 = vmul.f32 %v652, %v268
        %v683 = vmul.f32 %v656, %v269
        %v684 = vmul.f32 %v660, %v270
        %v685 = vmul.f32 %v664, %v271
        %v686 = vmul.f32 %v668, %v272
        %v687 = vmul.f32 %v672, %v273
        %v688 = vmul.f32 %v676, %v274
        %v689 = vmul.f32 %v680, %v275
        %v690 = vmul.f32 %v648, %v276
        %v691 = vmul.f32 %v652, %v277
        %v692 = vmul.f32 %v656, %v278
        %v693 = vmul.f32 %v660, %v279
        %v694 = vmul.f32 %v664, %v280
        %v695 = vmul.f32 %v668, %v281
        %v696 = vmul.f32 %v672, %v282
        %v697 = vmul.f32 %v676, %v283
        %v698 = vmul.f32 %v680, %v284
        %v699 = vadd.f32 %v627, %v681
        %v700 = vadd.f32 %v628, %v682
        %v701 = vadd.f32 %v629, %v683
        %v702 = vadd.f32 %v630, %v684
        %v703 = vadd.f32 %v631, %v685
        %v704 = vadd.f32 %v632, %v686
        %v705 = vadd.f32 %v633, %v687
        %v706 = vadd.f32 %v634, %v688
        %v707 = vadd.f32 %v635, %v689
        %v708 = vadd.f32 %v636, %v690
        %v709 = vadd.f32 %v637, %v691
        %v710 = vadd.f32 %v638, %v692
        %v711 = vadd.f32 %v639, %v693
        %v712 = vadd.f32 %v640, %v694
        %v713 = vadd.f32 %v641, %v695
        %v714 = vadd.f32 %v642, %v696
        %v715 = vadd.f32 %v643, %v697
        %v716 = vadd.f32 %v644, %v698
        %v717 = vlaneseq
        %v718 = vshrl.u32 %v717, 7
        %v719 = vsub.s32 5, %v718
        %v720 = vrot.slane %v186, %v719
        %v721 = vlaneseq
        %v722 = vshrl.u32 %v721, 7
        %v723 = vsub.s32 5, %v722
        %v724 = vrot.slane %v187, %v723
        %v725 = vlaneseq
        %v726 = vshrl.u32 %v725, 7
        %v727 = vsub.s32 5, %v726
        %v728 = vrot.slane %v188, %v727
        %v729 = vlaneseq
        %v730 = vshrl.u32 %v729, 7
        %v731 = vsub.s32 5, %v730
        %v732 = vrot.slane %v189, %v731
        %v733 = vlaneseq
        %v734 = vshrl.u32 %v733, 7
        %v735 = vsub.s32 5, %v734
        %v736 = vrot.slane %v190, %v735
        %v737 = vlaneseq
        %v738 = vshrl.u32 %v737, 7
        %v739 = vsub.s32 5, %v738
        %v740 = vrot.slane %v191, %v739
        %v741 = vlaneseq
        %v742 = vshrl.u32 %v741, 7
        %v743 = vsub.s32 5, %v742
        %v744 = vrot.slane %v192, %v743
        %v745 = vlaneseq
        %v746 = vshrl.u32 %v745, 7
        %v747 = vsub.s32 5, %v746
        %v748 = vrot.slane %v193, %v747
        %v749 = vlaneseq
        %v750 = vshrl.u32 %v749, 7
        %v751 = vsub.s32 5, %v750
        %v752 = vrot.slane %v194, %v751
        %v753 = vmul.f32 %v720, %v285
        %v754 = vmul.f32 %v724, %v286
        %v755 = vmul.f32 %v728, %v287
        %v756 = vmul.f32 %v732, %v288
        %v757 = vmul.f32 %v736, %v289
        %v758 = vmul.f32 %v740, %v290
        %v759 = vmul.f32 %v744, %v291
        %v760 = vmul.f32 %v748, %v292
        %v761 = vmul.f32 %v752, %v293
        %v762 = vmul.f32 %v720, %v294
        %v763 = vmul.f32 %v724, %v295
        %v764 = vmul.f32 %v728, %v296
        %v765 = vmul.f32 %v732, %v297
        %v766 = vmul.f32 %v736, %v298
        %v767 = vmul.f32 %v740, %v299
        %v768 = vmul.f32 %v744, %v300
        %v769 = vmul.f32 %v748, %v301
        %v770 = vmul.f32 %v752, %v302
        %v771 = vadd.f32 %v699, %v753
        %v772 = vadd.f32 %v700, %v754
        %v773 = vadd.f32 %v701, %v755
        %v774 = vadd.f32 %v702, %v756
        %v775 = vadd.f32 %v703, %v757
        %v776 = vadd.f32 %v704, %v758
        %v777 = vadd.f32 %v705, %v759
        %v778 = vadd.f32 %v706, %v760
        %v779 = vadd.f32 %v707, %v761
        %v780 = vadd.f32 %v708, %v762
        %v781 = vadd.f32 %v709, %v763
        %v782 = vadd.f32 %v710, %v764
        %v783 = vadd.f32 %v711, %v765
        %v784 = vadd.f32 %v712, %v766
        %v785 = vadd.f32 %v713, %v767
        %v786 = vadd.f32 %v714, %v768
        %v787 = vadd.f32 %v715, %v769
        %v788 = vadd.f32 %v716, %v770
        %v789 = vlaneseq
        %v790 = vshrl.u32 %v789, 7
        %v791 = vsub.s32 6, %v790
        %v792 = vrot.slane %v186, %v791
        %v793 = vlaneseq
        %v794 = vshrl.u32 %v793, 7
        %v795 = vsub.s32 6, %v794
        %v796 = vrot.slane %v187, %v795
        %v797 = vlaneseq
        %v798 = vshrl.u32 %v797, 7
        %v799 = vsub.s32 6, %v798
        %v800 = vrot.slane %v188, %v799
        %v801 = vlaneseq
        %v802 = vshrl.u32 %v801, 7
        %v803 = vsub.s32 6, %v802
        %v804 = vrot.slane %v189, %v803
        %v805 = vlaneseq
        %v806 = vshrl.u32 %v805, 7
        %v807 = vsub.s32 6, %v806
        %v808 = vrot.slane %v190, %v807
        %v809 = vlaneseq
        %v810 = vshrl.u32 %v809, 7
        %v811 = vsub.s32 6, %v810
        %v812 = vrot.slane %v191, %v811
        %v813 = vlaneseq
        %v814 = vshrl.u32 %v813, 7
        %v815 = vsub.s32 6, %v814
        %v816 = vrot.slane %v192, %v815
        %v817 = vlaneseq
        %v818 = vshrl.u32 %v817, 7
        %v819 = vsub.s32 6, %v818
        %v820 = vrot.slane %v193, %v819
        %v821 = vlaneseq
        %v822 = vshrl.u32 %v821, 7
        %v823 = vsub.s32 6, %v822
        %v824 = vrot.slane %v194, %v823
        %v825 = vmul.f32 %v792, %v303
        %v826 = vmul.f32 %v796, %v304
        %v827 = vmul.f32 %v800, %v305
        %v828 = vmul.f32 %v804, %v306
        %v829 = vmul.f32 %v808, %v307
        %v830 = vmul.f32 %v812, %v308
        %v831 = vmul.f32 %v816, %v309
        %v832 = vmul.f32 %v820, %v310
        %v833 = vmul.f32 %v824, %v311
        %v834 = vmul.f32 %v792, %v312
        %v835 = vmul.f32 %v796, %v313
        %v836 = vmul.f32 %v800, %v314
        %v837 = vmul.f32 %v804, %v315
        %v838 = vmul.f32 %v808, %v316
        %v839 = vmul.f32 %v812, %v317
        %v840 = vmul.f32 %v816, %v318
        %v841 = vmul.f32 %v820, %v319
        %v842 = vmul.f32 %v824, %v320
        %v843 = vadd.f32 %v771, %v825
        %v844 = vadd.f32 %v772, %v826
        %v845 = vadd.f32 %v773, %v827
        %v846 = vadd.f32 %v774, %v828
        %v847 = vadd.f32 %v775, %v829
        %v848 = vadd.f32 %v776, %v830
        %v849 = vadd.f32 %v777, %v831
        %v850 = vadd.f32 %v778, %v832
        %v851 = vadd.f32 %v779, %v833
        %v852 = vadd.f32 %v780, %v834
        %v853 = vadd.f32 %v781, %v835
        %v854 = vadd.f32 %v782, %v836
        %v855 = vadd.f32 %v783, %v837
        %v856 = vadd.f32 %v784, %v838
        %v857 = vadd.f32 %v785, %v839
        %v858 = vadd.f32 %v786, %v840
        %v859 = vadd.f32 %v787, %v841
        %v860 = vadd.f32 %v788, %v842
        %v861 = vlaneseq
        %v862 = vshrl.u32 %v861, 7
        %v863 = vsub.s32 7, %v862
        %v864 = vrot.slane %v186, %v863
        %v865 = vlaneseq
        %v866 = vshrl.u32 %v865, 7
        %v867 = vsub.s32 7, %v866
        %v868 = vrot.slane %v187, %v867
        %v869 = vlaneseq
        %v870 = vshrl.u32 %v869, 7
        %v871 = vsub.s32 7, %v870
        %v872 = vrot.slane %v188, %v871
        %v873 = vlaneseq
        %v874 = vshrl.u32 %v873, 7
        %v875 = vsub.s32 7, %v874
        %v876 = vrot.slane %v189, %v875
        %v877 = vlaneseq
        %v878 = vshrl.u32 %v877, 7
        %v879 = vsub.s32 7, %v878
        %v880 = vrot.slane %v190, %v879
        %v881 = vlaneseq
        %v882 = vshrl.u32 %v881, 7
        %v883 = vsub.s32 7, %v882
        %v884 = vrot.slane %v191, %v883
        %v885 = vlaneseq
        %v886 = vshrl.u32 %v885, 7
        %v887 = vsub.s32 7, %v886
        %v888 = vrot.slane %v192, %v887
        %v889 = vlaneseq
        %v890 = vshrl.u32 %v889, 7
        %v891 = vsub.s32 7, %v890
        %v892 = vrot.slane %v193, %v891
        %v893 = vlaneseq
        %v894 = vshrl.u32 %v893, 7
        %v895 = vsub.s32 7, %v894
        %v896 = vrot.slane %v194, %v895
        %v897 = vmul.f32 %v864, %v321
        %v898 = vmul.f32 %v868, %v322
        %v899 = vmul.f32 %v872, %v323
        %v900 = vmul.f32 %v876, %v324
        %v901 = vmul.f32 %v880, %v325
        %v902 = vmul.f32 %v884, %v326
        %v903 = vmul.f32 %v888, %v327
        %v904 = vmul.f32 %v892, %v328
        %v905 = vmul.f32 %v896, %v329
        %v906 = vmul.f32 %v864, %v330
        %v907 = vmul.f32 %v868, %v331
        %v908 = vmul.f32 %v872, %v332
        %v909 = vmul.f32 %v876, %v333
        %v910 = vmul.f32 %v880, %v334
        %v911 = vmul.f32 %v884, %v335
        %v912 = vmul.f32 %v888, %v336
        %v913 = vmul.f32 %v892, %v337
        %v914 = vmul.f32 %v896, %v338
        %v915 = vadd.f32 %v843, %v897
        %v916 = vadd.f32 %v844, %v898
        %v917 = vadd.f32 %v845, %v899
        %v918 = vadd.f32 %v846, %v900
        %v919 = vadd.f32 %v847, %v901
        %v920 = vadd.f32 %v848, %v902
        %v921 = vadd.f32 %v849, %v903
        %v922 = vadd.f32 %v850, %v904
        %v923 = vadd.f32 %v851, %v905
        %v924 = vadd.f32 %v852, %v906
        %v925 = vadd.f32 %v853, %v907
        %v926 = vadd.f32 %v854, %v908
        %v927 = vadd.f32 %v855, %v909
        %v928 = vadd.f32 %v856, %v910
        %v929 = vadd.f32 %v857, %v911
        %v930 = vadd.f32 %v858, %v912
        %v931 = vadd.f32 %v859, %v913
        %v932 = vadd.f32 %v860, %v914
        %vm933 = vcmask 1041408
        %v934 = vsel %vm933, 1.0, 0.0
        %v935 = vadd.f32 %v934, 1.0
        %v936 = vrot.slane %v935, 4
        %v937 = vadd.f32 %v935, %v936
        %v938 = vrot.slane %v937, 2
        %v939 = vadd.f32 %v937, %v938
        %v940 = vrot.slane %v939, 1
        %v941 = vadd.f32 %v939, %v940
        %v942 = vrcp.pop %v941
        %943 = vmatprep.subr.mxu0 %v916
        %944 = vmatpush1.xpose.msra.mxu0 %v915
        %945 = vmatprep.subr.mxu0 %v925
        %946 = vmatpush1.xpose.msra.mxu0 %v924
        %947 = vmatprep.subr.mxu0 0.0
        %948 = vmatpush1.xpose.msra.mxu0 0.0
        %949 = vmatprep.subr.mxu0 0.0
        %950 = vmatpush1.xpose.msra.mxu0 0.0
        %951 = vmatprep.subr.mxu0 0.0
        %952 = vmatpush1.xpose.msra.mxu0 0.0
        %953 = vmatprep.subr.mxu0 0.0
        %954 = vmatpush1.xpose.msra.mxu0 0.0
        %955 = vmatprep.subr.mxu0 0.0
        %956 = vmatpush1.xpose.msra.mxu0 0.0
        %957 = vmatprep.subr.mxu0 0.0
        %958 = vmatpush1.xpose.msra.mxu0 0.0
        %959 = vmatprep.subr.mxu0 0.0
        %960 = vmatpush1.xpose.msra.mxu0 0.0
        %961 = vmatprep.subr.mxu0 0.0
        %962 = vmatpush1.xpose.msra.mxu0 0.0
        %963 = vmatprep.subr.mxu0 0.0
        %964 = vmatpush1.xpose.msra.mxu0 0.0
        %965 = vmatprep.subr.mxu0 0.0
        %966 = vmatpush1.xpose.msra.mxu0 0.0
        %967 = vmatprep.subr.mxu0 0.0
        %968 = vmatpush1.xpose.msra.mxu0 0.0
        %969 = vmatprep.subr.mxu0 0.0
        %970 = vmatpush1.xpose.msra.mxu0 0.0
        %971 = vmatprep.subr.mxu0 0.0
        %972 = vmatpush1.xpose.msra.mxu0 0.0
        %973 = vmatprep.subr.mxu0 0.0
        %974 = vmatpush1.xpose.msra.mxu0 0.0
        %975 = vmatprep.subr.mxu0 0.0
        %976 = vmatpush1.xpose.msra.mxu0 0.0
        %977 = vmatprep.subr.mxu0 0.0
        %978 = vmatpush1.xpose.msra.mxu0 0.0
        %979 = vmatprep.subr.mxu0 0.0
        %980 = vmatpush1.xpose.msra.mxu0 0.0
        %981 = vmatprep.subr.mxu0 0.0
        %982 = vmatpush1.xpose.msra.mxu0 0.0
        %983 = vmatprep.subr.mxu0 0.0
        %984 = vmatpush1.xpose.msra.mxu0 0.0
        %985 = vmatprep.subr.mxu0 0.0
        %986 = vmatpush1.xpose.msra.mxu0 0.0
        %987 = vmatprep.subr.mxu0 0.0
        %988 = vmatpush1.xpose.msra.mxu0 0.0
        %989 = vmatprep.subr.mxu0 0.0
        %990 = vmatpush1.xpose.msra.mxu0 0.0
        %991 = vmatprep.subr.mxu0 0.0
        %992 = vmatpush1.xpose.msra.mxu0 0.0
        %993 = vmatprep.subr.mxu0 0.0
        %994 = vmatpush1.xpose.msra.mxu0 0.0
        %995 = vmatprep.subr.mxu0 0.0
        %996 = vmatpush1.xpose.msra.mxu0 0.0
        %997 = vmatprep.subr.mxu0 0.0
        %998 = vmatpush1.xpose.msra.mxu0 0.0
        %999 = vmatprep.subr.mxu0 0.0
        %1000 = vmatpush1.xpose.msra.mxu0 0.0
        %1001 = vmatprep.subr.mxu0 0.0
        %1002 = vmatpush1.xpose.msra.mxu0 0.0
        %1003 = vmatprep.subr.mxu0 0.0
        %1004 = vmatpush1.xpose.msra.mxu0 0.0
        %1005 = vmatprep.subr.mxu0 0.0
        %1006 = vmatpush1.xpose.msra.mxu0 0.0
        %1007 = vmatprep.mubr.f32.mxu0 %v942
        %1008 = vmatmul.mubr.f32.gmra.mrb[0].mxu0 %v942
        %v1009 = vpop.f32.mrb[0].mxu0
        %v1010 = vadd.f32 0.0, %v1009
        %v1011 = vpop.f32.mrb[0].mxu0
        %1012 = vmatprep.mubr.f32.mxu0 %v942
        %1013 = vmatmul.mubr.f32.gmra.mrb[0].mxu0 %v942
        %v1014 = vpop.f32.mrb[0].mxu0
        %v1015 = vadd.f32 0.0, %v1014
        %v1016 = vpop.f32.mrb[0].mxu0
        %1017 = vdwg.mxu0
        %1018 = vmatprep.subr.mxu0 %v918
        %1019 = vmatpush1.xpose.msra.mxu0 %v917
        %1020 = vmatprep.subr.mxu0 %v927
        %1021 = vmatpush1.xpose.msra.mxu0 %v926
        %1022 = vmatprep.subr.mxu0 0.0
        %1023 = vmatpush1.xpose.msra.mxu0 0.0
        %1024 = vmatprep.subr.mxu0 0.0
        %1025 = vmatpush1.xpose.msra.mxu0 0.0
        %1026 = vmatprep.subr.mxu0 0.0
        %1027 = vmatpush1.xpose.msra.mxu0 0.0
        %1028 = vmatprep.subr.mxu0 0.0
        %1029 = vmatpush1.xpose.msra.mxu0 0.0
        %1030 = vmatprep.subr.mxu0 0.0
        %1031 = vmatpush1.xpose.msra.mxu0 0.0
        %1032 = vmatprep.subr.mxu0 0.0
        %1033 = vmatpush1.xpose.msra.mxu0 0.0
        %1034 = vmatprep.subr.mxu0 0.0
        %1035 = vmatpush1.xpose.msra.mxu0 0.0
        %1036 = vmatprep.subr.mxu0 0.0
        %1037 = vmatpush1.xpose.msra.mxu0 0.0
        %1038 = vmatprep.subr.mxu0 0.0
        %1039 = vmatpush1.xpose.msra.mxu0 0.0
        %1040 = vmatprep.subr.mxu0 0.0
        %1041 = vmatpush1.xpose.msra.mxu0 0.0
        %1042 = vmatprep.subr.mxu0 0.0
        %1043 = vmatpush1.xpose.msra.mxu0 0.0
        %1044 = vmatprep.subr.mxu0 0.0
        %1045 = vmatpush1.xpose.msra.mxu0 0.0
        %1046 = vmatprep.subr.mxu0 0.0
        %1047 = vmatpush1.xpose.msra.mxu0 0.0
        %1048 = vmatprep.subr.mxu0 0.0
        %1049 = vmatpush1.xpose.msra.mxu0 0.0
        %1050 = vmatprep.subr.mxu0 0.0
        %1051 = vmatpush1.xpose.msra.mxu0 0.0
        %1052 = vmatprep.subr.mxu0 0.0
        %1053 = vmatpush1.xpose.msra.mxu0 0.0
        %1054 = vmatprep.subr.mxu0 0.0
        %1055 = vmatpush1.xpose.msra.mxu0 0.0
        %1056 = vmatprep.subr.mxu0 0.0
        %1057 = vmatpush1.xpose.msra.mxu0 0.0
        %1058 = vmatprep.subr.mxu0 0.0
        %1059 = vmatpush1.xpose.msra.mxu0 0.0
        %1060 = vmatprep.subr.mxu0 0.0
        %1061 = vmatpush1.xpose.msra.mxu0 0.0
        %1062 = vmatprep.subr.mxu0 0.0
        %1063 = vmatpush1.xpose.msra.mxu0 0.0
        %1064 = vmatprep.subr.mxu0 0.0
        %1065 = vmatpush1.xpose.msra.mxu0 0.0
        %1066 = vmatprep.subr.mxu0 0.0
        %1067 = vmatpush1.xpose.msra.mxu0 0.0
        %1068 = vmatprep.subr.mxu0 0.0
        %1069 = vmatpush1.xpose.msra.mxu0 0.0
        %1070 = vmatprep.subr.mxu0 0.0
        %1071 = vmatpush1.xpose.msra.mxu0 0.0
        %1072 = vmatprep.subr.mxu0 0.0
        %1073 = vmatpush1.xpose.msra.mxu0 0.0
        %1074 = vmatprep.subr.mxu0 0.0
        %1075 = vmatpush1.xpose.msra.mxu0 0.0
        %1076 = vmatprep.subr.mxu0 0.0
        %1077 = vmatpush1.xpose.msra.mxu0 0.0
        %1078 = vmatprep.subr.mxu0 0.0
        %1079 = vmatpush1.xpose.msra.mxu0 0.0
        %1080 = vmatprep.subr.mxu0 0.0
        %1081 = vmatpush1.xpose.msra.mxu0 0.0
        %1082 = vmatprep.mubr.f32.mxu0 %v942
        %1083 = vmatmul.mubr.f32.gmra.mrb[0].mxu0 %v942
        %v1084 = vpop.f32.mrb[0].mxu0
        %v1085 = vadd.f32 %v1010, %v1084
        %v1086 = vpop.f32.mrb[0].mxu0
        %1087 = vmatprep.mubr.f32.mxu0 %v942
        %1088 = vmatmul.mubr.f32.gmra.mrb[0].mxu0 %v942
        %v1089 = vpop.f32.mrb[0].mxu0
        %v1090 = vadd.f32 %v1015, %v1089
        %v1091 = vpop.f32.mrb[0].mxu0
        %1092 = vdwg.mxu0
        %1093 = vmatprep.subr.mxu0 %v920
        %1094 = vmatpush1.xpose.msra.mxu0 %v919
        %1095 = vmatprep.subr.mxu0 %v929
        %1096 = vmatpush1.xpose.msra.mxu0 %v928
        %1097 = vmatprep.subr.mxu0 0.0
        %1098 = vmatpush1.xpose.msra.mxu0 0.0
        %1099 = vmatprep.subr.mxu0 0.0
        %1100 = vmatpush1.xpose.msra.mxu0 0.0
        %1101 = vmatprep.subr.mxu0 0.0
        %1102 = vmatpush1.xpose.msra.mxu0 0.0
        %1103 = vmatprep.subr.mxu0 0.0
        %1104 = vmatpush1.xpose.msra.mxu0 0.0
        %1105 = vmatprep.subr.mxu0 0.0
        %1106 = vmatpush1.xpose.msra.mxu0 0.0
        %1107 = vmatprep.subr.mxu0 0.0
        %1108 = vmatpush1.xpose.msra.mxu0 0.0
        %1109 = vmatprep.subr.mxu0 0.0
        %1110 = vmatpush1.xpose.msra.mxu0 0.0
        %1111 = vmatprep.subr.mxu0 0.0
        %1112 = vmatpush1.xpose.msra.mxu0 0.0
        %1113 = vmatprep.subr.mxu0 0.0
        %1114 = vmatpush1.xpose.msra.mxu0 0.0
        %1115 = vmatprep.subr.mxu0 0.0
        %1116 = vmatpush1.xpose.msra.mxu0 0.0
        %1117 = vmatprep.subr.mxu0 0.0
        %1118 = vmatpush1.xpose.msra.mxu0 0.0
        %1119 = vmatprep.subr.mxu0 0.0
        %1120 = vmatpush1.xpose.msra.mxu0 0.0
        %1121 = vmatprep.subr.mxu0 0.0
        %1122 = vmatpush1.xpose.msra.mxu0 0.0
        %1123 = vmatprep.subr.mxu0 0.0
        %1124 = vmatpush1.xpose.msra.mxu0 0.0
        %1125 = vmatprep.subr.mxu0 0.0
        %1126 = vmatpush1.xpose.msra.mxu0 0.0
        %1127 = vmatprep.subr.mxu0 0.0
        %1128 = vmatpush1.xpose.msra.mxu0 0.0
        %1129 = vmatprep.subr.mxu0 0.0
        %1130 = vmatpush1.xpose.msra.mxu0 0.0
        %1131 = vmatprep.subr.mxu0 0.0
        %1132 = vmatpush1.xpose.msra.mxu0 0.0
        %1133 = vmatprep.subr.mxu0 0.0
        %1134 = vmatpush1.xpose.msra.mxu0 0.0
        %1135 = vmatprep.subr.mxu0 0.0
        %1136 = vmatpush1.xpose.msra.mxu0 0.0
        %1137 = vmatprep.subr.mxu0 0.0
        %1138 = vmatpush1.xpose.msra.mxu0 0.0
        %1139 = vmatprep.subr.mxu0 0.0
        %1140 = vmatpush1.xpose.msra.mxu0 0.0
        %1141 = vmatprep.subr.mxu0 0.0
        %1142 = vmatpush1.xpose.msra.mxu0 0.0
        %1143 = vmatprep.subr.mxu0 0.0
        %1144 = vmatpush1.xpose.msra.mxu0 0.0
        %1145 = vmatprep.subr.mxu0 0.0
        %1146 = vmatpush1.xpose.msra.mxu0 0.0
        %1147 = vmatprep.subr.mxu0 0.0
        %1148 = vmatpush1.xpose.msra.mxu0 0.0
        %1149 = vmatprep.subr.mxu0 0.0
        %1150 = vmatpush1.xpose.msra.mxu0 0.0
        %1151 = vmatprep.subr.mxu0 0.0
        %1152 = vmatpush1.xpose.msra.mxu0 0.0
        %1153 = vmatprep.subr.mxu0 0.0
        %1154 = vmatpush1.xpose.msra.mxu0 0.0
        %1155 = vmatprep.subr.mxu0 0.0
        %1156 = vmatpush1.xpose.msra.mxu0 0.0
        %1157 = vmatprep.mubr.f32.mxu0 %v942
        %1158 = vmatmul.mubr.f32.gmra.mrb[0].mxu0 %v942
        %v1159 = vpop.f32.mrb[0].mxu0
        %v1160 = vadd.f32 %v1085, %v1159
        %v1161 = vpop.f32.mrb[0].mxu0
        %1162 = vmatprep.mubr.f32.mxu0 %v942
        %1163 = vmatmul.mubr.f32.gmra.mrb[0].mxu0 %v942
        %v1164 = vpop.f32.mrb[0].mxu0
        %v1165 = vadd.f32 %v1090, %v1164
        %v1166 = vpop.f32.mrb[0].mxu0
        %1167 = vdwg.mxu0
        %1168 = vmatprep.subr.mxu0 %v922
        %1169 = vmatpush1.xpose.msra.mxu0 %v921
        %1170 = vmatprep.subr.mxu0 %v931
        %1171 = vmatpush1.xpose.msra.mxu0 %v930
        %1172 = vmatprep.subr.mxu0 0.0
        %1173 = vmatpush1.xpose.msra.mxu0 0.0
        %1174 = vmatprep.subr.mxu0 0.0
        %1175 = vmatpush1.xpose.msra.mxu0 0.0
        %1176 = vmatprep.subr.mxu0 0.0
        %1177 = vmatpush1.xpose.msra.mxu0 0.0
        %1178 = vmatprep.subr.mxu0 0.0
        %1179 = vmatpush1.xpose.msra.mxu0 0.0
        %1180 = vmatprep.subr.mxu0 0.0
        %1181 = vmatpush1.xpose.msra.mxu0 0.0
        %1182 = vmatprep.subr.mxu0 0.0
        %1183 = vmatpush1.xpose.msra.mxu0 0.0
        %1184 = vmatprep.subr.mxu0 0.0
        %1185 = vmatpush1.xpose.msra.mxu0 0.0
        %1186 = vmatprep.subr.mxu0 0.0
        %1187 = vmatpush1.xpose.msra.mxu0 0.0
        %1188 = vmatprep.subr.mxu0 0.0
        %1189 = vmatpush1.xpose.msra.mxu0 0.0
        %1190 = vmatprep.subr.mxu0 0.0
        %1191 = vmatpush1.xpose.msra.mxu0 0.0
        %1192 = vmatprep.subr.mxu0 0.0
        %1193 = vmatpush1.xpose.msra.mxu0 0.0
        %1194 = vmatprep.subr.mxu0 0.0
        %1195 = vmatpush1.xpose.msra.mxu0 0.0
        %1196 = vmatprep.subr.mxu0 0.0
        %1197 = vmatpush1.xpose.msra.mxu0 0.0
        %1198 = vmatprep.subr.mxu0 0.0
        %1199 = vmatpush1.xpose.msra.mxu0 0.0
        %1200 = vmatprep.subr.mxu0 0.0
        %1201 = vmatpush1.xpose.msra.mxu0 0.0
        %1202 = vmatprep.subr.mxu0 0.0
        %1203 = vmatpush1.xpose.msra.mxu0 0.0
        %1204 = vmatprep.subr.mxu0 0.0
        %1205 = vmatpush1.xpose.msra.mxu0 0.0
        %1206 = vmatprep.subr.mxu0 0.0
        %1207 = vmatpush1.xpose.msra.mxu0 0.0
        %1208 = vmatprep.subr.mxu0 0.0
        %1209 = vmatpush1.xpose.msra.mxu0 0.0
        %1210 = vmatprep.subr.mxu0 0.0
        %1211 = vmatpush1.xpose.msra.mxu0 0.0
        %1212 = vmatprep.subr.mxu0 0.0
        %1213 = vmatpush1.xpose.msra.mxu0 0.0
        %1214 = vmatprep.subr.mxu0 0.0
        %1215 = vmatpush1.xpose.msra.mxu0 0.0
        %1216 = vmatprep.subr.mxu0 0.0
        %1217 = vmatpush1.xpose.msra.mxu0 0.0
        %1218 = vmatprep.subr.mxu0 0.0
        %1219 = vmatpush1.xpose.msra.mxu0 0.0
        %1220 = vmatprep.subr.mxu0 0.0
        %1221 = vmatpush1.xpose.msra.mxu0 0.0
        %1222 = vmatprep.subr.mxu0 0.0
        %1223 = vmatpush1.xpose.msra.mxu0 0.0
        %1224 = vmatprep.subr.mxu0 0.0
        %1225 = vmatpush1.xpose.msra.mxu0 0.0
        %1226 = vmatprep.subr.mxu0 0.0
        %1227 = vmatpush1.xpose.msra.mxu0 0.0
        %1228 = vmatprep.subr.mxu0 0.0
        %1229 = vmatpush1.xpose.msra.mxu0 0.0
        %1230 = vmatprep.subr.mxu0 0.0
        %1231 = vmatpush1.xpose.msra.mxu0 0.0
        %1232 = vmatprep.mubr.f32.mxu0 %v942
        %1233 = vmatmul.mubr.f32.gmra.mrb[0].mxu0 %v942
        %v1234 = vpop.f32.mrb[0].mxu0
        %v1235 = vadd.f32 %v1160, %v1234
        %v1236 = vpop.f32.mrb[0].mxu0
        %1237 = vmatprep.mubr.f32.mxu0 %v942
        %1238 = vmatmul.mubr.f32.gmra.mrb[0].mxu0 %v942
        %v1239 = vpop.f32.mrb[0].mxu0
        %v1240 = vadd.f32 %v1165, %v1239
        %v1241 = vpop.f32.mrb[0].mxu0
        %1242 = vdwg.mxu0
        %1243 = vmatprep.subr.mxu0 0.0
        %1244 = vmatpush1.xpose.msra.mxu0 %v923
        %1245 = vmatprep.subr.mxu0 0.0
        %1246 = vmatpush1.xpose.msra.mxu0 %v932
        %1247 = vmatprep.subr.mxu0 0.0
        %1248 = vmatpush1.xpose.msra.mxu0 0.0
        %1249 = vmatprep.subr.mxu0 0.0
        %1250 = vmatpush1.xpose.msra.mxu0 0.0
        %1251 = vmatprep.subr.mxu0 0.0
        %1252 = vmatpush1.xpose.msra.mxu0 0.0
        %1253 = vmatprep.subr.mxu0 0.0
        %1254 = vmatpush1.xpose.msra.mxu0 0.0
        %1255 = vmatprep.subr.mxu0 0.0
        %1256 = vmatpush1.xpose.msra.mxu0 0.0
        %1257 = vmatprep.subr.mxu0 0.0
        %1258 = vmatpush1.xpose.msra.mxu0 0.0
        %1259 = vmatprep.subr.mxu0 0.0
        %1260 = vmatpush1.xpose.msra.mxu0 0.0
        %1261 = vmatprep.subr.mxu0 0.0
        %1262 = vmatpush1.xpose.msra.mxu0 0.0
        %1263 = vmatprep.subr.mxu0 0.0
        %1264 = vmatpush1.xpose.msra.mxu0 0.0
        %1265 = vmatprep.subr.mxu0 0.0
        %1266 = vmatpush1.xpose.msra.mxu0 0.0
        %1267 = vmatprep.subr.mxu0 0.0
        %1268 = vmatpush1.xpose.msra.mxu0 0.0
        %1269 = vmatprep.subr.mxu0 0.0
        %1270 = vmatpush1.xpose.msra.mxu0 0.0
        %1271 = vmatprep.subr.mxu0 0.0
        %1272 = vmatpush1.xpose.msra.mxu0 0.0
        %1273 = vmatprep.subr.mxu0 0.0
        %1274 = vmatpush1.xpose.msra.mxu0 0.0
        %1275 = vmatprep.subr.mxu0 0.0
        %1276 = vmatpush1.xpose.msra.mxu0 0.0
        %1277 = vmatprep.subr.mxu0 0.0
        %1278 = vmatpush1.xpose.msra.mxu0 0.0
        %1279 = vmatprep.subr.mxu0 0.0
        %1280 = vmatpush1.xpose.msra.mxu0 0.0
        %1281 = vmatprep.subr.mxu0 0.0
        %1282 = vmatpush1.xpose.msra.mxu0 0.0
        %1283 = vmatprep.subr.mxu0 0.0
        %1284 = vmatpush1.xpose.msra.mxu0 0.0
        %1285 = vmatprep.subr.mxu0 0.0
        %1286 = vmatpush1.xpose.msra.mxu0 0.0
        %1287 = vmatprep.subr.mxu0 0.0
        %1288 = vmatpush1.xpose.msra.mxu0 0.0
        %1289 = vmatprep.subr.mxu0 0.0
        %1290 = vmatpush1.xpose.msra.mxu0 0.0
        %1291 = vmatprep.subr.mxu0 0.0
        %1292 = vmatpush1.xpose.msra.mxu0 0.0
        %1293 = vmatprep.subr.mxu0 0.0
        %1294 = vmatpush1.xpose.msra.mxu0 0.0
        %1295 = vmatprep.subr.mxu0 0.0
        %1296 = vmatpush1.xpose.msra.mxu0 0.0
        %1297 = vmatprep.subr.mxu0 0.0
        %1298 = vmatpush1.xpose.msra.mxu0 0.0
        %1299 = vmatprep.subr.mxu0 0.0
        %1300 = vmatpush1.xpose.msra.mxu0 0.0
        %1301 = vmatprep.subr.mxu0 0.0
        %1302 = vmatpush1.xpose.msra.mxu0 0.0
        %1303 = vmatprep.subr.mxu0 0.0
        %1304 = vmatpush1.xpose.msra.mxu0 0.0
        %1305 = vmatprep.subr.mxu0 0.0
        %1306 = vmatpush1.xpose.msra.mxu0 0.0
        %1307 = vmatprep.mubr.f32.mxu0 0.0
        %1308 = vmatmul.mubr.f32.gmra.mrb[0].mxu0 %v942
        %v1309 = vpop.f32.mrb[0].mxu0
        %v1310 = vadd.f32 %v1235, %v1309
        %v1311 = vpop.f32.mrb[0].mxu0
        %1312 = vmatprep.mubr.f32.mxu0 0.0
        %1313 = vmatmul.mubr.f32.gmra.mrb[0].mxu0 %v942
        %v1314 = vpop.f32.mrb[0].mxu0
        %v1315 = vadd.f32 %v1240, %v1314
        %v1316 = vpop.f32.mrb[0].mxu0
        %1317 = vdwg.mxu0
        %v1318 = vmul.f32 %v1310, %v1310
        %v1319 = vmul.f32 %v1315, %v1315
        %vm1320 = vcmask 130048
        %v1321 = vsel %vm1320, %v1318, 0.0
        %vm1322 = vcmask 123904
        %v1323 = vsel %vm1322, %v1319, 0.0
        %v1324 = vadd.f32 %v1321, %v1323
        %v1325 = vrot.slane %v1324, 4
        %v1326 = vadd.f32 %v1324, %v1325
        %v1327 = vrot.slane %v1326, 2
        %v1328 = vadd.f32 %v1326, %v1327
        %v1329 = vrot.slane %v1328, 1
        %v1330 = vadd.f32 %v1328, %v1329
        %v1331 = vand.u32 2147483647, %v1310
        %v1332 = vand.u32 2147483647, %v1315
        %v1333 = vsel %vm1320, %v1331, 0.0
        %v1334 = vsel %vm1322, %v1332, 0.0
        %v1335 = vadd.f32 %v1333, %v1334
        %v1336 = vrot.slane %v1335, 4
        %v1337 = vadd.f32 %v1335, %v1336
        %v1338 = vrot.slane %v1337, 2
        %v1339 = vadd.f32 %v1337, %v1338
        %v1340 = vrot.slane %v1339, 1
        %v1341 = vadd.f32 %v1339, %v1340
        %v1342 = vmul.f32 %v1330, %v1341
        %v1343 = vadd.f32 %v1342, 1.0
        %v1344 = vrcp.pop %v1343
        %v1345 = vmul.f32 %v1330, %v1344
        %v1346 = vmul.f32 %v1345, %v1310
        %v1347 = vmul.f32 %v1345, %v1315
        %v1349 = vsel %vm1320, %v1346, 0
        %v1352 = vsel %vm1320, %v1347, 0
        %1354 = vmatprep.subr.mxu0 %v916
        %1355 = vmatpush1.msra.mxu0 %v915
        %1356 = vmatprep.subr.mxu0 %v925
        %1357 = vmatpush1.msra.mxu0 %v924
        %1358 = vmatprep.subr.mxu0 0.0
        %1359 = vmatpush1.msra.mxu0 0.0
        %1360 = vmatprep.subr.mxu0 0.0
        %1361 = vmatpush1.msra.mxu0 0.0
        %1362 = vmatprep.subr.mxu0 0.0
        %1363 = vmatpush1.msra.mxu0 0.0
        %1364 = vmatprep.subr.mxu0 0.0
        %1365 = vmatpush1.msra.mxu0 0.0
        %1366 = vmatprep.subr.mxu0 0.0
        %1367 = vmatpush1.msra.mxu0 0.0
        %1368 = vmatprep.subr.mxu0 0.0
        %1369 = vmatpush1.msra.mxu0 0.0
        %1370 = vmatprep.subr.mxu0 0.0
        %1371 = vmatpush1.msra.mxu0 0.0
        %1372 = vmatprep.subr.mxu0 0.0
        %1373 = vmatpush1.msra.mxu0 0.0
        %1374 = vmatprep.subr.mxu0 0.0
        %1375 = vmatpush1.msra.mxu0 0.0
        %1376 = vmatprep.subr.mxu0 0.0
        %1377 = vmatpush1.msra.mxu0 0.0
        %1378 = vmatprep.subr.mxu0 0.0
        %1379 = vmatpush1.msra.mxu0 0.0
        %1380 = vmatprep.subr.mxu0 0.0
        %1381 = vmatpush1.msra.mxu0 0.0
        %1382 = vmatprep.subr.mxu0 0.0
        %1383 = vmatpush1.msra.mxu0 0.0
        %1384 = vmatprep.subr.mxu0 0.0
        %1385 = vmatpush1.msra.mxu0 0.0
        %1386 = vmatprep.subr.mxu0 0.0
        %1387 = vmatpush1.msra.mxu0 0.0
        %1388 = vmatprep.subr.mxu0 0.0
        %1389 = vmatpush1.msra.mxu0 0.0
        %1390 = vmatprep.subr.mxu0 0.0
        %1391 = vmatpush1.msra.mxu0 0.0
        %1392 = vmatprep.subr.mxu0 0.0
        %1393 = vmatpush1.msra.mxu0 0.0
        %1394 = vmatprep.subr.mxu0 0.0
        %1395 = vmatpush1.msra.mxu0 0.0
        %1396 = vmatprep.subr.mxu0 0.0
        %1397 = vmatpush1.msra.mxu0 0.0
        %1398 = vmatprep.subr.mxu0 0.0
        %1399 = vmatpush1.msra.mxu0 0.0
        %1400 = vmatprep.subr.mxu0 0.0
        %1401 = vmatpush1.msra.mxu0 0.0
        %1402 = vmatprep.subr.mxu0 0.0
        %1403 = vmatpush1.msra.mxu0 0.0
        %1404 = vmatprep.subr.mxu0 0.0
        %1405 = vmatpush1.msra.mxu0 0.0
        %1406 = vmatprep.subr.mxu0 0.0
        %1407 = vmatpush1.msra.mxu0 0.0
        %1408 = vmatprep.subr.mxu0 0.0
        %1409 = vmatpush1.msra.mxu0 0.0
        %1410 = vmatprep.subr.mxu0 0.0
        %1411 = vmatpush1.msra.mxu0 0.0
        %1412 = vmatprep.subr.mxu0 0.0
        %1413 = vmatpush1.msra.mxu0 0.0
        %1414 = vmatprep.subr.mxu0 0.0
        %1415 = vmatpush1.msra.mxu0 0.0
        %1416 = vmatprep.subr.mxu0 0.0
        %1417 = vmatpush1.msra.mxu0 0.0
        %1418 = vmatprep.mubr.f32.mxu0 0.0
        %1419 = vmatmul.mubr.f32.gmra.mrb[0].mxu0 %v1349
        %v1420 = vpop.f32.mrb[0].mxu0
        %v1421 = vadd.f32 0.0, %v1420
        %v1422 = vpop.f32.mrb[0].mxu0
        %v1423 = vadd.f32 0.0, %v1422
        %1424 = vmatprep.mubr.f32.mxu0 0.0
        %1425 = vmatmul.mubr.f32.gmra.mrb[0].mxu0 %v1352
        %v1426 = vpop.f32.mrb[0].mxu0
        %v1427 = vadd.f32 0.0, %v1426
        %v1428 = vpop.f32.mrb[0].mxu0
        %v1429 = vadd.f32 0.0, %v1428
        %1430 = vdwg.mxu0
        %1431 = vmatprep.subr.mxu0 %v918
        %1432 = vmatpush1.msra.mxu0 %v917
        %1433 = vmatprep.subr.mxu0 %v927
        %1434 = vmatpush1.msra.mxu0 %v926
        %1435 = vmatprep.subr.mxu0 0.0
        %1436 = vmatpush1.msra.mxu0 0.0
        %1437 = vmatprep.subr.mxu0 0.0
        %1438 = vmatpush1.msra.mxu0 0.0
        %1439 = vmatprep.subr.mxu0 0.0
        %1440 = vmatpush1.msra.mxu0 0.0
        %1441 = vmatprep.subr.mxu0 0.0
        %1442 = vmatpush1.msra.mxu0 0.0
        %1443 = vmatprep.subr.mxu0 0.0
        %1444 = vmatpush1.msra.mxu0 0.0
        %1445 = vmatprep.subr.mxu0 0.0
        %1446 = vmatpush1.msra.mxu0 0.0
        %1447 = vmatprep.subr.mxu0 0.0
        %1448 = vmatpush1.msra.mxu0 0.0
        %1449 = vmatprep.subr.mxu0 0.0
        %1450 = vmatpush1.msra.mxu0 0.0
        %1451 = vmatprep.subr.mxu0 0.0
        %1452 = vmatpush1.msra.mxu0 0.0
        %1453 = vmatprep.subr.mxu0 0.0
        %1454 = vmatpush1.msra.mxu0 0.0
        %1455 = vmatprep.subr.mxu0 0.0
        %1456 = vmatpush1.msra.mxu0 0.0
        %1457 = vmatprep.subr.mxu0 0.0
        %1458 = vmatpush1.msra.mxu0 0.0
        %1459 = vmatprep.subr.mxu0 0.0
        %1460 = vmatpush1.msra.mxu0 0.0
        %1461 = vmatprep.subr.mxu0 0.0
        %1462 = vmatpush1.msra.mxu0 0.0
        %1463 = vmatprep.subr.mxu0 0.0
        %1464 = vmatpush1.msra.mxu0 0.0
        %1465 = vmatprep.subr.mxu0 0.0
        %1466 = vmatpush1.msra.mxu0 0.0
        %1467 = vmatprep.subr.mxu0 0.0
        %1468 = vmatpush1.msra.mxu0 0.0
        %1469 = vmatprep.subr.mxu0 0.0
        %1470 = vmatpush1.msra.mxu0 0.0
        %1471 = vmatprep.subr.mxu0 0.0
        %1472 = vmatpush1.msra.mxu0 0.0
        %1473 = vmatprep.subr.mxu0 0.0
        %1474 = vmatpush1.msra.mxu0 0.0
        %1475 = vmatprep.subr.mxu0 0.0
        %1476 = vmatpush1.msra.mxu0 0.0
        %1477 = vmatprep.subr.mxu0 0.0
        %1478 = vmatpush1.msra.mxu0 0.0
        %1479 = vmatprep.subr.mxu0 0.0
        %1480 = vmatpush1.msra.mxu0 0.0
        %1481 = vmatprep.subr.mxu0 0.0
        %1482 = vmatpush1.msra.mxu0 0.0
        %1483 = vmatprep.subr.mxu0 0.0
        %1484 = vmatpush1.msra.mxu0 0.0
        %1485 = vmatprep.subr.mxu0 0.0
        %1486 = vmatpush1.msra.mxu0 0.0
        %1487 = vmatprep.subr.mxu0 0.0
        %1488 = vmatpush1.msra.mxu0 0.0
        %1489 = vmatprep.subr.mxu0 0.0
        %1490 = vmatpush1.msra.mxu0 0.0
        %1491 = vmatprep.subr.mxu0 0.0
        %1492 = vmatpush1.msra.mxu0 0.0
        %1493 = vmatprep.subr.mxu0 0.0
        %1494 = vmatpush1.msra.mxu0 0.0
        %1495 = vmatprep.mubr.f32.mxu0 0.0
        %1496 = vmatmul.mubr.f32.gmra.mrb[0].mxu0 %v1349
        %v1497 = vpop.f32.mrb[0].mxu0
        %v1498 = vadd.f32 0.0, %v1497
        %v1499 = vpop.f32.mrb[0].mxu0
        %v1500 = vadd.f32 0.0, %v1499
        %1501 = vmatprep.mubr.f32.mxu0 0.0
        %1502 = vmatmul.mubr.f32.gmra.mrb[0].mxu0 %v1352
        %v1503 = vpop.f32.mrb[0].mxu0
        %v1504 = vadd.f32 0.0, %v1503
        %v1505 = vpop.f32.mrb[0].mxu0
        %v1506 = vadd.f32 0.0, %v1505
        %1507 = vdwg.mxu0
        %1508 = vmatprep.subr.mxu0 %v920
        %1509 = vmatpush1.msra.mxu0 %v919
        %1510 = vmatprep.subr.mxu0 %v929
        %1511 = vmatpush1.msra.mxu0 %v928
        %1512 = vmatprep.subr.mxu0 0.0
        %1513 = vmatpush1.msra.mxu0 0.0
        %1514 = vmatprep.subr.mxu0 0.0
        %1515 = vmatpush1.msra.mxu0 0.0
        %1516 = vmatprep.subr.mxu0 0.0
        %1517 = vmatpush1.msra.mxu0 0.0
        %1518 = vmatprep.subr.mxu0 0.0
        %1519 = vmatpush1.msra.mxu0 0.0
        %1520 = vmatprep.subr.mxu0 0.0
        %1521 = vmatpush1.msra.mxu0 0.0
        %1522 = vmatprep.subr.mxu0 0.0
        %1523 = vmatpush1.msra.mxu0 0.0
        %1524 = vmatprep.subr.mxu0 0.0
        %1525 = vmatpush1.msra.mxu0 0.0
        %1526 = vmatprep.subr.mxu0 0.0
        %1527 = vmatpush1.msra.mxu0 0.0
        %1528 = vmatprep.subr.mxu0 0.0
        %1529 = vmatpush1.msra.mxu0 0.0
        %1530 = vmatprep.subr.mxu0 0.0
        %1531 = vmatpush1.msra.mxu0 0.0
        %1532 = vmatprep.subr.mxu0 0.0
        %1533 = vmatpush1.msra.mxu0 0.0
        %1534 = vmatprep.subr.mxu0 0.0
        %1535 = vmatpush1.msra.mxu0 0.0
        %1536 = vmatprep.subr.mxu0 0.0
        %1537 = vmatpush1.msra.mxu0 0.0
        %1538 = vmatprep.subr.mxu0 0.0
        %1539 = vmatpush1.msra.mxu0 0.0
        %1540 = vmatprep.subr.mxu0 0.0
        %1541 = vmatpush1.msra.mxu0 0.0
        %1542 = vmatprep.subr.mxu0 0.0
        %1543 = vmatpush1.msra.mxu0 0.0
        %1544 = vmatprep.subr.mxu0 0.0
        %1545 = vmatpush1.msra.mxu0 0.0
        %1546 = vmatprep.subr.mxu0 0.0
        %1547 = vmatpush1.msra.mxu0 0.0
        %1548 = vmatprep.subr.mxu0 0.0
        %1549 = vmatpush1.msra.mxu0 0.0
        %1550 = vmatprep.subr.mxu0 0.0
        %1551 = vmatpush1.msra.mxu0 0.0
        %1552 = vmatprep.subr.mxu0 0.0
        %1553 = vmatpush1.msra.mxu0 0.0
        %1554 = vmatprep.subr.mxu0 0.0
        %1555 = vmatpush1.msra.mxu0 0.0
        %1556 = vmatprep.subr.mxu0 0.0
        %1557 = vmatpush1.msra.mxu0 0.0
        %1558 = vmatprep.subr.mxu0 0.0
        %1559 = vmatpush1.msra.mxu0 0.0
        %1560 = vmatprep.subr.mxu0 0.0
        %1561 = vmatpush1.msra.mxu0 0.0
        %1562 = vmatprep.subr.mxu0 0.0
        %1563 = vmatpush1.msra.mxu0 0.0
        %1564 = vmatprep.subr.mxu0 0.0
        %1565 = vmatpush1.msra.mxu0 0.0
        %1566 = vmatprep.subr.mxu0 0.0
        %1567 = vmatpush1.msra.mxu0 0.0
        %1568 = vmatprep.subr.mxu0 0.0
        %1569 = vmatpush1.msra.mxu0 0.0
        %1570 = vmatprep.subr.mxu0 0.0
        %1571 = vmatpush1.msra.mxu0 0.0
        %1572 = vmatprep.mubr.f32.mxu0 0.0
        %1573 = vmatmul.mubr.f32.gmra.mrb[0].mxu0 %v1349
        %v1574 = vpop.f32.mrb[0].mxu0
        %v1575 = vadd.f32 0.0, %v1574
        %v1576 = vpop.f32.mrb[0].mxu0
        %v1577 = vadd.f32 0.0, %v1576
        %1578 = vmatprep.mubr.f32.mxu0 0.0
        %1579 = vmatmul.mubr.f32.gmra.mrb[0].mxu0 %v1352
        %v1580 = vpop.f32.mrb[0].mxu0
        %v1581 = vadd.f32 0.0, %v1580
        %v1582 = vpop.f32.mrb[0].mxu0
        %v1583 = vadd.f32 0.0, %v1582
        %1584 = vdwg.mxu0
        %1585 = vmatprep.subr.mxu0 %v922
        %1586 = vmatpush1.msra.mxu0 %v921
        %1587 = vmatprep.subr.mxu0 %v931
        %1588 = vmatpush1.msra.mxu0 %v930
        %1589 = vmatprep.subr.mxu0 0.0
        %1590 = vmatpush1.msra.mxu0 0.0
        %1591 = vmatprep.subr.mxu0 0.0
        %1592 = vmatpush1.msra.mxu0 0.0
        %1593 = vmatprep.subr.mxu0 0.0
        %1594 = vmatpush1.msra.mxu0 0.0
        %1595 = vmatprep.subr.mxu0 0.0
        %1596 = vmatpush1.msra.mxu0 0.0
        %1597 = vmatprep.subr.mxu0 0.0
        %1598 = vmatpush1.msra.mxu0 0.0
        %1599 = vmatprep.subr.mxu0 0.0
        %1600 = vmatpush1.msra.mxu0 0.0
        %1601 = vmatprep.subr.mxu0 0.0
        %1602 = vmatpush1.msra.mxu0 0.0
        %1603 = vmatprep.subr.mxu0 0.0
        %1604 = vmatpush1.msra.mxu0 0.0
        %1605 = vmatprep.subr.mxu0 0.0
        %1606 = vmatpush1.msra.mxu0 0.0
        %1607 = vmatprep.subr.mxu0 0.0
        %1608 = vmatpush1.msra.mxu0 0.0
        %1609 = vmatprep.subr.mxu0 0.0
        %1610 = vmatpush1.msra.mxu0 0.0
        %1611 = vmatprep.subr.mxu0 0.0
        %1612 = vmatpush1.msra.mxu0 0.0
        %1613 = vmatprep.subr.mxu0 0.0
        %1614 = vmatpush1.msra.mxu0 0.0
        %1615 = vmatprep.subr.mxu0 0.0
        %1616 = vmatpush1.msra.mxu0 0.0
        %1617 = vmatprep.subr.mxu0 0.0
        %1618 = vmatpush1.msra.mxu0 0.0
        %1619 = vmatprep.subr.mxu0 0.0
        %1620 = vmatpush1.msra.mxu0 0.0
        %1621 = vmatprep.subr.mxu0 0.0
        %1622 = vmatpush1.msra.mxu0 0.0
        %1623 = vmatprep.subr.mxu0 0.0
        %1624 = vmatpush1.msra.mxu0 0.0
        %1625 = vmatprep.subr.mxu0 0.0
        %1626 = vmatpush1.msra.mxu0 0.0
        %1627 = vmatprep.subr.mxu0 0.0
        %1628 = vmatpush1.msra.mxu0 0.0
        %1629 = vmatprep.subr.mxu0 0.0
        %1630 = vmatpush1.msra.mxu0 0.0
        %1631 = vmatprep.subr.mxu0 0.0
        %1632 = vmatpush1.msra.mxu0 0.0
        %1633 = vmatprep.subr.mxu0 0.0
        %1634 = vmatpush1.msra.mxu0 0.0
        %1635 = vmatprep.subr.mxu0 0.0
        %1636 = vmatpush1.msra.mxu0 0.0
        %1637 = vmatprep.subr.mxu0 0.0
        %1638 = vmatpush1.msra.mxu0 0.0
        %1639 = vmatprep.subr.mxu0 0.0
        %1640 = vmatpush1.msra.mxu0 0.0
        %1641 = vmatprep.subr.mxu0 0.0
        %1642 = vmatpush1.msra.mxu0 0.0
        %1643 = vmatprep.subr.mxu0 0.0
        %1644 = vmatpush1.msra.mxu0 0.0
        %1645 = vmatprep.subr.mxu0 0.0
        %1646 = vmatpush1.msra.mxu0 0.0
        %1647 = vmatprep.subr.mxu0 0.0
        %1648 = vmatpush1.msra.mxu0 0.0
        %1649 = vmatprep.mubr.f32.mxu0 0.0
        %1650 = vmatmul.mubr.f32.gmra.mrb[0].mxu0 %v1349
        %v1651 = vpop.f32.mrb[0].mxu0
        %v1652 = vadd.f32 0.0, %v1651
        %v1653 = vpop.f32.mrb[0].mxu0
        %v1654 = vadd.f32 0.0, %v1653
        %1655 = vmatprep.mubr.f32.mxu0 0.0
        %1656 = vmatmul.mubr.f32.gmra.mrb[0].mxu0 %v1352
        %v1657 = vpop.f32.mrb[0].mxu0
        %v1658 = vadd.f32 0.0, %v1657
        %v1659 = vpop.f32.mrb[0].mxu0
        %v1660 = vadd.f32 0.0, %v1659
        %1661 = vdwg.mxu0
        %1662 = vmatprep.subr.mxu0 0.0
        %1663 = vmatpush1.msra.mxu0 %v923
        %1664 = vmatprep.subr.mxu0 0.0
        %1665 = vmatpush1.msra.mxu0 %v932
        %1666 = vmatprep.subr.mxu0 0.0
        %1667 = vmatpush1.msra.mxu0 0.0
        %1668 = vmatprep.subr.mxu0 0.0
        %1669 = vmatpush1.msra.mxu0 0.0
        %1670 = vmatprep.subr.mxu0 0.0
        %1671 = vmatpush1.msra.mxu0 0.0
        %1672 = vmatprep.subr.mxu0 0.0
        %1673 = vmatpush1.msra.mxu0 0.0
        %1674 = vmatprep.subr.mxu0 0.0
        %1675 = vmatpush1.msra.mxu0 0.0
        %1676 = vmatprep.subr.mxu0 0.0
        %1677 = vmatpush1.msra.mxu0 0.0
        %1678 = vmatprep.subr.mxu0 0.0
        %1679 = vmatpush1.msra.mxu0 0.0
        %1680 = vmatprep.subr.mxu0 0.0
        %1681 = vmatpush1.msra.mxu0 0.0
        %1682 = vmatprep.subr.mxu0 0.0
        %1683 = vmatpush1.msra.mxu0 0.0
        %1684 = vmatprep.subr.mxu0 0.0
        %1685 = vmatpush1.msra.mxu0 0.0
        %1686 = vmatprep.subr.mxu0 0.0
        %1687 = vmatpush1.msra.mxu0 0.0
        %1688 = vmatprep.subr.mxu0 0.0
        %1689 = vmatpush1.msra.mxu0 0.0
        %1690 = vmatprep.subr.mxu0 0.0
        %1691 = vmatpush1.msra.mxu0 0.0
        %1692 = vmatprep.subr.mxu0 0.0
        %1693 = vmatpush1.msra.mxu0 0.0
        %1694 = vmatprep.subr.mxu0 0.0
        %1695 = vmatpush1.msra.mxu0 0.0
        %1696 = vmatprep.subr.mxu0 0.0
        %1697 = vmatpush1.msra.mxu0 0.0
        %1698 = vmatprep.subr.mxu0 0.0
        %1699 = vmatpush1.msra.mxu0 0.0
        %1700 = vmatprep.subr.mxu0 0.0
        %1701 = vmatpush1.msra.mxu0 0.0
        %1702 = vmatprep.subr.mxu0 0.0
        %1703 = vmatpush1.msra.mxu0 0.0
        %1704 = vmatprep.subr.mxu0 0.0
        %1705 = vmatpush1.msra.mxu0 0.0
        %1706 = vmatprep.subr.mxu0 0.0
        %1707 = vmatpush1.msra.mxu0 0.0
        %1708 = vmatprep.subr.mxu0 0.0
        %1709 = vmatpush1.msra.mxu0 0.0
        %1710 = vmatprep.subr.mxu0 0.0
        %1711 = vmatpush1.msra.mxu0 0.0
        %1712 = vmatprep.subr.mxu0 0.0
        %1713 = vmatpush1.msra.mxu0 0.0
        %1714 = vmatprep.subr.mxu0 0.0
        %1715 = vmatpush1.msra.mxu0 0.0
        %1716 = vmatprep.subr.mxu0 0.0
        %1717 = vmatpush1.msra.mxu0 0.0
        %1718 = vmatprep.subr.mxu0 0.0
        %1719 = vmatpush1.msra.mxu0 0.0
        %1720 = vmatprep.subr.mxu0 0.0
        %1721 = vmatpush1.msra.mxu0 0.0
        %1722 = vmatprep.subr.mxu0 0.0
        %1723 = vmatpush1.msra.mxu0 0.0
        %1724 = vmatprep.subr.mxu0 0.0
        %1725 = vmatpush1.msra.mxu0 0.0
        %1726 = vmatprep.mubr.f32.mxu0 0.0
        %1727 = vmatmul.mubr.f32.gmra.mrb[0].mxu0 %v1349
        %v1728 = vpop.f32.mrb[0].mxu0
        %v1729 = vadd.f32 0.0, %v1728
        %v1730 = vpop.f32.mrb[0].mxu0
        %1731 = vmatprep.mubr.f32.mxu0 0.0
        %1732 = vmatmul.mubr.f32.gmra.mrb[0].mxu0 %v1352
        %v1733 = vpop.f32.mrb[0].mxu0
        %v1734 = vadd.f32 0.0, %v1733
        %v1735 = vpop.f32.mrb[0].mxu0
        %1736 = vdwg.mxu0
        %v1737 = vsel %vm933, %v1427, -inf
        %v1738 = vmax.f32 %v1421, %v1737
        %v1739 = vrot.slane %v1738, 4
        %v1740 = vmax.f32 %v1738, %v1739
        %v1741 = vrot.slane %v1740, 2
        %v1742 = vmax.f32 %v1740, %v1741
        %v1743 = vrot.slane %v1742, 1
        %v1744 = vmax.f32 %v1742, %v1743
        %v1745 = vsel %vm933, %v1429, -inf
        %v1746 = vmax.f32 %v1423, %v1745
        %v1747 = vrot.slane %v1746, 4
        %v1748 = vmax.f32 %v1746, %v1747
        %v1749 = vrot.slane %v1748, 2
        %v1750 = vmax.f32 %v1748, %v1749
        %v1751 = vrot.slane %v1750, 1
        %v1752 = vmax.f32 %v1750, %v1751
        %v1753 = vsel %vm933, %v1504, -inf
        %v1754 = vmax.f32 %v1498, %v1753
        %v1755 = vrot.slane %v1754, 4
        %v1756 = vmax.f32 %v1754, %v1755
        %v1757 = vrot.slane %v1756, 2
        %v1758 = vmax.f32 %v1756, %v1757
        %v1759 = vrot.slane %v1758, 1
        %v1760 = vmax.f32 %v1758, %v1759
        %v1761 = vsel %vm933, %v1506, -inf
        %v1762 = vmax.f32 %v1500, %v1761
        %v1763 = vrot.slane %v1762, 4
        %v1764 = vmax.f32 %v1762, %v1763
        %v1765 = vrot.slane %v1764, 2
        %v1766 = vmax.f32 %v1764, %v1765
        %v1767 = vrot.slane %v1766, 1
        %v1768 = vmax.f32 %v1766, %v1767
        %v1769 = vsel %vm933, %v1581, -inf
        %v1770 = vmax.f32 %v1575, %v1769
        %v1771 = vrot.slane %v1770, 4
        %v1772 = vmax.f32 %v1770, %v1771
        %v1773 = vrot.slane %v1772, 2
        %v1774 = vmax.f32 %v1772, %v1773
        %v1775 = vrot.slane %v1774, 1
        %v1776 = vmax.f32 %v1774, %v1775
        %v1777 = vsel %vm933, %v1583, -inf
        %v1778 = vmax.f32 %v1577, %v1777
        %v1779 = vrot.slane %v1778, 4
        %v1780 = vmax.f32 %v1778, %v1779
        %v1781 = vrot.slane %v1780, 2
        %v1782 = vmax.f32 %v1780, %v1781
        %v1783 = vrot.slane %v1782, 1
        %v1784 = vmax.f32 %v1782, %v1783
        %v1785 = vsel %vm933, %v1658, -inf
        %v1786 = vmax.f32 %v1652, %v1785
        %v1787 = vrot.slane %v1786, 4
        %v1788 = vmax.f32 %v1786, %v1787
        %v1789 = vrot.slane %v1788, 2
        %v1790 = vmax.f32 %v1788, %v1789
        %v1791 = vrot.slane %v1790, 1
        %v1792 = vmax.f32 %v1790, %v1791
        %v1793 = vsel %vm933, %v1660, -inf
        %v1794 = vmax.f32 %v1654, %v1793
        %v1795 = vrot.slane %v1794, 4
        %v1796 = vmax.f32 %v1794, %v1795
        %v1797 = vrot.slane %v1796, 2
        %v1798 = vmax.f32 %v1796, %v1797
        %v1799 = vrot.slane %v1798, 1
        %v1800 = vmax.f32 %v1798, %v1799
        %v1801 = vsel %vm933, %v1734, -inf
        %v1802 = vmax.f32 %v1729, %v1801
        %v1803 = vrot.slane %v1802, 4
        %v1804 = vmax.f32 %v1802, %v1803
        %v1805 = vrot.slane %v1804, 2
        %v1806 = vmax.f32 %v1804, %v1805
        %v1807 = vrot.slane %v1806, 1
        %v1808 = vmax.f32 %v1806, %v1807
        %v1809 = vsub.f32 %v1421, %v1744
        %v1810 = vsub.f32 %v1423, %v1752
        %v1811 = vsub.f32 %v1498, %v1760
        %v1812 = vsub.f32 %v1500, %v1768
        %v1813 = vsub.f32 %v1575, %v1776
        %v1814 = vsub.f32 %v1577, %v1784
        %v1815 = vsub.f32 %v1652, %v1792
        %v1816 = vsub.f32 %v1654, %v1800
        %v1817 = vsub.f32 %v1729, %v1808
        %v1818 = vsub.f32 %v1427, %v1744
        %v1819 = vsub.f32 %v1429, %v1752
        %v1820 = vsub.f32 %v1504, %v1760
        %v1821 = vsub.f32 %v1506, %v1768
        %v1822 = vsub.f32 %v1581, %v1776
        %v1823 = vsub.f32 %v1583, %v1784
        %v1824 = vsub.f32 %v1658, %v1792
        %v1825 = vsub.f32 %v1660, %v1800
        %v1826 = vsub.f32 %v1734, %v1808
        %v1827 = vmul.f32 %v1809, 1.442695
        %v1828 = vpow.pop %v1827
        %v1829 = vmul.f32 %v1810, 1.442695
        %v1830 = vpow.pop %v1829
        %v1831 = vmul.f32 %v1811, 1.442695
        %v1832 = vpow.pop %v1831
        %v1833 = vmul.f32 %v1812, 1.442695
        %v1834 = vpow.pop %v1833
        %v1835 = vmul.f32 %v1813, 1.442695
        %v1836 = vpow.pop %v1835
        %v1837 = vmul.f32 %v1814, 1.442695
        %v1838 = vpow.pop %v1837
        %v1839 = vmul.f32 %v1815, 1.442695
        %v1840 = vpow.pop %v1839
        %v1841 = vmul.f32 %v1816, 1.442695
        %v1842 = vpow.pop %v1841
        %v1843 = vmul.f32 %v1817, 1.442695
        %v1844 = vpow.pop %v1843
        %v1845 = vmul.f32 %v1818, 1.442695
        %v1846 = vpow.pop %v1845
        %v1847 = vmul.f32 %v1819, 1.442695
        %v1848 = vpow.pop %v1847
        %v1849 = vmul.f32 %v1820, 1.442695
        %v1850 = vpow.pop %v1849
        %v1851 = vmul.f32 %v1821, 1.442695
        %v1852 = vpow.pop %v1851
        %v1853 = vmul.f32 %v1822, 1.442695
        %v1854 = vpow.pop %v1853
        %v1855 = vmul.f32 %v1823, 1.442695
        %v1856 = vpow.pop %v1855
        %v1857 = vmul.f32 %v1824, 1.442695
        %v1858 = vpow.pop %v1857
        %v1859 = vmul.f32 %v1825, 1.442695
        %v1860 = vpow.pop %v1859
        %v1861 = vmul.f32 %v1826, 1.442695
        %v1862 = vpow.pop %v1861
        %v1863 = vsel %vm933, %v1846, 0.0
        %v1864 = vadd.f32 %v1828, %v1863
        %v1865 = vrot.slane %v1864, 4
        %v1866 = vadd.f32 %v1864, %v1865
        %v1867 = vrot.slane %v1866, 2
        %v1868 = vadd.f32 %v1866, %v1867
        %v1869 = vrot.slane %v1868, 1
        %v1870 = vadd.f32 %v1868, %v1869
        %v1871 = vsel %vm933, %v1848, 0.0
        %v1872 = vadd.f32 %v1830, %v1871
        %v1873 = vrot.slane %v1872, 4
        %v1874 = vadd.f32 %v1872, %v1873
        %v1875 = vrot.slane %v1874, 2
        %v1876 = vadd.f32 %v1874, %v1875
        %v1877 = vrot.slane %v1876, 1
        %v1878 = vadd.f32 %v1876, %v1877
        %v1879 = vsel %vm933, %v1850, 0.0
        %v1880 = vadd.f32 %v1832, %v1879
        %v1881 = vrot.slane %v1880, 4
        %v1882 = vadd.f32 %v1880, %v1881
        %v1883 = vrot.slane %v1882, 2
        %v1884 = vadd.f32 %v1882, %v1883
        %v1885 = vrot.slane %v1884, 1
        %v1886 = vadd.f32 %v1884, %v1885
        %v1887 = vsel %vm933, %v1852, 0.0
        %v1888 = vadd.f32 %v1834, %v1887
        %v1889 = vrot.slane %v1888, 4
        %v1890 = vadd.f32 %v1888, %v1889
        %v1891 = vrot.slane %v1890, 2
        %v1892 = vadd.f32 %v1890, %v1891
        %v1893 = vrot.slane %v1892, 1
        %v1894 = vadd.f32 %v1892, %v1893
        %v1895 = vsel %vm933, %v1854, 0.0
        %v1896 = vadd.f32 %v1836, %v1895
        %v1897 = vrot.slane %v1896, 4
        %v1898 = vadd.f32 %v1896, %v1897
        %v1899 = vrot.slane %v1898, 2
        %v1900 = vadd.f32 %v1898, %v1899
        %v1901 = vrot.slane %v1900, 1
        %v1902 = vadd.f32 %v1900, %v1901
        %v1903 = vsel %vm933, %v1856, 0.0
        %v1904 = vadd.f32 %v1838, %v1903
        %v1905 = vrot.slane %v1904, 4
        %v1906 = vadd.f32 %v1904, %v1905
        %v1907 = vrot.slane %v1906, 2
        %v1908 = vadd.f32 %v1906, %v1907
        %v1909 = vrot.slane %v1908, 1
        %v1910 = vadd.f32 %v1908, %v1909
        %v1911 = vsel %vm933, %v1858, 0.0
        %v1912 = vadd.f32 %v1840, %v1911
        %v1913 = vrot.slane %v1912, 4
        %v1914 = vadd.f32 %v1912, %v1913
        %v1915 = vrot.slane %v1914, 2
        %v1916 = vadd.f32 %v1914, %v1915
        %v1917 = vrot.slane %v1916, 1
        %v1918 = vadd.f32 %v1916, %v1917
        %v1919 = vsel %vm933, %v1860, 0.0
        %v1920 = vadd.f32 %v1842, %v1919
        %v1921 = vrot.slane %v1920, 4
        %v1922 = vadd.f32 %v1920, %v1921
        %v1923 = vrot.slane %v1922, 2
        %v1924 = vadd.f32 %v1922, %v1923
        %v1925 = vrot.slane %v1924, 1
        %v1926 = vadd.f32 %v1924, %v1925
        %v1927 = vsel %vm933, %v1862, 0.0
        %v1928 = vadd.f32 %v1844, %v1927
        %v1929 = vrot.slane %v1928, 4
        %v1930 = vadd.f32 %v1928, %v1929
        %v1931 = vrot.slane %v1930, 2
        %v1932 = vadd.f32 %v1930, %v1931
        %v1933 = vrot.slane %v1932, 1
        %v1934 = vadd.f32 %v1932, %v1933
        %v1935 = vrcp.pop %v1870
        %v1936 = vrcp.pop %v1878
        %v1937 = vrcp.pop %v1886
        %v1938 = vrcp.pop %v1894
        %v1939 = vrcp.pop %v1902
        %v1940 = vrcp.pop %v1910
        %v1941 = vrcp.pop %v1918
        %v1942 = vrcp.pop %v1926
        %v1943 = vrcp.pop %v1934
        %v1944 = vmul.f32 %v1828, %v1935
        %v1945 = vmul.f32 %v1830, %v1936
        %v1946 = vmul.f32 %v1832, %v1937
        %v1947 = vmul.f32 %v1834, %v1938
        %v1948 = vmul.f32 %v1836, %v1939
        %v1949 = vmul.f32 %v1838, %v1940
        %v1950 = vmul.f32 %v1840, %v1941
        %v1951 = vmul.f32 %v1842, %v1942
        %v1952 = vmul.f32 %v1844, %v1943
        %v1953 = vmul.f32 %v1846, %v1935
        %v1954 = vmul.f32 %v1848, %v1936
        %v1955 = vmul.f32 %v1850, %v1937
        %v1956 = vmul.f32 %v1852, %v1938
        %v1957 = vmul.f32 %v1854, %v1939
        %v1958 = vmul.f32 %v1856, %v1940
        %v1959 = vmul.f32 %v1858, %v1941
        %v1960 = vmul.f32 %v1860, %v1942
        %v1961 = vmul.f32 %v1862, %v1943
        %1962 = vmatprep.subr.mxu0 %v916
        %1963 = vmatpush1.xpose.msra.mxu0 %v915
        %1964 = vmatprep.subr.mxu0 %v925
        %1965 = vmatpush1.xpose.msra.mxu0 %v924
        %1966 = vmatprep.subr.mxu0 0.0
        %1967 = vmatpush1.xpose.msra.mxu0 0.0
        %1968 = vmatprep.subr.mxu0 0.0
        %1969 = vmatpush1.xpose.msra.mxu0 0.0
        %1970 = vmatprep.subr.mxu0 0.0
        %1971 = vmatpush1.xpose.msra.mxu0 0.0
        %1972 = vmatprep.subr.mxu0 0.0
        %1973 = vmatpush1.xpose.msra.mxu0 0.0
        %1974 = vmatprep.subr.mxu0 0.0
        %1975 = vmatpush1.xpose.msra.mxu0 0.0
        %1976 = vmatprep.subr.mxu0 0.0
        %1977 = vmatpush1.xpose.msra.mxu0 0.0
        %1978 = vmatprep.subr.mxu0 0.0
        %1979 = vmatpush1.xpose.msra.mxu0 0.0
        %1980 = vmatprep.subr.mxu0 0.0
        %1981 = vmatpush1.xpose.msra.mxu0 0.0
        %1982 = vmatprep.subr.mxu0 0.0
        %1983 = vmatpush1.xpose.msra.mxu0 0.0
        %1984 = vmatprep.subr.mxu0 0.0
        %1985 = vmatpush1.xpose.msra.mxu0 0.0
        %1986 = vmatprep.subr.mxu0 0.0
        %1987 = vmatpush1.xpose.msra.mxu0 0.0
        %1988 = vmatprep.subr.mxu0 0.0
        %1989 = vmatpush1.xpose.msra.mxu0 0.0
        %1990 = vmatprep.subr.mxu0 0.0
        %1991 = vmatpush1.xpose.msra.mxu0 0.0
        %1992 = vmatprep.subr.mxu0 0.0
        %1993 = vmatpush1.xpose.msra.mxu0 0.0
        %1994 = vmatprep.subr.mxu0 0.0
        %1995 = vmatpush1.xpose.msra.mxu0 0.0
        %1996 = vmatprep.subr.mxu0 0.0
        %1997 = vmatpush1.xpose.msra.mxu0 0.0
        %1998 = vmatprep.subr.mxu0 0.0
        %1999 = vmatpush1.xpose.msra.mxu0 0.0
        %2000 = vmatprep.subr.mxu0 0.0
        %2001 = vmatpush1.xpose.msra.mxu0 0.0
        %2002 = vmatprep.subr.mxu0 0.0
        %2003 = vmatpush1.xpose.msra.mxu0 0.0
        %2004 = vmatprep.subr.mxu0 0.0
        %2005 = vmatpush1.xpose.msra.mxu0 0.0
        %2006 = vmatprep.subr.mxu0 0.0
        %2007 = vmatpush1.xpose.msra.mxu0 0.0
        %2008 = vmatprep.subr.mxu0 0.0
        %2009 = vmatpush1.xpose.msra.mxu0 0.0
        %2010 = vmatprep.subr.mxu0 0.0
        %2011 = vmatpush1.xpose.msra.mxu0 0.0
        %2012 = vmatprep.subr.mxu0 0.0
        %2013 = vmatpush1.xpose.msra.mxu0 0.0
        %2014 = vmatprep.subr.mxu0 0.0
        %2015 = vmatpush1.xpose.msra.mxu0 0.0
        %2016 = vmatprep.subr.mxu0 0.0
        %2017 = vmatpush1.xpose.msra.mxu0 0.0
        %2018 = vmatprep.subr.mxu0 0.0
        %2019 = vmatpush1.xpose.msra.mxu0 0.0
        %2020 = vmatprep.subr.mxu0 0.0
        %2021 = vmatpush1.xpose.msra.mxu0 0.0
        %2022 = vmatprep.subr.mxu0 0.0
        %2023 = vmatpush1.xpose.msra.mxu0 0.0
        %2024 = vmatprep.subr.mxu0 0.0
        %2025 = vmatpush1.xpose.msra.mxu0 0.0
        %2026 = vmatprep.mubr.f32.mxu0 %v1945
        %2027 = vmatmul.mubr.f32.gmra.mrb[0].mxu0 %v1944
        %v2028 = vpop.f32.mrb[0].mxu0
        %v2029 = vadd.f32 0.0, %v2028
        %v2030 = vpop.f32.mrb[0].mxu0
        %2031 = vmatprep.mubr.f32.mxu0 %v1954
        %2032 = vmatmul.mubr.f32.gmra.mrb[0].mxu0 %v1953
        %v2033 = vpop.f32.mrb[0].mxu0
        %v2034 = vadd.f32 0.0, %v2033
        %v2035 = vpop.f32.mrb[0].mxu0
        %2036 = vdwg.mxu0
        %2037 = vmatprep.subr.mxu0 %v918
        %2038 = vmatpush1.xpose.msra.mxu0 %v917
        %2039 = vmatprep.subr.mxu0 %v927
        %2040 = vmatpush1.xpose.msra.mxu0 %v926
        %2041 = vmatprep.subr.mxu0 0.0
        %2042 = vmatpush1.xpose.msra.mxu0 0.0
        %2043 = vmatprep.subr.mxu0 0.0
        %2044 = vmatpush1.xpose.msra.mxu0 0.0
        %2045 = vmatprep.subr.mxu0 0.0
        %2046 = vmatpush1.xpose.msra.mxu0 0.0
        %2047 = vmatprep.subr.mxu0 0.0
        %2048 = vmatpush1.xpose.msra.mxu0 0.0
        %2049 = vmatprep.subr.mxu0 0.0
        %2050 = vmatpush1.xpose.msra.mxu0 0.0
        %2051 = vmatprep.subr.mxu0 0.0
        %2052 = vmatpush1.xpose.msra.mxu0 0.0
        %2053 = vmatprep.subr.mxu0 0.0
        %2054 = vmatpush1.xpose.msra.mxu0 0.0
        %2055 = vmatprep.subr.mxu0 0.0
        %2056 = vmatpush1.xpose.msra.mxu0 0.0
        %2057 = vmatprep.subr.mxu0 0.0
        %2058 = vmatpush1.xpose.msra.mxu0 0.0
        %2059 = vmatprep.subr.mxu0 0.0
        %2060 = vmatpush1.xpose.msra.mxu0 0.0
        %2061 = vmatprep.subr.mxu0 0.0
        %2062 = vmatpush1.xpose.msra.mxu0 0.0
        %2063 = vmatprep.subr.mxu0 0.0
        %2064 = vmatpush1.xpose.msra.mxu0 0.0
        %2065 = vmatprep.subr.mxu0 0.0
        %2066 = vmatpush1.xpose.msra.mxu0 0.0
        %2067 = vmatprep.subr.mxu0 0.0
        %2068 = vmatpush1.xpose.msra.mxu0 0.0
        %2069 = vmatprep.subr.mxu0 0.0
        %2070 = vmatpush1.xpose.msra.mxu0 0.0
        %2071 = vmatprep.subr.mxu0 0.0
        %2072 = vmatpush1.xpose.msra.mxu0 0.0
        %2073 = vmatprep.subr.mxu0 0.0
        %2074 = vmatpush1.xpose.msra.mxu0 0.0
        %2075 = vmatprep.subr.mxu0 0.0
        %2076 = vmatpush1.xpose.msra.mxu0 0.0
        %2077 = vmatprep.subr.mxu0 0.0
        %2078 = vmatpush1.xpose.msra.mxu0 0.0
        %2079 = vmatprep.subr.mxu0 0.0
        %2080 = vmatpush1.xpose.msra.mxu0 0.0
        %2081 = vmatprep.subr.mxu0 0.0
        %2082 = vmatpush1.xpose.msra.mxu0 0.0
        %2083 = vmatprep.subr.mxu0 0.0
        %2084 = vmatpush1.xpose.msra.mxu0 0.0
        %2085 = vmatprep.subr.mxu0 0.0
        %2086 = vmatpush1.xpose.msra.mxu0 0.0
        %2087 = vmatprep.subr.mxu0 0.0
        %2088 = vmatpush1.xpose.msra.mxu0 0.0
        %2089 = vmatprep.subr.mxu0 0.0
        %2090 = vmatpush1.xpose.msra.mxu0 0.0
        %2091 = vmatprep.subr.mxu0 0.0
        %2092 = vmatpush1.xpose.msra.mxu0 0.0
        %2093 = vmatprep.subr.mxu0 0.0
        %2094 = vmatpush1.xpose.msra.mxu0 0.0
        %2095 = vmatprep.subr.mxu0 0.0
        %2096 = vmatpush1.xpose.msra.mxu0 0.0
        %2097 = vmatprep.subr.mxu0 0.0
        %2098 = vmatpush1.xpose.msra.mxu0 0.0
        %2099 = vmatprep.subr.mxu0 0.0
        %2100 = vmatpush1.xpose.msra.mxu0 0.0
        %2101 = vmatprep.mubr.f32.mxu0 %v1947
        %2102 = vmatmul.mubr.f32.gmra.mrb[0].mxu0 %v1946
        %v2103 = vpop.f32.mrb[0].mxu0
        %v2104 = vadd.f32 %v2029, %v2103
        %v2105 = vpop.f32.mrb[0].mxu0
        %2106 = vmatprep.mubr.f32.mxu0 %v1956
        %2107 = vmatmul.mubr.f32.gmra.mrb[0].mxu0 %v1955
        %v2108 = vpop.f32.mrb[0].mxu0
        %v2109 = vadd.f32 %v2034, %v2108
        %v2110 = vpop.f32.mrb[0].mxu0
        %2111 = vdwg.mxu0
        %2112 = vmatprep.subr.mxu0 %v920
        %2113 = vmatpush1.xpose.msra.mxu0 %v919
        %2114 = vmatprep.subr.mxu0 %v929
        %2115 = vmatpush1.xpose.msra.mxu0 %v928
        %2116 = vmatprep.subr.mxu0 0.0
        %2117 = vmatpush1.xpose.msra.mxu0 0.0
        %2118 = vmatprep.subr.mxu0 0.0
        %2119 = vmatpush1.xpose.msra.mxu0 0.0
        %2120 = vmatprep.subr.mxu0 0.0
        %2121 = vmatpush1.xpose.msra.mxu0 0.0
        %2122 = vmatprep.subr.mxu0 0.0
        %2123 = vmatpush1.xpose.msra.mxu0 0.0
        %2124 = vmatprep.subr.mxu0 0.0
        %2125 = vmatpush1.xpose.msra.mxu0 0.0
        %2126 = vmatprep.subr.mxu0 0.0
        %2127 = vmatpush1.xpose.msra.mxu0 0.0
        %2128 = vmatprep.subr.mxu0 0.0
        %2129 = vmatpush1.xpose.msra.mxu0 0.0
        %2130 = vmatprep.subr.mxu0 0.0
        %2131 = vmatpush1.xpose.msra.mxu0 0.0
        %2132 = vmatprep.subr.mxu0 0.0
        %2133 = vmatpush1.xpose.msra.mxu0 0.0
        %2134 = vmatprep.subr.mxu0 0.0
        %2135 = vmatpush1.xpose.msra.mxu0 0.0
        %2136 = vmatprep.subr.mxu0 0.0
        %2137 = vmatpush1.xpose.msra.mxu0 0.0
        %2138 = vmatprep.subr.mxu0 0.0
        %2139 = vmatpush1.xpose.msra.mxu0 0.0
        %2140 = vmatprep.subr.mxu0 0.0
        %2141 = vmatpush1.xpose.msra.mxu0 0.0
        %2142 = vmatprep.subr.mxu0 0.0
        %2143 = vmatpush1.xpose.msra.mxu0 0.0
        %2144 = vmatprep.subr.mxu0 0.0
        %2145 = vmatpush1.xpose.msra.mxu0 0.0
        %2146 = vmatprep.subr.mxu0 0.0
        %2147 = vmatpush1.xpose.msra.mxu0 0.0
        %2148 = vmatprep.subr.mxu0 0.0
        %2149 = vmatpush1.xpose.msra.mxu0 0.0
        %2150 = vmatprep.subr.mxu0 0.0
        %2151 = vmatpush1.xpose.msra.mxu0 0.0
        %2152 = vmatprep.subr.mxu0 0.0
        %2153 = vmatpush1.xpose.msra.mxu0 0.0
        %2154 = vmatprep.subr.mxu0 0.0
        %2155 = vmatpush1.xpose.msra.mxu0 0.0
        %2156 = vmatprep.subr.mxu0 0.0
        %2157 = vmatpush1.xpose.msra.mxu0 0.0
        %2158 = vmatprep.subr.mxu0 0.0
        %2159 = vmatpush1.xpose.msra.mxu0 0.0
        %2160 = vmatprep.subr.mxu0 0.0
        %2161 = vmatpush1.xpose.msra.mxu0 0.0
        %2162 = vmatprep.subr.mxu0 0.0
        %2163 = vmatpush1.xpose.msra.mxu0 0.0
        %2164 = vmatprep.subr.mxu0 0.0
        %2165 = vmatpush1.xpose.msra.mxu0 0.0
        %2166 = vmatprep.subr.mxu0 0.0
        %2167 = vmatpush1.xpose.msra.mxu0 0.0
        %2168 = vmatprep.subr.mxu0 0.0
        %2169 = vmatpush1.xpose.msra.mxu0 0.0
        %2170 = vmatprep.subr.mxu0 0.0
        %2171 = vmatpush1.xpose.msra.mxu0 0.0
        %2172 = vmatprep.subr.mxu0 0.0
        %2173 = vmatpush1.xpose.msra.mxu0 0.0
        %2174 = vmatprep.subr.mxu0 0.0
        %2175 = vmatpush1.xpose.msra.mxu0 0.0
        %2176 = vmatprep.mubr.f32.mxu0 %v1949
        %2177 = vmatmul.mubr.f32.gmra.mrb[0].mxu0 %v1948
        %v2178 = vpop.f32.mrb[0].mxu0
        %v2179 = vadd.f32 %v2104, %v2178
        %v2180 = vpop.f32.mrb[0].mxu0
        %2181 = vmatprep.mubr.f32.mxu0 %v1958
        %2182 = vmatmul.mubr.f32.gmra.mrb[0].mxu0 %v1957
        %v2183 = vpop.f32.mrb[0].mxu0
        %v2184 = vadd.f32 %v2109, %v2183
        %v2185 = vpop.f32.mrb[0].mxu0
        %2186 = vdwg.mxu0
        %2187 = vmatprep.subr.mxu0 %v922
        %2188 = vmatpush1.xpose.msra.mxu0 %v921
        %2189 = vmatprep.subr.mxu0 %v931
        %2190 = vmatpush1.xpose.msra.mxu0 %v930
        %2191 = vmatprep.subr.mxu0 0.0
        %2192 = vmatpush1.xpose.msra.mxu0 0.0
        %2193 = vmatprep.subr.mxu0 0.0
        %2194 = vmatpush1.xpose.msra.mxu0 0.0
        %2195 = vmatprep.subr.mxu0 0.0
        %2196 = vmatpush1.xpose.msra.mxu0 0.0
        %2197 = vmatprep.subr.mxu0 0.0
        %2198 = vmatpush1.xpose.msra.mxu0 0.0
        %2199 = vmatprep.subr.mxu0 0.0
        %2200 = vmatpush1.xpose.msra.mxu0 0.0
        %2201 = vmatprep.subr.mxu0 0.0
        %2202 = vmatpush1.xpose.msra.mxu0 0.0
        %2203 = vmatprep.subr.mxu0 0.0
        %2204 = vmatpush1.xpose.msra.mxu0 0.0
        %2205 = vmatprep.subr.mxu0 0.0
        %2206 = vmatpush1.xpose.msra.mxu0 0.0
        %2207 = vmatprep.subr.mxu0 0.0
        %2208 = vmatpush1.xpose.msra.mxu0 0.0
        %2209 = vmatprep.subr.mxu0 0.0
        %2210 = vmatpush1.xpose.msra.mxu0 0.0
        %2211 = vmatprep.subr.mxu0 0.0
        %2212 = vmatpush1.xpose.msra.mxu0 0.0
        %2213 = vmatprep.subr.mxu0 0.0
        %2214 = vmatpush1.xpose.msra.mxu0 0.0
        %2215 = vmatprep.subr.mxu0 0.0
        %2216 = vmatpush1.xpose.msra.mxu0 0.0
        %2217 = vmatprep.subr.mxu0 0.0
        %2218 = vmatpush1.xpose.msra.mxu0 0.0
        %2219 = vmatprep.subr.mxu0 0.0
        %2220 = vmatpush1.xpose.msra.mxu0 0.0
        %2221 = vmatprep.subr.mxu0 0.0
        %2222 = vmatpush1.xpose.msra.mxu0 0.0
        %2223 = vmatprep.subr.mxu0 0.0
        %2224 = vmatpush1.xpose.msra.mxu0 0.0
        %2225 = vmatprep.subr.mxu0 0.0
        %2226 = vmatpush1.xpose.msra.mxu0 0.0
        %2227 = vmatprep.subr.mxu0 0.0
        %2228 = vmatpush1.xpose.msra.mxu0 0.0
        %2229 = vmatprep.subr.mxu0 0.0
        %2230 = vmatpush1.xpose.msra.mxu0 0.0
        %2231 = vmatprep.subr.mxu0 0.0
        %2232 = vmatpush1.xpose.msra.mxu0 0.0
        %2233 = vmatprep.subr.mxu0 0.0
        %2234 = vmatpush1.xpose.msra.mxu0 0.0
        %2235 = vmatprep.subr.mxu0 0.0
        %2236 = vmatpush1.xpose.msra.mxu0 0.0
        %2237 = vmatprep.subr.mxu0 0.0
        %2238 = vmatpush1.xpose.msra.mxu0 0.0
        %2239 = vmatprep.subr.mxu0 0.0
        %2240 = vmatpush1.xpose.msra.mxu0 0.0
        %2241 = vmatprep.subr.mxu0 0.0
        %2242 = vmatpush1.xpose.msra.mxu0 0.0
        %2243 = vmatprep.subr.mxu0 0.0
        %2244 = vmatpush1.xpose.msra.mxu0 0.0
        %2245 = vmatprep.subr.mxu0 0.0
        %2246 = vmatpush1.xpose.msra.mxu0 0.0
        %2247 = vmatprep.subr.mxu0 0.0
        %2248 = vmatpush1.xpose.msra.mxu0 0.0
        %2249 = vmatprep.subr.mxu0 0.0
        %2250 = vmatpush1.xpose.msra.mxu0 0.0
        %2251 = vmatprep.mubr.f32.mxu0 %v1951
        %2252 = vmatmul.mubr.f32.gmra.mrb[0].mxu0 %v1950
        %v2253 = vpop.f32.mrb[0].mxu0
        %v2254 = vadd.f32 %v2179, %v2253
        %v2255 = vpop.f32.mrb[0].mxu0
        %2256 = vmatprep.mubr.f32.mxu0 %v1960
        %2257 = vmatmul.mubr.f32.gmra.mrb[0].mxu0 %v1959
        %v2258 = vpop.f32.mrb[0].mxu0
        %v2259 = vadd.f32 %v2184, %v2258
        %v2260 = vpop.f32.mrb[0].mxu0
        %2261 = vdwg.mxu0
        %2262 = vmatprep.subr.mxu0 0.0
        %2263 = vmatpush1.xpose.msra.mxu0 %v923
        %2264 = vmatprep.subr.mxu0 0.0
        %2265 = vmatpush1.xpose.msra.mxu0 %v932
        %2266 = vmatprep.subr.mxu0 0.0
        %2267 = vmatpush1.xpose.msra.mxu0 0.0
        %2268 = vmatprep.subr.mxu0 0.0
        %2269 = vmatpush1.xpose.msra.mxu0 0.0
        %2270 = vmatprep.subr.mxu0 0.0
        %2271 = vmatpush1.xpose.msra.mxu0 0.0
        %2272 = vmatprep.subr.mxu0 0.0
        %2273 = vmatpush1.xpose.msra.mxu0 0.0
        %2274 = vmatprep.subr.mxu0 0.0
        %2275 = vmatpush1.xpose.msra.mxu0 0.0
        %2276 = vmatprep.subr.mxu0 0.0
        %2277 = vmatpush1.xpose.msra.mxu0 0.0
        %2278 = vmatprep.subr.mxu0 0.0
        %2279 = vmatpush1.xpose.msra.mxu0 0.0
        %2280 = vmatprep.subr.mxu0 0.0
        %2281 = vmatpush1.xpose.msra.mxu0 0.0
        %2282 = vmatprep.subr.mxu0 0.0
        %2283 = vmatpush1.xpose.msra.mxu0 0.0
        %2284 = vmatprep.subr.mxu0 0.0
        %2285 = vmatpush1.xpose.msra.mxu0 0.0
        %2286 = vmatprep.subr.mxu0 0.0
        %2287 = vmatpush1.xpose.msra.mxu0 0.0
        %2288 = vmatprep.subr.mxu0 0.0
        %2289 = vmatpush1.xpose.msra.mxu0 0.0
        %2290 = vmatprep.subr.mxu0 0.0
        %2291 = vmatpush1.xpose.msra.mxu0 0.0
        %2292 = vmatprep.subr.mxu0 0.0
        %2293 = vmatpush1.xpose.msra.mxu0 0.0
        %2294 = vmatprep.subr.mxu0 0.0
        %2295 = vmatpush1.xpose.msra.mxu0 0.0
        %2296 = vmatprep.subr.mxu0 0.0
        %2297 = vmatpush1.xpose.msra.mxu0 0.0
        %2298 = vmatprep.subr.mxu0 0.0
        %2299 = vmatpush1.xpose.msra.mxu0 0.0
        %2300 = vmatprep.subr.mxu0 0.0
        %2301 = vmatpush1.xpose.msra.mxu0 0.0
        %2302 = vmatprep.subr.mxu0 0.0
        %2303 = vmatpush1.xpose.msra.mxu0 0.0
        %2304 = vmatprep.subr.mxu0 0.0
        %2305 = vmatpush1.xpose.msra.mxu0 0.0
        %2306 = vmatprep.subr.mxu0 0.0
        %2307 = vmatpush1.xpose.msra.mxu0 0.0
        %2308 = vmatprep.subr.mxu0 0.0
        %2309 = vmatpush1.xpose.msra.mxu0 0.0
        %2310 = vmatprep.subr.mxu0 0.0
        %2311 = vmatpush1.xpose.msra.mxu0 0.0
        %2312 = vmatprep.subr.mxu0 0.0
        %2313 = vmatpush1.xpose.msra.mxu0 0.0
        %2314 = vmatprep.subr.mxu0 0.0
        %2315 = vmatpush1.xpose.msra.mxu0 0.0
        %2316 = vmatprep.subr.mxu0 0.0
        %2317 = vmatpush1.xpose.msra.mxu0 0.0
        %2318 = vmatprep.subr.mxu0 0.0
        %2319 = vmatpush1.xpose.msra.mxu0 0.0
        %2320 = vmatprep.subr.mxu0 0.0
        %2321 = vmatpush1.xpose.msra.mxu0 0.0
        %2322 = vmatprep.subr.mxu0 0.0
        %2323 = vmatpush1.xpose.msra.mxu0 0.0
        %2324 = vmatprep.subr.mxu0 0.0
        %2325 = vmatpush1.xpose.msra.mxu0 0.0
        %2326 = vmatprep.mubr.f32.mxu0 0.0
        %2327 = vmatmul.mubr.f32.gmra.mrb[0].mxu0 %v1952
        %v2328 = vpop.f32.mrb[0].mxu0
        %v2329 = vadd.f32 %v2254, %v2328
        %v2330 = vpop.f32.mrb[0].mxu0
        %2331 = vmatprep.mubr.f32.mxu0 0.0
        %2332 = vmatmul.mubr.f32.gmra.mrb[0].mxu0 %v1961
        %v2333 = vpop.f32.mrb[0].mxu0
        %v2334 = vadd.f32 %v2259, %v2333
        %v2335 = vpop.f32.mrb[0].mxu0
        %2336 = vdwg.mxu0
        %v2337 = vmul.f32 %v2329, %v2329
        %v2338 = vmul.f32 %v2334, %v2334
        %v2339 = vsel %vm1320, %v2337, 0.0
        %v2340 = vsel %vm1322, %v2338, 0.0
        %v2341 = vadd.f32 %v2339, %v2340
        %v2342 = vrot.slane %v2341, 4
        %v2343 = vadd.f32 %v2341, %v2342
        %v2344 = vrot.slane %v2343, 2
        %v2345 = vadd.f32 %v2343, %v2344
        %v2346 = vrot.slane %v2345, 1
        %v2347 = vadd.f32 %v2345, %v2346
        %v2348 = vand.u32 2147483647, %v2329
        %v2349 = vand.u32 2147483647, %v2334
        %v2350 = vsel %vm1320, %v2348, 0.0
        %v2351 = vsel %vm1322, %v2349, 0.0
        %v2352 = vadd.f32 %v2350, %v2351
        %v2353 = vrot.slane %v2352, 4
        %v2354 = vadd.f32 %v2352, %v2353
        %v2355 = vrot.slane %v2354, 2
        %v2356 = vadd.f32 %v2354, %v2355
        %v2357 = vrot.slane %v2356, 1
        %v2358 = vadd.f32 %v2356, %v2357
        %v2359 = vmul.f32 %v2347, %v2358
        %v2360 = vadd.f32 %v2359, 1.0
        %v2361 = vrcp.pop %v2360
        %v2362 = vmul.f32 %v2347, %v2361
        %v2363 = vmul.f32 %v2362, %v2329
        %v2364 = vmul.f32 %v2362, %v2334
        %v2366 = vsel %vm1320, %v2363, 0
        %v2369 = vsel %vm1320, %v2364, 0
        %2371 = vmatprep.subr.mxu0 %v916
        %2372 = vmatpush1.msra.mxu0 %v915
        %2373 = vmatprep.subr.mxu0 %v925
        %2374 = vmatpush1.msra.mxu0 %v924
        %2375 = vmatprep.subr.mxu0 0.0
        %2376 = vmatpush1.msra.mxu0 0.0
        %2377 = vmatprep.subr.mxu0 0.0
        %2378 = vmatpush1.msra.mxu0 0.0
        %2379 = vmatprep.subr.mxu0 0.0
        %2380 = vmatpush1.msra.mxu0 0.0
        %2381 = vmatprep.subr.mxu0 0.0
        %2382 = vmatpush1.msra.mxu0 0.0
        %2383 = vmatprep.subr.mxu0 0.0
        %2384 = vmatpush1.msra.mxu0 0.0
        %2385 = vmatprep.subr.mxu0 0.0
        %2386 = vmatpush1.msra.mxu0 0.0
        %2387 = vmatprep.subr.mxu0 0.0
        %2388 = vmatpush1.msra.mxu0 0.0
        %2389 = vmatprep.subr.mxu0 0.0
        %2390 = vmatpush1.msra.mxu0 0.0
        %2391 = vmatprep.subr.mxu0 0.0
        %2392 = vmatpush1.msra.mxu0 0.0
        %2393 = vmatprep.subr.mxu0 0.0
        %2394 = vmatpush1.msra.mxu0 0.0
        %2395 = vmatprep.subr.mxu0 0.0
        %2396 = vmatpush1.msra.mxu0 0.0
        %2397 = vmatprep.subr.mxu0 0.0
        %2398 = vmatpush1.msra.mxu0 0.0
        %2399 = vmatprep.subr.mxu0 0.0
        %2400 = vmatpush1.msra.mxu0 0.0
        %2401 = vmatprep.subr.mxu0 0.0
        %2402 = vmatpush1.msra.mxu0 0.0
        %2403 = vmatprep.subr.mxu0 0.0
        %2404 = vmatpush1.msra.mxu0 0.0
        %2405 = vmatprep.subr.mxu0 0.0
        %2406 = vmatpush1.msra.mxu0 0.0
        %2407 = vmatprep.subr.mxu0 0.0
        %2408 = vmatpush1.msra.mxu0 0.0
        %2409 = vmatprep.subr.mxu0 0.0
        %2410 = vmatpush1.msra.mxu0 0.0
        %2411 = vmatprep.subr.mxu0 0.0
        %2412 = vmatpush1.msra.mxu0 0.0
        %2413 = vmatprep.subr.mxu0 0.0
        %2414 = vmatpush1.msra.mxu0 0.0
        %2415 = vmatprep.subr.mxu0 0.0
        %2416 = vmatpush1.msra.mxu0 0.0
        %2417 = vmatprep.subr.mxu0 0.0
        %2418 = vmatpush1.msra.mxu0 0.0
        %2419 = vmatprep.subr.mxu0 0.0
        %2420 = vmatpush1.msra.mxu0 0.0
        %2421 = vmatprep.subr.mxu0 0.0
        %2422 = vmatpush1.msra.mxu0 0.0
        %2423 = vmatprep.subr.mxu0 0.0
        %2424 = vmatpush1.msra.mxu0 0.0
        %2425 = vmatprep.subr.mxu0 0.0
        %2426 = vmatpush1.msra.mxu0 0.0
        %2427 = vmatprep.subr.mxu0 0.0
        %2428 = vmatpush1.msra.mxu0 0.0
        %2429 = vmatprep.subr.mxu0 0.0
        %2430 = vmatpush1.msra.mxu0 0.0
        %2431 = vmatprep.subr.mxu0 0.0
        %2432 = vmatpush1.msra.mxu0 0.0
        %2433 = vmatprep.subr.mxu0 0.0
        %2434 = vmatpush1.msra.mxu0 0.0
        %2435 = vmatprep.mubr.f32.mxu0 0.0
        %2436 = vmatmul.mubr.f32.gmra.mrb[0].mxu0 %v2366
        %v2437 = vpop.f32.mrb[0].mxu0
        %v2438 = vadd.f32 0.0, %v2437
        %v2439 = vpop.f32.mrb[0].mxu0
        %v2440 = vadd.f32 0.0, %v2439
        %2441 = vmatprep.mubr.f32.mxu0 0.0
        %2442 = vmatmul.mubr.f32.gmra.mrb[0].mxu0 %v2369
        %v2443 = vpop.f32.mrb[0].mxu0
        %v2444 = vadd.f32 0.0, %v2443
        %v2445 = vpop.f32.mrb[0].mxu0
        %v2446 = vadd.f32 0.0, %v2445
        %2447 = vdwg.mxu0
        %2448 = vmatprep.subr.mxu0 %v918
        %2449 = vmatpush1.msra.mxu0 %v917
        %2450 = vmatprep.subr.mxu0 %v927
        %2451 = vmatpush1.msra.mxu0 %v926
        %2452 = vmatprep.subr.mxu0 0.0
        %2453 = vmatpush1.msra.mxu0 0.0
        %2454 = vmatprep.subr.mxu0 0.0
        %2455 = vmatpush1.msra.mxu0 0.0
        %2456 = vmatprep.subr.mxu0 0.0
        %2457 = vmatpush1.msra.mxu0 0.0
        %2458 = vmatprep.subr.mxu0 0.0
        %2459 = vmatpush1.msra.mxu0 0.0
        %2460 = vmatprep.subr.mxu0 0.0
        %2461 = vmatpush1.msra.mxu0 0.0
        %2462 = vmatprep.subr.mxu0 0.0
        %2463 = vmatpush1.msra.mxu0 0.0
        %2464 = vmatprep.subr.mxu0 0.0
        %2465 = vmatpush1.msra.mxu0 0.0
        %2466 = vmatprep.subr.mxu0 0.0
        %2467 = vmatpush1.msra.mxu0 0.0
        %2468 = vmatprep.subr.mxu0 0.0
        %2469 = vmatpush1.msra.mxu0 0.0
        %2470 = vmatprep.subr.mxu0 0.0
        %2471 = vmatpush1.msra.mxu0 0.0
        %2472 = vmatprep.subr.mxu0 0.0
        %2473 = vmatpush1.msra.mxu0 0.0
        %2474 = vmatprep.subr.mxu0 0.0
        %2475 = vmatpush1.msra.mxu0 0.0
        %2476 = vmatprep.subr.mxu0 0.0
        %2477 = vmatpush1.msra.mxu0 0.0
        %2478 = vmatprep.subr.mxu0 0.0
        %2479 = vmatpush1.msra.mxu0 0.0
        %2480 = vmatprep.subr.mxu0 0.0
        %2481 = vmatpush1.msra.mxu0 0.0
        %2482 = vmatprep.subr.mxu0 0.0
        %2483 = vmatpush1.msra.mxu0 0.0
        %2484 = vmatprep.subr.mxu0 0.0
        %2485 = vmatpush1.msra.mxu0 0.0
        %2486 = vmatprep.subr.mxu0 0.0
        %2487 = vmatpush1.msra.mxu0 0.0
        %2488 = vmatprep.subr.mxu0 0.0
        %2489 = vmatpush1.msra.mxu0 0.0
        %2490 = vmatprep.subr.mxu0 0.0
        %2491 = vmatpush1.msra.mxu0 0.0
        %2492 = vmatprep.subr.mxu0 0.0
        %2493 = vmatpush1.msra.mxu0 0.0
        %2494 = vmatprep.subr.mxu0 0.0
        %2495 = vmatpush1.msra.mxu0 0.0
        %2496 = vmatprep.subr.mxu0 0.0
        %2497 = vmatpush1.msra.mxu0 0.0
        %2498 = vmatprep.subr.mxu0 0.0
        %2499 = vmatpush1.msra.mxu0 0.0
        %2500 = vmatprep.subr.mxu0 0.0
        %2501 = vmatpush1.msra.mxu0 0.0
        %2502 = vmatprep.subr.mxu0 0.0
        %2503 = vmatpush1.msra.mxu0 0.0
        %2504 = vmatprep.subr.mxu0 0.0
        %2505 = vmatpush1.msra.mxu0 0.0
        %2506 = vmatprep.subr.mxu0 0.0
        %2507 = vmatpush1.msra.mxu0 0.0
        %2508 = vmatprep.subr.mxu0 0.0
        %2509 = vmatpush1.msra.mxu0 0.0
        %2510 = vmatprep.subr.mxu0 0.0
        %2511 = vmatpush1.msra.mxu0 0.0
        %2512 = vmatprep.mubr.f32.mxu0 0.0
        %2513 = vmatmul.mubr.f32.gmra.mrb[0].mxu0 %v2366
        %v2514 = vpop.f32.mrb[0].mxu0
        %v2515 = vadd.f32 0.0, %v2514
        %v2516 = vpop.f32.mrb[0].mxu0
        %v2517 = vadd.f32 0.0, %v2516
        %2518 = vmatprep.mubr.f32.mxu0 0.0
        %2519 = vmatmul.mubr.f32.gmra.mrb[0].mxu0 %v2369
        %v2520 = vpop.f32.mrb[0].mxu0
        %v2521 = vadd.f32 0.0, %v2520
        %v2522 = vpop.f32.mrb[0].mxu0
        %v2523 = vadd.f32 0.0, %v2522
        %2524 = vdwg.mxu0
        %2525 = vmatprep.subr.mxu0 %v920
        %2526 = vmatpush1.msra.mxu0 %v919
        %2527 = vmatprep.subr.mxu0 %v929
        %2528 = vmatpush1.msra.mxu0 %v928
        %2529 = vmatprep.subr.mxu0 0.0
        %2530 = vmatpush1.msra.mxu0 0.0
        %2531 = vmatprep.subr.mxu0 0.0
        %2532 = vmatpush1.msra.mxu0 0.0
        %2533 = vmatprep.subr.mxu0 0.0
        %2534 = vmatpush1.msra.mxu0 0.0
        %2535 = vmatprep.subr.mxu0 0.0
        %2536 = vmatpush1.msra.mxu0 0.0
        %2537 = vmatprep.subr.mxu0 0.0
        %2538 = vmatpush1.msra.mxu0 0.0
        %2539 = vmatprep.subr.mxu0 0.0
        %2540 = vmatpush1.msra.mxu0 0.0
        %2541 = vmatprep.subr.mxu0 0.0
        %2542 = vmatpush1.msra.mxu0 0.0
        %2543 = vmatprep.subr.mxu0 0.0
        %2544 = vmatpush1.msra.mxu0 0.0
        %2545 = vmatprep.subr.mxu0 0.0
        %2546 = vmatpush1.msra.mxu0 0.0
        %2547 = vmatprep.subr.mxu0 0.0
        %2548 = vmatpush1.msra.mxu0 0.0
        %2549 = vmatprep.subr.mxu0 0.0
        %2550 = vmatpush1.msra.mxu0 0.0
        %2551 = vmatprep.subr.mxu0 0.0
        %2552 = vmatpush1.msra.mxu0 0.0
        %2553 = vmatprep.subr.mxu0 0.0
        %2554 = vmatpush1.msra.mxu0 0.0
        %2555 = vmatprep.subr.mxu0 0.0
        %2556 = vmatpush1.msra.mxu0 0.0
        %2557 = vmatprep.subr.mxu0 0.0
        %2558 = vmatpush1.msra.mxu0 0.0
        %2559 = vmatprep.subr.mxu0 0.0
        %2560 = vmatpush1.msra.mxu0 0.0
        %2561 = vmatprep.subr.mxu0 0.0
        %2562 = vmatpush1.msra.mxu0 0.0
        %2563 = vmatprep.subr.mxu0 0.0
        %2564 = vmatpush1.msra.mxu0 0.0
        %2565 = vmatprep.subr.mxu0 0.0
        %2566 = vmatpush1.msra.mxu0 0.0
        %2567 = vmatprep.subr.mxu0 0.0
        %2568 = vmatpush1.msra.mxu0 0.0
        %2569 = vmatprep.subr.mxu0 0.0
        %2570 = vmatpush1.msra.mxu0 0.0
        %2571 = vmatprep.subr.mxu0 0.0
        %2572 = vmatpush1.msra.mxu0 0.0
        %2573 = vmatprep.subr.mxu0 0.0
        %2574 = vmatpush1.msra.mxu0 0.0
        %2575 = vmatprep.subr.mxu0 0.0
        %2576 = vmatpush1.msra.mxu0 0.0
        %2577 = vmatprep.subr.mxu0 0.0
        %2578 = vmatpush1.msra.mxu0 0.0
        %2579 = vmatprep.subr.mxu0 0.0
        %2580 = vmatpush1.msra.mxu0 0.0
        %2581 = vmatprep.subr.mxu0 0.0
        %2582 = vmatpush1.msra.mxu0 0.0
        %2583 = vmatprep.subr.mxu0 0.0
        %2584 = vmatpush1.msra.mxu0 0.0
        %2585 = vmatprep.subr.mxu0 0.0
        %2586 = vmatpush1.msra.mxu0 0.0
        %2587 = vmatprep.subr.mxu0 0.0
        %2588 = vmatpush1.msra.mxu0 0.0
        %2589 = vmatprep.mubr.f32.mxu0 0.0
        %2590 = vmatmul.mubr.f32.gmra.mrb[0].mxu0 %v2366
        %v2591 = vpop.f32.mrb[0].mxu0
        %v2592 = vadd.f32 0.0, %v2591
        %v2593 = vpop.f32.mrb[0].mxu0
        %v2594 = vadd.f32 0.0, %v2593
        %2595 = vmatprep.mubr.f32.mxu0 0.0
        %2596 = vmatmul.mubr.f32.gmra.mrb[0].mxu0 %v2369
        %v2597 = vpop.f32.mrb[0].mxu0
        %v2598 = vadd.f32 0.0, %v2597
        %v2599 = vpop.f32.mrb[0].mxu0
        %v2600 = vadd.f32 0.0, %v2599
        %2601 = vdwg.mxu0
        %2602 = vmatprep.subr.mxu0 %v922
        %2603 = vmatpush1.msra.mxu0 %v921
        %2604 = vmatprep.subr.mxu0 %v931
        %2605 = vmatpush1.msra.mxu0 %v930
        %2606 = vmatprep.subr.mxu0 0.0
        %2607 = vmatpush1.msra.mxu0 0.0
        %2608 = vmatprep.subr.mxu0 0.0
        %2609 = vmatpush1.msra.mxu0 0.0
        %2610 = vmatprep.subr.mxu0 0.0
        %2611 = vmatpush1.msra.mxu0 0.0
        %2612 = vmatprep.subr.mxu0 0.0
        %2613 = vmatpush1.msra.mxu0 0.0
        %2614 = vmatprep.subr.mxu0 0.0
        %2615 = vmatpush1.msra.mxu0 0.0
        %2616 = vmatprep.subr.mxu0 0.0
        %2617 = vmatpush1.msra.mxu0 0.0
        %2618 = vmatprep.subr.mxu0 0.0
        %2619 = vmatpush1.msra.mxu0 0.0
        %2620 = vmatprep.subr.mxu0 0.0
        %2621 = vmatpush1.msra.mxu0 0.0
        %2622 = vmatprep.subr.mxu0 0.0
        %2623 = vmatpush1.msra.mxu0 0.0
        %2624 = vmatprep.subr.mxu0 0.0
        %2625 = vmatpush1.msra.mxu0 0.0
        %2626 = vmatprep.subr.mxu0 0.0
        %2627 = vmatpush1.msra.mxu0 0.0
        %2628 = vmatprep.subr.mxu0 0.0
        %2629 = vmatpush1.msra.mxu0 0.0
        %2630 = vmatprep.subr.mxu0 0.0
        %2631 = vmatpush1.msra.mxu0 0.0
        %2632 = vmatprep.subr.mxu0 0.0
        %2633 = vmatpush1.msra.mxu0 0.0
        %2634 = vmatprep.subr.mxu0 0.0
        %2635 = vmatpush1.msra.mxu0 0.0
        %2636 = vmatprep.subr.mxu0 0.0
        %2637 = vmatpush1.msra.mxu0 0.0
        %2638 = vmatprep.subr.mxu0 0.0
        %2639 = vmatpush1.msra.mxu0 0.0
        %2640 = vmatprep.subr.mxu0 0.0
        %2641 = vmatpush1.msra.mxu0 0.0
        %2642 = vmatprep.subr.mxu0 0.0
        %2643 = vmatpush1.msra.mxu0 0.0
        %2644 = vmatprep.subr.mxu0 0.0
        %2645 = vmatpush1.msra.mxu0 0.0
        %2646 = vmatprep.subr.mxu0 0.0
        %2647 = vmatpush1.msra.mxu0 0.0
        %2648 = vmatprep.subr.mxu0 0.0
        %2649 = vmatpush1.msra.mxu0 0.0
        %2650 = vmatprep.subr.mxu0 0.0
        %2651 = vmatpush1.msra.mxu0 0.0
        %2652 = vmatprep.subr.mxu0 0.0
        %2653 = vmatpush1.msra.mxu0 0.0
        %2654 = vmatprep.subr.mxu0 0.0
        %2655 = vmatpush1.msra.mxu0 0.0
        %2656 = vmatprep.subr.mxu0 0.0
        %2657 = vmatpush1.msra.mxu0 0.0
        %2658 = vmatprep.subr.mxu0 0.0
        %2659 = vmatpush1.msra.mxu0 0.0
        %2660 = vmatprep.subr.mxu0 0.0
        %2661 = vmatpush1.msra.mxu0 0.0
        %2662 = vmatprep.subr.mxu0 0.0
        %2663 = vmatpush1.msra.mxu0 0.0
        %2664 = vmatprep.subr.mxu0 0.0
        %2665 = vmatpush1.msra.mxu0 0.0
        %2666 = vmatprep.mubr.f32.mxu0 0.0
        %2667 = vmatmul.mubr.f32.gmra.mrb[0].mxu0 %v2366
        %v2668 = vpop.f32.mrb[0].mxu0
        %v2669 = vadd.f32 0.0, %v2668
        %v2670 = vpop.f32.mrb[0].mxu0
        %v2671 = vadd.f32 0.0, %v2670
        %2672 = vmatprep.mubr.f32.mxu0 0.0
        %2673 = vmatmul.mubr.f32.gmra.mrb[0].mxu0 %v2369
        %v2674 = vpop.f32.mrb[0].mxu0
        %v2675 = vadd.f32 0.0, %v2674
        %v2676 = vpop.f32.mrb[0].mxu0
        %v2677 = vadd.f32 0.0, %v2676
        %2678 = vdwg.mxu0
        %2679 = vmatprep.subr.mxu0 0.0
        %2680 = vmatpush1.msra.mxu0 %v923
        %2681 = vmatprep.subr.mxu0 0.0
        %2682 = vmatpush1.msra.mxu0 %v932
        %2683 = vmatprep.subr.mxu0 0.0
        %2684 = vmatpush1.msra.mxu0 0.0
        %2685 = vmatprep.subr.mxu0 0.0
        %2686 = vmatpush1.msra.mxu0 0.0
        %2687 = vmatprep.subr.mxu0 0.0
        %2688 = vmatpush1.msra.mxu0 0.0
        %2689 = vmatprep.subr.mxu0 0.0
        %2690 = vmatpush1.msra.mxu0 0.0
        %2691 = vmatprep.subr.mxu0 0.0
        %2692 = vmatpush1.msra.mxu0 0.0
        %2693 = vmatprep.subr.mxu0 0.0
        %2694 = vmatpush1.msra.mxu0 0.0
        %2695 = vmatprep.subr.mxu0 0.0
        %2696 = vmatpush1.msra.mxu0 0.0
        %2697 = vmatprep.subr.mxu0 0.0
        %2698 = vmatpush1.msra.mxu0 0.0
        %2699 = vmatprep.subr.mxu0 0.0
        %2700 = vmatpush1.msra.mxu0 0.0
        %2701 = vmatprep.subr.mxu0 0.0
        %2702 = vmatpush1.msra.mxu0 0.0
        %2703 = vmatprep.subr.mxu0 0.0
        %2704 = vmatpush1.msra.mxu0 0.0
        %2705 = vmatprep.subr.mxu0 0.0
        %2706 = vmatpush1.msra.mxu0 0.0
        %2707 = vmatprep.subr.mxu0 0.0
        %2708 = vmatpush1.msra.mxu0 0.0
        %2709 = vmatprep.subr.mxu0 0.0
        %2710 = vmatpush1.msra.mxu0 0.0
        %2711 = vmatprep.subr.mxu0 0.0
        %2712 = vmatpush1.msra.mxu0 0.0
        %2713 = vmatprep.subr.mxu0 0.0
        %2714 = vmatpush1.msra.mxu0 0.0
        %2715 = vmatprep.subr.mxu0 0.0
        %2716 = vmatpush1.msra.mxu0 0.0
        %2717 = vmatprep.subr.mxu0 0.0
        %2718 = vmatpush1.msra.mxu0 0.0
        %2719 = vmatprep.subr.mxu0 0.0
        %2720 = vmatpush1.msra.mxu0 0.0
        %2721 = vmatprep.subr.mxu0 0.0
        %2722 = vmatpush1.msra.mxu0 0.0
        %2723 = vmatprep.subr.mxu0 0.0
        %2724 = vmatpush1.msra.mxu0 0.0
        %2725 = vmatprep.subr.mxu0 0.0
        %2726 = vmatpush1.msra.mxu0 0.0
        %2727 = vmatprep.subr.mxu0 0.0
        %2728 = vmatpush1.msra.mxu0 0.0
        %2729 = vmatprep.subr.mxu0 0.0
        %2730 = vmatpush1.msra.mxu0 0.0
        %2731 = vmatprep.subr.mxu0 0.0
        %2732 = vmatpush1.msra.mxu0 0.0
        %2733 = vmatprep.subr.mxu0 0.0
        %2734 = vmatpush1.msra.mxu0 0.0
        %2735 = vmatprep.subr.mxu0 0.0
        %2736 = vmatpush1.msra.mxu0 0.0
        %2737 = vmatprep.subr.mxu0 0.0
        %2738 = vmatpush1.msra.mxu0 0.0
        %2739 = vmatprep.subr.mxu0 0.0
        %2740 = vmatpush1.msra.mxu0 0.0
        %2741 = vmatprep.subr.mxu0 0.0
        %2742 = vmatpush1.msra.mxu0 0.0
        %2743 = vmatprep.mubr.f32.mxu0 0.0
        %2744 = vmatmul.mubr.f32.gmra.mrb[0].mxu0 %v2366
        %v2745 = vpop.f32.mrb[0].mxu0
        %v2746 = vadd.f32 0.0, %v2745
        %v2747 = vpop.f32.mrb[0].mxu0
        %2748 = vmatprep.mubr.f32.mxu0 0.0
        %2749 = vmatmul.mubr.f32.gmra.mrb[0].mxu0 %v2369
        %v2750 = vpop.f32.mrb[0].mxu0
        %v2751 = vadd.f32 0.0, %v2750
        %v2752 = vpop.f32.mrb[0].mxu0
        %2753 = vdwg.mxu0
        %v2754 = vadd.f32 %v1421, %v2438
        %v2755 = vadd.f32 %v1423, %v2440
        %v2756 = vadd.f32 %v1498, %v2515
        %v2757 = vadd.f32 %v1500, %v2517
        %v2758 = vadd.f32 %v1575, %v2592
        %v2759 = vadd.f32 %v1577, %v2594
        %v2760 = vadd.f32 %v1652, %v2669
        %v2761 = vadd.f32 %v1654, %v2671
        %v2762 = vadd.f32 %v1729, %v2746
        %v2763 = vadd.f32 %v1427, %v2444
        %v2764 = vadd.f32 %v1429, %v2446
        %v2765 = vadd.f32 %v1504, %v2521
        %v2766 = vadd.f32 %v1506, %v2523
        %v2767 = vadd.f32 %v1581, %v2598
        %v2768 = vadd.f32 %v1583, %v2600
        %v2769 = vadd.f32 %v1658, %v2675
        %v2770 = vadd.f32 %v1660, %v2677
        %v2771 = vadd.f32 %v1734, %v2751
        %v2772 = vsel %vm933, %v2763, -inf
        %v2773 = vmax.f32 %v2754, %v2772
        %v2774 = vrot.slane %v2773, 4
        %v2775 = vmax.f32 %v2773, %v2774
        %v2776 = vrot.slane %v2775, 2
        %v2777 = vmax.f32 %v2775, %v2776
        %v2778 = vrot.slane %v2777, 1
        %v2779 = vmax.f32 %v2777, %v2778
        %v2780 = vsel %vm933, %v2764, -inf
        %v2781 = vmax.f32 %v2755, %v2780
        %v2782 = vrot.slane %v2781, 4
        %v2783 = vmax.f32 %v2781, %v2782
        %v2784 = vrot.slane %v2783, 2
        %v2785 = vmax.f32 %v2783, %v2784
        %v2786 = vrot.slane %v2785, 1
        %v2787 = vmax.f32 %v2785, %v2786
        %v2788 = vsel %vm933, %v2765, -inf
        %v2789 = vmax.f32 %v2756, %v2788
        %v2790 = vrot.slane %v2789, 4
        %v2791 = vmax.f32 %v2789, %v2790
        %v2792 = vrot.slane %v2791, 2
        %v2793 = vmax.f32 %v2791, %v2792
        %v2794 = vrot.slane %v2793, 1
        %v2795 = vmax.f32 %v2793, %v2794
        %v2796 = vsel %vm933, %v2766, -inf
        %v2797 = vmax.f32 %v2757, %v2796
        %v2798 = vrot.slane %v2797, 4
        %v2799 = vmax.f32 %v2797, %v2798
        %v2800 = vrot.slane %v2799, 2
        %v2801 = vmax.f32 %v2799, %v2800
        %v2802 = vrot.slane %v2801, 1
        %v2803 = vmax.f32 %v2801, %v2802
        %v2804 = vsel %vm933, %v2767, -inf
        %v2805 = vmax.f32 %v2758, %v2804
        %v2806 = vrot.slane %v2805, 4
        %v2807 = vmax.f32 %v2805, %v2806
        %v2808 = vrot.slane %v2807, 2
        %v2809 = vmax.f32 %v2807, %v2808
        %v2810 = vrot.slane %v2809, 1
        %v2811 = vmax.f32 %v2809, %v2810
        %v2812 = vsel %vm933, %v2768, -inf
        %v2813 = vmax.f32 %v2759, %v2812
        %v2814 = vrot.slane %v2813, 4
        %v2815 = vmax.f32 %v2813, %v2814
        %v2816 = vrot.slane %v2815, 2
        %v2817 = vmax.f32 %v2815, %v2816
        %v2818 = vrot.slane %v2817, 1
        %v2819 = vmax.f32 %v2817, %v2818
        %v2820 = vsel %vm933, %v2769, -inf
        %v2821 = vmax.f32 %v2760, %v2820
        %v2822 = vrot.slane %v2821, 4
        %v2823 = vmax.f32 %v2821, %v2822
        %v2824 = vrot.slane %v2823, 2
        %v2825 = vmax.f32 %v2823, %v2824
        %v2826 = vrot.slane %v2825, 1
        %v2827 = vmax.f32 %v2825, %v2826
        %v2828 = vsel %vm933, %v2770, -inf
        %v2829 = vmax.f32 %v2761, %v2828
        %v2830 = vrot.slane %v2829, 4
        %v2831 = vmax.f32 %v2829, %v2830
        %v2832 = vrot.slane %v2831, 2
        %v2833 = vmax.f32 %v2831, %v2832
        %v2834 = vrot.slane %v2833, 1
        %v2835 = vmax.f32 %v2833, %v2834
        %v2836 = vsel %vm933, %v2771, -inf
        %v2837 = vmax.f32 %v2762, %v2836
        %v2838 = vrot.slane %v2837, 4
        %v2839 = vmax.f32 %v2837, %v2838
        %v2840 = vrot.slane %v2839, 2
        %v2841 = vmax.f32 %v2839, %v2840
        %v2842 = vrot.slane %v2841, 1
        %v2843 = vmax.f32 %v2841, %v2842
        %v2844 = vsub.f32 %v2754, %v2779
        %v2845 = vsub.f32 %v2755, %v2787
        %v2846 = vsub.f32 %v2756, %v2795
        %v2847 = vsub.f32 %v2757, %v2803
        %v2848 = vsub.f32 %v2758, %v2811
        %v2849 = vsub.f32 %v2759, %v2819
        %v2850 = vsub.f32 %v2760, %v2827
        %v2851 = vsub.f32 %v2761, %v2835
        %v2852 = vsub.f32 %v2762, %v2843
        %v2853 = vsub.f32 %v2763, %v2779
        %v2854 = vsub.f32 %v2764, %v2787
        %v2855 = vsub.f32 %v2765, %v2795
        %v2856 = vsub.f32 %v2766, %v2803
        %v2857 = vsub.f32 %v2767, %v2811
        %v2858 = vsub.f32 %v2768, %v2819
        %v2859 = vsub.f32 %v2769, %v2827
        %v2860 = vsub.f32 %v2770, %v2835
        %v2861 = vsub.f32 %v2771, %v2843
        %v2862 = vmul.f32 %v2844, 1.442695
        %v2863 = vpow.pop %v2862
        %v2864 = vmul.f32 %v2845, 1.442695
        %v2865 = vpow.pop %v2864
        %v2866 = vmul.f32 %v2846, 1.442695
        %v2867 = vpow.pop %v2866
        %v2868 = vmul.f32 %v2847, 1.442695
        %v2869 = vpow.pop %v2868
        %v2870 = vmul.f32 %v2848, 1.442695
        %v2871 = vpow.pop %v2870
        %v2872 = vmul.f32 %v2849, 1.442695
        %v2873 = vpow.pop %v2872
        %v2874 = vmul.f32 %v2850, 1.442695
        %v2875 = vpow.pop %v2874
        %v2876 = vmul.f32 %v2851, 1.442695
        %v2877 = vpow.pop %v2876
        %v2878 = vmul.f32 %v2852, 1.442695
        %v2879 = vpow.pop %v2878
        %v2880 = vmul.f32 %v2853, 1.442695
        %v2881 = vpow.pop %v2880
        %v2882 = vmul.f32 %v2854, 1.442695
        %v2883 = vpow.pop %v2882
        %v2884 = vmul.f32 %v2855, 1.442695
        %v2885 = vpow.pop %v2884
        %v2886 = vmul.f32 %v2856, 1.442695
        %v2887 = vpow.pop %v2886
        %v2888 = vmul.f32 %v2857, 1.442695
        %v2889 = vpow.pop %v2888
        %v2890 = vmul.f32 %v2858, 1.442695
        %v2891 = vpow.pop %v2890
        %v2892 = vmul.f32 %v2859, 1.442695
        %v2893 = vpow.pop %v2892
        %v2894 = vmul.f32 %v2860, 1.442695
        %v2895 = vpow.pop %v2894
        %v2896 = vmul.f32 %v2861, 1.442695
        %v2897 = vpow.pop %v2896
        %v2898 = vsel %vm933, %v2881, 0.0
        %v2899 = vadd.f32 %v2863, %v2898
        %v2900 = vrot.slane %v2899, 4
        %v2901 = vadd.f32 %v2899, %v2900
        %v2902 = vrot.slane %v2901, 2
        %v2903 = vadd.f32 %v2901, %v2902
        %v2904 = vrot.slane %v2903, 1
        %v2905 = vadd.f32 %v2903, %v2904
        %v2906 = vsel %vm933, %v2883, 0.0
        %v2907 = vadd.f32 %v2865, %v2906
        %v2908 = vrot.slane %v2907, 4
        %v2909 = vadd.f32 %v2907, %v2908
        %v2910 = vrot.slane %v2909, 2
        %v2911 = vadd.f32 %v2909, %v2910
        %v2912 = vrot.slane %v2911, 1
        %v2913 = vadd.f32 %v2911, %v2912
        %v2914 = vsel %vm933, %v2885, 0.0
        %v2915 = vadd.f32 %v2867, %v2914
        %v2916 = vrot.slane %v2915, 4
        %v2917 = vadd.f32 %v2915, %v2916
        %v2918 = vrot.slane %v2917, 2
        %v2919 = vadd.f32 %v2917, %v2918
        %v2920 = vrot.slane %v2919, 1
        %v2921 = vadd.f32 %v2919, %v2920
        %v2922 = vsel %vm933, %v2887, 0.0
        %v2923 = vadd.f32 %v2869, %v2922
        %v2924 = vrot.slane %v2923, 4
        %v2925 = vadd.f32 %v2923, %v2924
        %v2926 = vrot.slane %v2925, 2
        %v2927 = vadd.f32 %v2925, %v2926
        %v2928 = vrot.slane %v2927, 1
        %v2929 = vadd.f32 %v2927, %v2928
        %v2930 = vsel %vm933, %v2889, 0.0
        %v2931 = vadd.f32 %v2871, %v2930
        %v2932 = vrot.slane %v2931, 4
        %v2933 = vadd.f32 %v2931, %v2932
        %v2934 = vrot.slane %v2933, 2
        %v2935 = vadd.f32 %v2933, %v2934
        %v2936 = vrot.slane %v2935, 1
        %v2937 = vadd.f32 %v2935, %v2936
        %v2938 = vsel %vm933, %v2891, 0.0
        %v2939 = vadd.f32 %v2873, %v2938
        %v2940 = vrot.slane %v2939, 4
        %v2941 = vadd.f32 %v2939, %v2940
        %v2942 = vrot.slane %v2941, 2
        %v2943 = vadd.f32 %v2941, %v2942
        %v2944 = vrot.slane %v2943, 1
        %v2945 = vadd.f32 %v2943, %v2944
        %v2946 = vsel %vm933, %v2893, 0.0
        %v2947 = vadd.f32 %v2875, %v2946
        %v2948 = vrot.slane %v2947, 4
        %v2949 = vadd.f32 %v2947, %v2948
        %v2950 = vrot.slane %v2949, 2
        %v2951 = vadd.f32 %v2949, %v2950
        %v2952 = vrot.slane %v2951, 1
        %v2953 = vadd.f32 %v2951, %v2952
        %v2954 = vsel %vm933, %v2895, 0.0
        %v2955 = vadd.f32 %v2877, %v2954
        %v2956 = vrot.slane %v2955, 4
        %v2957 = vadd.f32 %v2955, %v2956
        %v2958 = vrot.slane %v2957, 2
        %v2959 = vadd.f32 %v2957, %v2958
        %v2960 = vrot.slane %v2959, 1
        %v2961 = vadd.f32 %v2959, %v2960
        %v2962 = vsel %vm933, %v2897, 0.0
        %v2963 = vadd.f32 %v2879, %v2962
        %v2964 = vrot.slane %v2963, 4
        %v2965 = vadd.f32 %v2963, %v2964
        %v2966 = vrot.slane %v2965, 2
        %v2967 = vadd.f32 %v2965, %v2966
        %v2968 = vrot.slane %v2967, 1
        %v2969 = vadd.f32 %v2967, %v2968
        %v2970 = vrcp.pop %v2905
        %v2971 = vrcp.pop %v2913
        %v2972 = vrcp.pop %v2921
        %v2973 = vrcp.pop %v2929
        %v2974 = vrcp.pop %v2937
        %v2975 = vrcp.pop %v2945
        %v2976 = vrcp.pop %v2953
        %v2977 = vrcp.pop %v2961
        %v2978 = vrcp.pop %v2969
        %v2979 = vmul.f32 %v2863, %v2970
        %v2980 = vmul.f32 %v2865, %v2971
        %v2981 = vmul.f32 %v2867, %v2972
        %v2982 = vmul.f32 %v2869, %v2973
        %v2983 = vmul.f32 %v2871, %v2974
        %v2984 = vmul.f32 %v2873, %v2975
        %v2985 = vmul.f32 %v2875, %v2976
        %v2986 = vmul.f32 %v2877, %v2977
        %v2987 = vmul.f32 %v2879, %v2978
        %v2988 = vmul.f32 %v2881, %v2970
        %v2989 = vmul.f32 %v2883, %v2971
        %v2990 = vmul.f32 %v2885, %v2972
        %v2991 = vmul.f32 %v2887, %v2973
        %v2992 = vmul.f32 %v2889, %v2974
        %v2993 = vmul.f32 %v2891, %v2975
        %v2994 = vmul.f32 %v2893, %v2976
        %v2995 = vmul.f32 %v2895, %v2977
        %v2996 = vmul.f32 %v2897, %v2978
        %2997 = vmatprep.subr.mxu0 %v916
        %2998 = vmatpush1.xpose.msra.mxu0 %v915
        %2999 = vmatprep.subr.mxu0 %v925
        %3000 = vmatpush1.xpose.msra.mxu0 %v924
        %3001 = vmatprep.subr.mxu0 0.0
        %3002 = vmatpush1.xpose.msra.mxu0 0.0
        %3003 = vmatprep.subr.mxu0 0.0
        %3004 = vmatpush1.xpose.msra.mxu0 0.0
        %3005 = vmatprep.subr.mxu0 0.0
        %3006 = vmatpush1.xpose.msra.mxu0 0.0
        %3007 = vmatprep.subr.mxu0 0.0
        %3008 = vmatpush1.xpose.msra.mxu0 0.0
        %3009 = vmatprep.subr.mxu0 0.0
        %3010 = vmatpush1.xpose.msra.mxu0 0.0
        %3011 = vmatprep.subr.mxu0 0.0
        %3012 = vmatpush1.xpose.msra.mxu0 0.0
        %3013 = vmatprep.subr.mxu0 0.0
        %3014 = vmatpush1.xpose.msra.mxu0 0.0
        %3015 = vmatprep.subr.mxu0 0.0
        %3016 = vmatpush1.xpose.msra.mxu0 0.0
        %3017 = vmatprep.subr.mxu0 0.0
        %3018 = vmatpush1.xpose.msra.mxu0 0.0
        %3019 = vmatprep.subr.mxu0 0.0
        %3020 = vmatpush1.xpose.msra.mxu0 0.0
        %3021 = vmatprep.subr.mxu0 0.0
        %3022 = vmatpush1.xpose.msra.mxu0 0.0
        %3023 = vmatprep.subr.mxu0 0.0
        %3024 = vmatpush1.xpose.msra.mxu0 0.0
        %3025 = vmatprep.subr.mxu0 0.0
        %3026 = vmatpush1.xpose.msra.mxu0 0.0
        %3027 = vmatprep.subr.mxu0 0.0
        %3028 = vmatpush1.xpose.msra.mxu0 0.0
        %3029 = vmatprep.subr.mxu0 0.0
        %3030 = vmatpush1.xpose.msra.mxu0 0.0
        %3031 = vmatprep.subr.mxu0 0.0
        %3032 = vmatpush1.xpose.msra.mxu0 0.0
        %3033 = vmatprep.subr.mxu0 0.0
        %3034 = vmatpush1.xpose.msra.mxu0 0.0
        %3035 = vmatprep.subr.mxu0 0.0
        %3036 = vmatpush1.xpose.msra.mxu0 0.0
        %3037 = vmatprep.subr.mxu0 0.0
        %3038 = vmatpush1.xpose.msra.mxu0 0.0
        %3039 = vmatprep.subr.mxu0 0.0
        %3040 = vmatpush1.xpose.msra.mxu0 0.0
        %3041 = vmatprep.subr.mxu0 0.0
        %3042 = vmatpush1.xpose.msra.mxu0 0.0
        %3043 = vmatprep.subr.mxu0 0.0
        %3044 = vmatpush1.xpose.msra.mxu0 0.0
        %3045 = vmatprep.subr.mxu0 0.0
        %3046 = vmatpush1.xpose.msra.mxu0 0.0
        %3047 = vmatprep.subr.mxu0 0.0
        %3048 = vmatpush1.xpose.msra.mxu0 0.0
        %3049 = vmatprep.subr.mxu0 0.0
        %3050 = vmatpush1.xpose.msra.mxu0 0.0
        %3051 = vmatprep.subr.mxu0 0.0
        %3052 = vmatpush1.xpose.msra.mxu0 0.0
        %3053 = vmatprep.subr.mxu0 0.0
        %3054 = vmatpush1.xpose.msra.mxu0 0.0
        %3055 = vmatprep.subr.mxu0 0.0
        %3056 = vmatpush1.xpose.msra.mxu0 0.0
        %3057 = vmatprep.subr.mxu0 0.0
        %3058 = vmatpush1.xpose.msra.mxu0 0.0
        %3059 = vmatprep.subr.mxu0 0.0
        %3060 = vmatpush1.xpose.msra.mxu0 0.0
        %3061 = vmatprep.mubr.f32.mxu0 %v2980
        %3062 = vmatmul.mubr.f32.gmra.mrb[0].mxu0 %v2979
        %v3063 = vpop.f32.mrb[0].mxu0
        %v3064 = vadd.f32 0.0, %v3063
        %v3065 = vpop.f32.mrb[0].mxu0
        %3066 = vmatprep.mubr.f32.mxu0 %v2989
        %3067 = vmatmul.mubr.f32.gmra.mrb[0].mxu0 %v2988
        %v3068 = vpop.f32.mrb[0].mxu0
        %v3069 = vadd.f32 0.0, %v3068
        %v3070 = vpop.f32.mrb[0].mxu0
        %3071 = vdwg.mxu0
        %3072 = vmatprep.subr.mxu0 %v918
        %3073 = vmatpush1.xpose.msra.mxu0 %v917
        %3074 = vmatprep.subr.mxu0 %v927
        %3075 = vmatpush1.xpose.msra.mxu0 %v926
        %3076 = vmatprep.subr.mxu0 0.0
        %3077 = vmatpush1.xpose.msra.mxu0 0.0
        %3078 = vmatprep.subr.mxu0 0.0
        %3079 = vmatpush1.xpose.msra.mxu0 0.0
        %3080 = vmatprep.subr.mxu0 0.0
        %3081 = vmatpush1.xpose.msra.mxu0 0.0
        %3082 = vmatprep.subr.mxu0 0.0
        %3083 = vmatpush1.xpose.msra.mxu0 0.0
        %3084 = vmatprep.subr.mxu0 0.0
        %3085 = vmatpush1.xpose.msra.mxu0 0.0
        %3086 = vmatprep.subr.mxu0 0.0
        %3087 = vmatpush1.xpose.msra.mxu0 0.0
        %3088 = vmatprep.subr.mxu0 0.0
        %3089 = vmatpush1.xpose.msra.mxu0 0.0
        %3090 = vmatprep.subr.mxu0 0.0
        %3091 = vmatpush1.xpose.msra.mxu0 0.0
        %3092 = vmatprep.subr.mxu0 0.0
        %3093 = vmatpush1.xpose.msra.mxu0 0.0
        %3094 = vmatprep.subr.mxu0 0.0
        %3095 = vmatpush1.xpose.msra.mxu0 0.0
        %3096 = vmatprep.subr.mxu0 0.0
        %3097 = vmatpush1.xpose.msra.mxu0 0.0
        %3098 = vmatprep.subr.mxu0 0.0
        %3099 = vmatpush1.xpose.msra.mxu0 0.0
        %3100 = vmatprep.subr.mxu0 0.0
        %3101 = vmatpush1.xpose.msra.mxu0 0.0
        %3102 = vmatprep.subr.mxu0 0.0
        %3103 = vmatpush1.xpose.msra.mxu0 0.0
        %3104 = vmatprep.subr.mxu0 0.0
        %3105 = vmatpush1.xpose.msra.mxu0 0.0
        %3106 = vmatprep.subr.mxu0 0.0
        %3107 = vmatpush1.xpose.msra.mxu0 0.0
        %3108 = vmatprep.subr.mxu0 0.0
        %3109 = vmatpush1.xpose.msra.mxu0 0.0
        %3110 = vmatprep.subr.mxu0 0.0
        %3111 = vmatpush1.xpose.msra.mxu0 0.0
        %3112 = vmatprep.subr.mxu0 0.0
        %3113 = vmatpush1.xpose.msra.mxu0 0.0
        %3114 = vmatprep.subr.mxu0 0.0
        %3115 = vmatpush1.xpose.msra.mxu0 0.0
        %3116 = vmatprep.subr.mxu0 0.0
        %3117 = vmatpush1.xpose.msra.mxu0 0.0
        %3118 = vmatprep.subr.mxu0 0.0
        %3119 = vmatpush1.xpose.msra.mxu0 0.0
        %3120 = vmatprep.subr.mxu0 0.0
        %3121 = vmatpush1.xpose.msra.mxu0 0.0
        %3122 = vmatprep.subr.mxu0 0.0
        %3123 = vmatpush1.xpose.msra.mxu0 0.0
        %3124 = vmatprep.subr.mxu0 0.0
        %3125 = vmatpush1.xpose.msra.mxu0 0.0
        %3126 = vmatprep.subr.mxu0 0.0
        %3127 = vmatpush1.xpose.msra.mxu0 0.0
        %3128 = vmatprep.subr.mxu0 0.0
        %3129 = vmatpush1.xpose.msra.mxu0 0.0
        %3130 = vmatprep.subr.mxu0 0.0
        %3131 = vmatpush1.xpose.msra.mxu0 0.0
        %3132 = vmatprep.subr.mxu0 0.0
        %3133 = vmatpush1.xpose.msra.mxu0 0.0
        %3134 = vmatprep.subr.mxu0 0.0
        %3135 = vmatpush1.xpose.msra.mxu0 0.0
        %3136 = vmatprep.mubr.f32.mxu0 %v2982
        %3137 = vmatmul.mubr.f32.gmra.mrb[0].mxu0 %v2981
        %v3138 = vpop.f32.mrb[0].mxu0
        %v3139 = vadd.f32 %v3064, %v3138
        %v3140 = vpop.f32.mrb[0].mxu0
        %3141 = vmatprep.mubr.f32.mxu0 %v2991
        %3142 = vmatmul.mubr.f32.gmra.mrb[0].mxu0 %v2990
        %v3143 = vpop.f32.mrb[0].mxu0
        %v3144 = vadd.f32 %v3069, %v3143
        %v3145 = vpop.f32.mrb[0].mxu0
        %3146 = vdwg.mxu0
        %3147 = vmatprep.subr.mxu0 %v920
        %3148 = vmatpush1.xpose.msra.mxu0 %v919
        %3149 = vmatprep.subr.mxu0 %v929
        %3150 = vmatpush1.xpose.msra.mxu0 %v928
        %3151 = vmatprep.subr.mxu0 0.0
        %3152 = vmatpush1.xpose.msra.mxu0 0.0
        %3153 = vmatprep.subr.mxu0 0.0
        %3154 = vmatpush1.xpose.msra.mxu0 0.0
        %3155 = vmatprep.subr.mxu0 0.0
        %3156 = vmatpush1.xpose.msra.mxu0 0.0
        %3157 = vmatprep.subr.mxu0 0.0
        %3158 = vmatpush1.xpose.msra.mxu0 0.0
        %3159 = vmatprep.subr.mxu0 0.0
        %3160 = vmatpush1.xpose.msra.mxu0 0.0
        %3161 = vmatprep.subr.mxu0 0.0
        %3162 = vmatpush1.xpose.msra.mxu0 0.0
        %3163 = vmatprep.subr.mxu0 0.0
        %3164 = vmatpush1.xpose.msra.mxu0 0.0
        %3165 = vmatprep.subr.mxu0 0.0
        %3166 = vmatpush1.xpose.msra.mxu0 0.0
        %3167 = vmatprep.subr.mxu0 0.0
        %3168 = vmatpush1.xpose.msra.mxu0 0.0
        %3169 = vmatprep.subr.mxu0 0.0
        %3170 = vmatpush1.xpose.msra.mxu0 0.0
        %3171 = vmatprep.subr.mxu0 0.0
        %3172 = vmatpush1.xpose.msra.mxu0 0.0
        %3173 = vmatprep.subr.mxu0 0.0
        %3174 = vmatpush1.xpose.msra.mxu0 0.0
        %3175 = vmatprep.subr.mxu0 0.0
        %3176 = vmatpush1.xpose.msra.mxu0 0.0
        %3177 = vmatprep.subr.mxu0 0.0
        %3178 = vmatpush1.xpose.msra.mxu0 0.0
        %3179 = vmatprep.subr.mxu0 0.0
        %3180 = vmatpush1.xpose.msra.mxu0 0.0
        %3181 = vmatprep.subr.mxu0 0.0
        %3182 = vmatpush1.xpose.msra.mxu0 0.0
        %3183 = vmatprep.subr.mxu0 0.0
        %3184 = vmatpush1.xpose.msra.mxu0 0.0
        %3185 = vmatprep.subr.mxu0 0.0
        %3186 = vmatpush1.xpose.msra.mxu0 0.0
        %3187 = vmatprep.subr.mxu0 0.0
        %3188 = vmatpush1.xpose.msra.mxu0 0.0
        %3189 = vmatprep.subr.mxu0 0.0
        %3190 = vmatpush1.xpose.msra.mxu0 0.0
        %3191 = vmatprep.subr.mxu0 0.0
        %3192 = vmatpush1.xpose.msra.mxu0 0.0
        %3193 = vmatprep.subr.mxu0 0.0
        %3194 = vmatpush1.xpose.msra.mxu0 0.0
        %3195 = vmatprep.subr.mxu0 0.0
        %3196 = vmatpush1.xpose.msra.mxu0 0.0
        %3197 = vmatprep.subr.mxu0 0.0
        %3198 = vmatpush1.xpose.msra.mxu0 0.0
        %3199 = vmatprep.subr.mxu0 0.0
        %3200 = vmatpush1.xpose.msra.mxu0 0.0
        %3201 = vmatprep.subr.mxu0 0.0
        %3202 = vmatpush1.xpose.msra.mxu0 0.0
        %3203 = vmatprep.subr.mxu0 0.0
        %3204 = vmatpush1.xpose.msra.mxu0 0.0
        %3205 = vmatprep.subr.mxu0 0.0
        %3206 = vmatpush1.xpose.msra.mxu0 0.0
        %3207 = vmatprep.subr.mxu0 0.0
        %3208 = vmatpush1.xpose.msra.mxu0 0.0
        %3209 = vmatprep.subr.mxu0 0.0
        %3210 = vmatpush1.xpose.msra.mxu0 0.0
        %3211 = vmatprep.mubr.f32.mxu0 %v2984
        %3212 = vmatmul.mubr.f32.gmra.mrb[0].mxu0 %v2983
        %v3213 = vpop.f32.mrb[0].mxu0
        %v3214 = vadd.f32 %v3139, %v3213
        %v3215 = vpop.f32.mrb[0].mxu0
        %3216 = vmatprep.mubr.f32.mxu0 %v2993
        %3217 = vmatmul.mubr.f32.gmra.mrb[0].mxu0 %v2992
        %v3218 = vpop.f32.mrb[0].mxu0
        %v3219 = vadd.f32 %v3144, %v3218
        %v3220 = vpop.f32.mrb[0].mxu0
        %3221 = vdwg.mxu0
        %3222 = vmatprep.subr.mxu0 %v922
        %3223 = vmatpush1.xpose.msra.mxu0 %v921
        %3224 = vmatprep.subr.mxu0 %v931
        %3225 = vmatpush1.xpose.msra.mxu0 %v930
        %3226 = vmatprep.subr.mxu0 0.0
        %3227 = vmatpush1.xpose.msra.mxu0 0.0
        %3228 = vmatprep.subr.mxu0 0.0
        %3229 = vmatpush1.xpose.msra.mxu0 0.0
        %3230 = vmatprep.subr.mxu0 0.0
        %3231 = vmatpush1.xpose.msra.mxu0 0.0
        %3232 = vmatprep.subr.mxu0 0.0
        %3233 = vmatpush1.xpose.msra.mxu0 0.0
        %3234 = vmatprep.subr.mxu0 0.0
        %3235 = vmatpush1.xpose.msra.mxu0 0.0
        %3236 = vmatprep.subr.mxu0 0.0
        %3237 = vmatpush1.xpose.msra.mxu0 0.0
        %3238 = vmatprep.subr.mxu0 0.0
        %3239 = vmatpush1.xpose.msra.mxu0 0.0
        %3240 = vmatprep.subr.mxu0 0.0
        %3241 = vmatpush1.xpose.msra.mxu0 0.0
        %3242 = vmatprep.subr.mxu0 0.0
        %3243 = vmatpush1.xpose.msra.mxu0 0.0
        %3244 = vmatprep.subr.mxu0 0.0
        %3245 = vmatpush1.xpose.msra.mxu0 0.0
        %3246 = vmatprep.subr.mxu0 0.0
        %3247 = vmatpush1.xpose.msra.mxu0 0.0
        %3248 = vmatprep.subr.mxu0 0.0
        %3249 = vmatpush1.xpose.msra.mxu0 0.0
        %3250 = vmatprep.subr.mxu0 0.0
        %3251 = vmatpush1.xpose.msra.mxu0 0.0
        %3252 = vmatprep.subr.mxu0 0.0
        %3253 = vmatpush1.xpose.msra.mxu0 0.0
        %3254 = vmatprep.subr.mxu0 0.0
        %3255 = vmatpush1.xpose.msra.mxu0 0.0
        %3256 = vmatprep.subr.mxu0 0.0
        %3257 = vmatpush1.xpose.msra.mxu0 0.0
        %3258 = vmatprep.subr.mxu0 0.0
        %3259 = vmatpush1.xpose.msra.mxu0 0.0
        %3260 = vmatprep.subr.mxu0 0.0
        %3261 = vmatpush1.xpose.msra.mxu0 0.0
        %3262 = vmatprep.subr.mxu0 0.0
        %3263 = vmatpush1.xpose.msra.mxu0 0.0
        %3264 = vmatprep.subr.mxu0 0.0
        %3265 = vmatpush1.xpose.msra.mxu0 0.0
        %3266 = vmatprep.subr.mxu0 0.0
        %3267 = vmatpush1.xpose.msra.mxu0 0.0
        %3268 = vmatprep.subr.mxu0 0.0
        %3269 = vmatpush1.xpose.msra.mxu0 0.0
        %3270 = vmatprep.subr.mxu0 0.0
        %3271 = vmatpush1.xpose.msra.mxu0 0.0
        %3272 = vmatprep.subr.mxu0 0.0
        %3273 = vmatpush1.xpose.msra.mxu0 0.0
        %3274 = vmatprep.subr.mxu0 0.0
        %3275 = vmatpush1.xpose.msra.mxu0 0.0
        %3276 = vmatprep.subr.mxu0 0.0
        %3277 = vmatpush1.xpose.msra.mxu0 0.0
        %3278 = vmatprep.subr.mxu0 0.0
        %3279 = vmatpush1.xpose.msra.mxu0 0.0
        %3280 = vmatprep.subr.mxu0 0.0
        %3281 = vmatpush1.xpose.msra.mxu0 0.0
        %3282 = vmatprep.subr.mxu0 0.0
        %3283 = vmatpush1.xpose.msra.mxu0 0.0
        %3284 = vmatprep.subr.mxu0 0.0
        %3285 = vmatpush1.xpose.msra.mxu0 0.0
        %3286 = vmatprep.mubr.f32.mxu0 %v2986
        %3287 = vmatmul.mubr.f32.gmra.mrb[0].mxu0 %v2985
        %v3288 = vpop.f32.mrb[0].mxu0
        %v3289 = vadd.f32 %v3214, %v3288
        %v3290 = vpop.f32.mrb[0].mxu0
        %3291 = vmatprep.mubr.f32.mxu0 %v2995
        %3292 = vmatmul.mubr.f32.gmra.mrb[0].mxu0 %v2994
        %v3293 = vpop.f32.mrb[0].mxu0
        %v3294 = vadd.f32 %v3219, %v3293
        %v3295 = vpop.f32.mrb[0].mxu0
        %3296 = vdwg.mxu0
        %3297 = vmatprep.subr.mxu0 0.0
        %3298 = vmatpush1.xpose.msra.mxu0 %v923
        %3299 = vmatprep.subr.mxu0 0.0
        %3300 = vmatpush1.xpose.msra.mxu0 %v932
        %3301 = vmatprep.subr.mxu0 0.0
        %3302 = vmatpush1.xpose.msra.mxu0 0.0
        %3303 = vmatprep.subr.mxu0 0.0
        %3304 = vmatpush1.xpose.msra.mxu0 0.0
        %3305 = vmatprep.subr.mxu0 0.0
        %3306 = vmatpush1.xpose.msra.mxu0 0.0
        %3307 = vmatprep.subr.mxu0 0.0
        %3308 = vmatpush1.xpose.msra.mxu0 0.0
        %3309 = vmatprep.subr.mxu0 0.0
        %3310 = vmatpush1.xpose.msra.mxu0 0.0
        %3311 = vmatprep.subr.mxu0 0.0
        %3312 = vmatpush1.xpose.msra.mxu0 0.0
        %3313 = vmatprep.subr.mxu0 0.0
        %3314 = vmatpush1.xpose.msra.mxu0 0.0
        %3315 = vmatprep.subr.mxu0 0.0
        %3316 = vmatpush1.xpose.msra.mxu0 0.0
        %3317 = vmatprep.subr.mxu0 0.0
        %3318 = vmatpush1.xpose.msra.mxu0 0.0
        %3319 = vmatprep.subr.mxu0 0.0
        %3320 = vmatpush1.xpose.msra.mxu0 0.0
        %3321 = vmatprep.subr.mxu0 0.0
        %3322 = vmatpush1.xpose.msra.mxu0 0.0
        %3323 = vmatprep.subr.mxu0 0.0
        %3324 = vmatpush1.xpose.msra.mxu0 0.0
        %3325 = vmatprep.subr.mxu0 0.0
        %3326 = vmatpush1.xpose.msra.mxu0 0.0
        %3327 = vmatprep.subr.mxu0 0.0
        %3328 = vmatpush1.xpose.msra.mxu0 0.0
        %3329 = vmatprep.subr.mxu0 0.0
        %3330 = vmatpush1.xpose.msra.mxu0 0.0
        %3331 = vmatprep.subr.mxu0 0.0
        %3332 = vmatpush1.xpose.msra.mxu0 0.0
        %3333 = vmatprep.subr.mxu0 0.0
        %3334 = vmatpush1.xpose.msra.mxu0 0.0
        %3335 = vmatprep.subr.mxu0 0.0
        %3336 = vmatpush1.xpose.msra.mxu0 0.0
        %3337 = vmatprep.subr.mxu0 0.0
        %3338 = vmatpush1.xpose.msra.mxu0 0.0
        %3339 = vmatprep.subr.mxu0 0.0
        %3340 = vmatpush1.xpose.msra.mxu0 0.0
        %3341 = vmatprep.subr.mxu0 0.0
        %3342 = vmatpush1.xpose.msra.mxu0 0.0
        %3343 = vmatprep.subr.mxu0 0.0
        %3344 = vmatpush1.xpose.msra.mxu0 0.0
        %3345 = vmatprep.subr.mxu0 0.0
        %3346 = vmatpush1.xpose.msra.mxu0 0.0
        %3347 = vmatprep.subr.mxu0 0.0
        %3348 = vmatpush1.xpose.msra.mxu0 0.0
        %3349 = vmatprep.subr.mxu0 0.0
        %3350 = vmatpush1.xpose.msra.mxu0 0.0
        %3351 = vmatprep.subr.mxu0 0.0
        %3352 = vmatpush1.xpose.msra.mxu0 0.0
        %3353 = vmatprep.subr.mxu0 0.0
        %3354 = vmatpush1.xpose.msra.mxu0 0.0
        %3355 = vmatprep.subr.mxu0 0.0
        %3356 = vmatpush1.xpose.msra.mxu0 0.0
        %3357 = vmatprep.subr.mxu0 0.0
        %3358 = vmatpush1.xpose.msra.mxu0 0.0
        %3359 = vmatprep.subr.mxu0 0.0
        %3360 = vmatpush1.xpose.msra.mxu0 0.0
        %3361 = vmatprep.mubr.f32.mxu0 0.0
        %3362 = vmatmul.mubr.f32.gmra.mrb[0].mxu0 %v2987
        %v3363 = vpop.f32.mrb[0].mxu0
        %v3364 = vadd.f32 %v3289, %v3363
        %v3365 = vpop.f32.mrb[0].mxu0
        %3366 = vmatprep.mubr.f32.mxu0 0.0
        %3367 = vmatmul.mubr.f32.gmra.mrb[0].mxu0 %v2996
        %v3368 = vpop.f32.mrb[0].mxu0
        %v3369 = vadd.f32 %v3294, %v3368
        %v3370 = vpop.f32.mrb[0].mxu0
        %3371 = vdwg.mxu0
        %v3372 = vmul.f32 %v3364, %v3364
        %v3373 = vmul.f32 %v3369, %v3369
        %v3374 = vsel %vm1320, %v3372, 0.0
        %v3375 = vsel %vm1322, %v3373, 0.0
        %v3376 = vadd.f32 %v3374, %v3375
        %v3377 = vrot.slane %v3376, 4
        %v3378 = vadd.f32 %v3376, %v3377
        %v3379 = vrot.slane %v3378, 2
        %v3380 = vadd.f32 %v3378, %v3379
        %v3381 = vrot.slane %v3380, 1
        %v3382 = vadd.f32 %v3380, %v3381
        %v3383 = vand.u32 2147483647, %v3364
        %v3384 = vand.u32 2147483647, %v3369
        %v3385 = vsel %vm1320, %v3383, 0.0
        %v3386 = vsel %vm1322, %v3384, 0.0
        %v3387 = vadd.f32 %v3385, %v3386
        %v3388 = vrot.slane %v3387, 4
        %v3389 = vadd.f32 %v3387, %v3388
        %v3390 = vrot.slane %v3389, 2
        %v3391 = vadd.f32 %v3389, %v3390
        %v3392 = vrot.slane %v3391, 1
        %v3393 = vadd.f32 %v3391, %v3392
        %v3394 = vmul.f32 %v3382, %v3393
        %v3395 = vadd.f32 %v3394, 1.0
        %v3396 = vrcp.pop %v3395
        %v3397 = vmul.f32 %v3382, %v3396
        %v3398 = vmul.f32 %v3397, %v3364
        %v3399 = vmul.f32 %v3397, %v3369
        %v3400 = vmul.f32 %v3398, %v3398
        %v3401 = vmul.f32 %v3399, %v3399
        %v3402 = vsel %vm1320, %v3400, 0.0
        %3403 = vadd.xlane.f32.xlu0 %v3402
        %v3404 = vpop.xlane.xlu0 %3403
        %v3405 = vsel %vm1322, %v3401, 0.0
        %3406 = vadd.xlane.f32.xlu0 %v3405
        %v3407 = vpop.xlane.xlu0 %3406
        %v3408 = vand.u32 2147483647, %v3398
        %v3409 = vand.u32 2147483647, %v3399
        %v3410 = vsel %vm1320, %v3408, 0.0
        %3411 = vadd.xlane.f32.xlu0 %v3410
        %v3412 = vpop.xlane.xlu0 %3411
        %v3413 = vsel %vm1322, %v3409, 0.0
        %3414 = vadd.xlane.f32.xlu0 %v3413
        %v3415 = vpop.xlane.xlu0 %3414
        %v3416 = vmul.f32 %v3404, %v3412
        %v3417 = vmul.f32 %v3407, %v3415
        %v3418 = vadd.f32 %v3416, 1.0
        %v3419 = vadd.f32 %v3417, 1.0
        %v3420 = vrcp.pop %v3418
        %v3421 = vrcp.pop %v3419
        %v3422 = vmul.f32 %v3404, %v3420
        %v3423 = vmul.f32 %v3407, %v3421
        %v3424 = vmul.f32 %v3422, %v3398
        %v3425 = vmul.f32 %v3423, %v3399
        %v3426 = vmul.f32 %v3424, %v3424
        %v3427 = vmul.f32 %v3425, %v3425
        %v3428 = vsel %vm1320, %v3426, 0.0
        %3429 = vadd.xlane.f32.xlu0 %v3428
        %v3430 = vpop.xlane.xlu0 %3429
        %v3431 = vsel %vm1322, %v3427, 0.0
        %3432 = vadd.xlane.f32.xlu0 %v3431
        %v3433 = vpop.xlane.xlu0 %3432
        %v3434 = vrsqrt.pop %v3430
        %v3435 = vmul.f32 %v3430, %v3434
        %vm3436 = vcmp.eq.f32.partialorder %v3430, inf
        %v3437 = vsel %vm3436, %v3430, %v3435
        %vm3438 = vcmp.eq.f32.partialorder %v3430, 0.0
        %v3439 = vand.u32 %v3430, 2147483648
        %v3440 = vsel %vm3438, %v3439, %v3437
        %v3441 = vrsqrt.pop %v3433
        %v3442 = vmul.f32 %v3433, %v3441
        %vm3443 = vcmp.eq.f32.partialorder %v3433, inf
        %v3444 = vsel %vm3443, %v3433, %v3442
        %vm3445 = vcmp.eq.f32.partialorder %v3433, 0.0
        %v3446 = vand.u32 %v3433, 2147483648
        %v3447 = vsel %vm3445, %v3446, %v3444
        %v3448 = vsel %vm933, %v3447, -inf
        %v3449 = vmax.f32 %v3440, %v3448
        %v3450 = vrot.slane %v3449, 4
        %v3451 = vmax.f32 %v3449, %v3450
        %v3452 = vrot.slane %v3451, 2
        %v3453 = vmax.f32 %v3451, %v3452
        %v3454 = vrot.slane %v3453, 1
        %v3455 = vmax.f32 %v3453, %v3454
        %v3456 = vsub.f32 %v3440, %v3455
        %v3457 = vsub.f32 %v3447, %v3455
        %v3458 = vmul.f32 %v3456, 1.442695
        %v3459 = vpow.pop %v3458
        %v3460 = vmul.f32 %v3457, 1.442695
        %v3461 = vpow.pop %v3460
        %v3462 = vsel %vm933, %v3461, 0.0
        %v3463 = vadd.f32 %v3459, %v3462
        %v3464 = vrot.slane %v3463, 4
        %v3465 = vadd.f32 %v3463, %v3464
        %v3466 = vrot.slane %v3465, 2
        %v3467 = vadd.f32 %v3465, %v3466
        %v3468 = vrot.slane %v3467, 1
        %v3469 = vadd.f32 %v3467, %v3468
        %v3470 = vrcp.pop %v3469
        %v3471 = vmul.f32 %v3459, %v3470
        %v3472 = vmul.f32 %v3461, %v3470
        %vm3473 = vcmask 7168
        %3474 = vst.msk [vmem:[%s185] sm:$0xff] %vm3473, %v3471
        %vm3475 = vcmask 1024
        %3476 = vst.msk [vmem:[%s185 + $0x8] sm:$0x3] %vm3475, %v3472
        %p3477 = scmp.lt.s32.totalorder %s15, 1
        %s3478 = scalar_select %p3477, %s15, 1
        %s3479 = smul.addr %s3478, 2
        %s3480 = smul.addr %s3479, 8
        %s3481 = scalar_lea.vmem %s3, %s3480
        // Predicated region
        $region37: #{capsnet_forward.5} parent=31 // pred_check
          %p3482 = pneg %p101
        $region38: #{capsnet_forward.5} parent=31 // pred_check_branch
          %3484 = sbr.rel (%p3482) target = $region40
        $region39: #{capsnet_forward.5} parent=31 // pred_region
          _
        $region40: #{capsnet_forward.5} parent=31 // pred_fallthru
          _
      $region32: #{capsnet_forward.5} parent=5 // pred_fallthru
        _
      %p3485 = scmp.le.s32.totalorder 2, %s10
      // Predicated region
      $region41: #{capsnet_forward.5} parent=5 // pred_check
        %p3486 = pneg %p3485
      $region42: #{capsnet_forward.5} parent=5 // pred_check_branch
        %3488 = sbr.rel (%p3486) target = $region44
      $region43: #{capsnet_forward.5} parent=5 // pred_region
        %s3489 = ssub.s32 %s10, 2
        // Predicated region
        $region45: #{capsnet_forward.5} parent=43 // pred_check
          %p3490 = pneg %p107
        $region46: #{capsnet_forward.5} parent=43 // pred_check_branch
          %3492 = sbr.rel (%p3490) target = $region48
        $region47: #{capsnet_forward.5} parent=43 // pred_region
          %p3493 = scmp.lt.s32.totalorder %s16, 1
          %s3494 = scalar_select %p3493, %s16, 1
          %s3495 = smul.addr %s3494, 2
          %s3496 = smul.addr %s3495, 8
          %s3497 = scalar_lea.vmem %s3, %s3496
        $region48: #{capsnet_forward.5} parent=43 // pred_fallthru
          _
      $region44: #{capsnet_forward.5} parent=5 // pred_fallthru
        _
    $region6: #{capsnet_forward.5} parent=1 // loop_footer
      %s14 = sadd.s32 1, %s10
    $region7: #{capsnet_forward.5} parent=1 // loop_footer_branch
      %9 = sbr.rel target = $region3
    $region8: #{capsnet_forward.5} parent=1 // loop_exit
      _
    %3498 = vsyncpa [#allocation3], 1
    %s3499 = scalar_lea.sflag [#allocation3], 1
    %3500 = vsyncpa %s3499, 1

</llo_original>
